<compile_context>
chip_gen: v5e
topology: v5e:2x2
jax: 0.10.0
libtpu: 0.0.40
codegen_flags: <defaults>
</compile_context>

<pallas_src>
import jax
import jax.numpy as jnp
from jax.experimental import pallas as pl
from jax.experimental.pallas import tpu as pltpu

_FC_PAD = 128  # lane-dense FC output width


def _const_spec(shape):
    """BlockSpec covering the entire array at every grid step (weights)."""
    zeros = (0,) * len(shape)
    return pl.BlockSpec(shape, lambda i, _z=zeros: _z)


def _pick_batch_tile(n, max_tile):
    """Largest batch tile <= max_tile that divides n (prefer multiples of 8)."""
    if n <= max_tile:
        return n
    for cand in range(max_tile - (max_tile % 8), 7, -8):
        if n % cand == 0:
            return cand
    for cand in range(max_tile, 0, -1):
        if n % cand == 0:
            return cand
    return n


def _bn_relu_pool(acc, sb_ref, nb, h, w_sp, out_dtype):
    """acc: (nb*h*w_sp, cout) f32 pre-activation.  Folded BN + ReLU + 2x2 max
    pool.  Returns (nb, h//2, w_sp//2, cout) in out_dtype."""
    cout = acc.shape[-1]
    sb = sb_ref[...]                                   # (2, cout) f32
    z = jnp.maximum(acc * sb[0:1, :] + sb[1:2, :], 0.0)
    ho, wo = h // 2, w_sp // 2
    z = z.reshape(nb * ho, 2, wo, 2, cout)             # 2x2 max pool
    z = jnp.max(z, axis=3)
    z = jnp.max(z, axis=1)
    return z.reshape(nb, ho, wo, cout).astype(out_dtype)


def _conv_block(y, w_ref, sb_ref, out_dtype):
    """3x3 conv (pad=1) as 9 accumulating MXU dots + BN + ReLU + 2x2 pool.

    y: (nb, h, w, cin) bf16 activations.  w_ref: (9*cin, cout) bf16 with rows
    ordered (tap, cin) -- every per-tap K slice starts at a multiple of cin,
    so all operands stay lane/sublane aligned (no lane-misaligned concat).
    """
    nb, h, w_sp, cin = y.shape
    cout = w_ref.shape[-1]
    zr = jnp.zeros((nb, 1, w_sp, cin), y.dtype)
    p = jnp.concatenate([zr, y, zr], axis=1)           # zero-pad H
    zc = jnp.zeros((nb, h + 2, 1, cin), y.dtype)
    p = jnp.concatenate([zc, p, zc], axis=2)           # zero-pad W
    acc = jnp.zeros((nb * h * w_sp, cout), jnp.float32)
    t = 0
    for dy in range(3):
        for dx in range(3):
            tap = p[:, dy:dy + h, dx:dx + w_sp, :].reshape(nb * h * w_sp, cin)
            acc = acc + jnp.dot(tap, w_ref[t * cin:(t + 1) * cin, :],
                                preferred_element_type=jnp.float32)
            t += 1
    return _bn_relu_pool(acc, sb_ref, nb, h, w_sp, out_dtype)


def _fused_kernel(x_ref, w1_ref, sb1_ref, w2_ref, sb2_ref, w3_ref, sb3_ref,
                  w4_ref, sb4_ref, fcw_ref, fcb_ref, out_ref):
    nb, h0, w0 = x_ref.shape
    c1 = w1_ref.shape[-1]

    # ---------- Layer 1: Cin = 1, computed as 9 VPU broadcast MACs ----------
    x = x_ref[...]                                     # (nb, h0, w0) f32
    zr = jnp.zeros((nb, 1, w0), jnp.float32)
    p = jnp.concatenate([zr, x, zr], axis=1)           # zero-pad H
    zc = jnp.zeros((nb, h0 + 2, 1), jnp.float32)
    p = jnp.concatenate([zc, p, zc], axis=2)           # zero-pad W
    w1 = w1_ref[...]                                   # (9, c1) f32
    acc1 = jnp.zeros((nb, h0, w0, c1), jnp.float32)
    t = 0
    for dy in range(3):
        for dx in range(3):
            tap = jnp.expand_dims(p[:, dy:dy + h0, dx:dx + w0], -1)
            acc1 = acc1 + tap * w1[t]                  # (nb,h0,w0,1)*(c1,)
            t += 1
    y = _bn_relu_pool(acc1.reshape(nb * h0 * w0, c1), sb1_ref,
                      nb, h0, w0, jnp.bfloat16)        # (nb, h0/2, w0/2, 32)

    # ---------- Layers 2-4: accumulating im2col dots (bf16 in, f32 acc) -----
    y = _conv_block(y, w2_ref, sb2_ref, jnp.bfloat16)  # (nb, h/4,  w/4,  64)
    y = _conv_block(y, w3_ref, sb3_ref, jnp.bfloat16)  # (nb, h/8,  w/8, 128)
    y = _conv_block(y, w4_ref, sb4_ref, jnp.float32)   # (nb, h/16, w/16,256)

    # ---------- AdaptiveAvgPool2d((1,1)) + flatten + Dropout(eval) + FC -----
    if y.shape[1] == 1 and y.shape[2] == 1:
        feat = y.reshape(nb, y.shape[-1])              # exact for 16x16 input
    else:
        feat = jnp.mean(y, axis=(1, 2))
    # TODO(synk): Dropout(0.5) is identity in eval mode; training-mode dropout
    # (random mask) is not implemented.
    logits = jnp.dot(feat.astype(jnp.bfloat16), fcw_ref[...],
                     preferred_element_type=jnp.float32) + fcb_ref[...]
    out_ref[...] = logits                              # (nb, 128) lane-dense


def better_convnet_forward(x_nchw, params, fc_w_pad, fc_b_pad, num_classes,
                           *, batch_tile=32):
    """x_nchw: (N, 1, H, W).  Returns (N, num_classes) f32 logits."""
    n, cin, h, w = x_nchw.shape
    assert cin == 1 and h % 16 == 0 and w % 16 == 0
    x = x_nchw[:, 0, :, :].astype(jnp.float32)         # (N, H, W)

    nb = _pick_batch_tile(n, batch_tile)
    assert n % nb == 0
    fcout = fc_w_pad.shape[1]

    inputs = [x]
    for wk, sb in params:
        inputs += [wk, sb]
    inputs += [fc_w_pad, fc_b_pad]

    in_specs = [pl.BlockSpec((nb, h, w), lambda i: (i, 0, 0))]
    in_specs += [_const_spec(a.shape) for a in inputs[1:]]

    out = pl.pallas_call(
        _fused_kernel,
        out_shape=jax.ShapeDtypeStruct((n, fcout), jnp.float32),
        grid=(n // nb,),
        in_specs=in_specs,
        out_specs=pl.BlockSpec((nb, fcout), lambda i: (i, 0)),
        compiler_params=pltpu.CompilerParams(
            dimension_semantics=("parallel",)),
    )(*inputs)
    return out[:, :num_classes]


def init_params(key, num_classes, fc_pad=_FC_PAD):
    """Deterministic parameter init (synthetic weights, not a checkpoint)."""
    assert num_classes <= fc_pad
    chans = (1, 32, 64, 128, 256)
    eps = 1e-5
    params = []
    for li in range(4):
        cin, cout = chans[li], chans[li + 1]
        key, kw, kb, kg, kbeta, km, kv = jax.random.split(key, 7)
        fan_in = cin * 9
        wconv = jax.random.normal(kw, (3, 3, cin, cout), jnp.float32) / jnp.sqrt(
            jnp.float32(fan_in))
        conv_b = jax.random.normal(kb, (cout,), jnp.float32) * 0.05
        gamma = 1.0 + 0.1 * jax.random.normal(kg, (cout,), jnp.float32)
        beta = 0.05 * jax.random.normal(kbeta, (cout,), jnp.float32)
        rmean = 0.05 * jax.random.normal(km, (cout,), jnp.float32)
        rvar = 1.0 + 0.1 * jax.random.uniform(kv, (cout,), jnp.float32)
        # Fold conv bias + BatchNorm (eval mode) into per-channel scale / bias.
        scale = gamma / jnp.sqrt(rvar + eps)
        bias = (conv_b - rmean) * scale + beta
        # (3,3,cin,cout) -> (9*cin, cout), rows ordered (tap=dy*3+dx, cin).
        wk = wconv.reshape(9 * cin, cout)
        wk = wk.astype(jnp.float32 if cin == 1 else jnp.bfloat16)
        sb = jnp.stack([scale, bias], axis=0)           # (2, cout) f32 epilogue
        params.append((wk, sb))
    key, kw, kb = jax.random.split(key, 3)
    fc_w = jax.random.normal(kw, (256, num_classes), jnp.float32) / jnp.sqrt(256.0)
    fc_b = 0.05 * jax.random.normal(kb, (num_classes,), jnp.float32)
    # Pad FC to a lane-dense 128-wide output; kernel writes (NB, 128).
    fc_w_pad = jnp.zeros((256, fc_pad), jnp.float32).at[:, :num_classes].set(
        fc_w).astype(jnp.bfloat16)
    fc_b_pad = jnp.zeros((1, fc_pad), jnp.float32).at[0, :num_classes].set(fc_b)
    return params, fc_w_pad, fc_b_pad


if __name__ == "__main__":
    num_classes = 10  # class_names is undefined in the source; pick 10.
    key = jax.random.PRNGKey(0)
    key, kx = jax.random.split(key)
    # Small MNIST-like input consistent with Conv2d(1, 32, ...): (N=2, C=1, 16, 16)
    x = jax.random.normal(kx, (2, 1, 16, 16), jnp.float32)
    params, fc_w_pad, fc_b_pad = init_params(key, num_classes)

    out = better_convnet_forward(x, params, fc_w_pad, fc_b_pad, num_classes)
    out = jax.block_until_ready(out)
    assert out.shape == (2, num_classes) and out.dtype == jnp.float32
    assert bool(jnp.all(jnp.isfinite(out)))
    print("KERNEL_OK")
</pallas_src>

<mosaic_0001>
module attributes {stable_mosaic.version = 11 : i64} {
  func.func @_fused_kernel(%arg0: i32, %arg1: memref<2x16x16xf32, #tpu.memory_space<vmem>>, %arg2: memref<9x32xf32, #tpu.memory_space<vmem>>, %arg3: memref<2x32xf32, #tpu.memory_space<vmem>>, %arg4: memref<288x64xbf16, #tpu.memory_space<vmem>>, %arg5: memref<2x64xf32, #tpu.memory_space<vmem>>, %arg6: memref<576x128xbf16, #tpu.memory_space<vmem>>, %arg7: memref<2x128xf32, #tpu.memory_space<vmem>>, %arg8: memref<1152x256xbf16, #tpu.memory_space<vmem>>, %arg9: memref<2x256xf32, #tpu.memory_space<vmem>>, %arg10: memref<256x128xbf16, #tpu.memory_space<vmem>>, %arg11: memref<1x128xf32, #tpu.memory_space<vmem>>, %arg12: memref<2x128xf32, #tpu.memory_space<vmem>>) attributes {dimension_semantics = [#tpu.dimension_semantics<parallel>], iteration_bounds = array<i64: 1>, scalar_prefetch = 0 : i64, scratch_operands = 0 : i64, tpu.core_type = #tpu.core_type<tc>, window_params = [{transform_indices = @transform_0, window_bounds = array<i64: 2, 16, 16>}, {pipeline_mode = #tpu.pipeline_mode<synchronous>, transform_indices = @transform_1, window_bounds = array<i64: 9, 32>}, {pipeline_mode = #tpu.pipeline_mode<synchronous>, transform_indices = @transform_2, window_bounds = array<i64: 2, 32>}, {pipeline_mode = #tpu.pipeline_mode<synchronous>, transform_indices = @transform_3, window_bounds = array<i64: 288, 64>}, {pipeline_mode = #tpu.pipeline_mode<synchronous>, transform_indices = @transform_4, window_bounds = array<i64: 2, 64>}, {pipeline_mode = #tpu.pipeline_mode<synchronous>, transform_indices = @transform_5, window_bounds = array<i64: 576, 128>}, {pipeline_mode = #tpu.pipeline_mode<synchronous>, transform_indices = @transform_6, window_bounds = array<i64: 2, 128>}, {pipeline_mode = #tpu.pipeline_mode<synchronous>, transform_indices = @transform_7, window_bounds = array<i64: 1152, 256>}, {pipeline_mode = #tpu.pipeline_mode<synchronous>, transform_indices = @transform_8, window_bounds = array<i64: 2, 256>}, {pipeline_mode = #tpu.pipeline_mode<synchronous>, transform_indices = @transform_9, window_bounds = array<i64: 256, 128>}, {pipeline_mode = #tpu.pipeline_mode<synchronous>, transform_indices = @transform_10, window_bounds = array<i64: 1, 128>}, {transform_indices = @transform_11, window_bounds = array<i64: 2, 128>}]} {
    %c0 = arith.constant 0 : index
    %c0_0 = arith.constant 0 : index
    %c0_1 = arith.constant 0 : index
    %0 = vector.load %arg1[%c0, %c0_0, %c0_1] : memref<2x16x16xf32, #tpu.memory_space<vmem>>, vector<2x16x16xf32>
    %cst = arith.constant 0.000000e+00 : f32
    %1 = vector.broadcast %cst : f32 to vector<2x1x16xf32>
    %2 = tpu.concatenate %1, %0, %1 in 1 : vector<2x1x16xf32>, vector<2x16x16xf32>, vector<2x1x16xf32> -> vector<2x18x16xf32>
    %cst_2 = arith.constant 0.000000e+00 : f32
    %3 = vector.broadcast %cst_2 : f32 to vector<2x18x1xf32>
    %4 = tpu.concatenate %3, %2, %3 in 2 : vector<2x18x1xf32>, vector<2x18x16xf32>, vector<2x18x1xf32> -> vector<2x18x18xf32>
    %c0_3 = arith.constant 0 : index
    %c0_4 = arith.constant 0 : index
    %5 = vector.load %arg2[%c0_3, %c0_4] : memref<9x32xf32, #tpu.memory_space<vmem>>, vector<9x32xf32>
    %cst_5 = arith.constant 0.000000e+00 : f32
    %6 = vector.broadcast %cst_5 : f32 to vector<2x16x16x32xf32>
    %7 = vector.extract_strided_slice %4 {offsets = [0, 0, 0], sizes = [2, 16, 16], strides = [1, 1, 1]} : vector<2x18x18xf32> to vector<2x16x16xf32>
    %8 = vector.shape_cast %7 : vector<2x16x16xf32> to vector<2x16x16x1xf32>
    %9 = vector.extract_strided_slice %5 {offsets = [0, 0], sizes = [1, 32], strides = [1, 1]} : vector<9x32xf32> to vector<1x32xf32>
    %10 = vector.shape_cast %9 : vector<1x32xf32> to vector<32xf32>
    %11 = vector.shape_cast %10 : vector<32xf32> to vector<1x1x1x32xf32>
    %12 = vector.broadcast %8 : vector<2x16x16x1xf32> to vector<2x16x16x32xf32>
    %13 = vector.broadcast %11 : vector<1x1x1x32xf32> to vector<2x16x16x32xf32>
    %14 = arith.mulf %12, %13 : vector<2x16x16x32xf32>
    %15 = arith.addf %6, %14 : vector<2x16x16x32xf32>
    %16 = vector.extract_strided_slice %4 {offsets = [0, 0, 1], sizes = [2, 16, 16], strides = [1, 1, 1]} : vector<2x18x18xf32> to vector<2x16x16xf32>
    %17 = vector.shape_cast %16 : vector<2x16x16xf32> to vector<2x16x16x1xf32>
    %18 = vector.extract_strided_slice %5 {offsets = [1, 0], sizes = [1, 32], strides = [1, 1]} : vector<9x32xf32> to vector<1x32xf32>
    %19 = vector.shape_cast %18 : vector<1x32xf32> to vector<32xf32>
    %20 = vector.shape_cast %19 : vector<32xf32> to vector<1x1x1x32xf32>
    %21 = vector.broadcast %17 : vector<2x16x16x1xf32> to vector<2x16x16x32xf32>
    %22 = vector.broadcast %20 : vector<1x1x1x32xf32> to vector<2x16x16x32xf32>
    %23 = arith.mulf %21, %22 : vector<2x16x16x32xf32>
    %24 = arith.addf %15, %23 : vector<2x16x16x32xf32>
    %25 = vector.extract_strided_slice %4 {offsets = [0, 0, 2], sizes = [2, 16, 16], strides = [1, 1, 1]} : vector<2x18x18xf32> to vector<2x16x16xf32>
    %26 = vector.shape_cast %25 : vector<2x16x16xf32> to vector<2x16x16x1xf32>
    %27 = vector.extract_strided_slice %5 {offsets = [2, 0], sizes = [1, 32], strides = [1, 1]} : vector<9x32xf32> to vector<1x32xf32>
    %28 = vector.shape_cast %27 : vector<1x32xf32> to vector<32xf32>
    %29 = vector.shape_cast %28 : vector<32xf32> to vector<1x1x1x32xf32>
    %30 = vector.broadcast %26 : vector<2x16x16x1xf32> to vector<2x16x16x32xf32>
    %31 = vector.broadcast %29 : vector<1x1x1x32xf32> to vector<2x16x16x32xf32>
    %32 = arith.mulf %30, %31 : vector<2x16x16x32xf32>
    %33 = arith.addf %24, %32 : vector<2x16x16x32xf32>
    %34 = vector.extract_strided_slice %4 {offsets = [0, 1, 0], sizes = [2, 16, 16], strides = [1, 1, 1]} : vector<2x18x18xf32> to vector<2x16x16xf32>
    %35 = vector.shape_cast %34 : vector<2x16x16xf32> to vector<2x16x16x1xf32>
    %36 = vector.extract_strided_slice %5 {offsets = [3, 0], sizes = [1, 32], strides = [1, 1]} : vector<9x32xf32> to vector<1x32xf32>
    %37 = vector.shape_cast %36 : vector<1x32xf32> to vector<32xf32>
    %38 = vector.shape_cast %37 : vector<32xf32> to vector<1x1x1x32xf32>
    %39 = vector.broadcast %35 : vector<2x16x16x1xf32> to vector<2x16x16x32xf32>
    %40 = vector.broadcast %38 : vector<1x1x1x32xf32> to vector<2x16x16x32xf32>
    %41 = arith.mulf %39, %40 : vector<2x16x16x32xf32>
    %42 = arith.addf %33, %41 : vector<2x16x16x32xf32>
    %43 = vector.extract_strided_slice %4 {offsets = [0, 1, 1], sizes = [2, 16, 16], strides = [1, 1, 1]} : vector<2x18x18xf32> to vector<2x16x16xf32>
    %44 = vector.shape_cast %43 : vector<2x16x16xf32> to vector<2x16x16x1xf32>
    %45 = vector.extract_strided_slice %5 {offsets = [4, 0], sizes = [1, 32], strides = [1, 1]} : vector<9x32xf32> to vector<1x32xf32>
    %46 = vector.shape_cast %45 : vector<1x32xf32> to vector<32xf32>
    %47 = vector.shape_cast %46 : vector<32xf32> to vector<1x1x1x32xf32>
    %48 = vector.broadcast %44 : vector<2x16x16x1xf32> to vector<2x16x16x32xf32>
    %49 = vector.broadcast %47 : vector<1x1x1x32xf32> to vector<2x16x16x32xf32>
    %50 = arith.mulf %48, %49 : vector<2x16x16x32xf32>
    %51 = arith.addf %42, %50 : vector<2x16x16x32xf32>
    %52 = vector.extract_strided_slice %4 {offsets = [0, 1, 2], sizes = [2, 16, 16], strides = [1, 1, 1]} : vector<2x18x18xf32> to vector<2x16x16xf32>
    %53 = vector.shape_cast %52 : vector<2x16x16xf32> to vector<2x16x16x1xf32>
    %54 = vector.extract_strided_slice %5 {offsets = [5, 0], sizes = [1, 32], strides = [1, 1]} : vector<9x32xf32> to vector<1x32xf32>
    %55 = vector.shape_cast %54 : vector<1x32xf32> to vector<32xf32>
    %56 = vector.shape_cast %55 : vector<32xf32> to vector<1x1x1x32xf32>
    %57 = vector.broadcast %53 : vector<2x16x16x1xf32> to vector<2x16x16x32xf32>
    %58 = vector.broadcast %56 : vector<1x1x1x32xf32> to vector<2x16x16x32xf32>
    %59 = arith.mulf %57, %58 : vector<2x16x16x32xf32>
    %60 = arith.addf %51, %59 : vector<2x16x16x32xf32>
    %61 = vector.extract_strided_slice %4 {offsets = [0, 2, 0], sizes = [2, 16, 16], strides = [1, 1, 1]} : vector<2x18x18xf32> to vector<2x16x16xf32>
    %62 = vector.shape_cast %61 : vector<2x16x16xf32> to vector<2x16x16x1xf32>
    %63 = vector.extract_strided_slice %5 {offsets = [6, 0], sizes = [1, 32], strides = [1, 1]} : vector<9x32xf32> to vector<1x32xf32>
    %64 = vector.shape_cast %63 : vector<1x32xf32> to vector<32xf32>
    %65 = vector.shape_cast %64 : vector<32xf32> to vector<1x1x1x32xf32>
    %66 = vector.broadcast %62 : vector<2x16x16x1xf32> to vector<2x16x16x32xf32>
    %67 = vector.broadcast %65 : vector<1x1x1x32xf32> to vector<2x16x16x32xf32>
    %68 = arith.mulf %66, %67 : vector<2x16x16x32xf32>
    %69 = arith.addf %60, %68 : vector<2x16x16x32xf32>
    %70 = vector.extract_strided_slice %4 {offsets = [0, 2, 1], sizes = [2, 16, 16], strides = [1, 1, 1]} : vector<2x18x18xf32> to vector<2x16x16xf32>
    %71 = vector.shape_cast %70 : vector<2x16x16xf32> to vector<2x16x16x1xf32>
    %72 = vector.extract_strided_slice %5 {offsets = [7, 0], sizes = [1, 32], strides = [1, 1]} : vector<9x32xf32> to vector<1x32xf32>
    %73 = vector.shape_cast %72 : vector<1x32xf32> to vector<32xf32>
    %74 = vector.shape_cast %73 : vector<32xf32> to vector<1x1x1x32xf32>
    %75 = vector.broadcast %71 : vector<2x16x16x1xf32> to vector<2x16x16x32xf32>
    %76 = vector.broadcast %74 : vector<1x1x1x32xf32> to vector<2x16x16x32xf32>
    %77 = arith.mulf %75, %76 : vector<2x16x16x32xf32>
    %78 = arith.addf %69, %77 : vector<2x16x16x32xf32>
    %79 = vector.extract_strided_slice %4 {offsets = [0, 2, 2], sizes = [2, 16, 16], strides = [1, 1, 1]} : vector<2x18x18xf32> to vector<2x16x16xf32>
    %80 = vector.shape_cast %79 : vector<2x16x16xf32> to vector<2x16x16x1xf32>
    %81 = vector.extract_strided_slice %5 {offsets = [8, 0], sizes = [1, 32], strides = [1, 1]} : vector<9x32xf32> to vector<1x32xf32>
    %82 = vector.shape_cast %81 : vector<1x32xf32> to vector<32xf32>
    %83 = vector.shape_cast %82 : vector<32xf32> to vector<1x1x1x32xf32>
    %84 = vector.broadcast %80 : vector<2x16x16x1xf32> to vector<2x16x16x32xf32>
    %85 = vector.broadcast %83 : vector<1x1x1x32xf32> to vector<2x16x16x32xf32>
    %86 = arith.mulf %84, %85 : vector<2x16x16x32xf32>
    %87 = arith.addf %78, %86 : vector<2x16x16x32xf32>
    %88 = vector.shape_cast %87 : vector<2x16x16x32xf32> to vector<512x32xf32>
    %c0_6 = arith.constant 0 : index
    %c0_7 = arith.constant 0 : index
    %89 = vector.load %arg3[%c0_6, %c0_7] : memref<2x32xf32, #tpu.memory_space<vmem>>, vector<2x32xf32>
    %90 = vector.extract_strided_slice %89 {offsets = [0, 0], sizes = [1, 32], strides = [1, 1]} : vector<2x32xf32> to vector<1x32xf32>
    %91 = vector.broadcast %90 : vector<1x32xf32> to vector<512x32xf32>
    %92 = arith.mulf %88, %91 : vector<512x32xf32>
    %93 = vector.extract_strided_slice %89 {offsets = [1, 0], sizes = [1, 32], strides = [1, 1]} : vector<2x32xf32> to vector<1x32xf32>
    %94 = vector.broadcast %93 : vector<1x32xf32> to vector<512x32xf32>
    %95 = arith.addf %92, %94 : vector<512x32xf32>
    %cst_8 = arith.constant 0.000000e+00 : f32
    %96 = vector.broadcast %cst_8 : f32 to vector<512x32xf32>
    %97 = arith.maximumf %95, %96 : vector<512x32xf32>
    %98 = vector.shape_cast %97 : vector<512x32xf32> to vector<16x2x8x2x32xf32>
    %cst_9 = arith.constant dense<0xFF800000> : vector<16x2x8x32xf32>
    %99 = vector.multi_reduction <maximumf>, %98, %cst_9 [3] : vector<16x2x8x2x32xf32> to vector<16x2x8x32xf32>
    %cst_10 = arith.constant dense<0xFF800000> : vector<16x8x32xf32>
    %100 = vector.multi_reduction <maximumf>, %99, %cst_10 [1] : vector<16x2x8x32xf32> to vector<16x8x32xf32>
    %101 = vector.shape_cast %100 : vector<16x8x32xf32> to vector<2x8x8x32xf32>
    %102 = arith.truncf %101 : vector<2x8x8x32xf32> to vector<2x8x8x32xbf16>
    %cst_11 = arith.constant 0.000000e+00 : bf16
    %103 = vector.broadcast %cst_11 : bf16 to vector<2x1x8x32xbf16>
    %104 = tpu.concatenate %103, %102, %103 in 1 : vector<2x1x8x32xbf16>, vector<2x8x8x32xbf16>, vector<2x1x8x32xbf16> -> vector<2x10x8x32xbf16>
    %cst_12 = arith.constant 0.000000e+00 : bf16
    %105 = vector.broadcast %cst_12 : bf16 to vector<2x10x1x32xbf16>
    %106 = tpu.concatenate %105, %104, %105 in 2 : vector<2x10x1x32xbf16>, vector<2x10x8x32xbf16>, vector<2x10x1x32xbf16> -> vector<2x10x10x32xbf16>
    %cst_13 = arith.constant 0.000000e+00 : f32
    %107 = vector.broadcast %cst_13 : f32 to vector<128x64xf32>
    %108 = vector.extract_strided_slice %106 {offsets = [0, 0, 0, 0], sizes = [2, 8, 8, 32], strides = [1, 1, 1, 1]} : vector<2x10x10x32xbf16> to vector<2x8x8x32xbf16>
    %109 = vector.shape_cast %108 : vector<2x8x8x32xbf16> to vector<128x32xbf16>
    %c0_14 = arith.constant 0 : index
    %c0_15 = arith.constant 0 : index
    %110 = vector.load %arg4[%c0_14, %c0_15] : memref<288x64xbf16, #tpu.memory_space<vmem>>, vector<32x64xbf16>
    %cst_16 = arith.constant dense<0.000000e+00> : vector<128x64xf32>
    %111 = tpu.matmul %109, %110, %cst_16 {dimension_numbers = #tpu.dot_dimension_numbers<[1], [0], [0], [1], [0, 0, 1, 1], [], []>} : vector<128x32xbf16>, vector<32x64xbf16>, vector<128x64xf32> -> vector<128x64xf32>
    %112 = arith.addf %107, %111 : vector<128x64xf32>
    %113 = vector.extract_strided_slice %106 {offsets = [0, 0, 1, 0], sizes = [2, 8, 8, 32], strides = [1, 1, 1, 1]} : vector<2x10x10x32xbf16> to vector<2x8x8x32xbf16>
    %114 = vector.shape_cast %113 : vector<2x8x8x32xbf16> to vector<128x32xbf16>
    %c32 = arith.constant 32 : index
    %c0_17 = arith.constant 0 : index
    %115 = vector.load %arg4[%c32, %c0_17] : memref<288x64xbf16, #tpu.memory_space<vmem>>, vector<32x64xbf16>
    %cst_18 = arith.constant dense<0.000000e+00> : vector<128x64xf32>
    %116 = tpu.matmul %114, %115, %cst_18 {dimension_numbers = #tpu.dot_dimension_numbers<[1], [0], [0], [1], [0, 0, 1, 1], [], []>} : vector<128x32xbf16>, vector<32x64xbf16>, vector<128x64xf32> -> vector<128x64xf32>
    %117 = arith.addf %112, %116 : vector<128x64xf32>
    %118 = vector.extract_strided_slice %106 {offsets = [0, 0, 2, 0], sizes = [2, 8, 8, 32], strides = [1, 1, 1, 1]} : vector<2x10x10x32xbf16> to vector<2x8x8x32xbf16>
    %119 = vector.shape_cast %118 : vector<2x8x8x32xbf16> to vector<128x32xbf16>
    %c64 = arith.constant 64 : index
    %c0_19 = arith.constant 0 : index
    %120 = vector.load %arg4[%c64, %c0_19] : memref<288x64xbf16, #tpu.memory_space<vmem>>, vector<32x64xbf16>
    %cst_20 = arith.constant dense<0.000000e+00> : vector<128x64xf32>
    %121 = tpu.matmul %119, %120, %cst_20 {dimension_numbers = #tpu.dot_dimension_numbers<[1], [0], [0], [1], [0, 0, 1, 1], [], []>} : vector<128x32xbf16>, vector<32x64xbf16>, vector<128x64xf32> -> vector<128x64xf32>
    %122 = arith.addf %117, %121 : vector<128x64xf32>
    %123 = vector.extract_strided_slice %106 {offsets = [0, 1, 0, 0], sizes = [2, 8, 8, 32], strides = [1, 1, 1, 1]} : vector<2x10x10x32xbf16> to vector<2x8x8x32xbf16>
    %124 = vector.shape_cast %123 : vector<2x8x8x32xbf16> to vector<128x32xbf16>
    %c96 = arith.constant 96 : index
    %c0_21 = arith.constant 0 : index
    %125 = vector.load %arg4[%c96, %c0_21] : memref<288x64xbf16, #tpu.memory_space<vmem>>, vector<32x64xbf16>
    %cst_22 = arith.constant dense<0.000000e+00> : vector<128x64xf32>
    %126 = tpu.matmul %124, %125, %cst_22 {dimension_numbers = #tpu.dot_dimension_numbers<[1], [0], [0], [1], [0, 0, 1, 1], [], []>} : vector<128x32xbf16>, vector<32x64xbf16>, vector<128x64xf32> -> vector<128x64xf32>
    %127 = arith.addf %122, %126 : vector<128x64xf32>
    %128 = vector.extract_strided_slice %106 {offsets = [0, 1, 1, 0], sizes = [2, 8, 8, 32], strides = [1, 1, 1, 1]} : vector<2x10x10x32xbf16> to vector<2x8x8x32xbf16>
    %129 = vector.shape_cast %128 : vector<2x8x8x32xbf16> to vector<128x32xbf16>
    %c128 = arith.constant 128 : index
    %c0_23 = arith.constant 0 : index
    %130 = vector.load %arg4[%c128, %c0_23] : memref<288x64xbf16, #tpu.memory_space<vmem>>, vector<32x64xbf16>
    %cst_24 = arith.constant dense<0.000000e+00> : vector<128x64xf32>
    %131 = tpu.matmul %129, %130, %cst_24 {dimension_numbers = #tpu.dot_dimension_numbers<[1], [0], [0], [1], [0, 0, 1, 1], [], []>} : vector<128x32xbf16>, vector<32x64xbf16>, vector<128x64xf32> -> vector<128x64xf32>
    %132 = arith.addf %127, %131 : vector<128x64xf32>
    %133 = vector.extract_strided_slice %106 {offsets = [0, 1, 2, 0], sizes = [2, 8, 8, 32], strides = [1, 1, 1, 1]} : vector<2x10x10x32xbf16> to vector<2x8x8x32xbf16>
    %134 = vector.shape_cast %133 : vector<2x8x8x32xbf16> to vector<128x32xbf16>
    %c160 = arith.constant 160 : index
    %c0_25 = arith.constant 0 : index
    %135 = vector.load %arg4[%c160, %c0_25] : memref<288x64xbf16, #tpu.memory_space<vmem>>, vector<32x64xbf16>
    %cst_26 = arith.constant dense<0.000000e+00> : vector<128x64xf32>
    %136 = tpu.matmul %134, %135, %cst_26 {dimension_numbers = #tpu.dot_dimension_numbers<[1], [0], [0], [1], [0, 0, 1, 1], [], []>} : vector<128x32xbf16>, vector<32x64xbf16>, vector<128x64xf32> -> vector<128x64xf32>
    %137 = arith.addf %132, %136 : vector<128x64xf32>
    %138 = vector.extract_strided_slice %106 {offsets = [0, 2, 0, 0], sizes = [2, 8, 8, 32], strides = [1, 1, 1, 1]} : vector<2x10x10x32xbf16> to vector<2x8x8x32xbf16>
    %139 = vector.shape_cast %138 : vector<2x8x8x32xbf16> to vector<128x32xbf16>
    %c192 = arith.constant 192 : index
    %c0_27 = arith.constant 0 : index
    %140 = vector.load %arg4[%c192, %c0_27] : memref<288x64xbf16, #tpu.memory_space<vmem>>, vector<32x64xbf16>
    %cst_28 = arith.constant dense<0.000000e+00> : vector<128x64xf32>
    %141 = tpu.matmul %139, %140, %cst_28 {dimension_numbers = #tpu.dot_dimension_numbers<[1], [0], [0], [1], [0, 0, 1, 1], [], []>} : vector<128x32xbf16>, vector<32x64xbf16>, vector<128x64xf32> -> vector<128x64xf32>
    %142 = arith.addf %137, %141 : vector<128x64xf32>
    %143 = vector.extract_strided_slice %106 {offsets = [0, 2, 1, 0], sizes = [2, 8, 8, 32], strides = [1, 1, 1, 1]} : vector<2x10x10x32xbf16> to vector<2x8x8x32xbf16>
    %144 = vector.shape_cast %143 : vector<2x8x8x32xbf16> to vector<128x32xbf16>
    %c224 = arith.constant 224 : index
    %c0_29 = arith.constant 0 : index
    %145 = vector.load %arg4[%c224, %c0_29] : memref<288x64xbf16, #tpu.memory_space<vmem>>, vector<32x64xbf16>
    %cst_30 = arith.constant dense<0.000000e+00> : vector<128x64xf32>
    %146 = tpu.matmul %144, %145, %cst_30 {dimension_numbers = #tpu.dot_dimension_numbers<[1], [0], [0], [1], [0, 0, 1, 1], [], []>} : vector<128x32xbf16>, vector<32x64xbf16>, vector<128x64xf32> -> vector<128x64xf32>
    %147 = arith.addf %142, %146 : vector<128x64xf32>
    %148 = vector.extract_strided_slice %106 {offsets = [0, 2, 2, 0], sizes = [2, 8, 8, 32], strides = [1, 1, 1, 1]} : vector<2x10x10x32xbf16> to vector<2x8x8x32xbf16>
    %149 = vector.shape_cast %148 : vector<2x8x8x32xbf16> to vector<128x32xbf16>
    %c256 = arith.constant 256 : index
    %c0_31 = arith.constant 0 : index
    %150 = vector.load %arg4[%c256, %c0_31] : memref<288x64xbf16, #tpu.memory_space<vmem>>, vector<32x64xbf16>
    %cst_32 = arith.constant dense<0.000000e+00> : vector<128x64xf32>
    %151 = tpu.matmul %149, %150, %cst_32 {dimension_numbers = #tpu.dot_dimension_numbers<[1], [0], [0], [1], [0, 0, 1, 1], [], []>} : vector<128x32xbf16>, vector<32x64xbf16>, vector<128x64xf32> -> vector<128x64xf32>
    %152 = arith.addf %147, %151 : vector<128x64xf32>
    %c0_33 = arith.constant 0 : index
    %c0_34 = arith.constant 0 : index
    %153 = vector.load %arg5[%c0_33, %c0_34] : memref<2x64xf32, #tpu.memory_space<vmem>>, vector<2x64xf32>
    %154 = vector.extract_strided_slice %153 {offsets = [0, 0], sizes = [1, 64], strides = [1, 1]} : vector<2x64xf32> to vector<1x64xf32>
    %155 = vector.broadcast %154 : vector<1x64xf32> to vector<128x64xf32>
    %156 = arith.mulf %152, %155 : vector<128x64xf32>
    %157 = vector.extract_strided_slice %153 {offsets = [1, 0], sizes = [1, 64], strides = [1, 1]} : vector<2x64xf32> to vector<1x64xf32>
    %158 = vector.broadcast %157 : vector<1x64xf32> to vector<128x64xf32>
    %159 = arith.addf %156, %158 : vector<128x64xf32>
    %cst_35 = arith.constant 0.000000e+00 : f32
    %160 = vector.broadcast %cst_35 : f32 to vector<128x64xf32>
    %161 = arith.maximumf %159, %160 : vector<128x64xf32>
    %162 = vector.shape_cast %161 : vector<128x64xf32> to vector<8x2x4x2x64xf32>
    %cst_36 = arith.constant dense<0xFF800000> : vector<8x2x4x64xf32>
    %163 = vector.multi_reduction <maximumf>, %162, %cst_36 [3] : vector<8x2x4x2x64xf32> to vector<8x2x4x64xf32>
    %cst_37 = arith.constant dense<0xFF800000> : vector<8x4x64xf32>
    %164 = vector.multi_reduction <maximumf>, %163, %cst_37 [1] : vector<8x2x4x64xf32> to vector<8x4x64xf32>
    %165 = vector.shape_cast %164 : vector<8x4x64xf32> to vector<2x4x4x64xf32>
    %166 = arith.truncf %165 : vector<2x4x4x64xf32> to vector<2x4x4x64xbf16>
    %cst_38 = arith.constant 0.000000e+00 : bf16
    %167 = vector.broadcast %cst_38 : bf16 to vector<2x1x4x64xbf16>
    %168 = tpu.concatenate %167, %166, %167 in 1 : vector<2x1x4x64xbf16>, vector<2x4x4x64xbf16>, vector<2x1x4x64xbf16> -> vector<2x6x4x64xbf16>
    %cst_39 = arith.constant 0.000000e+00 : bf16
    %169 = vector.broadcast %cst_39 : bf16 to vector<2x6x1x64xbf16>
    %170 = tpu.concatenate %169, %168, %169 in 2 : vector<2x6x1x64xbf16>, vector<2x6x4x64xbf16>, vector<2x6x1x64xbf16> -> vector<2x6x6x64xbf16>
    %cst_40 = arith.constant 0.000000e+00 : f32
    %171 = vector.broadcast %cst_40 : f32 to vector<32x128xf32>
    %172 = vector.extract_strided_slice %170 {offsets = [0, 0, 0, 0], sizes = [2, 4, 4, 64], strides = [1, 1, 1, 1]} : vector<2x6x6x64xbf16> to vector<2x4x4x64xbf16>
    %173 = vector.shape_cast %172 : vector<2x4x4x64xbf16> to vector<32x64xbf16>
    %c0_41 = arith.constant 0 : index
    %c0_42 = arith.constant 0 : index
    %174 = vector.load %arg6[%c0_41, %c0_42] : memref<576x128xbf16, #tpu.memory_space<vmem>>, vector<64x128xbf16>
    %cst_43 = arith.constant dense<0.000000e+00> : vector<32x128xf32>
    %175 = tpu.matmul %173, %174, %cst_43 {dimension_numbers = #tpu.dot_dimension_numbers<[1], [0], [0], [1], [0, 0, 1, 1], [], []>} : vector<32x64xbf16>, vector<64x128xbf16>, vector<32x128xf32> -> vector<32x128xf32>
    %176 = arith.addf %171, %175 : vector<32x128xf32>
    %177 = vector.extract_strided_slice %170 {offsets = [0, 0, 1, 0], sizes = [2, 4, 4, 64], strides = [1, 1, 1, 1]} : vector<2x6x6x64xbf16> to vector<2x4x4x64xbf16>
    %178 = vector.shape_cast %177 : vector<2x4x4x64xbf16> to vector<32x64xbf16>
    %c64_44 = arith.constant 64 : index
    %c0_45 = arith.constant 0 : index
    %179 = vector.load %arg6[%c64_44, %c0_45] : memref<576x128xbf16, #tpu.memory_space<vmem>>, vector<64x128xbf16>
    %cst_46 = arith.constant dense<0.000000e+00> : vector<32x128xf32>
    %180 = tpu.matmul %178, %179, %cst_46 {dimension_numbers = #tpu.dot_dimension_numbers<[1], [0], [0], [1], [0, 0, 1, 1], [], []>} : vector<32x64xbf16>, vector<64x128xbf16>, vector<32x128xf32> -> vector<32x128xf32>
    %181 = arith.addf %176, %180 : vector<32x128xf32>
    %182 = vector.extract_strided_slice %170 {offsets = [0, 0, 2, 0], sizes = [2, 4, 4, 64], strides = [1, 1, 1, 1]} : vector<2x6x6x64xbf16> to vector<2x4x4x64xbf16>
    %183 = vector.shape_cast %182 : vector<2x4x4x64xbf16> to vector<32x64xbf16>
    %c128_47 = arith.constant 128 : index
    %c0_48 = arith.constant 0 : index
    %184 = vector.load %arg6[%c128_47, %c0_48] : memref<576x128xbf16, #tpu.memory_space<vmem>>, vector<64x128xbf16>
    %cst_49 = arith.constant dense<0.000000e+00> : vector<32x128xf32>
    %185 = tpu.matmul %183, %184, %cst_49 {dimension_numbers = #tpu.dot_dimension_numbers<[1], [0], [0], [1], [0, 0, 1, 1], [], []>} : vector<32x64xbf16>, vector<64x128xbf16>, vector<32x128xf32> -> vector<32x128xf32>
    %186 = arith.addf %181, %185 : vector<32x128xf32>
    %187 = vector.extract_strided_slice %170 {offsets = [0, 1, 0, 0], sizes = [2, 4, 4, 64], strides = [1, 1, 1, 1]} : vector<2x6x6x64xbf16> to vector<2x4x4x64xbf16>
    %188 = vector.shape_cast %187 : vector<2x4x4x64xbf16> to vector<32x64xbf16>
    %c192_50 = arith.constant 192 : index
    %c0_51 = arith.constant 0 : index
    %189 = vector.load %arg6[%c192_50, %c0_51] : memref<576x128xbf16, #tpu.memory_space<vmem>>, vector<64x128xbf16>
    %cst_52 = arith.constant dense<0.000000e+00> : vector<32x128xf32>
    %190 = tpu.matmul %188, %189, %cst_52 {dimension_numbers = #tpu.dot_dimension_numbers<[1], [0], [0], [1], [0, 0, 1, 1], [], []>} : vector<32x64xbf16>, vector<64x128xbf16>, vector<32x128xf32> -> vector<32x128xf32>
    %191 = arith.addf %186, %190 : vector<32x128xf32>
    %192 = vector.extract_strided_slice %170 {offsets = [0, 1, 1, 0], sizes = [2, 4, 4, 64], strides = [1, 1, 1, 1]} : vector<2x6x6x64xbf16> to vector<2x4x4x64xbf16>
    %193 = vector.shape_cast %192 : vector<2x4x4x64xbf16> to vector<32x64xbf16>
    %c256_53 = arith.constant 256 : index
    %c0_54 = arith.constant 0 : index
    %194 = vector.load %arg6[%c256_53, %c0_54] : memref<576x128xbf16, #tpu.memory_space<vmem>>, vector<64x128xbf16>
    %cst_55 = arith.constant dense<0.000000e+00> : vector<32x128xf32>
    %195 = tpu.matmul %193, %194, %cst_55 {dimension_numbers = #tpu.dot_dimension_numbers<[1], [0], [0], [1], [0, 0, 1, 1], [], []>} : vector<32x64xbf16>, vector<64x128xbf16>, vector<32x128xf32> -> vector<32x128xf32>
    %196 = arith.addf %191, %195 : vector<32x128xf32>
    %197 = vector.extract_strided_slice %170 {offsets = [0, 1, 2, 0], sizes = [2, 4, 4, 64], strides = [1, 1, 1, 1]} : vector<2x6x6x64xbf16> to vector<2x4x4x64xbf16>
    %198 = vector.shape_cast %197 : vector<2x4x4x64xbf16> to vector<32x64xbf16>
    %c320 = arith.constant 320 : index
    %c0_56 = arith.constant 0 : index
    %199 = vector.load %arg6[%c320, %c0_56] : memref<576x128xbf16, #tpu.memory_space<vmem>>, vector<64x128xbf16>
    %cst_57 = arith.constant dense<0.000000e+00> : vector<32x128xf32>
    %200 = tpu.matmul %198, %199, %cst_57 {dimension_numbers = #tpu.dot_dimension_numbers<[1], [0], [0], [1], [0, 0, 1, 1], [], []>} : vector<32x64xbf16>, vector<64x128xbf16>, vector<32x128xf32> -> vector<32x128xf32>
    %201 = arith.addf %196, %200 : vector<32x128xf32>
    %202 = vector.extract_strided_slice %170 {offsets = [0, 2, 0, 0], sizes = [2, 4, 4, 64], strides = [1, 1, 1, 1]} : vector<2x6x6x64xbf16> to vector<2x4x4x64xbf16>
    %203 = vector.shape_cast %202 : vector<2x4x4x64xbf16> to vector<32x64xbf16>
    %c384 = arith.constant 384 : index
    %c0_58 = arith.constant 0 : index
    %204 = vector.load %arg6[%c384, %c0_58] : memref<576x128xbf16, #tpu.memory_space<vmem>>, vector<64x128xbf16>
    %cst_59 = arith.constant dense<0.000000e+00> : vector<32x128xf32>
    %205 = tpu.matmul %203, %204, %cst_59 {dimension_numbers = #tpu.dot_dimension_numbers<[1], [0], [0], [1], [0, 0, 1, 1], [], []>} : vector<32x64xbf16>, vector<64x128xbf16>, vector<32x128xf32> -> vector<32x128xf32>
    %206 = arith.addf %201, %205 : vector<32x128xf32>
    %207 = vector.extract_strided_slice %170 {offsets = [0, 2, 1, 0], sizes = [2, 4, 4, 64], strides = [1, 1, 1, 1]} : vector<2x6x6x64xbf16> to vector<2x4x4x64xbf16>
    %208 = vector.shape_cast %207 : vector<2x4x4x64xbf16> to vector<32x64xbf16>
    %c448 = arith.constant 448 : index
    %c0_60 = arith.constant 0 : index
    %209 = vector.load %arg6[%c448, %c0_60] : memref<576x128xbf16, #tpu.memory_space<vmem>>, vector<64x128xbf16>
    %cst_61 = arith.constant dense<0.000000e+00> : vector<32x128xf32>
    %210 = tpu.matmul %208, %209, %cst_61 {dimension_numbers = #tpu.dot_dimension_numbers<[1], [0], [0], [1], [0, 0, 1, 1], [], []>} : vector<32x64xbf16>, vector<64x128xbf16>, vector<32x128xf32> -> vector<32x128xf32>
    %211 = arith.addf %206, %210 : vector<32x128xf32>
    %212 = vector.extract_strided_slice %170 {offsets = [0, 2, 2, 0], sizes = [2, 4, 4, 64], strides = [1, 1, 1, 1]} : vector<2x6x6x64xbf16> to vector<2x4x4x64xbf16>
    %213 = vector.shape_cast %212 : vector<2x4x4x64xbf16> to vector<32x64xbf16>
    %c512 = arith.constant 512 : index
    %c0_62 = arith.constant 0 : index
    %214 = vector.load %arg6[%c512, %c0_62] : memref<576x128xbf16, #tpu.memory_space<vmem>>, vector<64x128xbf16>
    %cst_63 = arith.constant dense<0.000000e+00> : vector<32x128xf32>
    %215 = tpu.matmul %213, %214, %cst_63 {dimension_numbers = #tpu.dot_dimension_numbers<[1], [0], [0], [1], [0, 0, 1, 1], [], []>} : vector<32x64xbf16>, vector<64x128xbf16>, vector<32x128xf32> -> vector<32x128xf32>
    %216 = arith.addf %211, %215 : vector<32x128xf32>
    %c0_64 = arith.constant 0 : index
    %c0_65 = arith.constant 0 : index
    %217 = vector.load %arg7[%c0_64, %c0_65] : memref<2x128xf32, #tpu.memory_space<vmem>>, vector<2x128xf32>
    %218 = vector.extract_strided_slice %217 {offsets = [0, 0], sizes = [1, 128], strides = [1, 1]} : vector<2x128xf32> to vector<1x128xf32>
    %219 = vector.broadcast %218 : vector<1x128xf32> to vector<32x128xf32>
    %220 = arith.mulf %216, %219 : vector<32x128xf32>
    %221 = vector.extract_strided_slice %217 {offsets = [1, 0], sizes = [1, 128], strides = [1, 1]} : vector<2x128xf32> to vector<1x128xf32>
    %222 = vector.broadcast %221 : vector<1x128xf32> to vector<32x128xf32>
    %223 = arith.addf %220, %222 : vector<32x128xf32>
    %cst_66 = arith.constant 0.000000e+00 : f32
    %224 = vector.broadcast %cst_66 : f32 to vector<32x128xf32>
    %225 = arith.maximumf %223, %224 : vector<32x128xf32>
    %226 = vector.shape_cast %225 : vector<32x128xf32> to vector<4x2x2x2x128xf32>
    %cst_67 = arith.constant dense<0xFF800000> : vector<4x2x2x128xf32>
    %227 = vector.multi_reduction <maximumf>, %226, %cst_67 [3] : vector<4x2x2x2x128xf32> to vector<4x2x2x128xf32>
    %cst_68 = arith.constant dense<0xFF800000> : vector<4x2x128xf32>
    %228 = vector.multi_reduction <maximumf>, %227, %cst_68 [1] : vector<4x2x2x128xf32> to vector<4x2x128xf32>
    %229 = vector.shape_cast %228 : vector<4x2x128xf32> to vector<2x2x2x128xf32>
    %230 = arith.truncf %229 : vector<2x2x2x128xf32> to vector<2x2x2x128xbf16>
    %cst_69 = arith.constant 0.000000e+00 : bf16
    %231 = vector.broadcast %cst_69 : bf16 to vector<2x1x2x128xbf16>
    %232 = tpu.concatenate %231, %230, %231 in 1 : vector<2x1x2x128xbf16>, vector<2x2x2x128xbf16>, vector<2x1x2x128xbf16> -> vector<2x4x2x128xbf16>
    %cst_70 = arith.constant 0.000000e+00 : bf16
    %233 = vector.broadcast %cst_70 : bf16 to vector<2x4x1x128xbf16>
    %234 = tpu.concatenate %233, %232, %233 in 2 : vector<2x4x1x128xbf16>, vector<2x4x2x128xbf16>, vector<2x4x1x128xbf16> -> vector<2x4x4x128xbf16>
    %cst_71 = arith.constant 0.000000e+00 : f32
    %235 = vector.broadcast %cst_71 : f32 to vector<8x256xf32>
    %236 = vector.extract_strided_slice %234 {offsets = [0, 0, 0, 0], sizes = [2, 2, 2, 128], strides = [1, 1, 1, 1]} : vector<2x4x4x128xbf16> to vector<2x2x2x128xbf16>
    %237 = vector.shape_cast %236 : vector<2x2x2x128xbf16> to vector<8x128xbf16>
    %c0_72 = arith.constant 0 : index
    %c0_73 = arith.constant 0 : index
    %238 = vector.load %arg8[%c0_72, %c0_73] : memref<1152x256xbf16, #tpu.memory_space<vmem>>, vector<128x256xbf16>
    %cst_74 = arith.constant dense<0.000000e+00> : vector<8x256xf32>
    %239 = tpu.matmul %237, %238, %cst_74 {dimension_numbers = #tpu.dot_dimension_numbers<[1], [0], [0], [1], [0, 0, 1, 1], [], []>} : vector<8x128xbf16>, vector<128x256xbf16>, vector<8x256xf32> -> vector<8x256xf32>
    %240 = arith.addf %235, %239 : vector<8x256xf32>
    %241 = vector.extract_strided_slice %234 {offsets = [0, 0, 1, 0], sizes = [2, 2, 2, 128], strides = [1, 1, 1, 1]} : vector<2x4x4x128xbf16> to vector<2x2x2x128xbf16>
    %242 = vector.shape_cast %241 : vector<2x2x2x128xbf16> to vector<8x128xbf16>
    %c128_75 = arith.constant 128 : index
    %c0_76 = arith.constant 0 : index
    %243 = vector.load %arg8[%c128_75, %c0_76] : memref<1152x256xbf16, #tpu.memory_space<vmem>>, vector<128x256xbf16>
    %cst_77 = arith.constant dense<0.000000e+00> : vector<8x256xf32>
    %244 = tpu.matmul %242, %243, %cst_77 {dimension_numbers = #tpu.dot_dimension_numbers<[1], [0], [0], [1], [0, 0, 1, 1], [], []>} : vector<8x128xbf16>, vector<128x256xbf16>, vector<8x256xf32> -> vector<8x256xf32>
    %245 = arith.addf %240, %244 : vector<8x256xf32>
    %246 = vector.extract_strided_slice %234 {offsets = [0, 0, 2, 0], sizes = [2, 2, 2, 128], strides = [1, 1, 1, 1]} : vector<2x4x4x128xbf16> to vector<2x2x2x128xbf16>
    %247 = vector.shape_cast %246 : vector<2x2x2x128xbf16> to vector<8x128xbf16>
    %c256_78 = arith.constant 256 : index
    %c0_79 = arith.constant 0 : index
    %248 = vector.load %arg8[%c256_78, %c0_79] : memref<1152x256xbf16, #tpu.memory_space<vmem>>, vector<128x256xbf16>
    %cst_80 = arith.constant dense<0.000000e+00> : vector<8x256xf32>
    %249 = tpu.matmul %247, %248, %cst_80 {dimension_numbers = #tpu.dot_dimension_numbers<[1], [0], [0], [1], [0, 0, 1, 1], [], []>} : vector<8x128xbf16>, vector<128x256xbf16>, vector<8x256xf32> -> vector<8x256xf32>
    %250 = arith.addf %245, %249 : vector<8x256xf32>
    %251 = vector.extract_strided_slice %234 {offsets = [0, 1, 0, 0], sizes = [2, 2, 2, 128], strides = [1, 1, 1, 1]} : vector<2x4x4x128xbf16> to vector<2x2x2x128xbf16>
    %252 = vector.shape_cast %251 : vector<2x2x2x128xbf16> to vector<8x128xbf16>
    %c384_81 = arith.constant 384 : index
    %c0_82 = arith.constant 0 : index
    %253 = vector.load %arg8[%c384_81, %c0_82] : memref<1152x256xbf16, #tpu.memory_space<vmem>>, vector<128x256xbf16>
    %cst_83 = arith.constant dense<0.000000e+00> : vector<8x256xf32>
    %254 = tpu.matmul %252, %253, %cst_83 {dimension_numbers = #tpu.dot_dimension_numbers<[1], [0], [0], [1], [0, 0, 1, 1], [], []>} : vector<8x128xbf16>, vector<128x256xbf16>, vector<8x256xf32> -> vector<8x256xf32>
    %255 = arith.addf %250, %254 : vector<8x256xf32>
    %256 = vector.extract_strided_slice %234 {offsets = [0, 1, 1, 0], sizes = [2, 2, 2, 128], strides = [1, 1, 1, 1]} : vector<2x4x4x128xbf16> to vector<2x2x2x128xbf16>
    %257 = vector.shape_cast %256 : vector<2x2x2x128xbf16> to vector<8x128xbf16>
    %c512_84 = arith.constant 512 : index
    %c0_85 = arith.constant 0 : index
    %258 = vector.load %arg8[%c512_84, %c0_85] : memref<1152x256xbf16, #tpu.memory_space<vmem>>, vector<128x256xbf16>
    %cst_86 = arith.constant dense<0.000000e+00> : vector<8x256xf32>
    %259 = tpu.matmul %257, %258, %cst_86 {dimension_numbers = #tpu.dot_dimension_numbers<[1], [0], [0], [1], [0, 0, 1, 1], [], []>} : vector<8x128xbf16>, vector<128x256xbf16>, vector<8x256xf32> -> vector<8x256xf32>
    %260 = arith.addf %255, %259 : vector<8x256xf32>
    %261 = vector.extract_strided_slice %234 {offsets = [0, 1, 2, 0], sizes = [2, 2, 2, 128], strides = [1, 1, 1, 1]} : vector<2x4x4x128xbf16> to vector<2x2x2x128xbf16>
    %262 = vector.shape_cast %261 : vector<2x2x2x128xbf16> to vector<8x128xbf16>
    %c640 = arith.constant 640 : index
    %c0_87 = arith.constant 0 : index
    %263 = vector.load %arg8[%c640, %c0_87] : memref<1152x256xbf16, #tpu.memory_space<vmem>>, vector<128x256xbf16>
    %cst_88 = arith.constant dense<0.000000e+00> : vector<8x256xf32>
    %264 = tpu.matmul %262, %263, %cst_88 {dimension_numbers = #tpu.dot_dimension_numbers<[1], [0], [0], [1], [0, 0, 1, 1], [], []>} : vector<8x128xbf16>, vector<128x256xbf16>, vector<8x256xf32> -> vector<8x256xf32>
    %265 = arith.addf %260, %264 : vector<8x256xf32>
    %266 = vector.extract_strided_slice %234 {offsets = [0, 2, 0, 0], sizes = [2, 2, 2, 128], strides = [1, 1, 1, 1]} : vector<2x4x4x128xbf16> to vector<2x2x2x128xbf16>
    %267 = vector.shape_cast %266 : vector<2x2x2x128xbf16> to vector<8x128xbf16>
    %c768 = arith.constant 768 : index
    %c0_89 = arith.constant 0 : index
    %268 = vector.load %arg8[%c768, %c0_89] : memref<1152x256xbf16, #tpu.memory_space<vmem>>, vector<128x256xbf16>
    %cst_90 = arith.constant dense<0.000000e+00> : vector<8x256xf32>
    %269 = tpu.matmul %267, %268, %cst_90 {dimension_numbers = #tpu.dot_dimension_numbers<[1], [0], [0], [1], [0, 0, 1, 1], [], []>} : vector<8x128xbf16>, vector<128x256xbf16>, vector<8x256xf32> -> vector<8x256xf32>
    %270 = arith.addf %265, %269 : vector<8x256xf32>
    %271 = vector.extract_strided_slice %234 {offsets = [0, 2, 1, 0], sizes = [2, 2, 2, 128], strides = [1, 1, 1, 1]} : vector<2x4x4x128xbf16> to vector<2x2x2x128xbf16>
    %272 = vector.shape_cast %271 : vector<2x2x2x128xbf16> to vector<8x128xbf16>
    %c896 = arith.constant 896 : index
    %c0_91 = arith.constant 0 : index
    %273 = vector.load %arg8[%c896, %c0_91] : memref<1152x256xbf16, #tpu.memory_space<vmem>>, vector<128x256xbf16>
    %cst_92 = arith.constant dense<0.000000e+00> : vector<8x256xf32>
    %274 = tpu.matmul %272, %273, %cst_92 {dimension_numbers = #tpu.dot_dimension_numbers<[1], [0], [0], [1], [0, 0, 1, 1], [], []>} : vector<8x128xbf16>, vector<128x256xbf16>, vector<8x256xf32> -> vector<8x256xf32>
    %275 = arith.addf %270, %274 : vector<8x256xf32>
    %276 = vector.extract_strided_slice %234 {offsets = [0, 2, 2, 0], sizes = [2, 2, 2, 128], strides = [1, 1, 1, 1]} : vector<2x4x4x128xbf16> to vector<2x2x2x128xbf16>
    %277 = vector.shape_cast %276 : vector<2x2x2x128xbf16> to vector<8x128xbf16>
    %c1024 = arith.constant 1024 : index
    %c0_93 = arith.constant 0 : index
    %278 = vector.load %arg8[%c1024, %c0_93] : memref<1152x256xbf16, #tpu.memory_space<vmem>>, vector<128x256xbf16>
    %cst_94 = arith.constant dense<0.000000e+00> : vector<8x256xf32>
    %279 = tpu.matmul %277, %278, %cst_94 {dimension_numbers = #tpu.dot_dimension_numbers<[1], [0], [0], [1], [0, 0, 1, 1], [], []>} : vector<8x128xbf16>, vector<128x256xbf16>, vector<8x256xf32> -> vector<8x256xf32>
    %280 = arith.addf %275, %279 : vector<8x256xf32>
    %c0_95 = arith.constant 0 : index
    %c0_96 = arith.constant 0 : index
    %281 = vector.load %arg9[%c0_95, %c0_96] : memref<2x256xf32, #tpu.memory_space<vmem>>, vector<2x256xf32>
    %282 = vector.extract_strided_slice %281 {offsets = [0, 0], sizes = [1, 256], strides = [1, 1]} : vector<2x256xf32> to vector<1x256xf32>
    %283 = vector.broadcast %282 : vector<1x256xf32> to vector<8x256xf32>
    %284 = arith.mulf %280, %283 : vector<8x256xf32>
    %285 = vector.extract_strided_slice %281 {offsets = [1, 0], sizes = [1, 256], strides = [1, 1]} : vector<2x256xf32> to vector<1x256xf32>
    %286 = vector.broadcast %285 : vector<1x256xf32> to vector<8x256xf32>
    %287 = arith.addf %284, %286 : vector<8x256xf32>
    %cst_97 = arith.constant 0.000000e+00 : f32
    %288 = vector.broadcast %cst_97 : f32 to vector<8x256xf32>
    %289 = arith.maximumf %287, %288 : vector<8x256xf32>
    %290 = vector.shape_cast %289 : vector<8x256xf32> to vector<2x2x1x2x256xf32>
    %cst_98 = arith.constant dense<0xFF800000> : vector<2x2x1x256xf32>
    %291 = vector.multi_reduction <maximumf>, %290, %cst_98 [3] : vector<2x2x1x2x256xf32> to vector<2x2x1x256xf32>
    %cst_99 = arith.constant dense<0xFF800000> : vector<2x1x256xf32>
    %292 = vector.multi_reduction <maximumf>, %291, %cst_99 [1] : vector<2x2x1x256xf32> to vector<2x1x256xf32>
    %293 = vector.shape_cast %292 : vector<2x1x256xf32> to vector<2x1x1x256xf32>
    %294 = vector.shape_cast %293 : vector<2x1x1x256xf32> to vector<2x256xf32>
    %295 = arith.truncf %294 : vector<2x256xf32> to vector<2x256xbf16>
    %c0_100 = arith.constant 0 : index
    %c0_101 = arith.constant 0 : index
    %296 = vector.load %arg10[%c0_100, %c0_101] : memref<256x128xbf16, #tpu.memory_space<vmem>>, vector<256x128xbf16>
    %cst_102 = arith.constant dense<0.000000e+00> : vector<2x128xf32>
    %297 = tpu.matmul %295, %296, %cst_102 {dimension_numbers = #tpu.dot_dimension_numbers<[1], [0], [0], [1], [0, 0, 1, 1], [], []>} : vector<2x256xbf16>, vector<256x128xbf16>, vector<2x128xf32> -> vector<2x128xf32>
    %c0_103 = arith.constant 0 : index
    %c0_104 = arith.constant 0 : index
    %298 = vector.load %arg11[%c0_103, %c0_104] : memref<1x128xf32, #tpu.memory_space<vmem>>, vector<1x128xf32>
    %299 = vector.broadcast %298 : vector<1x128xf32> to vector<2x128xf32>
    %300 = arith.addf %297, %299 : vector<2x128xf32>
    %c0_105 = arith.constant 0 : index
    %c0_106 = arith.constant 0 : index
    %301 = vector.load %arg12[%c0_105, %c0_106] : memref<2x128xf32, #tpu.memory_space<vmem>>, vector<2x128xf32>
    tpu.vector_store %arg12[%c0_105, %c0_106], %300 {strides = array<i32>} : memref<2x128xf32, #tpu.memory_space<vmem>>, vector<2x128xf32>,
    return
  }
  func.func @transform_0(%arg0: i32) -> (i32, i32, i32) {
    %c0_i32 = arith.constant 0 : i32
    %c0_i32_0 = arith.constant 0 : i32
    %c0_i32_1 = arith.constant 0 : i32
    return %arg0, %c0_i32, %c0_i32_0 : i32, i32, i32
  }
  func.func @transform_1(%arg0: i32) -> (i32, i32) {
    %c0_i32 = arith.constant 0 : i32
    %c0_i32_0 = arith.constant 0 : i32
    %c0_i32_1 = arith.constant 0 : i32
    return %c0_i32, %c0_i32_0 : i32, i32
  }
  func.func @transform_2(%arg0: i32) -> (i32, i32) {
    %c0_i32 = arith.constant 0 : i32
    %c0_i32_0 = arith.constant 0 : i32
    %c0_i32_1 = arith.constant 0 : i32
    return %c0_i32, %c0_i32_0 : i32, i32
  }
  func.func @transform_3(%arg0: i32) -> (i32, i32) {
    %c0_i32 = arith.constant 0 : i32
    %c0_i32_0 = arith.constant 0 : i32
    %c0_i32_1 = arith.constant 0 : i32
    return %c0_i32, %c0_i32_0 : i32, i32
  }
  func.func @transform_4(%arg0: i32) -> (i32, i32) {
    %c0_i32 = arith.constant 0 : i32
    %c0_i32_0 = arith.constant 0 : i32
    %c0_i32_1 = arith.constant 0 : i32
    return %c0_i32, %c0_i32_0 : i32, i32
  }
  func.func @transform_5(%arg0: i32) -> (i32, i32) {
    %c0_i32 = arith.constant 0 : i32
    %c0_i32_0 = arith.constant 0 : i32
    %c0_i32_1 = arith.constant 0 : i32
    return %c0_i32, %c0_i32_0 : i32, i32
  }
  func.func @transform_6(%arg0: i32) -> (i32, i32) {
    %c0_i32 = arith.constant 0 : i32
    %c0_i32_0 = arith.constant 0 : i32
    %c0_i32_1 = arith.constant 0 : i32
    return %c0_i32, %c0_i32_0 : i32, i32
  }
  func.func @transform_7(%arg0: i32) -> (i32, i32) {
    %c0_i32 = arith.constant 0 : i32
    %c0_i32_0 = arith.constant 0 : i32
    %c0_i32_1 = arith.constant 0 : i32
    return %c0_i32, %c0_i32_0 : i32, i32
  }
  func.func @transform_8(%arg0: i32) -> (i32, i32) {
    %c0_i32 = arith.constant 0 : i32
    %c0_i32_0 = arith.constant 0 : i32
    %c0_i32_1 = arith.constant 0 : i32
    return %c0_i32, %c0_i32_0 : i32, i32
  }
  func.func @transform_9(%arg0: i32) -> (i32, i32) {
    %c0_i32 = arith.constant 0 : i32
    %c0_i32_0 = arith.constant 0 : i32
    %c0_i32_1 = arith.constant 0 : i32
    return %c0_i32, %c0_i32_0 : i32, i32
  }
  func.func @transform_10(%arg0: i32) -> (i32, i32) {
    %c0_i32 = arith.constant 0 : i32
    %c0_i32_0 = arith.constant 0 : i32
    %c0_i32_1 = arith.constant 0 : i32
    return %c0_i32, %c0_i32_0 : i32, i32
  }
  func.func @transform_11(%arg0: i32) -> (i32, i32) {
    %c0_i32 = arith.constant 0 : i32
    %c0_i32_0 = arith.constant 0 : i32
    return %arg0, %c0_i32 : i32, i32
  }
}

</mosaic_0001>

<llo_original>
// kernel: tpu_custom_call.1
$region0: #{tpu_custom_call.1}
  #allocation0 [shape = 'u32[]', space=smem, size = 0x4, offset = 0x4, fixed_abs, tag = 'smem constant byte address 0x4 - core index']
  #allocation1 [shape = 'u32[72,128]{1,0:T(1,128)}', space=vmem, size = 0x9000, scoped, tag = 'internal scratch']
  %s0 = inlined_call_operand.vmem [shape: f32[2,16,16], index: 0, kind: input, shape index: {}]
  %s1 = inlined_call_operand.vmem [shape: f32[9,32], index: 1, kind: input, shape index: {}]
  %s2 = inlined_call_operand.vmem [shape: f32[2,32], index: 2, kind: input, shape index: {}]
  %s3 = inlined_call_operand.vmem [shape: bf16[288,64], index: 3, kind: input, shape index: {}]
  %s4 = inlined_call_operand.vmem [shape: f32[2,64], index: 4, kind: input, shape index: {}]
  %s5 = inlined_call_operand.hbm [shape: bf16[576,128], index: 5, kind: input, shape index: {}]
  %s6 = inlined_call_operand.vmem [shape: f32[2,128], index: 6, kind: input, shape index: {}]
  %s7 = inlined_call_operand.hbm [shape: bf16[1152,256], index: 7, kind: input, shape index: {}]
  %s8 = inlined_call_operand.vmem [shape: f32[2,256], index: 8, kind: input, shape index: {}]
  %s9 = inlined_call_operand.vmem [shape: bf16[256,128], index: 9, kind: input, shape index: {}]
  %s10 = inlined_call_operand.vmem [shape: f32[1,128], index: 10, kind: input, shape index: {}]
  %s11 = inlined_call_operand.hbm [shape: f32[2,128], index: 11, kind: output, shape index: {}]
  %s12 = sld [smem:[#allocation0]]
  $region62: #{tpu_custom_call.1} parent=0
    _
  %s14 = ssub.s32 1, %s12
  %s15 = scalar_select 0, %s14, %s12
  $region1: #{tpu_custom_call.1} parent=0
    #allocation2 [shape = 'u8[147456]{0}', space=vmem, size = 0x24000, scoped, tag = 'input window, operand 5, single buffered']
    #allocation3 [shape = 's32[1]{0}', space=sflag, size = 0x4, scoped, tag = 'scoped memory for tpu_custom_call.1']
    #allocation4 [shape = 's32[1]{0}', space=sflag, size = 0x4, scoped, tag = 'scoped memory for tpu_custom_call.1']
    #allocation5 [shape = 'u8[589824]{0}', space=vmem, size = 0x90000, scoped, tag = 'input window, operand 7, single buffered']
    #allocation6 [shape = 's32[1]{0}', space=sflag, size = 0x4, scoped, tag = 'scoped memory for tpu_custom_call.1']
    #allocation7 [shape = 'u8[1024]{0}', space=vmem, size = 0x400, scoped, tag = 'output window, operand 0, single buffered']
    %16 = vsyncpa [#allocation3], 0
    %17 = vsyncpa [#allocation6], 0
    %18 = vsyncpa [#allocation4], 0
    // Predicated region
    $region2: #{tpu_custom_call.1} parent=1 // pred_check
      _
    $region3: #{tpu_custom_call.1} parent=1 // pred_check_branch
      %20 = sbr.rel (0) target = $region5
    $region4: #{tpu_custom_call.1} parent=1 // pred_region
      _
    $region5: #{tpu_custom_call.1} parent=1 // pred_fallthru
      _
    // Predicated region
    $region6: #{tpu_custom_call.1} parent=1 // pred_check
      _
    $region7: #{tpu_custom_call.1} parent=1 // pred_check_branch
      %22 = sbr.rel (0) target = $region9
    $region8: #{tpu_custom_call.1} parent=1 // pred_region
      _
    $region9: #{tpu_custom_call.1} parent=1 // pred_fallthru
      _
    // Predicated region
    $region10: #{tpu_custom_call.1} parent=1 // pred_check
      _
    $region11: #{tpu_custom_call.1} parent=1 // pred_check_branch
      %24 = sbr.rel (0) target = $region13
    $region12: #{tpu_custom_call.1} parent=1 // pred_region
      _
    $region13: #{tpu_custom_call.1} parent=1 // pred_fallthru
      _
    // Predicated region
    $region14: #{tpu_custom_call.1} parent=1 // pred_check
      _
    $region15: #{tpu_custom_call.1} parent=1 // pred_check_branch
      %26 = sbr.rel (0) target = $region17
    $region16: #{tpu_custom_call.1} parent=1 // pred_region
      _
    $region17: #{tpu_custom_call.1} parent=1 // pred_fallthru
      _
    // Predicated region
    $region18: #{tpu_custom_call.1} parent=1 // pred_check
      _
    $region19: #{tpu_custom_call.1} parent=1 // pred_check_branch
      %28 = sbr.rel (0) target = $region21
    $region20: #{tpu_custom_call.1} parent=1 // pred_region
      _
    $region21: #{tpu_custom_call.1} parent=1 // pred_fallthru
      _
    // Predicated region
    $region22: #{tpu_custom_call.1} parent=1 // pred_check
      _
    $region23: #{tpu_custom_call.1} parent=1 // pred_check_branch
      %30 = sbr.rel (0) target = $region25
    $region24: #{tpu_custom_call.1} parent=1 // pred_region
      %32 = vsyncadd [#allocation3], 0
      %s33 = sshll.u32 %s5, 4
      %s34 = int_to_ptr.hbm [resolvable:$true] %s33
      %s35 = sshll.u32 [#allocation2], 4
      %s36 = int_to_ptr.vmem [resolvable:$true] %s35
      %41 = dma.hbm_to_vmem [thread:$0]  %s34, 4608, %s36, [#allocation3], 64, 64, 4
    $region25: #{tpu_custom_call.1} parent=1 // pred_fallthru
      _
    // Predicated region
    $region26: #{tpu_custom_call.1} parent=1 // pred_check
      _
    $region27: #{tpu_custom_call.1} parent=1 // pred_check_branch
      %43 = sbr.rel (0) target = $region29
    $region28: #{tpu_custom_call.1} parent=1 // pred_region
      _
    $region29: #{tpu_custom_call.1} parent=1 // pred_fallthru
      _
    // Predicated region
    $region30: #{tpu_custom_call.1} parent=1 // pred_check
      _
    $region31: #{tpu_custom_call.1} parent=1 // pred_check_branch
      %45 = sbr.rel (0) target = $region33
    $region32: #{tpu_custom_call.1} parent=1 // pred_region
      %47 = vsyncadd [#allocation6], 0
      %s48 = sshll.u32 %s7, 4
      %s49 = int_to_ptr.hbm [resolvable:$true] %s48
      %s50 = sshll.u32 [#allocation5], 4
      %s51 = int_to_ptr.vmem [resolvable:$true] %s50
      %56 = dma.hbm_to_vmem [thread:$0]  %s49, 18432, %s51, [#allocation6], 128, 128, 8
    $region33: #{tpu_custom_call.1} parent=1 // pred_fallthru
      _
    // Predicated region
    $region34: #{tpu_custom_call.1} parent=1 // pred_check
      _
    $region35: #{tpu_custom_call.1} parent=1 // pred_check_branch
      %58 = sbr.rel (0) target = $region37
    $region36: #{tpu_custom_call.1} parent=1 // pred_region
      _
    $region37: #{tpu_custom_call.1} parent=1 // pred_fallthru
      _
    // Predicated region
    $region38: #{tpu_custom_call.1} parent=1 // pred_check
      _
    $region39: #{tpu_custom_call.1} parent=1 // pred_check_branch
      %60 = sbr.rel (0) target = $region41
    $region40: #{tpu_custom_call.1} parent=1 // pred_region
      _
    $region41: #{tpu_custom_call.1} parent=1 // pred_fallthru
      _
    // Predicated region
    $region42: #{tpu_custom_call.1} parent=1 // pred_check
      _
    $region43: #{tpu_custom_call.1} parent=1 // pred_check_branch
      %62 = sbr.rel (0) target = $region45
    $region44: #{tpu_custom_call.1} parent=1 // pred_region
      _
    $region45: #{tpu_custom_call.1} parent=1 // pred_fallthru
      _
    // Predicated region
    $region46: #{tpu_custom_call.1} parent=1 // pred_check
      _
    $region47: #{tpu_custom_call.1} parent=1 // pred_check_branch
      %64 = sbr.rel (0) target = $region49
    $region48: #{tpu_custom_call.1} parent=1 // pred_region
      %66 = dma.done [#allocation3], 4608
    $region49: #{tpu_custom_call.1} parent=1 // pred_fallthru
      _
    // Predicated region
    $region50: #{tpu_custom_call.1} parent=1 // pred_check
      _
    $region51: #{tpu_custom_call.1} parent=1 // pred_check_branch
      %68 = sbr.rel (0) target = $region53
    $region52: #{tpu_custom_call.1} parent=1 // pred_region
      %70 = dma.done [#allocation6], 18432
    $region53: #{tpu_custom_call.1} parent=1 // pred_fallthru
      _
    %v72 = vld [vmem:[%s0] sm:$0xff]
    %v73 = vld [vmem:[%s0 + $0x8] sm:$0xff]
    %v74 = vld [vmem:[%s0 + $0x10] sm:$0xff]
    %v75 = vld [vmem:[%s0 + $0x18] sm:$0xff]
    %vm80 = vcmask 1040384
    %v81 = vrot.slane %v72, 7
    %v82 = vrot.slane %v73, 7
    %v83 = vsel %vm80, %v81, %v82
    %v84 = vrot.slane %v74, 7
    %v85 = vrot.slane %v75, 7
    %v86 = vsel %vm80, %v84, %v85
    %v91 = vsel %vm80, 0.0, %v81
    %v92 = vsel %vm80, 0.0, %v84
    %v93 = vsel %vm80, %v82, 0.0
    %v94 = vsel %vm80, %v85, 0.0
    %99 = vrot.lane.b32.xlu0 %v91, 1
    %v100 = vpop.permute.xlu0 %99
    %101 = vrot.lane.b32.xlu0 %v83, 1
    %v102 = vpop.permute.xlu0 %101
    %103 = vrot.lane.b32.xlu0 %v93, 1
    %v104 = vpop.permute.xlu0 %103
    %105 = vrot.lane.b32.xlu0 %v92, 1
    %v106 = vpop.permute.xlu0 %105
    %107 = vrot.lane.b32.xlu0 %v86, 1
    %v108 = vpop.permute.xlu0 %107
    %109 = vrot.lane.b32.xlu0 %v94, 1
    %v110 = vpop.permute.xlu0 %109
    %vm117 = vcmask 7168
    %v118 = vsel %vm117, 0.0, %v100
    %v119 = vsel %vm117, 0.0, %v102
    %v120 = vsel %vm117, 0.0, %v104
    %v121 = vsel %vm117, 0.0, %v106
    %v122 = vsel %vm117, 0.0, %v108
    %v123 = vsel %vm117, 0.0, %v110
    %vm124 = vcmask 138240
    %v125 = vsel %vm124, %v118, 0.0
    %v126 = vsel %vm124, %v119, 0.0
    %v127 = vsel %vm124, %v120, 0.0
    %v128 = vsel %vm124, %v121, 0.0
    %v129 = vsel %vm124, %v122, 0.0
    %v130 = vsel %vm124, %v123, 0.0
    %v131 = vld [vmem:[%s1] sm:$0xff]
    %v132 = vld [vmem:[%s1 + $0x8] sm:$0x1]
    %v133 = vperm.slane %v125, 0
    %v134 = vlaneseq
    %v135 = vshrl.u32 %v134, 7
    %137 = vset.pattern.permute.xlu0 %v135
    %138 = vperm.xlu0 %137, %v133
    %v139 = vpop.permute.xlu0 %138
    %v140 = vlaneseq
    %v141 = vshrl.u32 %v140, 7
    %v142 = vadd.s32 %v141, 8
    %143 = vset.pattern.permute.xlu0 %v142
    %144 = vperm.xlu0 %143, %v133
    %v145 = vpop.permute.xlu0 %144
    %v146 = vperm.slane %v125, 1
    %v147 = vlaneseq
    %v148 = vshrl.u32 %v147, 7
    %150 = vset.pattern.permute.xlu0 %v148
    %151 = vperm.xlu0 %150, %v146
    %v152 = vpop.permute.xlu0 %151
    %v153 = vlaneseq
    %v154 = vshrl.u32 %v153, 7
    %v155 = vadd.s32 %v154, 8
    %156 = vset.pattern.permute.xlu0 %v155
    %157 = vperm.xlu0 %156, %v146
    %v158 = vpop.permute.xlu0 %157
    %v159 = vperm.slane %v125, 2
    %v160 = vlaneseq
    %v161 = vshrl.u32 %v160, 7
    %163 = vset.pattern.permute.xlu0 %v161
    %164 = vperm.xlu0 %163, %v159
    %v165 = vpop.permute.xlu0 %164
    %v166 = vlaneseq
    %v167 = vshrl.u32 %v166, 7
    %v168 = vadd.s32 %v167, 8
    %169 = vset.pattern.permute.xlu0 %v168
    %170 = vperm.xlu0 %169, %v159
    %v171 = vpop.permute.xlu0 %170
    %v172 = vperm.slane %v125, 3
    %v173 = vlaneseq
    %v174 = vshrl.u32 %v173, 7
    %176 = vset.pattern.permute.xlu0 %v174
    %177 = vperm.xlu0 %176, %v172
    %v178 = vpop.permute.xlu0 %177
    %v179 = vlaneseq
    %v180 = vshrl.u32 %v179, 7
    %v181 = vadd.s32 %v180, 8
    %182 = vset.pattern.permute.xlu0 %v181
    %183 = vperm.xlu0 %182, %v172
    %v184 = vpop.permute.xlu0 %183
    %v185 = vperm.slane %v125, 4
    %v186 = vlaneseq
    %v187 = vshrl.u32 %v186, 7
    %189 = vset.pattern.permute.xlu0 %v187
    %190 = vperm.xlu0 %189, %v185
    %v191 = vpop.permute.xlu0 %190
    %v192 = vlaneseq
    %v193 = vshrl.u32 %v192, 7
    %v194 = vadd.s32 %v193, 8
    %195 = vset.pattern.permute.xlu0 %v194
    %196 = vperm.xlu0 %195, %v185
    %v197 = vpop.permute.xlu0 %196
    %v198 = vperm.slane %v125, 5
    %v199 = vlaneseq
    %v200 = vshrl.u32 %v199, 7
    %202 = vset.pattern.permute.xlu0 %v200
    %203 = vperm.xlu0 %202, %v198
    %v204 = vpop.permute.xlu0 %203
    %v205 = vlaneseq
    %v206 = vshrl.u32 %v205, 7
    %v207 = vadd.s32 %v206, 8
    %208 = vset.pattern.permute.xlu0 %v207
    %209 = vperm.xlu0 %208, %v198
    %v210 = vpop.permute.xlu0 %209
    %v211 = vperm.slane %v125, 6
    %v212 = vlaneseq
    %v213 = vshrl.u32 %v212, 7
    %215 = vset.pattern.permute.xlu0 %v213
    %216 = vperm.xlu0 %215, %v211
    %v217 = vpop.permute.xlu0 %216
    %v218 = vlaneseq
    %v219 = vshrl.u32 %v218, 7
    %v220 = vadd.s32 %v219, 8
    %221 = vset.pattern.permute.xlu0 %v220
    %222 = vperm.xlu0 %221, %v211
    %v223 = vpop.permute.xlu0 %222
    %v224 = vperm.slane %v125, 7
    %v225 = vlaneseq
    %v226 = vshrl.u32 %v225, 7
    %228 = vset.pattern.permute.xlu0 %v226
    %229 = vperm.xlu0 %228, %v224
    %v230 = vpop.permute.xlu0 %229
    %v231 = vlaneseq
    %v232 = vshrl.u32 %v231, 7
    %v233 = vadd.s32 %v232, 8
    %234 = vset.pattern.permute.xlu0 %v233
    %235 = vperm.xlu0 %234, %v224
    %v236 = vpop.permute.xlu0 %235
    %v237 = vperm.slane %v126, 0
    %v238 = vlaneseq
    %v239 = vshrl.u32 %v238, 7
    %241 = vset.pattern.permute.xlu0 %v239
    %242 = vperm.xlu0 %241, %v237
    %v243 = vpop.permute.xlu0 %242
    %v244 = vlaneseq
    %v245 = vshrl.u32 %v244, 7
    %v246 = vadd.s32 %v245, 8
    %247 = vset.pattern.permute.xlu0 %v246
    %248 = vperm.xlu0 %247, %v237
    %v249 = vpop.permute.xlu0 %248
    %v250 = vperm.slane %v126, 1
    %v251 = vlaneseq
    %v252 = vshrl.u32 %v251, 7
    %254 = vset.pattern.permute.xlu0 %v252
    %255 = vperm.xlu0 %254, %v250
    %v256 = vpop.permute.xlu0 %255
    %v257 = vlaneseq
    %v258 = vshrl.u32 %v257, 7
    %v259 = vadd.s32 %v258, 8
    %260 = vset.pattern.permute.xlu0 %v259
    %261 = vperm.xlu0 %260, %v250
    %v262 = vpop.permute.xlu0 %261
    %v263 = vperm.slane %v126, 2
    %v264 = vlaneseq
    %v265 = vshrl.u32 %v264, 7
    %267 = vset.pattern.permute.xlu0 %v265
    %268 = vperm.xlu0 %267, %v263
    %v269 = vpop.permute.xlu0 %268
    %v270 = vlaneseq
    %v271 = vshrl.u32 %v270, 7
    %v272 = vadd.s32 %v271, 8
    %273 = vset.pattern.permute.xlu0 %v272
    %274 = vperm.xlu0 %273, %v263
    %v275 = vpop.permute.xlu0 %274
    %v276 = vperm.slane %v126, 3
    %v277 = vlaneseq
    %v278 = vshrl.u32 %v277, 7
    %280 = vset.pattern.permute.xlu0 %v278
    %281 = vperm.xlu0 %280, %v276
    %v282 = vpop.permute.xlu0 %281
    %v283 = vlaneseq
    %v284 = vshrl.u32 %v283, 7
    %v285 = vadd.s32 %v284, 8
    %286 = vset.pattern.permute.xlu0 %v285
    %287 = vperm.xlu0 %286, %v276
    %v288 = vpop.permute.xlu0 %287
    %v289 = vperm.slane %v126, 4
    %v290 = vlaneseq
    %v291 = vshrl.u32 %v290, 7
    %293 = vset.pattern.permute.xlu0 %v291
    %294 = vperm.xlu0 %293, %v289
    %v295 = vpop.permute.xlu0 %294
    %v296 = vlaneseq
    %v297 = vshrl.u32 %v296, 7
    %v298 = vadd.s32 %v297, 8
    %299 = vset.pattern.permute.xlu0 %v298
    %300 = vperm.xlu0 %299, %v289
    %v301 = vpop.permute.xlu0 %300
    %v302 = vperm.slane %v126, 5
    %v303 = vlaneseq
    %v304 = vshrl.u32 %v303, 7
    %306 = vset.pattern.permute.xlu0 %v304
    %307 = vperm.xlu0 %306, %v302
    %v308 = vpop.permute.xlu0 %307
    %v309 = vlaneseq
    %v310 = vshrl.u32 %v309, 7
    %v311 = vadd.s32 %v310, 8
    %312 = vset.pattern.permute.xlu0 %v311
    %313 = vperm.xlu0 %312, %v302
    %v314 = vpop.permute.xlu0 %313
    %v315 = vperm.slane %v126, 6
    %v316 = vlaneseq
    %v317 = vshrl.u32 %v316, 7
    %319 = vset.pattern.permute.xlu0 %v317
    %320 = vperm.xlu0 %319, %v315
    %v321 = vpop.permute.xlu0 %320
    %v322 = vlaneseq
    %v323 = vshrl.u32 %v322, 7
    %v324 = vadd.s32 %v323, 8
    %325 = vset.pattern.permute.xlu0 %v324
    %326 = vperm.xlu0 %325, %v315
    %v327 = vpop.permute.xlu0 %326
    %v328 = vperm.slane %v126, 7
    %v329 = vlaneseq
    %v330 = vshrl.u32 %v329, 7
    %332 = vset.pattern.permute.xlu0 %v330
    %333 = vperm.xlu0 %332, %v328
    %v334 = vpop.permute.xlu0 %333
    %v335 = vlaneseq
    %v336 = vshrl.u32 %v335, 7
    %v337 = vadd.s32 %v336, 8
    %338 = vset.pattern.permute.xlu0 %v337
    %339 = vperm.xlu0 %338, %v328
    %v340 = vpop.permute.xlu0 %339
    %v341 = vperm.slane %v128, 0
    %v342 = vlaneseq
    %v343 = vshrl.u32 %v342, 7
    %345 = vset.pattern.permute.xlu0 %v343
    %346 = vperm.xlu0 %345, %v341
    %v347 = vpop.permute.xlu0 %346
    %v348 = vlaneseq
    %v349 = vshrl.u32 %v348, 7
    %v350 = vadd.s32 %v349, 8
    %351 = vset.pattern.permute.xlu0 %v350
    %352 = vperm.xlu0 %351, %v341
    %v353 = vpop.permute.xlu0 %352
    %v354 = vperm.slane %v128, 1
    %v355 = vlaneseq
    %v356 = vshrl.u32 %v355, 7
    %358 = vset.pattern.permute.xlu0 %v356
    %359 = vperm.xlu0 %358, %v354
    %v360 = vpop.permute.xlu0 %359
    %v361 = vlaneseq
    %v362 = vshrl.u32 %v361, 7
    %v363 = vadd.s32 %v362, 8
    %364 = vset.pattern.permute.xlu0 %v363
    %365 = vperm.xlu0 %364, %v354
    %v366 = vpop.permute.xlu0 %365
    %v367 = vperm.slane %v128, 2
    %v368 = vlaneseq
    %v369 = vshrl.u32 %v368, 7
    %371 = vset.pattern.permute.xlu0 %v369
    %372 = vperm.xlu0 %371, %v367
    %v373 = vpop.permute.xlu0 %372
    %v374 = vlaneseq
    %v375 = vshrl.u32 %v374, 7
    %v376 = vadd.s32 %v375, 8
    %377 = vset.pattern.permute.xlu0 %v376
    %378 = vperm.xlu0 %377, %v367
    %v379 = vpop.permute.xlu0 %378
    %v380 = vperm.slane %v128, 3
    %v381 = vlaneseq
    %v382 = vshrl.u32 %v381, 7
    %384 = vset.pattern.permute.xlu0 %v382
    %385 = vperm.xlu0 %384, %v380
    %v386 = vpop.permute.xlu0 %385
    %v387 = vlaneseq
    %v388 = vshrl.u32 %v387, 7
    %v389 = vadd.s32 %v388, 8
    %390 = vset.pattern.permute.xlu0 %v389
    %391 = vperm.xlu0 %390, %v380
    %v392 = vpop.permute.xlu0 %391
    %v393 = vperm.slane %v128, 4
    %v394 = vlaneseq
    %v395 = vshrl.u32 %v394, 7
    %397 = vset.pattern.permute.xlu0 %v395
    %398 = vperm.xlu0 %397, %v393
    %v399 = vpop.permute.xlu0 %398
    %v400 = vlaneseq
    %v401 = vshrl.u32 %v400, 7
    %v402 = vadd.s32 %v401, 8
    %403 = vset.pattern.permute.xlu0 %v402
    %404 = vperm.xlu0 %403, %v393
    %v405 = vpop.permute.xlu0 %404
    %v406 = vperm.slane %v128, 5
    %v407 = vlaneseq
    %v408 = vshrl.u32 %v407, 7
    %410 = vset.pattern.permute.xlu0 %v408
    %411 = vperm.xlu0 %410, %v406
    %v412 = vpop.permute.xlu0 %411
    %v413 = vlaneseq
    %v414 = vshrl.u32 %v413, 7
    %v415 = vadd.s32 %v414, 8
    %416 = vset.pattern.permute.xlu0 %v415
    %417 = vperm.xlu0 %416, %v406
    %v418 = vpop.permute.xlu0 %417
    %v419 = vperm.slane %v128, 6
    %v420 = vlaneseq
    %v421 = vshrl.u32 %v420, 7
    %423 = vset.pattern.permute.xlu0 %v421
    %424 = vperm.xlu0 %423, %v419
    %v425 = vpop.permute.xlu0 %424
    %v426 = vlaneseq
    %v427 = vshrl.u32 %v426, 7
    %v428 = vadd.s32 %v427, 8
    %429 = vset.pattern.permute.xlu0 %v428
    %430 = vperm.xlu0 %429, %v419
    %v431 = vpop.permute.xlu0 %430
    %v432 = vperm.slane %v128, 7
    %v433 = vlaneseq
    %v434 = vshrl.u32 %v433, 7
    %436 = vset.pattern.permute.xlu0 %v434
    %437 = vperm.xlu0 %436, %v432
    %v438 = vpop.permute.xlu0 %437
    %v439 = vlaneseq
    %v440 = vshrl.u32 %v439, 7
    %v441 = vadd.s32 %v440, 8
    %442 = vset.pattern.permute.xlu0 %v441
    %443 = vperm.xlu0 %442, %v432
    %v444 = vpop.permute.xlu0 %443
    %v445 = vperm.slane %v129, 0
    %v446 = vlaneseq
    %v447 = vshrl.u32 %v446, 7
    %449 = vset.pattern.permute.xlu0 %v447
    %450 = vperm.xlu0 %449, %v445
    %v451 = vpop.permute.xlu0 %450
    %v452 = vlaneseq
    %v453 = vshrl.u32 %v452, 7
    %v454 = vadd.s32 %v453, 8
    %455 = vset.pattern.permute.xlu0 %v454
    %456 = vperm.xlu0 %455, %v445
    %v457 = vpop.permute.xlu0 %456
    %v458 = vperm.slane %v129, 1
    %v459 = vlaneseq
    %v460 = vshrl.u32 %v459, 7
    %462 = vset.pattern.permute.xlu0 %v460
    %463 = vperm.xlu0 %462, %v458
    %v464 = vpop.permute.xlu0 %463
    %v465 = vlaneseq
    %v466 = vshrl.u32 %v465, 7
    %v467 = vadd.s32 %v466, 8
    %468 = vset.pattern.permute.xlu0 %v467
    %469 = vperm.xlu0 %468, %v458
    %v470 = vpop.permute.xlu0 %469
    %v471 = vperm.slane %v129, 2
    %v472 = vlaneseq
    %v473 = vshrl.u32 %v472, 7
    %475 = vset.pattern.permute.xlu0 %v473
    %476 = vperm.xlu0 %475, %v471
    %v477 = vpop.permute.xlu0 %476
    %v478 = vlaneseq
    %v479 = vshrl.u32 %v478, 7
    %v480 = vadd.s32 %v479, 8
    %481 = vset.pattern.permute.xlu0 %v480
    %482 = vperm.xlu0 %481, %v471
    %v483 = vpop.permute.xlu0 %482
    %v484 = vperm.slane %v129, 3
    %v485 = vlaneseq
    %v486 = vshrl.u32 %v485, 7
    %488 = vset.pattern.permute.xlu0 %v486
    %489 = vperm.xlu0 %488, %v484
    %v490 = vpop.permute.xlu0 %489
    %v491 = vlaneseq
    %v492 = vshrl.u32 %v491, 7
    %v493 = vadd.s32 %v492, 8
    %494 = vset.pattern.permute.xlu0 %v493
    %495 = vperm.xlu0 %494, %v484
    %v496 = vpop.permute.xlu0 %495
    %v497 = vperm.slane %v129, 4
    %v498 = vlaneseq
    %v499 = vshrl.u32 %v498, 7
    %501 = vset.pattern.permute.xlu0 %v499
    %502 = vperm.xlu0 %501, %v497
    %v503 = vpop.permute.xlu0 %502
    %v504 = vlaneseq
    %v505 = vshrl.u32 %v504, 7
    %v506 = vadd.s32 %v505, 8
    %507 = vset.pattern.permute.xlu0 %v506
    %508 = vperm.xlu0 %507, %v497
    %v509 = vpop.permute.xlu0 %508
    %v510 = vperm.slane %v129, 5
    %v511 = vlaneseq
    %v512 = vshrl.u32 %v511, 7
    %514 = vset.pattern.permute.xlu0 %v512
    %515 = vperm.xlu0 %514, %v510
    %v516 = vpop.permute.xlu0 %515
    %v517 = vlaneseq
    %v518 = vshrl.u32 %v517, 7
    %v519 = vadd.s32 %v518, 8
    %520 = vset.pattern.permute.xlu0 %v519
    %521 = vperm.xlu0 %520, %v510
    %v522 = vpop.permute.xlu0 %521
    %v523 = vperm.slane %v129, 6
    %v524 = vlaneseq
    %v525 = vshrl.u32 %v524, 7
    %527 = vset.pattern.permute.xlu0 %v525
    %528 = vperm.xlu0 %527, %v523
    %v529 = vpop.permute.xlu0 %528
    %v530 = vlaneseq
    %v531 = vshrl.u32 %v530, 7
    %v532 = vadd.s32 %v531, 8
    %533 = vset.pattern.permute.xlu0 %v532
    %534 = vperm.xlu0 %533, %v523
    %v535 = vpop.permute.xlu0 %534
    %v536 = vperm.slane %v129, 7
    %v537 = vlaneseq
    %v538 = vshrl.u32 %v537, 7
    %540 = vset.pattern.permute.xlu0 %v538
    %541 = vperm.xlu0 %540, %v536
    %v542 = vpop.permute.xlu0 %541
    %v543 = vlaneseq
    %v544 = vshrl.u32 %v543, 7
    %v545 = vadd.s32 %v544, 8
    %546 = vset.pattern.permute.xlu0 %v545
    %547 = vperm.xlu0 %546, %v536
    %v548 = vpop.permute.xlu0 %547
    %v549 = vperm.slane %v131, 0
    %v550 = vmul.f32 %v139, %v549
    %v551 = vmul.f32 %v145, %v549
    %v552 = vmul.f32 %v152, %v549
    %v553 = vmul.f32 %v158, %v549
    %v554 = vmul.f32 %v165, %v549
    %v555 = vmul.f32 %v171, %v549
    %v556 = vmul.f32 %v178, %v549
    %v557 = vmul.f32 %v184, %v549
    %v558 = vmul.f32 %v191, %v549
    %v559 = vmul.f32 %v197, %v549
    %v560 = vmul.f32 %v204, %v549
    %v561 = vmul.f32 %v210, %v549
    %v562 = vmul.f32 %v217, %v549
    %v563 = vmul.f32 %v223, %v549
    %v564 = vmul.f32 %v230, %v549
    %v565 = vmul.f32 %v236, %v549
    %v566 = vmul.f32 %v243, %v549
    %v567 = vmul.f32 %v249, %v549
    %v568 = vmul.f32 %v256, %v549
    %v569 = vmul.f32 %v262, %v549
    %v570 = vmul.f32 %v269, %v549
    %v571 = vmul.f32 %v275, %v549
    %v572 = vmul.f32 %v282, %v549
    %v573 = vmul.f32 %v288, %v549
    %v574 = vmul.f32 %v295, %v549
    %v575 = vmul.f32 %v301, %v549
    %v576 = vmul.f32 %v308, %v549
    %v577 = vmul.f32 %v314, %v549
    %v578 = vmul.f32 %v321, %v549
    %v579 = vmul.f32 %v327, %v549
    %v580 = vmul.f32 %v334, %v549
    %v581 = vmul.f32 %v340, %v549
    %v582 = vmul.f32 %v347, %v549
    %v583 = vmul.f32 %v353, %v549
    %v584 = vmul.f32 %v360, %v549
    %v585 = vmul.f32 %v366, %v549
    %v586 = vmul.f32 %v373, %v549
    %v587 = vmul.f32 %v379, %v549
    %v588 = vmul.f32 %v386, %v549
    %v589 = vmul.f32 %v392, %v549
    %v590 = vmul.f32 %v399, %v549
    %v591 = vmul.f32 %v405, %v549
    %v592 = vmul.f32 %v412, %v549
    %v593 = vmul.f32 %v418, %v549
    %v594 = vmul.f32 %v425, %v549
    %v595 = vmul.f32 %v431, %v549
    %v596 = vmul.f32 %v438, %v549
    %v597 = vmul.f32 %v444, %v549
    %v598 = vmul.f32 %v451, %v549
    %v599 = vmul.f32 %v457, %v549
    %v600 = vmul.f32 %v464, %v549
    %v601 = vmul.f32 %v470, %v549
    %v602 = vmul.f32 %v477, %v549
    %v603 = vmul.f32 %v483, %v549
    %v604 = vmul.f32 %v490, %v549
    %v605 = vmul.f32 %v496, %v549
    %v606 = vmul.f32 %v503, %v549
    %v607 = vmul.f32 %v509, %v549
    %v608 = vmul.f32 %v516, %v549
    %v609 = vmul.f32 %v522, %v549
    %v610 = vmul.f32 %v529, %v549
    %v611 = vmul.f32 %v535, %v549
    %v612 = vmul.f32 %v542, %v549
    %v613 = vmul.f32 %v548, %v549
    %v614 = vadd.f32 %v550, 0.0
    %v615 = vadd.f32 %v551, 0.0
    %v616 = vadd.f32 %v552, 0.0
    %v617 = vadd.f32 %v553, 0.0
    %v618 = vadd.f32 %v554, 0.0
    %v619 = vadd.f32 %v555, 0.0
    %v620 = vadd.f32 %v556, 0.0
    %v621 = vadd.f32 %v557, 0.0
    %v622 = vadd.f32 %v558, 0.0
    %v623 = vadd.f32 %v559, 0.0
    %v624 = vadd.f32 %v560, 0.0
    %v625 = vadd.f32 %v561, 0.0
    %v626 = vadd.f32 %v562, 0.0
    %v627 = vadd.f32 %v563, 0.0
    %v628 = vadd.f32 %v564, 0.0
    %v629 = vadd.f32 %v565, 0.0
    %v630 = vadd.f32 %v566, 0.0
    %v631 = vadd.f32 %v567, 0.0
    %v632 = vadd.f32 %v568, 0.0
    %v633 = vadd.f32 %v569, 0.0
    %v634 = vadd.f32 %v570, 0.0
    %v635 = vadd.f32 %v571, 0.0
    %v636 = vadd.f32 %v572, 0.0
    %v637 = vadd.f32 %v573, 0.0
    %v638 = vadd.f32 %v574, 0.0
    %v639 = vadd.f32 %v575, 0.0
    %v640 = vadd.f32 %v576, 0.0
    %v641 = vadd.f32 %v577, 0.0
    %v642 = vadd.f32 %v578, 0.0
    %v643 = vadd.f32 %v579, 0.0
    %v644 = vadd.f32 %v580, 0.0
    %v645 = vadd.f32 %v581, 0.0
    %v646 = vadd.f32 %v582, 0.0
    %v647 = vadd.f32 %v583, 0.0
    %v648 = vadd.f32 %v584, 0.0
    %v649 = vadd.f32 %v585, 0.0
    %v650 = vadd.f32 %v586, 0.0
    %v651 = vadd.f32 %v587, 0.0
    %v652 = vadd.f32 %v588, 0.0
    %v653 = vadd.f32 %v589, 0.0
    %v654 = vadd.f32 %v590, 0.0
    %v655 = vadd.f32 %v591, 0.0
    %v656 = vadd.f32 %v592, 0.0
    %v657 = vadd.f32 %v593, 0.0
    %v658 = vadd.f32 %v594, 0.0
    %v659 = vadd.f32 %v595, 0.0
    %v660 = vadd.f32 %v596, 0.0
    %v661 = vadd.f32 %v597, 0.0
    %v662 = vadd.f32 %v598, 0.0
    %v663 = vadd.f32 %v599, 0.0
    %v664 = vadd.f32 %v600, 0.0
    %v665 = vadd.f32 %v601, 0.0
    %v666 = vadd.f32 %v602, 0.0
    %v667 = vadd.f32 %v603, 0.0
    %v668 = vadd.f32 %v604, 0.0
    %v669 = vadd.f32 %v605, 0.0
    %v670 = vadd.f32 %v606, 0.0
    %v671 = vadd.f32 %v607, 0.0
    %v672 = vadd.f32 %v608, 0.0
    %v673 = vadd.f32 %v609, 0.0
    %v674 = vadd.f32 %v610, 0.0
    %v675 = vadd.f32 %v611, 0.0
    %v676 = vadd.f32 %v612, 0.0
    %v677 = vadd.f32 %v613, 0.0
    %v678 = vlaneseq
    %v679 = vshrl.u32 %v678, 7
    %v680 = vadd.s32 %v679, 1
    %681 = vset.pattern.permute.xlu0 %v680
    %682 = vperm.xlu0 %681, %v133
    %v683 = vpop.permute.xlu0 %682
    %v684 = vlaneseq
    %v685 = vshrl.u32 %v684, 7
    %v686 = vadd.s32 %v685, 9
    %687 = vset.pattern.permute.xlu0 %v686
    %688 = vperm.xlu0 %687, %v133
    %v689 = vpop.permute.xlu0 %688
    %v690 = vlaneseq
    %v691 = vshrl.u32 %v690, 7
    %v692 = vadd.s32 %v691, 1
    %693 = vset.pattern.permute.xlu0 %v692
    %694 = vperm.xlu0 %693, %v146
    %v695 = vpop.permute.xlu0 %694
    %v696 = vlaneseq
    %v697 = vshrl.u32 %v696, 7
    %v698 = vadd.s32 %v697, 9
    %699 = vset.pattern.permute.xlu0 %v698
    %700 = vperm.xlu0 %699, %v146
    %v701 = vpop.permute.xlu0 %700
    %v702 = vlaneseq
    %v703 = vshrl.u32 %v702, 7
    %v704 = vadd.s32 %v703, 1
    %705 = vset.pattern.permute.xlu0 %v704
    %706 = vperm.xlu0 %705, %v159
    %v707 = vpop.permute.xlu0 %706
    %v708 = vlaneseq
    %v709 = vshrl.u32 %v708, 7
    %v710 = vadd.s32 %v709, 9
    %711 = vset.pattern.permute.xlu0 %v710
    %712 = vperm.xlu0 %711, %v159
    %v713 = vpop.permute.xlu0 %712
    %v714 = vlaneseq
    %v715 = vshrl.u32 %v714, 7
    %v716 = vadd.s32 %v715, 1
    %717 = vset.pattern.permute.xlu0 %v716
    %718 = vperm.xlu0 %717, %v172
    %v719 = vpop.permute.xlu0 %718
    %v720 = vlaneseq
    %v721 = vshrl.u32 %v720, 7
    %v722 = vadd.s32 %v721, 9
    %723 = vset.pattern.permute.xlu0 %v722
    %724 = vperm.xlu0 %723, %v172
    %v725 = vpop.permute.xlu0 %724
    %v726 = vlaneseq
    %v727 = vshrl.u32 %v726, 7
    %v728 = vadd.s32 %v727, 1
    %729 = vset.pattern.permute.xlu0 %v728
    %730 = vperm.xlu0 %729, %v185
    %v731 = vpop.permute.xlu0 %730
    %v732 = vlaneseq
    %v733 = vshrl.u32 %v732, 7
    %v734 = vadd.s32 %v733, 9
    %735 = vset.pattern.permute.xlu0 %v734
    %736 = vperm.xlu0 %735, %v185
    %v737 = vpop.permute.xlu0 %736
    %v738 = vlaneseq
    %v739 = vshrl.u32 %v738, 7
    %v740 = vadd.s32 %v739, 1
    %741 = vset.pattern.permute.xlu0 %v740
    %742 = vperm.xlu0 %741, %v198
    %v743 = vpop.permute.xlu0 %742
    %v744 = vlaneseq
    %v745 = vshrl.u32 %v744, 7
    %v746 = vadd.s32 %v745, 9
    %747 = vset.pattern.permute.xlu0 %v746
    %748 = vperm.xlu0 %747, %v198
    %v749 = vpop.permute.xlu0 %748
    %v750 = vlaneseq
    %v751 = vshrl.u32 %v750, 7
    %v752 = vadd.s32 %v751, 1
    %753 = vset.pattern.permute.xlu0 %v752
    %754 = vperm.xlu0 %753, %v211
    %v755 = vpop.permute.xlu0 %754
    %v756 = vlaneseq
    %v757 = vshrl.u32 %v756, 7
    %v758 = vadd.s32 %v757, 9
    %759 = vset.pattern.permute.xlu0 %v758
    %760 = vperm.xlu0 %759, %v211
    %v761 = vpop.permute.xlu0 %760
    %v762 = vlaneseq
    %v763 = vshrl.u32 %v762, 7
    %v764 = vadd.s32 %v763, 1
    %765 = vset.pattern.permute.xlu0 %v764
    %766 = vperm.xlu0 %765, %v224
    %v767 = vpop.permute.xlu0 %766
    %v768 = vlaneseq
    %v769 = vshrl.u32 %v768, 7
    %v770 = vadd.s32 %v769, 9
    %771 = vset.pattern.permute.xlu0 %v770
    %772 = vperm.xlu0 %771, %v224
    %v773 = vpop.permute.xlu0 %772
    %v774 = vlaneseq
    %v775 = vshrl.u32 %v774, 7
    %v776 = vadd.s32 %v775, 1
    %777 = vset.pattern.permute.xlu0 %v776
    %778 = vperm.xlu0 %777, %v237
    %v779 = vpop.permute.xlu0 %778
    %v780 = vlaneseq
    %v781 = vshrl.u32 %v780, 7
    %v782 = vadd.s32 %v781, 9
    %783 = vset.pattern.permute.xlu0 %v782
    %784 = vperm.xlu0 %783, %v237
    %v785 = vpop.permute.xlu0 %784
    %v786 = vlaneseq
    %v787 = vshrl.u32 %v786, 7
    %v788 = vadd.s32 %v787, 1
    %789 = vset.pattern.permute.xlu0 %v788
    %790 = vperm.xlu0 %789, %v250
    %v791 = vpop.permute.xlu0 %790
    %v792 = vlaneseq
    %v793 = vshrl.u32 %v792, 7
    %v794 = vadd.s32 %v793, 9
    %795 = vset.pattern.permute.xlu0 %v794
    %796 = vperm.xlu0 %795, %v250
    %v797 = vpop.permute.xlu0 %796
    %v798 = vlaneseq
    %v799 = vshrl.u32 %v798, 7
    %v800 = vadd.s32 %v799, 1
    %801 = vset.pattern.permute.xlu0 %v800
    %802 = vperm.xlu0 %801, %v263
    %v803 = vpop.permute.xlu0 %802
    %v804 = vlaneseq
    %v805 = vshrl.u32 %v804, 7
    %v806 = vadd.s32 %v805, 9
    %807 = vset.pattern.permute.xlu0 %v806
    %808 = vperm.xlu0 %807, %v263
    %v809 = vpop.permute.xlu0 %808
    %v810 = vlaneseq
    %v811 = vshrl.u32 %v810, 7
    %v812 = vadd.s32 %v811, 1
    %813 = vset.pattern.permute.xlu0 %v812
    %814 = vperm.xlu0 %813, %v276
    %v815 = vpop.permute.xlu0 %814
    %v816 = vlaneseq
    %v817 = vshrl.u32 %v816, 7
    %v818 = vadd.s32 %v817, 9
    %819 = vset.pattern.permute.xlu0 %v818
    %820 = vperm.xlu0 %819, %v276
    %v821 = vpop.permute.xlu0 %820
    %v822 = vlaneseq
    %v823 = vshrl.u32 %v822, 7
    %v824 = vadd.s32 %v823, 1
    %825 = vset.pattern.permute.xlu0 %v824
    %826 = vperm.xlu0 %825, %v289
    %v827 = vpop.permute.xlu0 %826
    %v828 = vlaneseq
    %v829 = vshrl.u32 %v828, 7
    %v830 = vadd.s32 %v829, 9
    %831 = vset.pattern.permute.xlu0 %v830
    %832 = vperm.xlu0 %831, %v289
    %v833 = vpop.permute.xlu0 %832
    %v834 = vlaneseq
    %v835 = vshrl.u32 %v834, 7
    %v836 = vadd.s32 %v835, 1
    %837 = vset.pattern.permute.xlu0 %v836
    %838 = vperm.xlu0 %837, %v302
    %v839 = vpop.permute.xlu0 %838
    %v840 = vlaneseq
    %v841 = vshrl.u32 %v840, 7
    %v842 = vadd.s32 %v841, 9
    %843 = vset.pattern.permute.xlu0 %v842
    %844 = vperm.xlu0 %843, %v302
    %v845 = vpop.permute.xlu0 %844
    %v846 = vlaneseq
    %v847 = vshrl.u32 %v846, 7
    %v848 = vadd.s32 %v847, 1
    %849 = vset.pattern.permute.xlu0 %v848
    %850 = vperm.xlu0 %849, %v315
    %v851 = vpop.permute.xlu0 %850
    %v852 = vlaneseq
    %v853 = vshrl.u32 %v852, 7
    %v854 = vadd.s32 %v853, 9
    %855 = vset.pattern.permute.xlu0 %v854
    %856 = vperm.xlu0 %855, %v315
    %v857 = vpop.permute.xlu0 %856
    %v858 = vlaneseq
    %v859 = vshrl.u32 %v858, 7
    %v860 = vadd.s32 %v859, 1
    %861 = vset.pattern.permute.xlu0 %v860
    %862 = vperm.xlu0 %861, %v328
    %v863 = vpop.permute.xlu0 %862
    %v864 = vlaneseq
    %v865 = vshrl.u32 %v864, 7
    %v866 = vadd.s32 %v865, 9
    %867 = vset.pattern.permute.xlu0 %v866
    %868 = vperm.xlu0 %867, %v328
    %v869 = vpop.permute.xlu0 %868
    %v870 = vlaneseq
    %v871 = vshrl.u32 %v870, 7
    %v872 = vadd.s32 %v871, 1
    %873 = vset.pattern.permute.xlu0 %v872
    %874 = vperm.xlu0 %873, %v341
    %v875 = vpop.permute.xlu0 %874
    %v876 = vlaneseq
    %v877 = vshrl.u32 %v876, 7
    %v878 = vadd.s32 %v877, 9
    %879 = vset.pattern.permute.xlu0 %v878
    %880 = vperm.xlu0 %879, %v341
    %v881 = vpop.permute.xlu0 %880
    %v882 = vlaneseq
    %v883 = vshrl.u32 %v882, 7
    %v884 = vadd.s32 %v883, 1
    %885 = vset.pattern.permute.xlu0 %v884
    %886 = vperm.xlu0 %885, %v354
    %v887 = vpop.permute.xlu0 %886
    %v888 = vlaneseq
    %v889 = vshrl.u32 %v888, 7
    %v890 = vadd.s32 %v889, 9
    %891 = vset.pattern.permute.xlu0 %v890
    %892 = vperm.xlu0 %891, %v354
    %v893 = vpop.permute.xlu0 %892
    %v894 = vlaneseq
    %v895 = vshrl.u32 %v894, 7
    %v896 = vadd.s32 %v895, 1
    %897 = vset.pattern.permute.xlu0 %v896
    %898 = vperm.xlu0 %897, %v367
    %v899 = vpop.permute.xlu0 %898
    %v900 = vlaneseq
    %v901 = vshrl.u32 %v900, 7
    %v902 = vadd.s32 %v901, 9
    %903 = vset.pattern.permute.xlu0 %v902
    %904 = vperm.xlu0 %903, %v367
    %v905 = vpop.permute.xlu0 %904
    %v906 = vlaneseq
    %v907 = vshrl.u32 %v906, 7
    %v908 = vadd.s32 %v907, 1
    %909 = vset.pattern.permute.xlu0 %v908
    %910 = vperm.xlu0 %909, %v380
    %v911 = vpop.permute.xlu0 %910
    %v912 = vlaneseq
    %v913 = vshrl.u32 %v912, 7
    %v914 = vadd.s32 %v913, 9
    %915 = vset.pattern.permute.xlu0 %v914
    %916 = vperm.xlu0 %915, %v380
    %v917 = vpop.permute.xlu0 %916
    %v918 = vlaneseq
    %v919 = vshrl.u32 %v918, 7
    %v920 = vadd.s32 %v919, 1
    %921 = vset.pattern.permute.xlu0 %v920
    %922 = vperm.xlu0 %921, %v393
    %v923 = vpop.permute.xlu0 %922
    %v924 = vlaneseq
    %v925 = vshrl.u32 %v924, 7
    %v926 = vadd.s32 %v925, 9
    %927 = vset.pattern.permute.xlu0 %v926
    %928 = vperm.xlu0 %927, %v393
    %v929 = vpop.permute.xlu0 %928
    %v930 = vlaneseq
    %v931 = vshrl.u32 %v930, 7
    %v932 = vadd.s32 %v931, 1
    %933 = vset.pattern.permute.xlu0 %v932
    %934 = vperm.xlu0 %933, %v406
    %v935 = vpop.permute.xlu0 %934
    %v936 = vlaneseq
    %v937 = vshrl.u32 %v936, 7
    %v938 = vadd.s32 %v937, 9
    %939 = vset.pattern.permute.xlu0 %v938
    %940 = vperm.xlu0 %939, %v406
    %v941 = vpop.permute.xlu0 %940
    %v942 = vlaneseq
    %v943 = vshrl.u32 %v942, 7
    %v944 = vadd.s32 %v943, 1
    %945 = vset.pattern.permute.xlu0 %v944
    %946 = vperm.xlu0 %945, %v419
    %v947 = vpop.permute.xlu0 %946
    %v948 = vlaneseq
    %v949 = vshrl.u32 %v948, 7
    %v950 = vadd.s32 %v949, 9
    %951 = vset.pattern.permute.xlu0 %v950
    %952 = vperm.xlu0 %951, %v419
    %v953 = vpop.permute.xlu0 %952
    %v954 = vlaneseq
    %v955 = vshrl.u32 %v954, 7
    %v956 = vadd.s32 %v955, 1
    %957 = vset.pattern.permute.xlu0 %v956
    %958 = vperm.xlu0 %957, %v432
    %v959 = vpop.permute.xlu0 %958
    %v960 = vlaneseq
    %v961 = vshrl.u32 %v960, 7
    %v962 = vadd.s32 %v961, 9
    %963 = vset.pattern.permute.xlu0 %v962
    %964 = vperm.xlu0 %963, %v432
    %v965 = vpop.permute.xlu0 %964
    %v966 = vlaneseq
    %v967 = vshrl.u32 %v966, 7
    %v968 = vadd.s32 %v967, 1
    %969 = vset.pattern.permute.xlu0 %v968
    %970 = vperm.xlu0 %969, %v445
    %v971 = vpop.permute.xlu0 %970
    %v972 = vlaneseq
    %v973 = vshrl.u32 %v972, 7
    %v974 = vadd.s32 %v973, 9
    %975 = vset.pattern.permute.xlu0 %v974
    %976 = vperm.xlu0 %975, %v445
    %v977 = vpop.permute.xlu0 %976
    %v978 = vlaneseq
    %v979 = vshrl.u32 %v978, 7
    %v980 = vadd.s32 %v979, 1
    %981 = vset.pattern.permute.xlu0 %v980
    %982 = vperm.xlu0 %981, %v458
    %v983 = vpop.permute.xlu0 %982
    %v984 = vlaneseq
    %v985 = vshrl.u32 %v984, 7
    %v986 = vadd.s32 %v985, 9
    %987 = vset.pattern.permute.xlu0 %v986
    %988 = vperm.xlu0 %987, %v458
    %v989 = vpop.permute.xlu0 %988
    %v990 = vlaneseq
    %v991 = vshrl.u32 %v990, 7
    %v992 = vadd.s32 %v991, 1
    %993 = vset.pattern.permute.xlu0 %v992
    %994 = vperm.xlu0 %993, %v471
    %v995 = vpop.permute.xlu0 %994
    %v996 = vlaneseq
    %v997 = vshrl.u32 %v996, 7
    %v998 = vadd.s32 %v997, 9
    %999 = vset.pattern.permute.xlu0 %v998
    %1000 = vperm.xlu0 %999, %v471
    %v1001 = vpop.permute.xlu0 %1000
    %v1002 = vlaneseq
    %v1003 = vshrl.u32 %v1002, 7
    %v1004 = vadd.s32 %v1003, 1
    %1005 = vset.pattern.permute.xlu0 %v1004
    %1006 = vperm.xlu0 %1005, %v484
    %v1007 = vpop.permute.xlu0 %1006
    %v1008 = vlaneseq
    %v1009 = vshrl.u32 %v1008, 7
    %v1010 = vadd.s32 %v1009, 9
    %1011 = vset.pattern.permute.xlu0 %v1010
    %1012 = vperm.xlu0 %1011, %v484
    %v1013 = vpop.permute.xlu0 %1012
    %v1014 = vlaneseq
    %v1015 = vshrl.u32 %v1014, 7
    %v1016 = vadd.s32 %v1015, 1
    %1017 = vset.pattern.permute.xlu0 %v1016
    %1018 = vperm.xlu0 %1017, %v497
    %v1019 = vpop.permute.xlu0 %1018
    %v1020 = vlaneseq
    %v1021 = vshrl.u32 %v1020, 7
    %v1022 = vadd.s32 %v1021, 9
    %1023 = vset.pattern.permute.xlu0 %v1022
    %1024 = vperm.xlu0 %1023, %v497
    %v1025 = vpop.permute.xlu0 %1024
    %v1026 = vlaneseq
    %v1027 = vshrl.u32 %v1026, 7
    %v1028 = vadd.s32 %v1027, 1
    %1029 = vset.pattern.permute.xlu0 %v1028
    %1030 = vperm.xlu0 %1029, %v510
    %v1031 = vpop.permute.xlu0 %1030
    %v1032 = vlaneseq
    %v1033 = vshrl.u32 %v1032, 7
    %v1034 = vadd.s32 %v1033, 9
    %1035 = vset.pattern.permute.xlu0 %v1034
    %1036 = vperm.xlu0 %1035, %v510
    %v1037 = vpop.permute.xlu0 %1036
    %v1038 = vlaneseq
    %v1039 = vshrl.u32 %v1038, 7
    %v1040 = vadd.s32 %v1039, 1
    %1041 = vset.pattern.permute.xlu0 %v1040
    %1042 = vperm.xlu0 %1041, %v523
    %v1043 = vpop.permute.xlu0 %1042
    %v1044 = vlaneseq
    %v1045 = vshrl.u32 %v1044, 7
    %v1046 = vadd.s32 %v1045, 9
    %1047 = vset.pattern.permute.xlu0 %v1046
    %1048 = vperm.xlu0 %1047, %v523
    %v1049 = vpop.permute.xlu0 %1048
    %v1050 = vlaneseq
    %v1051 = vshrl.u32 %v1050, 7
    %v1052 = vadd.s32 %v1051, 1
    %1053 = vset.pattern.permute.xlu0 %v1052
    %1054 = vperm.xlu0 %1053, %v536
    %v1055 = vpop.permute.xlu0 %1054
    %v1056 = vlaneseq
    %v1057 = vshrl.u32 %v1056, 7
    %v1058 = vadd.s32 %v1057, 9
    %1059 = vset.pattern.permute.xlu0 %v1058
    %1060 = vperm.xlu0 %1059, %v536
    %v1061 = vpop.permute.xlu0 %1060
    %v1062 = vperm.slane %v131, 1
    %v1063 = vmul.f32 %v683, %v1062
    %v1064 = vmul.f32 %v689, %v1062
    %v1065 = vmul.f32 %v695, %v1062
    %v1066 = vmul.f32 %v701, %v1062
    %v1067 = vmul.f32 %v707, %v1062
    %v1068 = vmul.f32 %v713, %v1062
    %v1069 = vmul.f32 %v719, %v1062
    %v1070 = vmul.f32 %v725, %v1062
    %v1071 = vmul.f32 %v731, %v1062
    %v1072 = vmul.f32 %v737, %v1062
    %v1073 = vmul.f32 %v743, %v1062
    %v1074 = vmul.f32 %v749, %v1062
    %v1075 = vmul.f32 %v755, %v1062
    %v1076 = vmul.f32 %v761, %v1062
    %v1077 = vmul.f32 %v767, %v1062
    %v1078 = vmul.f32 %v773, %v1062
    %v1079 = vmul.f32 %v779, %v1062
    %v1080 = vmul.f32 %v785, %v1062
    %v1081 = vmul.f32 %v791, %v1062
    %v1082 = vmul.f32 %v797, %v1062
    %v1083 = vmul.f32 %v803, %v1062
    %v1084 = vmul.f32 %v809, %v1062
    %v1085 = vmul.f32 %v815, %v1062
    %v1086 = vmul.f32 %v821, %v1062
    %v1087 = vmul.f32 %v827, %v1062
    %v1088 = vmul.f32 %v833, %v1062
    %v1089 = vmul.f32 %v839, %v1062
    %v1090 = vmul.f32 %v845, %v1062
    %v1091 = vmul.f32 %v851, %v1062
    %v1092 = vmul.f32 %v857, %v1062
    %v1093 = vmul.f32 %v863, %v1062
    %v1094 = vmul.f32 %v869, %v1062
    %v1095 = vmul.f32 %v875, %v1062
    %v1096 = vmul.f32 %v881, %v1062
    %v1097 = vmul.f32 %v887, %v1062
    %v1098 = vmul.f32 %v893, %v1062
    %v1099 = vmul.f32 %v899, %v1062
    %v1100 = vmul.f32 %v905, %v1062
    %v1101 = vmul.f32 %v911, %v1062
    %v1102 = vmul.f32 %v917, %v1062
    %v1103 = vmul.f32 %v923, %v1062
    %v1104 = vmul.f32 %v929, %v1062
    %v1105 = vmul.f32 %v935, %v1062
    %v1106 = vmul.f32 %v941, %v1062
    %v1107 = vmul.f32 %v947, %v1062
    %v1108 = vmul.f32 %v953, %v1062
    %v1109 = vmul.f32 %v959, %v1062
    %v1110 = vmul.f32 %v965, %v1062
    %v1111 = vmul.f32 %v971, %v1062
    %v1112 = vmul.f32 %v977, %v1062
    %v1113 = vmul.f32 %v983, %v1062
    %v1114 = vmul.f32 %v989, %v1062
    %v1115 = vmul.f32 %v995, %v1062
    %v1116 = vmul.f32 %v1001, %v1062
    %v1117 = vmul.f32 %v1007, %v1062
    %v1118 = vmul.f32 %v1013, %v1062
    %v1119 = vmul.f32 %v1019, %v1062
    %v1120 = vmul.f32 %v1025, %v1062
    %v1121 = vmul.f32 %v1031, %v1062
    %v1122 = vmul.f32 %v1037, %v1062
    %v1123 = vmul.f32 %v1043, %v1062
    %v1124 = vmul.f32 %v1049, %v1062
    %v1125 = vmul.f32 %v1055, %v1062
    %v1126 = vmul.f32 %v1061, %v1062
    %v1127 = vadd.f32 %v614, %v1063
    %v1128 = vadd.f32 %v615, %v1064
    %v1129 = vadd.f32 %v616, %v1065
    %v1130 = vadd.f32 %v617, %v1066
    %v1131 = vadd.f32 %v618, %v1067
    %v1132 = vadd.f32 %v619, %v1068
    %v1133 = vadd.f32 %v620, %v1069
    %v1134 = vadd.f32 %v621, %v1070
    %v1135 = vadd.f32 %v622, %v1071
    %v1136 = vadd.f32 %v623, %v1072
    %v1137 = vadd.f32 %v624, %v1073
    %v1138 = vadd.f32 %v625, %v1074
    %v1139 = vadd.f32 %v626, %v1075
    %v1140 = vadd.f32 %v627, %v1076
    %v1141 = vadd.f32 %v628, %v1077
    %v1142 = vadd.f32 %v629, %v1078
    %v1143 = vadd.f32 %v630, %v1079
    %v1144 = vadd.f32 %v631, %v1080
    %v1145 = vadd.f32 %v632, %v1081
    %v1146 = vadd.f32 %v633, %v1082
    %v1147 = vadd.f32 %v634, %v1083
    %v1148 = vadd.f32 %v635, %v1084
    %v1149 = vadd.f32 %v636, %v1085
    %v1150 = vadd.f32 %v637, %v1086
    %v1151 = vadd.f32 %v638, %v1087
    %v1152 = vadd.f32 %v639, %v1088
    %v1153 = vadd.f32 %v640, %v1089
    %v1154 = vadd.f32 %v641, %v1090
    %v1155 = vadd.f32 %v642, %v1091
    %v1156 = vadd.f32 %v643, %v1092
    %v1157 = vadd.f32 %v644, %v1093
    %v1158 = vadd.f32 %v645, %v1094
    %v1159 = vadd.f32 %v646, %v1095
    %v1160 = vadd.f32 %v647, %v1096
    %v1161 = vadd.f32 %v648, %v1097
    %v1162 = vadd.f32 %v649, %v1098
    %v1163 = vadd.f32 %v650, %v1099
    %v1164 = vadd.f32 %v651, %v1100
    %v1165 = vadd.f32 %v652, %v1101
    %v1166 = vadd.f32 %v653, %v1102
    %v1167 = vadd.f32 %v654, %v1103
    %v1168 = vadd.f32 %v655, %v1104
    %v1169 = vadd.f32 %v656, %v1105
    %v1170 = vadd.f32 %v657, %v1106
    %v1171 = vadd.f32 %v658, %v1107
    %v1172 = vadd.f32 %v659, %v1108
    %v1173 = vadd.f32 %v660, %v1109
    %v1174 = vadd.f32 %v661, %v1110
    %v1175 = vadd.f32 %v662, %v1111
    %v1176 = vadd.f32 %v663, %v1112
    %v1177 = vadd.f32 %v664, %v1113
    %v1178 = vadd.f32 %v665, %v1114
    %v1179 = vadd.f32 %v666, %v1115
    %v1180 = vadd.f32 %v667, %v1116
    %v1181 = vadd.f32 %v668, %v1117
    %v1182 = vadd.f32 %v669, %v1118
    %v1183 = vadd.f32 %v670, %v1119
    %v1184 = vadd.f32 %v671, %v1120
    %v1185 = vadd.f32 %v672, %v1121
    %v1186 = vadd.f32 %v673, %v1122
    %v1187 = vadd.f32 %v674, %v1123
    %v1188 = vadd.f32 %v675, %v1124
    %v1189 = vadd.f32 %v676, %v1125
    %v1190 = vadd.f32 %v677, %v1126
    %v1191 = vlaneseq
    %v1192 = vshrl.u32 %v1191, 7
    %v1193 = vadd.s32 %v1192, 2
    %1194 = vset.pattern.permute.xlu0 %v1193
    %1195 = vperm.xlu0 %1194, %v133
    %v1196 = vpop.permute.xlu0 %1195
    %v1197 = vlaneseq
    %v1198 = vshrl.u32 %v1197, 7
    %v1199 = vadd.s32 %v1198, 10
    %1200 = vset.pattern.permute.xlu0 %v1199
    %1201 = vperm.xlu0 %1200, %v133
    %v1202 = vpop.permute.xlu0 %1201
    %v1203 = vlaneseq
    %v1204 = vshrl.u32 %v1203, 7
    %v1205 = vadd.s32 %v1204, 2
    %1206 = vset.pattern.permute.xlu0 %v1205
    %1207 = vperm.xlu0 %1206, %v146
    %v1208 = vpop.permute.xlu0 %1207
    %v1209 = vlaneseq
    %v1210 = vshrl.u32 %v1209, 7
    %v1211 = vadd.s32 %v1210, 10
    %1212 = vset.pattern.permute.xlu0 %v1211
    %1213 = vperm.xlu0 %1212, %v146
    %v1214 = vpop.permute.xlu0 %1213
    %v1215 = vlaneseq
    %v1216 = vshrl.u32 %v1215, 7
    %v1217 = vadd.s32 %v1216, 2
    %1218 = vset.pattern.permute.xlu0 %v1217
    %1219 = vperm.xlu0 %1218, %v159
    %v1220 = vpop.permute.xlu0 %1219
    %v1221 = vlaneseq
    %v1222 = vshrl.u32 %v1221, 7
    %v1223 = vadd.s32 %v1222, 10
    %1224 = vset.pattern.permute.xlu0 %v1223
    %1225 = vperm.xlu0 %1224, %v159
    %v1226 = vpop.permute.xlu0 %1225
    %v1227 = vlaneseq
    %v1228 = vshrl.u32 %v1227, 7
    %v1229 = vadd.s32 %v1228, 2
    %1230 = vset.pattern.permute.xlu0 %v1229
    %1231 = vperm.xlu0 %1230, %v172
    %v1232 = vpop.permute.xlu0 %1231
    %v1233 = vlaneseq
    %v1234 = vshrl.u32 %v1233, 7
    %v1235 = vadd.s32 %v1234, 10
    %1236 = vset.pattern.permute.xlu0 %v1235
    %1237 = vperm.xlu0 %1236, %v172
    %v1238 = vpop.permute.xlu0 %1237
    %v1239 = vlaneseq
    %v1240 = vshrl.u32 %v1239, 7
    %v1241 = vadd.s32 %v1240, 2
    %1242 = vset.pattern.permute.xlu0 %v1241
    %1243 = vperm.xlu0 %1242, %v185
    %v1244 = vpop.permute.xlu0 %1243
    %v1245 = vlaneseq
    %v1246 = vshrl.u32 %v1245, 7
    %v1247 = vadd.s32 %v1246, 10
    %1248 = vset.pattern.permute.xlu0 %v1247
    %1249 = vperm.xlu0 %1248, %v185
    %v1250 = vpop.permute.xlu0 %1249
    %v1251 = vlaneseq
    %v1252 = vshrl.u32 %v1251, 7
    %v1253 = vadd.s32 %v1252, 2
    %1254 = vset.pattern.permute.xlu0 %v1253
    %1255 = vperm.xlu0 %1254, %v198
    %v1256 = vpop.permute.xlu0 %1255
    %v1257 = vlaneseq
    %v1258 = vshrl.u32 %v1257, 7
    %v1259 = vadd.s32 %v1258, 10
    %1260 = vset.pattern.permute.xlu0 %v1259
    %1261 = vperm.xlu0 %1260, %v198
    %v1262 = vpop.permute.xlu0 %1261
    %v1263 = vlaneseq
    %v1264 = vshrl.u32 %v1263, 7
    %v1265 = vadd.s32 %v1264, 2
    %1266 = vset.pattern.permute.xlu0 %v1265
    %1267 = vperm.xlu0 %1266, %v211
    %v1268 = vpop.permute.xlu0 %1267
    %v1269 = vlaneseq
    %v1270 = vshrl.u32 %v1269, 7
    %v1271 = vadd.s32 %v1270, 10
    %1272 = vset.pattern.permute.xlu0 %v1271
    %1273 = vperm.xlu0 %1272, %v211
    %v1274 = vpop.permute.xlu0 %1273
    %v1275 = vlaneseq
    %v1276 = vshrl.u32 %v1275, 7
    %v1277 = vadd.s32 %v1276, 2
    %1278 = vset.pattern.permute.xlu0 %v1277
    %1279 = vperm.xlu0 %1278, %v224
    %v1280 = vpop.permute.xlu0 %1279
    %v1281 = vlaneseq
    %v1282 = vshrl.u32 %v1281, 7
    %v1283 = vadd.s32 %v1282, 10
    %1284 = vset.pattern.permute.xlu0 %v1283
    %1285 = vperm.xlu0 %1284, %v224
    %v1286 = vpop.permute.xlu0 %1285
    %v1287 = vlaneseq
    %v1288 = vshrl.u32 %v1287, 7
    %v1289 = vadd.s32 %v1288, 2
    %1290 = vset.pattern.permute.xlu0 %v1289
    %1291 = vperm.xlu0 %1290, %v237
    %v1292 = vpop.permute.xlu0 %1291
    %v1293 = vlaneseq
    %v1294 = vshrl.u32 %v1293, 7
    %v1295 = vadd.s32 %v1294, 10
    %1296 = vset.pattern.permute.xlu0 %v1295
    %1297 = vperm.xlu0 %1296, %v237
    %v1298 = vpop.permute.xlu0 %1297
    %v1299 = vlaneseq
    %v1300 = vshrl.u32 %v1299, 7
    %v1301 = vadd.s32 %v1300, 2
    %1302 = vset.pattern.permute.xlu0 %v1301
    %1303 = vperm.xlu0 %1302, %v250
    %v1304 = vpop.permute.xlu0 %1303
    %v1305 = vlaneseq
    %v1306 = vshrl.u32 %v1305, 7
    %v1307 = vadd.s32 %v1306, 10
    %1308 = vset.pattern.permute.xlu0 %v1307
    %1309 = vperm.xlu0 %1308, %v250
    %v1310 = vpop.permute.xlu0 %1309
    %v1311 = vlaneseq
    %v1312 = vshrl.u32 %v1311, 7
    %v1313 = vadd.s32 %v1312, 2
    %1314 = vset.pattern.permute.xlu0 %v1313
    %1315 = vperm.xlu0 %1314, %v263
    %v1316 = vpop.permute.xlu0 %1315
    %v1317 = vlaneseq
    %v1318 = vshrl.u32 %v1317, 7
    %v1319 = vadd.s32 %v1318, 10
    %1320 = vset.pattern.permute.xlu0 %v1319
    %1321 = vperm.xlu0 %1320, %v263
    %v1322 = vpop.permute.xlu0 %1321
    %v1323 = vlaneseq
    %v1324 = vshrl.u32 %v1323, 7
    %v1325 = vadd.s32 %v1324, 2
    %1326 = vset.pattern.permute.xlu0 %v1325
    %1327 = vperm.xlu0 %1326, %v276
    %v1328 = vpop.permute.xlu0 %1327
    %v1329 = vlaneseq
    %v1330 = vshrl.u32 %v1329, 7
    %v1331 = vadd.s32 %v1330, 10
    %1332 = vset.pattern.permute.xlu0 %v1331
    %1333 = vperm.xlu0 %1332, %v276
    %v1334 = vpop.permute.xlu0 %1333
    %v1335 = vlaneseq
    %v1336 = vshrl.u32 %v1335, 7
    %v1337 = vadd.s32 %v1336, 2
    %1338 = vset.pattern.permute.xlu0 %v1337
    %1339 = vperm.xlu0 %1338, %v289
    %v1340 = vpop.permute.xlu0 %1339
    %v1341 = vlaneseq
    %v1342 = vshrl.u32 %v1341, 7
    %v1343 = vadd.s32 %v1342, 10
    %1344 = vset.pattern.permute.xlu0 %v1343
    %1345 = vperm.xlu0 %1344, %v289
    %v1346 = vpop.permute.xlu0 %1345
    %v1347 = vlaneseq
    %v1348 = vshrl.u32 %v1347, 7
    %v1349 = vadd.s32 %v1348, 2
    %1350 = vset.pattern.permute.xlu0 %v1349
    %1351 = vperm.xlu0 %1350, %v302
    %v1352 = vpop.permute.xlu0 %1351
    %v1353 = vlaneseq
    %v1354 = vshrl.u32 %v1353, 7
    %v1355 = vadd.s32 %v1354, 10
    %1356 = vset.pattern.permute.xlu0 %v1355
    %1357 = vperm.xlu0 %1356, %v302
    %v1358 = vpop.permute.xlu0 %1357
    %v1359 = vlaneseq
    %v1360 = vshrl.u32 %v1359, 7
    %v1361 = vadd.s32 %v1360, 2
    %1362 = vset.pattern.permute.xlu0 %v1361
    %1363 = vperm.xlu0 %1362, %v315
    %v1364 = vpop.permute.xlu0 %1363
    %v1365 = vlaneseq
    %v1366 = vshrl.u32 %v1365, 7
    %v1367 = vadd.s32 %v1366, 10
    %1368 = vset.pattern.permute.xlu0 %v1367
    %1369 = vperm.xlu0 %1368, %v315
    %v1370 = vpop.permute.xlu0 %1369
    %v1371 = vlaneseq
    %v1372 = vshrl.u32 %v1371, 7
    %v1373 = vadd.s32 %v1372, 2
    %1374 = vset.pattern.permute.xlu0 %v1373
    %1375 = vperm.xlu0 %1374, %v328
    %v1376 = vpop.permute.xlu0 %1375
    %v1377 = vlaneseq
    %v1378 = vshrl.u32 %v1377, 7
    %v1379 = vadd.s32 %v1378, 10
    %1380 = vset.pattern.permute.xlu0 %v1379
    %1381 = vperm.xlu0 %1380, %v328
    %v1382 = vpop.permute.xlu0 %1381
    %v1383 = vlaneseq
    %v1384 = vshrl.u32 %v1383, 7
    %v1385 = vadd.s32 %v1384, 2
    %1386 = vset.pattern.permute.xlu0 %v1385
    %1387 = vperm.xlu0 %1386, %v341
    %v1388 = vpop.permute.xlu0 %1387
    %v1389 = vlaneseq
    %v1390 = vshrl.u32 %v1389, 7
    %v1391 = vadd.s32 %v1390, 10
    %1392 = vset.pattern.permute.xlu0 %v1391
    %1393 = vperm.xlu0 %1392, %v341
    %v1394 = vpop.permute.xlu0 %1393
    %v1395 = vlaneseq
    %v1396 = vshrl.u32 %v1395, 7
    %v1397 = vadd.s32 %v1396, 2
    %1398 = vset.pattern.permute.xlu0 %v1397
    %1399 = vperm.xlu0 %1398, %v354
    %v1400 = vpop.permute.xlu0 %1399
    %v1401 = vlaneseq
    %v1402 = vshrl.u32 %v1401, 7
    %v1403 = vadd.s32 %v1402, 10
    %1404 = vset.pattern.permute.xlu0 %v1403
    %1405 = vperm.xlu0 %1404, %v354
    %v1406 = vpop.permute.xlu0 %1405
    %v1407 = vlaneseq
    %v1408 = vshrl.u32 %v1407, 7
    %v1409 = vadd.s32 %v1408, 2
    %1410 = vset.pattern.permute.xlu0 %v1409
    %1411 = vperm.xlu0 %1410, %v367
    %v1412 = vpop.permute.xlu0 %1411
    %v1413 = vlaneseq
    %v1414 = vshrl.u32 %v1413, 7
    %v1415 = vadd.s32 %v1414, 10
    %1416 = vset.pattern.permute.xlu0 %v1415
    %1417 = vperm.xlu0 %1416, %v367
    %v1418 = vpop.permute.xlu0 %1417
    %v1419 = vlaneseq
    %v1420 = vshrl.u32 %v1419, 7
    %v1421 = vadd.s32 %v1420, 2
    %1422 = vset.pattern.permute.xlu0 %v1421
    %1423 = vperm.xlu0 %1422, %v380
    %v1424 = vpop.permute.xlu0 %1423
    %v1425 = vlaneseq
    %v1426 = vshrl.u32 %v1425, 7
    %v1427 = vadd.s32 %v1426, 10
    %1428 = vset.pattern.permute.xlu0 %v1427
    %1429 = vperm.xlu0 %1428, %v380
    %v1430 = vpop.permute.xlu0 %1429
    %v1431 = vlaneseq
    %v1432 = vshrl.u32 %v1431, 7
    %v1433 = vadd.s32 %v1432, 2
    %1434 = vset.pattern.permute.xlu0 %v1433
    %1435 = vperm.xlu0 %1434, %v393
    %v1436 = vpop.permute.xlu0 %1435
    %v1437 = vlaneseq
    %v1438 = vshrl.u32 %v1437, 7
    %v1439 = vadd.s32 %v1438, 10
    %1440 = vset.pattern.permute.xlu0 %v1439
    %1441 = vperm.xlu0 %1440, %v393
    %v1442 = vpop.permute.xlu0 %1441
    %v1443 = vlaneseq
    %v1444 = vshrl.u32 %v1443, 7
    %v1445 = vadd.s32 %v1444, 2
    %1446 = vset.pattern.permute.xlu0 %v1445
    %1447 = vperm.xlu0 %1446, %v406
    %v1448 = vpop.permute.xlu0 %1447
    %v1449 = vlaneseq
    %v1450 = vshrl.u32 %v1449, 7
    %v1451 = vadd.s32 %v1450, 10
    %1452 = vset.pattern.permute.xlu0 %v1451
    %1453 = vperm.xlu0 %1452, %v406
    %v1454 = vpop.permute.xlu0 %1453
    %v1455 = vlaneseq
    %v1456 = vshrl.u32 %v1455, 7
    %v1457 = vadd.s32 %v1456, 2
    %1458 = vset.pattern.permute.xlu0 %v1457
    %1459 = vperm.xlu0 %1458, %v419
    %v1460 = vpop.permute.xlu0 %1459
    %v1461 = vlaneseq
    %v1462 = vshrl.u32 %v1461, 7
    %v1463 = vadd.s32 %v1462, 10
    %1464 = vset.pattern.permute.xlu0 %v1463
    %1465 = vperm.xlu0 %1464, %v419
    %v1466 = vpop.permute.xlu0 %1465
    %v1467 = vlaneseq
    %v1468 = vshrl.u32 %v1467, 7
    %v1469 = vadd.s32 %v1468, 2
    %1470 = vset.pattern.permute.xlu0 %v1469
    %1471 = vperm.xlu0 %1470, %v432
    %v1472 = vpop.permute.xlu0 %1471
    %v1473 = vlaneseq
    %v1474 = vshrl.u32 %v1473, 7
    %v1475 = vadd.s32 %v1474, 10
    %1476 = vset.pattern.permute.xlu0 %v1475
    %1477 = vperm.xlu0 %1476, %v432
    %v1478 = vpop.permute.xlu0 %1477
    %v1479 = vlaneseq
    %v1480 = vshrl.u32 %v1479, 7
    %v1481 = vadd.s32 %v1480, 2
    %1482 = vset.pattern.permute.xlu0 %v1481
    %1483 = vperm.xlu0 %1482, %v445
    %v1484 = vpop.permute.xlu0 %1483
    %v1485 = vlaneseq
    %v1486 = vshrl.u32 %v1485, 7
    %v1487 = vadd.s32 %v1486, 10
    %1488 = vset.pattern.permute.xlu0 %v1487
    %1489 = vperm.xlu0 %1488, %v445
    %v1490 = vpop.permute.xlu0 %1489
    %v1491 = vlaneseq
    %v1492 = vshrl.u32 %v1491, 7
    %v1493 = vadd.s32 %v1492, 2
    %1494 = vset.pattern.permute.xlu0 %v1493
    %1495 = vperm.xlu0 %1494, %v458
    %v1496 = vpop.permute.xlu0 %1495
    %v1497 = vlaneseq
    %v1498 = vshrl.u32 %v1497, 7
    %v1499 = vadd.s32 %v1498, 10
    %1500 = vset.pattern.permute.xlu0 %v1499
    %1501 = vperm.xlu0 %1500, %v458
    %v1502 = vpop.permute.xlu0 %1501
    %v1503 = vlaneseq
    %v1504 = vshrl.u32 %v1503, 7
    %v1505 = vadd.s32 %v1504, 2
    %1506 = vset.pattern.permute.xlu0 %v1505
    %1507 = vperm.xlu0 %1506, %v471
    %v1508 = vpop.permute.xlu0 %1507
    %v1509 = vlaneseq
    %v1510 = vshrl.u32 %v1509, 7
    %v1511 = vadd.s32 %v1510, 10
    %1512 = vset.pattern.permute.xlu0 %v1511
    %1513 = vperm.xlu0 %1512, %v471
    %v1514 = vpop.permute.xlu0 %1513
    %v1515 = vlaneseq
    %v1516 = vshrl.u32 %v1515, 7
    %v1517 = vadd.s32 %v1516, 2
    %1518 = vset.pattern.permute.xlu0 %v1517
    %1519 = vperm.xlu0 %1518, %v484
    %v1520 = vpop.permute.xlu0 %1519
    %v1521 = vlaneseq
    %v1522 = vshrl.u32 %v1521, 7
    %v1523 = vadd.s32 %v1522, 10
    %1524 = vset.pattern.permute.xlu0 %v1523
    %1525 = vperm.xlu0 %1524, %v484
    %v1526 = vpop.permute.xlu0 %1525
    %v1527 = vlaneseq
    %v1528 = vshrl.u32 %v1527, 7
    %v1529 = vadd.s32 %v1528, 2
    %1530 = vset.pattern.permute.xlu0 %v1529
    %1531 = vperm.xlu0 %1530, %v497
    %v1532 = vpop.permute.xlu0 %1531
    %v1533 = vlaneseq
    %v1534 = vshrl.u32 %v1533, 7
    %v1535 = vadd.s32 %v1534, 10
    %1536 = vset.pattern.permute.xlu0 %v1535
    %1537 = vperm.xlu0 %1536, %v497
    %v1538 = vpop.permute.xlu0 %1537
    %v1539 = vlaneseq
    %v1540 = vshrl.u32 %v1539, 7
    %v1541 = vadd.s32 %v1540, 2
    %1542 = vset.pattern.permute.xlu0 %v1541
    %1543 = vperm.xlu0 %1542, %v510
    %v1544 = vpop.permute.xlu0 %1543
    %v1545 = vlaneseq
    %v1546 = vshrl.u32 %v1545, 7
    %v1547 = vadd.s32 %v1546, 10
    %1548 = vset.pattern.permute.xlu0 %v1547
    %1549 = vperm.xlu0 %1548, %v510
    %v1550 = vpop.permute.xlu0 %1549
    %v1551 = vlaneseq
    %v1552 = vshrl.u32 %v1551, 7
    %v1553 = vadd.s32 %v1552, 2
    %1554 = vset.pattern.permute.xlu0 %v1553
    %1555 = vperm.xlu0 %1554, %v523
    %v1556 = vpop.permute.xlu0 %1555
    %v1557 = vlaneseq
    %v1558 = vshrl.u32 %v1557, 7
    %v1559 = vadd.s32 %v1558, 10
    %1560 = vset.pattern.permute.xlu0 %v1559
    %1561 = vperm.xlu0 %1560, %v523
    %v1562 = vpop.permute.xlu0 %1561
    %v1563 = vlaneseq
    %v1564 = vshrl.u32 %v1563, 7
    %v1565 = vadd.s32 %v1564, 2
    %1566 = vset.pattern.permute.xlu0 %v1565
    %1567 = vperm.xlu0 %1566, %v536
    %v1568 = vpop.permute.xlu0 %1567
    %v1569 = vlaneseq
    %v1570 = vshrl.u32 %v1569, 7
    %v1571 = vadd.s32 %v1570, 10
    %1572 = vset.pattern.permute.xlu0 %v1571
    %1573 = vperm.xlu0 %1572, %v536
    %v1574 = vpop.permute.xlu0 %1573
    %v1575 = vperm.slane %v131, 2
    %v1576 = vmul.f32 %v1196, %v1575
    %v1577 = vmul.f32 %v1202, %v1575
    %v1578 = vmul.f32 %v1208, %v1575
    %v1579 = vmul.f32 %v1214, %v1575
    %v1580 = vmul.f32 %v1220, %v1575
    %v1581 = vmul.f32 %v1226, %v1575
    %v1582 = vmul.f32 %v1232, %v1575
    %v1583 = vmul.f32 %v1238, %v1575
    %v1584 = vmul.f32 %v1244, %v1575
    %v1585 = vmul.f32 %v1250, %v1575
    %v1586 = vmul.f32 %v1256, %v1575
    %v1587 = vmul.f32 %v1262, %v1575
    %v1588 = vmul.f32 %v1268, %v1575
    %v1589 = vmul.f32 %v1274, %v1575
    %v1590 = vmul.f32 %v1280, %v1575
    %v1591 = vmul.f32 %v1286, %v1575
    %v1592 = vmul.f32 %v1292, %v1575
    %v1593 = vmul.f32 %v1298, %v1575
    %v1594 = vmul.f32 %v1304, %v1575
    %v1595 = vmul.f32 %v1310, %v1575
    %v1596 = vmul.f32 %v1316, %v1575
    %v1597 = vmul.f32 %v1322, %v1575
    %v1598 = vmul.f32 %v1328, %v1575
    %v1599 = vmul.f32 %v1334, %v1575
    %v1600 = vmul.f32 %v1340, %v1575
    %v1601 = vmul.f32 %v1346, %v1575
    %v1602 = vmul.f32 %v1352, %v1575
    %v1603 = vmul.f32 %v1358, %v1575
    %v1604 = vmul.f32 %v1364, %v1575
    %v1605 = vmul.f32 %v1370, %v1575
    %v1606 = vmul.f32 %v1376, %v1575
    %v1607 = vmul.f32 %v1382, %v1575
    %v1608 = vmul.f32 %v1388, %v1575
    %v1609 = vmul.f32 %v1394, %v1575
    %v1610 = vmul.f32 %v1400, %v1575
    %v1611 = vmul.f32 %v1406, %v1575
    %v1612 = vmul.f32 %v1412, %v1575
    %v1613 = vmul.f32 %v1418, %v1575
    %v1614 = vmul.f32 %v1424, %v1575
    %v1615 = vmul.f32 %v1430, %v1575
    %v1616 = vmul.f32 %v1436, %v1575
    %v1617 = vmul.f32 %v1442, %v1575
    %v1618 = vmul.f32 %v1448, %v1575
    %v1619 = vmul.f32 %v1454, %v1575
    %v1620 = vmul.f32 %v1460, %v1575
    %v1621 = vmul.f32 %v1466, %v1575
    %v1622 = vmul.f32 %v1472, %v1575
    %v1623 = vmul.f32 %v1478, %v1575
    %v1624 = vmul.f32 %v1484, %v1575
    %v1625 = vmul.f32 %v1490, %v1575
    %v1626 = vmul.f32 %v1496, %v1575
    %v1627 = vmul.f32 %v1502, %v1575
    %v1628 = vmul.f32 %v1508, %v1575
    %v1629 = vmul.f32 %v1514, %v1575
    %v1630 = vmul.f32 %v1520, %v1575
    %v1631 = vmul.f32 %v1526, %v1575
    %v1632 = vmul.f32 %v1532, %v1575
    %v1633 = vmul.f32 %v1538, %v1575
    %v1634 = vmul.f32 %v1544, %v1575
    %v1635 = vmul.f32 %v1550, %v1575
    %v1636 = vmul.f32 %v1556, %v1575
    %v1637 = vmul.f32 %v1562, %v1575
    %v1638 = vmul.f32 %v1568, %v1575
    %v1639 = vmul.f32 %v1574, %v1575
    %v1640 = vadd.f32 %v1127, %v1576
    %v1641 = vadd.f32 %v1128, %v1577
    %v1642 = vadd.f32 %v1129, %v1578
    %v1643 = vadd.f32 %v1130, %v1579
    %v1644 = vadd.f32 %v1131, %v1580
    %v1645 = vadd.f32 %v1132, %v1581
    %v1646 = vadd.f32 %v1133, %v1582
    %v1647 = vadd.f32 %v1134, %v1583
    %v1648 = vadd.f32 %v1135, %v1584
    %v1649 = vadd.f32 %v1136, %v1585
    %v1650 = vadd.f32 %v1137, %v1586
    %v1651 = vadd.f32 %v1138, %v1587
    %v1652 = vadd.f32 %v1139, %v1588
    %v1653 = vadd.f32 %v1140, %v1589
    %v1654 = vadd.f32 %v1141, %v1590
    %v1655 = vadd.f32 %v1142, %v1591
    %v1656 = vadd.f32 %v1143, %v1592
    %v1657 = vadd.f32 %v1144, %v1593
    %v1658 = vadd.f32 %v1145, %v1594
    %v1659 = vadd.f32 %v1146, %v1595
    %v1660 = vadd.f32 %v1147, %v1596
    %v1661 = vadd.f32 %v1148, %v1597
    %v1662 = vadd.f32 %v1149, %v1598
    %v1663 = vadd.f32 %v1150, %v1599
    %v1664 = vadd.f32 %v1151, %v1600
    %v1665 = vadd.f32 %v1152, %v1601
    %v1666 = vadd.f32 %v1153, %v1602
    %v1667 = vadd.f32 %v1154, %v1603
    %v1668 = vadd.f32 %v1155, %v1604
    %v1669 = vadd.f32 %v1156, %v1605
    %v1670 = vadd.f32 %v1157, %v1606
    %v1671 = vadd.f32 %v1158, %v1607
    %v1672 = vadd.f32 %v1159, %v1608
    %v1673 = vadd.f32 %v1160, %v1609
    %v1674 = vadd.f32 %v1161, %v1610
    %v1675 = vadd.f32 %v1162, %v1611
    %v1676 = vadd.f32 %v1163, %v1612
    %v1677 = vadd.f32 %v1164, %v1613
    %v1678 = vadd.f32 %v1165, %v1614
    %v1679 = vadd.f32 %v1166, %v1615
    %v1680 = vadd.f32 %v1167, %v1616
    %v1681 = vadd.f32 %v1168, %v1617
    %v1682 = vadd.f32 %v1169, %v1618
    %v1683 = vadd.f32 %v1170, %v1619
    %v1684 = vadd.f32 %v1171, %v1620
    %v1685 = vadd.f32 %v1172, %v1621
    %v1686 = vadd.f32 %v1173, %v1622
    %v1687 = vadd.f32 %v1174, %v1623
    %v1688 = vadd.f32 %v1175, %v1624
    %v1689 = vadd.f32 %v1176, %v1625
    %v1690 = vadd.f32 %v1177, %v1626
    %v1691 = vadd.f32 %v1178, %v1627
    %v1692 = vadd.f32 %v1179, %v1628
    %v1693 = vadd.f32 %v1180, %v1629
    %v1694 = vadd.f32 %v1181, %v1630
    %v1695 = vadd.f32 %v1182, %v1631
    %v1696 = vadd.f32 %v1183, %v1632
    %v1697 = vadd.f32 %v1184, %v1633
    %v1698 = vadd.f32 %v1185, %v1634
    %v1699 = vadd.f32 %v1186, %v1635
    %v1700 = vadd.f32 %v1187, %v1636
    %v1701 = vadd.f32 %v1188, %v1637
    %v1702 = vadd.f32 %v1189, %v1638
    %v1703 = vadd.f32 %v1190, %v1639
    %v1704 = vperm.slane %v127, 0
    %v1705 = vlaneseq
    %v1706 = vshrl.u32 %v1705, 7
    %1708 = vset.pattern.permute.xlu0 %v1706
    %1709 = vperm.xlu0 %1708, %v1704
    %v1710 = vpop.permute.xlu0 %1709
    %v1711 = vlaneseq
    %v1712 = vshrl.u32 %v1711, 7
    %v1713 = vadd.s32 %v1712, 8
    %1714 = vset.pattern.permute.xlu0 %v1713
    %1715 = vperm.xlu0 %1714, %v1704
    %v1716 = vpop.permute.xlu0 %1715
    %v1717 = vperm.slane %v130, 0
    %v1718 = vlaneseq
    %v1719 = vshrl.u32 %v1718, 7
    %1721 = vset.pattern.permute.xlu0 %v1719
    %1722 = vperm.xlu0 %1721, %v1717
    %v1723 = vpop.permute.xlu0 %1722
    %v1724 = vlaneseq
    %v1725 = vshrl.u32 %v1724, 7
    %v1726 = vadd.s32 %v1725, 8
    %1727 = vset.pattern.permute.xlu0 %v1726
    %1728 = vperm.xlu0 %1727, %v1717
    %v1729 = vpop.permute.xlu0 %1728
    %v1730 = vperm.slane %v131, 3
    %v1731 = vmul.f32 %v152, %v1730
    %v1732 = vmul.f32 %v158, %v1730
    %v1733 = vmul.f32 %v165, %v1730
    %v1734 = vmul.f32 %v171, %v1730
    %v1735 = vmul.f32 %v178, %v1730
    %v1736 = vmul.f32 %v184, %v1730
    %v1737 = vmul.f32 %v191, %v1730
    %v1738 = vmul.f32 %v197, %v1730
    %v1739 = vmul.f32 %v204, %v1730
    %v1740 = vmul.f32 %v210, %v1730
    %v1741 = vmul.f32 %v217, %v1730
    %v1742 = vmul.f32 %v223, %v1730
    %v1743 = vmul.f32 %v230, %v1730
    %v1744 = vmul.f32 %v236, %v1730
    %v1745 = vmul.f32 %v243, %v1730
    %v1746 = vmul.f32 %v249, %v1730
    %v1747 = vmul.f32 %v256, %v1730
    %v1748 = vmul.f32 %v262, %v1730
    %v1749 = vmul.f32 %v269, %v1730
    %v1750 = vmul.f32 %v275, %v1730
    %v1751 = vmul.f32 %v282, %v1730
    %v1752 = vmul.f32 %v288, %v1730
    %v1753 = vmul.f32 %v295, %v1730
    %v1754 = vmul.f32 %v301, %v1730
    %v1755 = vmul.f32 %v308, %v1730
    %v1756 = vmul.f32 %v314, %v1730
    %v1757 = vmul.f32 %v321, %v1730
    %v1758 = vmul.f32 %v327, %v1730
    %v1759 = vmul.f32 %v334, %v1730
    %v1760 = vmul.f32 %v340, %v1730
    %v1761 = vmul.f32 %v1710, %v1730
    %v1762 = vmul.f32 %v1716, %v1730
    %v1763 = vmul.f32 %v360, %v1730
    %v1764 = vmul.f32 %v366, %v1730
    %v1765 = vmul.f32 %v373, %v1730
    %v1766 = vmul.f32 %v379, %v1730
    %v1767 = vmul.f32 %v386, %v1730
    %v1768 = vmul.f32 %v392, %v1730
    %v1769 = vmul.f32 %v399, %v1730
    %v1770 = vmul.f32 %v405, %v1730
    %v1771 = vmul.f32 %v412, %v1730
    %v1772 = vmul.f32 %v418, %v1730
    %v1773 = vmul.f32 %v425, %v1730
    %v1774 = vmul.f32 %v431, %v1730
    %v1775 = vmul.f32 %v438, %v1730
    %v1776 = vmul.f32 %v444, %v1730
    %v1777 = vmul.f32 %v451, %v1730
    %v1778 = vmul.f32 %v457, %v1730
    %v1779 = vmul.f32 %v464, %v1730
    %v1780 = vmul.f32 %v470, %v1730
    %v1781 = vmul.f32 %v477, %v1730
    %v1782 = vmul.f32 %v483, %v1730
    %v1783 = vmul.f32 %v490, %v1730
    %v1784 = vmul.f32 %v496, %v1730
    %v1785 = vmul.f32 %v503, %v1730
    %v1786 = vmul.f32 %v509, %v1730
    %v1787 = vmul.f32 %v516, %v1730
    %v1788 = vmul.f32 %v522, %v1730
    %v1789 = vmul.f32 %v529, %v1730
    %v1790 = vmul.f32 %v535, %v1730
    %v1791 = vmul.f32 %v542, %v1730
    %v1792 = vmul.f32 %v548, %v1730
    %v1793 = vmul.f32 %v1723, %v1730
    %v1794 = vmul.f32 %v1729, %v1730
    %v1795 = vadd.f32 %v1640, %v1731
    %v1796 = vadd.f32 %v1641, %v1732
    %v1797 = vadd.f32 %v1642, %v1733
    %v1798 = vadd.f32 %v1643, %v1734
    %v1799 = vadd.f32 %v1644, %v1735
    %v1800 = vadd.f32 %v1645, %v1736
    %v1801 = vadd.f32 %v1646, %v1737
    %v1802 = vadd.f32 %v1647, %v1738
    %v1803 = vadd.f32 %v1648, %v1739
    %v1804 = vadd.f32 %v1649, %v1740
    %v1805 = vadd.f32 %v1650, %v1741
    %v1806 = vadd.f32 %v1651, %v1742
    %v1807 = vadd.f32 %v1652, %v1743
    %v1808 = vadd.f32 %v1653, %v1744
    %v1809 = vadd.f32 %v1654, %v1745
    %v1810 = vadd.f32 %v1655, %v1746
    %v1811 = vadd.f32 %v1656, %v1747
    %v1812 = vadd.f32 %v1657, %v1748
    %v1813 = vadd.f32 %v1658, %v1749
    %v1814 = vadd.f32 %v1659, %v1750
    %v1815 = vadd.f32 %v1660, %v1751
    %v1816 = vadd.f32 %v1661, %v1752
    %v1817 = vadd.f32 %v1662, %v1753
    %v1818 = vadd.f32 %v1663, %v1754
    %v1819 = vadd.f32 %v1664, %v1755
    %v1820 = vadd.f32 %v1665, %v1756
    %v1821 = vadd.f32 %v1666, %v1757
    %v1822 = vadd.f32 %v1667, %v1758
    %v1823 = vadd.f32 %v1668, %v1759
    %v1824 = vadd.f32 %v1669, %v1760
    %v1825 = vadd.f32 %v1670, %v1761
    %v1826 = vadd.f32 %v1671, %v1762
    %v1827 = vadd.f32 %v1672, %v1763
    %v1828 = vadd.f32 %v1673, %v1764
    %v1829 = vadd.f32 %v1674, %v1765
    %v1830 = vadd.f32 %v1675, %v1766
    %v1831 = vadd.f32 %v1676, %v1767
    %v1832 = vadd.f32 %v1677, %v1768
    %v1833 = vadd.f32 %v1678, %v1769
    %v1834 = vadd.f32 %v1679, %v1770
    %v1835 = vadd.f32 %v1680, %v1771
    %v1836 = vadd.f32 %v1681, %v1772
    %v1837 = vadd.f32 %v1682, %v1773
    %v1838 = vadd.f32 %v1683, %v1774
    %v1839 = vadd.f32 %v1684, %v1775
    %v1840 = vadd.f32 %v1685, %v1776
    %v1841 = vadd.f32 %v1686, %v1777
    %v1842 = vadd.f32 %v1687, %v1778
    %v1843 = vadd.f32 %v1688, %v1779
    %v1844 = vadd.f32 %v1689, %v1780
    %v1845 = vadd.f32 %v1690, %v1781
    %v1846 = vadd.f32 %v1691, %v1782
    %v1847 = vadd.f32 %v1692, %v1783
    %v1848 = vadd.f32 %v1693, %v1784
    %v1849 = vadd.f32 %v1694, %v1785
    %v1850 = vadd.f32 %v1695, %v1786
    %v1851 = vadd.f32 %v1696, %v1787
    %v1852 = vadd.f32 %v1697, %v1788
    %v1853 = vadd.f32 %v1698, %v1789
    %v1854 = vadd.f32 %v1699, %v1790
    %v1855 = vadd.f32 %v1700, %v1791
    %v1856 = vadd.f32 %v1701, %v1792
    %v1857 = vadd.f32 %v1702, %v1793
    %v1858 = vadd.f32 %v1703, %v1794
    %v1859 = vlaneseq
    %v1860 = vshrl.u32 %v1859, 7
    %v1861 = vadd.s32 %v1860, 1
    %1862 = vset.pattern.permute.xlu0 %v1861
    %1863 = vperm.xlu0 %1862, %v1704
    %v1864 = vpop.permute.xlu0 %1863
    %v1865 = vlaneseq
    %v1866 = vshrl.u32 %v1865, 7
    %v1867 = vadd.s32 %v1866, 9
    %1868 = vset.pattern.permute.xlu0 %v1867
    %1869 = vperm.xlu0 %1868, %v1704
    %v1870 = vpop.permute.xlu0 %1869
    %v1871 = vlaneseq
    %v1872 = vshrl.u32 %v1871, 7
    %v1873 = vadd.s32 %v1872, 1
    %1874 = vset.pattern.permute.xlu0 %v1873
    %1875 = vperm.xlu0 %1874, %v1717
    %v1876 = vpop.permute.xlu0 %1875
    %v1877 = vlaneseq
    %v1878 = vshrl.u32 %v1877, 7
    %v1879 = vadd.s32 %v1878, 9
    %1880 = vset.pattern.permute.xlu0 %v1879
    %1881 = vperm.xlu0 %1880, %v1717
    %v1882 = vpop.permute.xlu0 %1881
    %v1883 = vperm.slane %v131, 4
    %v1884 = vmul.f32 %v695, %v1883
    %v1885 = vmul.f32 %v701, %v1883
    %v1886 = vmul.f32 %v707, %v1883
    %v1887 = vmul.f32 %v713, %v1883
    %v1888 = vmul.f32 %v719, %v1883
    %v1889 = vmul.f32 %v725, %v1883
    %v1890 = vmul.f32 %v731, %v1883
    %v1891 = vmul.f32 %v737, %v1883
    %v1892 = vmul.f32 %v743, %v1883
    %v1893 = vmul.f32 %v749, %v1883
    %v1894 = vmul.f32 %v755, %v1883
    %v1895 = vmul.f32 %v761, %v1883
    %v1896 = vmul.f32 %v767, %v1883
    %v1897 = vmul.f32 %v773, %v1883
    %v1898 = vmul.f32 %v779, %v1883
    %v1899 = vmul.f32 %v785, %v1883
    %v1900 = vmul.f32 %v791, %v1883
    %v1901 = vmul.f32 %v797, %v1883
    %v1902 = vmul.f32 %v803, %v1883
    %v1903 = vmul.f32 %v809, %v1883
    %v1904 = vmul.f32 %v815, %v1883
    %v1905 = vmul.f32 %v821, %v1883
    %v1906 = vmul.f32 %v827, %v1883
    %v1907 = vmul.f32 %v833, %v1883
    %v1908 = vmul.f32 %v839, %v1883
    %v1909 = vmul.f32 %v845, %v1883
    %v1910 = vmul.f32 %v851, %v1883
    %v1911 = vmul.f32 %v857, %v1883
    %v1912 = vmul.f32 %v863, %v1883
    %v1913 = vmul.f32 %v869, %v1883
    %v1914 = vmul.f32 %v1864, %v1883
    %v1915 = vmul.f32 %v1870, %v1883
    %v1916 = vmul.f32 %v887, %v1883
    %v1917 = vmul.f32 %v893, %v1883
    %v1918 = vmul.f32 %v899, %v1883
    %v1919 = vmul.f32 %v905, %v1883
    %v1920 = vmul.f32 %v911, %v1883
    %v1921 = vmul.f32 %v917, %v1883
    %v1922 = vmul.f32 %v923, %v1883
    %v1923 = vmul.f32 %v929, %v1883
    %v1924 = vmul.f32 %v935, %v1883
    %v1925 = vmul.f32 %v941, %v1883
    %v1926 = vmul.f32 %v947, %v1883
    %v1927 = vmul.f32 %v953, %v1883
    %v1928 = vmul.f32 %v959, %v1883
    %v1929 = vmul.f32 %v965, %v1883
    %v1930 = vmul.f32 %v971, %v1883
    %v1931 = vmul.f32 %v977, %v1883
    %v1932 = vmul.f32 %v983, %v1883
    %v1933 = vmul.f32 %v989, %v1883
    %v1934 = vmul.f32 %v995, %v1883
    %v1935 = vmul.f32 %v1001, %v1883
    %v1936 = vmul.f32 %v1007, %v1883
    %v1937 = vmul.f32 %v1013, %v1883
    %v1938 = vmul.f32 %v1019, %v1883
    %v1939 = vmul.f32 %v1025, %v1883
    %v1940 = vmul.f32 %v1031, %v1883
    %v1941 = vmul.f32 %v1037, %v1883
    %v1942 = vmul.f32 %v1043, %v1883
    %v1943 = vmul.f32 %v1049, %v1883
    %v1944 = vmul.f32 %v1055, %v1883
    %v1945 = vmul.f32 %v1061, %v1883
    %v1946 = vmul.f32 %v1876, %v1883
    %v1947 = vmul.f32 %v1882, %v1883
    %v1948 = vadd.f32 %v1795, %v1884
    %v1949 = vadd.f32 %v1796, %v1885
    %v1950 = vadd.f32 %v1797, %v1886
    %v1951 = vadd.f32 %v1798, %v1887
    %v1952 = vadd.f32 %v1799, %v1888
    %v1953 = vadd.f32 %v1800, %v1889
    %v1954 = vadd.f32 %v1801, %v1890
    %v1955 = vadd.f32 %v1802, %v1891
    %v1956 = vadd.f32 %v1803, %v1892
    %v1957 = vadd.f32 %v1804, %v1893
    %v1958 = vadd.f32 %v1805, %v1894
    %v1959 = vadd.f32 %v1806, %v1895
    %v1960 = vadd.f32 %v1807, %v1896
    %v1961 = vadd.f32 %v1808, %v1897
    %v1962 = vadd.f32 %v1809, %v1898
    %v1963 = vadd.f32 %v1810, %v1899
    %v1964 = vadd.f32 %v1811, %v1900
    %v1965 = vadd.f32 %v1812, %v1901
    %v1966 = vadd.f32 %v1813, %v1902
    %v1967 = vadd.f32 %v1814, %v1903
    %v1968 = vadd.f32 %v1815, %v1904
    %v1969 = vadd.f32 %v1816, %v1905
    %v1970 = vadd.f32 %v1817, %v1906
    %v1971 = vadd.f32 %v1818, %v1907
    %v1972 = vadd.f32 %v1819, %v1908
    %v1973 = vadd.f32 %v1820, %v1909
    %v1974 = vadd.f32 %v1821, %v1910
    %v1975 = vadd.f32 %v1822, %v1911
    %v1976 = vadd.f32 %v1823, %v1912
    %v1977 = vadd.f32 %v1824, %v1913
    %v1978 = vadd.f32 %v1825, %v1914
    %v1979 = vadd.f32 %v1826, %v1915
    %v1980 = vadd.f32 %v1827, %v1916
    %v1981 = vadd.f32 %v1828, %v1917
    %v1982 = vadd.f32 %v1829, %v1918
    %v1983 = vadd.f32 %v1830, %v1919
    %v1984 = vadd.f32 %v1831, %v1920
    %v1985 = vadd.f32 %v1832, %v1921
    %v1986 = vadd.f32 %v1833, %v1922
    %v1987 = vadd.f32 %v1834, %v1923
    %v1988 = vadd.f32 %v1835, %v1924
    %v1989 = vadd.f32 %v1836, %v1925
    %v1990 = vadd.f32 %v1837, %v1926
    %v1991 = vadd.f32 %v1838, %v1927
    %v1992 = vadd.f32 %v1839, %v1928
    %v1993 = vadd.f32 %v1840, %v1929
    %v1994 = vadd.f32 %v1841, %v1930
    %v1995 = vadd.f32 %v1842, %v1931
    %v1996 = vadd.f32 %v1843, %v1932
    %v1997 = vadd.f32 %v1844, %v1933
    %v1998 = vadd.f32 %v1845, %v1934
    %v1999 = vadd.f32 %v1846, %v1935
    %v2000 = vadd.f32 %v1847, %v1936
    %v2001 = vadd.f32 %v1848, %v1937
    %v2002 = vadd.f32 %v1849, %v1938
    %v2003 = vadd.f32 %v1850, %v1939
    %v2004 = vadd.f32 %v1851, %v1940
    %v2005 = vadd.f32 %v1852, %v1941
    %v2006 = vadd.f32 %v1853, %v1942
    %v2007 = vadd.f32 %v1854, %v1943
    %v2008 = vadd.f32 %v1855, %v1944
    %v2009 = vadd.f32 %v1856, %v1945
    %v2010 = vadd.f32 %v1857, %v1946
    %v2011 = vadd.f32 %v1858, %v1947
    %v2012 = vlaneseq
    %v2013 = vshrl.u32 %v2012, 7
    %v2014 = vadd.s32 %v2013, 2
    %2015 = vset.pattern.permute.xlu0 %v2014
    %2016 = vperm.xlu0 %2015, %v1704
    %v2017 = vpop.permute.xlu0 %2016
    %v2018 = vlaneseq
    %v2019 = vshrl.u32 %v2018, 7
    %v2020 = vadd.s32 %v2019, 10
    %2021 = vset.pattern.permute.xlu0 %v2020
    %2022 = vperm.xlu0 %2021, %v1704
    %v2023 = vpop.permute.xlu0 %2022
    %v2024 = vlaneseq
    %v2025 = vshrl.u32 %v2024, 7
    %v2026 = vadd.s32 %v2025, 2
    %2027 = vset.pattern.permute.xlu0 %v2026
    %2028 = vperm.xlu0 %2027, %v1717
    %v2029 = vpop.permute.xlu0 %2028
    %v2030 = vlaneseq
    %v2031 = vshrl.u32 %v2030, 7
    %v2032 = vadd.s32 %v2031, 10
    %2033 = vset.pattern.permute.xlu0 %v2032
    %2034 = vperm.xlu0 %2033, %v1717
    %v2035 = vpop.permute.xlu0 %2034
    %v2036 = vperm.slane %v131, 5
    %v2037 = vmul.f32 %v1208, %v2036
    %v2038 = vmul.f32 %v1214, %v2036
    %v2039 = vmul.f32 %v1220, %v2036
    %v2040 = vmul.f32 %v1226, %v2036
    %v2041 = vmul.f32 %v1232, %v2036
    %v2042 = vmul.f32 %v1238, %v2036
    %v2043 = vmul.f32 %v1244, %v2036
    %v2044 = vmul.f32 %v1250, %v2036
    %v2045 = vmul.f32 %v1256, %v2036
    %v2046 = vmul.f32 %v1262, %v2036
    %v2047 = vmul.f32 %v1268, %v2036
    %v2048 = vmul.f32 %v1274, %v2036
    %v2049 = vmul.f32 %v1280, %v2036
    %v2050 = vmul.f32 %v1286, %v2036
    %v2051 = vmul.f32 %v1292, %v2036
    %v2052 = vmul.f32 %v1298, %v2036
    %v2053 = vmul.f32 %v1304, %v2036
    %v2054 = vmul.f32 %v1310, %v2036
    %v2055 = vmul.f32 %v1316, %v2036
    %v2056 = vmul.f32 %v1322, %v2036
    %v2057 = vmul.f32 %v1328, %v2036
    %v2058 = vmul.f32 %v1334, %v2036
    %v2059 = vmul.f32 %v1340, %v2036
    %v2060 = vmul.f32 %v1346, %v2036
    %v2061 = vmul.f32 %v1352, %v2036
    %v2062 = vmul.f32 %v1358, %v2036
    %v2063 = vmul.f32 %v1364, %v2036
    %v2064 = vmul.f32 %v1370, %v2036
    %v2065 = vmul.f32 %v1376, %v2036
    %v2066 = vmul.f32 %v1382, %v2036
    %v2067 = vmul.f32 %v2017, %v2036
    %v2068 = vmul.f32 %v2023, %v2036
    %v2069 = vmul.f32 %v1400, %v2036
    %v2070 = vmul.f32 %v1406, %v2036
    %v2071 = vmul.f32 %v1412, %v2036
    %v2072 = vmul.f32 %v1418, %v2036
    %v2073 = vmul.f32 %v1424, %v2036
    %v2074 = vmul.f32 %v1430, %v2036
    %v2075 = vmul.f32 %v1436, %v2036
    %v2076 = vmul.f32 %v1442, %v2036
    %v2077 = vmul.f32 %v1448, %v2036
    %v2078 = vmul.f32 %v1454, %v2036
    %v2079 = vmul.f32 %v1460, %v2036
    %v2080 = vmul.f32 %v1466, %v2036
    %v2081 = vmul.f32 %v1472, %v2036
    %v2082 = vmul.f32 %v1478, %v2036
    %v2083 = vmul.f32 %v1484, %v2036
    %v2084 = vmul.f32 %v1490, %v2036
    %v2085 = vmul.f32 %v1496, %v2036
    %v2086 = vmul.f32 %v1502, %v2036
    %v2087 = vmul.f32 %v1508, %v2036
    %v2088 = vmul.f32 %v1514, %v2036
    %v2089 = vmul.f32 %v1520, %v2036
    %v2090 = vmul.f32 %v1526, %v2036
    %v2091 = vmul.f32 %v1532, %v2036
    %v2092 = vmul.f32 %v1538, %v2036
    %v2093 = vmul.f32 %v1544, %v2036
    %v2094 = vmul.f32 %v1550, %v2036
    %v2095 = vmul.f32 %v1556, %v2036
    %v2096 = vmul.f32 %v1562, %v2036
    %v2097 = vmul.f32 %v1568, %v2036
    %v2098 = vmul.f32 %v1574, %v2036
    %v2099 = vmul.f32 %v2029, %v2036
    %v2100 = vmul.f32 %v2035, %v2036
    %v2101 = vadd.f32 %v1948, %v2037
    %v2102 = vadd.f32 %v1949, %v2038
    %v2103 = vadd.f32 %v1950, %v2039
    %v2104 = vadd.f32 %v1951, %v2040
    %v2105 = vadd.f32 %v1952, %v2041
    %v2106 = vadd.f32 %v1953, %v2042
    %v2107 = vadd.f32 %v1954, %v2043
    %v2108 = vadd.f32 %v1955, %v2044
    %v2109 = vadd.f32 %v1956, %v2045
    %v2110 = vadd.f32 %v1957, %v2046
    %v2111 = vadd.f32 %v1958, %v2047
    %v2112 = vadd.f32 %v1959, %v2048
    %v2113 = vadd.f32 %v1960, %v2049
    %v2114 = vadd.f32 %v1961, %v2050
    %v2115 = vadd.f32 %v1962, %v2051
    %v2116 = vadd.f32 %v1963, %v2052
    %v2117 = vadd.f32 %v1964, %v2053
    %v2118 = vadd.f32 %v1965, %v2054
    %v2119 = vadd.f32 %v1966, %v2055
    %v2120 = vadd.f32 %v1967, %v2056
    %v2121 = vadd.f32 %v1968, %v2057
    %v2122 = vadd.f32 %v1969, %v2058
    %v2123 = vadd.f32 %v1970, %v2059
    %v2124 = vadd.f32 %v1971, %v2060
    %v2125 = vadd.f32 %v1972, %v2061
    %v2126 = vadd.f32 %v1973, %v2062
    %v2127 = vadd.f32 %v1974, %v2063
    %v2128 = vadd.f32 %v1975, %v2064
    %v2129 = vadd.f32 %v1976, %v2065
    %v2130 = vadd.f32 %v1977, %v2066
    %v2131 = vadd.f32 %v1978, %v2067
    %v2132 = vadd.f32 %v1979, %v2068
    %v2133 = vadd.f32 %v1980, %v2069
    %v2134 = vadd.f32 %v1981, %v2070
    %v2135 = vadd.f32 %v1982, %v2071
    %v2136 = vadd.f32 %v1983, %v2072
    %v2137 = vadd.f32 %v1984, %v2073
    %v2138 = vadd.f32 %v1985, %v2074
    %v2139 = vadd.f32 %v1986, %v2075
    %v2140 = vadd.f32 %v1987, %v2076
    %v2141 = vadd.f32 %v1988, %v2077
    %v2142 = vadd.f32 %v1989, %v2078
    %v2143 = vadd.f32 %v1990, %v2079
    %v2144 = vadd.f32 %v1991, %v2080
    %v2145 = vadd.f32 %v1992, %v2081
    %v2146 = vadd.f32 %v1993, %v2082
    %v2147 = vadd.f32 %v1994, %v2083
    %v2148 = vadd.f32 %v1995, %v2084
    %v2149 = vadd.f32 %v1996, %v2085
    %v2150 = vadd.f32 %v1997, %v2086
    %v2151 = vadd.f32 %v1998, %v2087
    %v2152 = vadd.f32 %v1999, %v2088
    %v2153 = vadd.f32 %v2000, %v2089
    %v2154 = vadd.f32 %v2001, %v2090
    %v2155 = vadd.f32 %v2002, %v2091
    %v2156 = vadd.f32 %v2003, %v2092
    %v2157 = vadd.f32 %v2004, %v2093
    %v2158 = vadd.f32 %v2005, %v2094
    %v2159 = vadd.f32 %v2006, %v2095
    %v2160 = vadd.f32 %v2007, %v2096
    %v2161 = vadd.f32 %v2008, %v2097
    %v2162 = vadd.f32 %v2009, %v2098
    %v2163 = vadd.f32 %v2010, %v2099
    %v2164 = vadd.f32 %v2011, %v2100
    %v2165 = vperm.slane %v127, 1
    %v2166 = vlaneseq
    %v2167 = vshrl.u32 %v2166, 7
    %2169 = vset.pattern.permute.xlu0 %v2167
    %2170 = vperm.xlu0 %2169, %v2165
    %v2171 = vpop.permute.xlu0 %2170
    %v2172 = vlaneseq
    %v2173 = vshrl.u32 %v2172, 7
    %v2174 = vadd.s32 %v2173, 8
    %2175 = vset.pattern.permute.xlu0 %v2174
    %2176 = vperm.xlu0 %2175, %v2165
    %v2177 = vpop.permute.xlu0 %2176
    %v2178 = vperm.slane %v130, 1
    %v2179 = vlaneseq
    %v2180 = vshrl.u32 %v2179, 7
    %2182 = vset.pattern.permute.xlu0 %v2180
    %2183 = vperm.xlu0 %2182, %v2178
    %v2184 = vpop.permute.xlu0 %2183
    %v2185 = vlaneseq
    %v2186 = vshrl.u32 %v2185, 7
    %v2187 = vadd.s32 %v2186, 8
    %2188 = vset.pattern.permute.xlu0 %v2187
    %2189 = vperm.xlu0 %2188, %v2178
    %v2190 = vpop.permute.xlu0 %2189
    %v2191 = vperm.slane %v131, 6
    %v2192 = vmul.f32 %v165, %v2191
    %v2193 = vmul.f32 %v171, %v2191
    %v2194 = vmul.f32 %v178, %v2191
    %v2195 = vmul.f32 %v184, %v2191
    %v2196 = vmul.f32 %v191, %v2191
    %v2197 = vmul.f32 %v197, %v2191
    %v2198 = vmul.f32 %v204, %v2191
    %v2199 = vmul.f32 %v210, %v2191
    %v2200 = vmul.f32 %v217, %v2191
    %v2201 = vmul.f32 %v223, %v2191
    %v2202 = vmul.f32 %v230, %v2191
    %v2203 = vmul.f32 %v236, %v2191
    %v2204 = vmul.f32 %v243, %v2191
    %v2205 = vmul.f32 %v249, %v2191
    %v2206 = vmul.f32 %v256, %v2191
    %v2207 = vmul.f32 %v262, %v2191
    %v2208 = vmul.f32 %v269, %v2191
    %v2209 = vmul.f32 %v275, %v2191
    %v2210 = vmul.f32 %v282, %v2191
    %v2211 = vmul.f32 %v288, %v2191
    %v2212 = vmul.f32 %v295, %v2191
    %v2213 = vmul.f32 %v301, %v2191
    %v2214 = vmul.f32 %v308, %v2191
    %v2215 = vmul.f32 %v314, %v2191
    %v2216 = vmul.f32 %v321, %v2191
    %v2217 = vmul.f32 %v327, %v2191
    %v2218 = vmul.f32 %v334, %v2191
    %v2219 = vmul.f32 %v340, %v2191
    %v2220 = vmul.f32 %v1710, %v2191
    %v2221 = vmul.f32 %v1716, %v2191
    %v2222 = vmul.f32 %v2171, %v2191
    %v2223 = vmul.f32 %v2177, %v2191
    %v2224 = vmul.f32 %v373, %v2191
    %v2225 = vmul.f32 %v379, %v2191
    %v2226 = vmul.f32 %v386, %v2191
    %v2227 = vmul.f32 %v392, %v2191
    %v2228 = vmul.f32 %v399, %v2191
    %v2229 = vmul.f32 %v405, %v2191
    %v2230 = vmul.f32 %v412, %v2191
    %v2231 = vmul.f32 %v418, %v2191
    %v2232 = vmul.f32 %v425, %v2191
    %v2233 = vmul.f32 %v431, %v2191
    %v2234 = vmul.f32 %v438, %v2191
    %v2235 = vmul.f32 %v444, %v2191
    %v2236 = vmul.f32 %v451, %v2191
    %v2237 = vmul.f32 %v457, %v2191
    %v2238 = vmul.f32 %v464, %v2191
    %v2239 = vmul.f32 %v470, %v2191
    %v2240 = vmul.f32 %v477, %v2191
    %v2241 = vmul.f32 %v483, %v2191
    %v2242 = vmul.f32 %v490, %v2191
    %v2243 = vmul.f32 %v496, %v2191
    %v2244 = vmul.f32 %v503, %v2191
    %v2245 = vmul.f32 %v509, %v2191
    %v2246 = vmul.f32 %v516, %v2191
    %v2247 = vmul.f32 %v522, %v2191
    %v2248 = vmul.f32 %v529, %v2191
    %v2249 = vmul.f32 %v535, %v2191
    %v2250 = vmul.f32 %v542, %v2191
    %v2251 = vmul.f32 %v548, %v2191
    %v2252 = vmul.f32 %v1723, %v2191
    %v2253 = vmul.f32 %v1729, %v2191
    %v2254 = vmul.f32 %v2184, %v2191
    %v2255 = vmul.f32 %v2190, %v2191
    %v2256 = vadd.f32 %v2101, %v2192
    %v2257 = vadd.f32 %v2102, %v2193
    %v2258 = vadd.f32 %v2103, %v2194
    %v2259 = vadd.f32 %v2104, %v2195
    %v2260 = vadd.f32 %v2105, %v2196
    %v2261 = vadd.f32 %v2106, %v2197
    %v2262 = vadd.f32 %v2107, %v2198
    %v2263 = vadd.f32 %v2108, %v2199
    %v2264 = vadd.f32 %v2109, %v2200
    %v2265 = vadd.f32 %v2110, %v2201
    %v2266 = vadd.f32 %v2111, %v2202
    %v2267 = vadd.f32 %v2112, %v2203
    %v2268 = vadd.f32 %v2113, %v2204
    %v2269 = vadd.f32 %v2114, %v2205
    %v2270 = vadd.f32 %v2115, %v2206
    %v2271 = vadd.f32 %v2116, %v2207
    %v2272 = vadd.f32 %v2117, %v2208
    %v2273 = vadd.f32 %v2118, %v2209
    %v2274 = vadd.f32 %v2119, %v2210
    %v2275 = vadd.f32 %v2120, %v2211
    %v2276 = vadd.f32 %v2121, %v2212
    %v2277 = vadd.f32 %v2122, %v2213
    %v2278 = vadd.f32 %v2123, %v2214
    %v2279 = vadd.f32 %v2124, %v2215
    %v2280 = vadd.f32 %v2125, %v2216
    %v2281 = vadd.f32 %v2126, %v2217
    %v2282 = vadd.f32 %v2127, %v2218
    %v2283 = vadd.f32 %v2128, %v2219
    %v2284 = vadd.f32 %v2129, %v2220
    %v2285 = vadd.f32 %v2130, %v2221
    %v2286 = vadd.f32 %v2131, %v2222
    %v2287 = vadd.f32 %v2132, %v2223
    %v2288 = vadd.f32 %v2133, %v2224
    %v2289 = vadd.f32 %v2134, %v2225
    %v2290 = vadd.f32 %v2135, %v2226
    %v2291 = vadd.f32 %v2136, %v2227
    %v2292 = vadd.f32 %v2137, %v2228
    %v2293 = vadd.f32 %v2138, %v2229
    %v2294 = vadd.f32 %v2139, %v2230
    %v2295 = vadd.f32 %v2140, %v2231
    %v2296 = vadd.f32 %v2141, %v2232
    %v2297 = vadd.f32 %v2142, %v2233
    %v2298 = vadd.f32 %v2143, %v2234
    %v2299 = vadd.f32 %v2144, %v2235
    %v2300 = vadd.f32 %v2145, %v2236
    %v2301 = vadd.f32 %v2146, %v2237
    %v2302 = vadd.f32 %v2147, %v2238
    %v2303 = vadd.f32 %v2148, %v2239
    %v2304 = vadd.f32 %v2149, %v2240
    %v2305 = vadd.f32 %v2150, %v2241
    %v2306 = vadd.f32 %v2151, %v2242
    %v2307 = vadd.f32 %v2152, %v2243
    %v2308 = vadd.f32 %v2153, %v2244
    %v2309 = vadd.f32 %v2154, %v2245
    %v2310 = vadd.f32 %v2155, %v2246
    %v2311 = vadd.f32 %v2156, %v2247
    %v2312 = vadd.f32 %v2157, %v2248
    %v2313 = vadd.f32 %v2158, %v2249
    %v2314 = vadd.f32 %v2159, %v2250
    %v2315 = vadd.f32 %v2160, %v2251
    %v2316 = vadd.f32 %v2161, %v2252
    %v2317 = vadd.f32 %v2162, %v2253
    %v2318 = vadd.f32 %v2163, %v2254
    %v2319 = vadd.f32 %v2164, %v2255
    %v2320 = vlaneseq
    %v2321 = vshrl.u32 %v2320, 7
    %v2322 = vadd.s32 %v2321, 1
    %2323 = vset.pattern.permute.xlu0 %v2322
    %2324 = vperm.xlu0 %2323, %v2165
    %v2325 = vpop.permute.xlu0 %2324
    %v2326 = vlaneseq
    %v2327 = vshrl.u32 %v2326, 7
    %v2328 = vadd.s32 %v2327, 9
    %2329 = vset.pattern.permute.xlu0 %v2328
    %2330 = vperm.xlu0 %2329, %v2165
    %v2331 = vpop.permute.xlu0 %2330
    %v2332 = vlaneseq
    %v2333 = vshrl.u32 %v2332, 7
    %v2334 = vadd.s32 %v2333, 1
    %2335 = vset.pattern.permute.xlu0 %v2334
    %2336 = vperm.xlu0 %2335, %v2178
    %v2337 = vpop.permute.xlu0 %2336
    %v2338 = vlaneseq
    %v2339 = vshrl.u32 %v2338, 7
    %v2340 = vadd.s32 %v2339, 9
    %2341 = vset.pattern.permute.xlu0 %v2340
    %2342 = vperm.xlu0 %2341, %v2178
    %v2343 = vpop.permute.xlu0 %2342
    %v2344 = vperm.slane %v131, 7
    %v2345 = vmul.f32 %v707, %v2344
    %v2346 = vmul.f32 %v713, %v2344
    %v2347 = vmul.f32 %v719, %v2344
    %v2348 = vmul.f32 %v725, %v2344
    %v2349 = vmul.f32 %v731, %v2344
    %v2350 = vmul.f32 %v737, %v2344
    %v2351 = vmul.f32 %v743, %v2344
    %v2352 = vmul.f32 %v749, %v2344
    %v2353 = vmul.f32 %v755, %v2344
    %v2354 = vmul.f32 %v761, %v2344
    %v2355 = vmul.f32 %v767, %v2344
    %v2356 = vmul.f32 %v773, %v2344
    %v2357 = vmul.f32 %v779, %v2344
    %v2358 = vmul.f32 %v785, %v2344
    %v2359 = vmul.f32 %v791, %v2344
    %v2360 = vmul.f32 %v797, %v2344
    %v2361 = vmul.f32 %v803, %v2344
    %v2362 = vmul.f32 %v809, %v2344
    %v2363 = vmul.f32 %v815, %v2344
    %v2364 = vmul.f32 %v821, %v2344
    %v2365 = vmul.f32 %v827, %v2344
    %v2366 = vmul.f32 %v833, %v2344
    %v2367 = vmul.f32 %v839, %v2344
    %v2368 = vmul.f32 %v845, %v2344
    %v2369 = vmul.f32 %v851, %v2344
    %v2370 = vmul.f32 %v857, %v2344
    %v2371 = vmul.f32 %v863, %v2344
    %v2372 = vmul.f32 %v869, %v2344
    %v2373 = vmul.f32 %v1864, %v2344
    %v2374 = vmul.f32 %v1870, %v2344
    %v2375 = vmul.f32 %v2325, %v2344
    %v2376 = vmul.f32 %v2331, %v2344
    %v2377 = vmul.f32 %v899, %v2344
    %v2378 = vmul.f32 %v905, %v2344
    %v2379 = vmul.f32 %v911, %v2344
    %v2380 = vmul.f32 %v917, %v2344
    %v2381 = vmul.f32 %v923, %v2344
    %v2382 = vmul.f32 %v929, %v2344
    %v2383 = vmul.f32 %v935, %v2344
    %v2384 = vmul.f32 %v941, %v2344
    %v2385 = vmul.f32 %v947, %v2344
    %v2386 = vmul.f32 %v953, %v2344
    %v2387 = vmul.f32 %v959, %v2344
    %v2388 = vmul.f32 %v965, %v2344
    %v2389 = vmul.f32 %v971, %v2344
    %v2390 = vmul.f32 %v977, %v2344
    %v2391 = vmul.f32 %v983, %v2344
    %v2392 = vmul.f32 %v989, %v2344
    %v2393 = vmul.f32 %v995, %v2344
    %v2394 = vmul.f32 %v1001, %v2344
    %v2395 = vmul.f32 %v1007, %v2344
    %v2396 = vmul.f32 %v1013, %v2344
    %v2397 = vmul.f32 %v1019, %v2344
    %v2398 = vmul.f32 %v1025, %v2344
    %v2399 = vmul.f32 %v1031, %v2344
    %v2400 = vmul.f32 %v1037, %v2344
    %v2401 = vmul.f32 %v1043, %v2344
    %v2402 = vmul.f32 %v1049, %v2344
    %v2403 = vmul.f32 %v1055, %v2344
    %v2404 = vmul.f32 %v1061, %v2344
    %v2405 = vmul.f32 %v1876, %v2344
    %v2406 = vmul.f32 %v1882, %v2344
    %v2407 = vmul.f32 %v2337, %v2344
    %v2408 = vmul.f32 %v2343, %v2344
    %v2409 = vadd.f32 %v2256, %v2345
    %v2410 = vadd.f32 %v2257, %v2346
    %v2411 = vadd.f32 %v2258, %v2347
    %v2412 = vadd.f32 %v2259, %v2348
    %v2413 = vadd.f32 %v2260, %v2349
    %v2414 = vadd.f32 %v2261, %v2350
    %v2415 = vadd.f32 %v2262, %v2351
    %v2416 = vadd.f32 %v2263, %v2352
    %v2417 = vadd.f32 %v2264, %v2353
    %v2418 = vadd.f32 %v2265, %v2354
    %v2419 = vadd.f32 %v2266, %v2355
    %v2420 = vadd.f32 %v2267, %v2356
    %v2421 = vadd.f32 %v2268, %v2357
    %v2422 = vadd.f32 %v2269, %v2358
    %v2423 = vadd.f32 %v2270, %v2359
    %v2424 = vadd.f32 %v2271, %v2360
    %v2425 = vadd.f32 %v2272, %v2361
    %v2426 = vadd.f32 %v2273, %v2362
    %v2427 = vadd.f32 %v2274, %v2363
    %v2428 = vadd.f32 %v2275, %v2364
    %v2429 = vadd.f32 %v2276, %v2365
    %v2430 = vadd.f32 %v2277, %v2366
    %v2431 = vadd.f32 %v2278, %v2367
    %v2432 = vadd.f32 %v2279, %v2368
    %v2433 = vadd.f32 %v2280, %v2369
    %v2434 = vadd.f32 %v2281, %v2370
    %v2435 = vadd.f32 %v2282, %v2371
    %v2436 = vadd.f32 %v2283, %v2372
    %v2437 = vadd.f32 %v2284, %v2373
    %v2438 = vadd.f32 %v2285, %v2374
    %v2439 = vadd.f32 %v2286, %v2375
    %v2440 = vadd.f32 %v2287, %v2376
    %v2441 = vadd.f32 %v2288, %v2377
    %v2442 = vadd.f32 %v2289, %v2378
    %v2443 = vadd.f32 %v2290, %v2379
    %v2444 = vadd.f32 %v2291, %v2380
    %v2445 = vadd.f32 %v2292, %v2381
    %v2446 = vadd.f32 %v2293, %v2382
    %v2447 = vadd.f32 %v2294, %v2383
    %v2448 = vadd.f32 %v2295, %v2384
    %v2449 = vadd.f32 %v2296, %v2385
    %v2450 = vadd.f32 %v2297, %v2386
    %v2451 = vadd.f32 %v2298, %v2387
    %v2452 = vadd.f32 %v2299, %v2388
    %v2453 = vadd.f32 %v2300, %v2389
    %v2454 = vadd.f32 %v2301, %v2390
    %v2455 = vadd.f32 %v2302, %v2391
    %v2456 = vadd.f32 %v2303, %v2392
    %v2457 = vadd.f32 %v2304, %v2393
    %v2458 = vadd.f32 %v2305, %v2394
    %v2459 = vadd.f32 %v2306, %v2395
    %v2460 = vadd.f32 %v2307, %v2396
    %v2461 = vadd.f32 %v2308, %v2397
    %v2462 = vadd.f32 %v2309, %v2398
    %v2463 = vadd.f32 %v2310, %v2399
    %v2464 = vadd.f32 %v2311, %v2400
    %v2465 = vadd.f32 %v2312, %v2401
    %v2466 = vadd.f32 %v2313, %v2402
    %v2467 = vadd.f32 %v2314, %v2403
    %v2468 = vadd.f32 %v2315, %v2404
    %v2469 = vadd.f32 %v2316, %v2405
    %v2470 = vadd.f32 %v2317, %v2406
    %v2471 = vadd.f32 %v2318, %v2407
    %v2472 = vadd.f32 %v2319, %v2408
    %v2473 = vlaneseq
    %v2474 = vshrl.u32 %v2473, 7
    %v2475 = vadd.s32 %v2474, 2
    %2476 = vset.pattern.permute.xlu0 %v2475
    %2477 = vperm.xlu0 %2476, %v2165
    %v2478 = vpop.permute.xlu0 %2477
    %v2479 = vlaneseq
    %v2480 = vshrl.u32 %v2479, 7
    %v2481 = vadd.s32 %v2480, 10
    %2482 = vset.pattern.permute.xlu0 %v2481
    %2483 = vperm.xlu0 %2482, %v2165
    %v2484 = vpop.permute.xlu0 %2483
    %v2485 = vlaneseq
    %v2486 = vshrl.u32 %v2485, 7
    %v2487 = vadd.s32 %v2486, 2
    %2488 = vset.pattern.permute.xlu0 %v2487
    %2489 = vperm.xlu0 %2488, %v2178
    %v2490 = vpop.permute.xlu0 %2489
    %v2491 = vlaneseq
    %v2492 = vshrl.u32 %v2491, 7
    %v2493 = vadd.s32 %v2492, 10
    %2494 = vset.pattern.permute.xlu0 %v2493
    %2495 = vperm.xlu0 %2494, %v2178
    %v2496 = vpop.permute.xlu0 %2495
    %v2497 = vperm.slane %v132, 0
    %v2498 = vmul.f32 %v1220, %v2497
    %v2499 = vmul.f32 %v1226, %v2497
    %v2500 = vmul.f32 %v1232, %v2497
    %v2501 = vmul.f32 %v1238, %v2497
    %v2502 = vmul.f32 %v1244, %v2497
    %v2503 = vmul.f32 %v1250, %v2497
    %v2504 = vmul.f32 %v1256, %v2497
    %v2505 = vmul.f32 %v1262, %v2497
    %v2506 = vmul.f32 %v1268, %v2497
    %v2507 = vmul.f32 %v1274, %v2497
    %v2508 = vmul.f32 %v1280, %v2497
    %v2509 = vmul.f32 %v1286, %v2497
    %v2510 = vmul.f32 %v1292, %v2497
    %v2511 = vmul.f32 %v1298, %v2497
    %v2512 = vmul.f32 %v1304, %v2497
    %v2513 = vmul.f32 %v1310, %v2497
    %v2514 = vmul.f32 %v1316, %v2497
    %v2515 = vmul.f32 %v1322, %v2497
    %v2516 = vmul.f32 %v1328, %v2497
    %v2517 = vmul.f32 %v1334, %v2497
    %v2518 = vmul.f32 %v1340, %v2497
    %v2519 = vmul.f32 %v1346, %v2497
    %v2520 = vmul.f32 %v1352, %v2497
    %v2521 = vmul.f32 %v1358, %v2497
    %v2522 = vmul.f32 %v1364, %v2497
    %v2523 = vmul.f32 %v1370, %v2497
    %v2524 = vmul.f32 %v1376, %v2497
    %v2525 = vmul.f32 %v1382, %v2497
    %v2526 = vmul.f32 %v2017, %v2497
    %v2527 = vmul.f32 %v2023, %v2497
    %v2528 = vmul.f32 %v2478, %v2497
    %v2529 = vmul.f32 %v2484, %v2497
    %v2530 = vmul.f32 %v1412, %v2497
    %v2531 = vmul.f32 %v1418, %v2497
    %v2532 = vmul.f32 %v1424, %v2497
    %v2533 = vmul.f32 %v1430, %v2497
    %v2534 = vmul.f32 %v1436, %v2497
    %v2535 = vmul.f32 %v1442, %v2497
    %v2536 = vmul.f32 %v1448, %v2497
    %v2537 = vmul.f32 %v1454, %v2497
    %v2538 = vmul.f32 %v1460, %v2497
    %v2539 = vmul.f32 %v1466, %v2497
    %v2540 = vmul.f32 %v1472, %v2497
    %v2541 = vmul.f32 %v1478, %v2497
    %v2542 = vmul.f32 %v1484, %v2497
    %v2543 = vmul.f32 %v1490, %v2497
    %v2544 = vmul.f32 %v1496, %v2497
    %v2545 = vmul.f32 %v1502, %v2497
    %v2546 = vmul.f32 %v1508, %v2497
    %v2547 = vmul.f32 %v1514, %v2497
    %v2548 = vmul.f32 %v1520, %v2497
    %v2549 = vmul.f32 %v1526, %v2497
    %v2550 = vmul.f32 %v1532, %v2497
    %v2551 = vmul.f32 %v1538, %v2497
    %v2552 = vmul.f32 %v1544, %v2497
    %v2553 = vmul.f32 %v1550, %v2497
    %v2554 = vmul.f32 %v1556, %v2497
    %v2555 = vmul.f32 %v1562, %v2497
    %v2556 = vmul.f32 %v1568, %v2497
    %v2557 = vmul.f32 %v1574, %v2497
    %v2558 = vmul.f32 %v2029, %v2497
    %v2559 = vmul.f32 %v2035, %v2497
    %v2560 = vmul.f32 %v2490, %v2497
    %v2561 = vmul.f32 %v2496, %v2497
    %v2562 = vadd.f32 %v2409, %v2498
    %v2563 = vadd.f32 %v2410, %v2499
    %v2564 = vadd.f32 %v2411, %v2500
    %v2565 = vadd.f32 %v2412, %v2501
    %v2566 = vadd.f32 %v2413, %v2502
    %v2567 = vadd.f32 %v2414, %v2503
    %v2568 = vadd.f32 %v2415, %v2504
    %v2569 = vadd.f32 %v2416, %v2505
    %v2570 = vadd.f32 %v2417, %v2506
    %v2571 = vadd.f32 %v2418, %v2507
    %v2572 = vadd.f32 %v2419, %v2508
    %v2573 = vadd.f32 %v2420, %v2509
    %v2574 = vadd.f32 %v2421, %v2510
    %v2575 = vadd.f32 %v2422, %v2511
    %v2576 = vadd.f32 %v2423, %v2512
    %v2577 = vadd.f32 %v2424, %v2513
    %v2578 = vadd.f32 %v2425, %v2514
    %v2579 = vadd.f32 %v2426, %v2515
    %v2580 = vadd.f32 %v2427, %v2516
    %v2581 = vadd.f32 %v2428, %v2517
    %v2582 = vadd.f32 %v2429, %v2518
    %v2583 = vadd.f32 %v2430, %v2519
    %v2584 = vadd.f32 %v2431, %v2520
    %v2585 = vadd.f32 %v2432, %v2521
    %v2586 = vadd.f32 %v2433, %v2522
    %v2587 = vadd.f32 %v2434, %v2523
    %v2588 = vadd.f32 %v2435, %v2524
    %v2589 = vadd.f32 %v2436, %v2525
    %v2590 = vadd.f32 %v2437, %v2526
    %v2591 = vadd.f32 %v2438, %v2527
    %v2592 = vadd.f32 %v2439, %v2528
    %v2593 = vadd.f32 %v2440, %v2529
    %v2594 = vadd.f32 %v2441, %v2530
    %v2595 = vadd.f32 %v2442, %v2531
    %v2596 = vadd.f32 %v2443, %v2532
    %v2597 = vadd.f32 %v2444, %v2533
    %v2598 = vadd.f32 %v2445, %v2534
    %v2599 = vadd.f32 %v2446, %v2535
    %v2600 = vadd.f32 %v2447, %v2536
    %v2601 = vadd.f32 %v2448, %v2537
    %v2602 = vadd.f32 %v2449, %v2538
    %v2603 = vadd.f32 %v2450, %v2539
    %v2604 = vadd.f32 %v2451, %v2540
    %v2605 = vadd.f32 %v2452, %v2541
    %v2606 = vadd.f32 %v2453, %v2542
    %v2607 = vadd.f32 %v2454, %v2543
    %v2608 = vadd.f32 %v2455, %v2544
    %v2609 = vadd.f32 %v2456, %v2545
    %v2610 = vadd.f32 %v2457, %v2546
    %v2611 = vadd.f32 %v2458, %v2547
    %v2612 = vadd.f32 %v2459, %v2548
    %v2613 = vadd.f32 %v2460, %v2549
    %v2614 = vadd.f32 %v2461, %v2550
    %v2615 = vadd.f32 %v2462, %v2551
    %v2616 = vadd.f32 %v2463, %v2552
    %v2617 = vadd.f32 %v2464, %v2553
    %v2618 = vadd.f32 %v2465, %v2554
    %v2619 = vadd.f32 %v2466, %v2555
    %v2620 = vadd.f32 %v2467, %v2556
    %v2621 = vadd.f32 %v2468, %v2557
    %v2622 = vadd.f32 %v2469, %v2558
    %v2623 = vadd.f32 %v2470, %v2559
    %v2624 = vadd.f32 %v2471, %v2560
    %v2625 = vadd.f32 %v2472, %v2561
    %v2626 = vld [vmem:[%s2] sm:$0x3]
    %v2627 = vperm.slane %v2626, 0
    %v2628 = vmul.f32 %v2562, %v2627
    %v2629 = vmul.f32 %v2563, %v2627
    %v2630 = vmul.f32 %v2564, %v2627
    %v2631 = vmul.f32 %v2565, %v2627
    %v2632 = vmul.f32 %v2566, %v2627
    %v2633 = vmul.f32 %v2567, %v2627
    %v2634 = vmul.f32 %v2568, %v2627
    %v2635 = vmul.f32 %v2569, %v2627
    %v2636 = vmul.f32 %v2570, %v2627
    %v2637 = vmul.f32 %v2571, %v2627
    %v2638 = vmul.f32 %v2572, %v2627
    %v2639 = vmul.f32 %v2573, %v2627
    %v2640 = vmul.f32 %v2574, %v2627
    %v2641 = vmul.f32 %v2575, %v2627
    %v2642 = vmul.f32 %v2576, %v2627
    %v2643 = vmul.f32 %v2577, %v2627
    %v2644 = vmul.f32 %v2578, %v2627
    %v2645 = vmul.f32 %v2579, %v2627
    %v2646 = vmul.f32 %v2580, %v2627
    %v2647 = vmul.f32 %v2581, %v2627
    %v2648 = vmul.f32 %v2582, %v2627
    %v2649 = vmul.f32 %v2583, %v2627
    %v2650 = vmul.f32 %v2584, %v2627
    %v2651 = vmul.f32 %v2585, %v2627
    %v2652 = vmul.f32 %v2586, %v2627
    %v2653 = vmul.f32 %v2587, %v2627
    %v2654 = vmul.f32 %v2588, %v2627
    %v2655 = vmul.f32 %v2589, %v2627
    %v2656 = vmul.f32 %v2590, %v2627
    %v2657 = vmul.f32 %v2591, %v2627
    %v2658 = vmul.f32 %v2592, %v2627
    %v2659 = vmul.f32 %v2593, %v2627
    %v2660 = vmul.f32 %v2594, %v2627
    %v2661 = vmul.f32 %v2595, %v2627
    %v2662 = vmul.f32 %v2596, %v2627
    %v2663 = vmul.f32 %v2597, %v2627
    %v2664 = vmul.f32 %v2598, %v2627
    %v2665 = vmul.f32 %v2599, %v2627
    %v2666 = vmul.f32 %v2600, %v2627
    %v2667 = vmul.f32 %v2601, %v2627
    %v2668 = vmul.f32 %v2602, %v2627
    %v2669 = vmul.f32 %v2603, %v2627
    %v2670 = vmul.f32 %v2604, %v2627
    %v2671 = vmul.f32 %v2605, %v2627
    %v2672 = vmul.f32 %v2606, %v2627
    %v2673 = vmul.f32 %v2607, %v2627
    %v2674 = vmul.f32 %v2608, %v2627
    %v2675 = vmul.f32 %v2609, %v2627
    %v2676 = vmul.f32 %v2610, %v2627
    %v2677 = vmul.f32 %v2611, %v2627
    %v2678 = vmul.f32 %v2612, %v2627
    %v2679 = vmul.f32 %v2613, %v2627
    %v2680 = vmul.f32 %v2614, %v2627
    %v2681 = vmul.f32 %v2615, %v2627
    %v2682 = vmul.f32 %v2616, %v2627
    %v2683 = vmul.f32 %v2617, %v2627
    %v2684 = vmul.f32 %v2618, %v2627
    %v2685 = vmul.f32 %v2619, %v2627
    %v2686 = vmul.f32 %v2620, %v2627
    %v2687 = vmul.f32 %v2621, %v2627
    %v2688 = vmul.f32 %v2622, %v2627
    %v2689 = vmul.f32 %v2623, %v2627
    %v2690 = vmul.f32 %v2624, %v2627
    %v2691 = vmul.f32 %v2625, %v2627
    %v2692 = vperm.slane %v2626, 1
    %v2693 = vadd.f32 %v2628, %v2692
    %v2694 = vadd.f32 %v2629, %v2692
    %v2695 = vadd.f32 %v2630, %v2692
    %v2696 = vadd.f32 %v2631, %v2692
    %v2697 = vadd.f32 %v2632, %v2692
    %v2698 = vadd.f32 %v2633, %v2692
    %v2699 = vadd.f32 %v2634, %v2692
    %v2700 = vadd.f32 %v2635, %v2692
    %v2701 = vadd.f32 %v2636, %v2692
    %v2702 = vadd.f32 %v2637, %v2692
    %v2703 = vadd.f32 %v2638, %v2692
    %v2704 = vadd.f32 %v2639, %v2692
    %v2705 = vadd.f32 %v2640, %v2692
    %v2706 = vadd.f32 %v2641, %v2692
    %v2707 = vadd.f32 %v2642, %v2692
    %v2708 = vadd.f32 %v2643, %v2692
    %v2709 = vadd.f32 %v2644, %v2692
    %v2710 = vadd.f32 %v2645, %v2692
    %v2711 = vadd.f32 %v2646, %v2692
    %v2712 = vadd.f32 %v2647, %v2692
    %v2713 = vadd.f32 %v2648, %v2692
    %v2714 = vadd.f32 %v2649, %v2692
    %v2715 = vadd.f32 %v2650, %v2692
    %v2716 = vadd.f32 %v2651, %v2692
    %v2717 = vadd.f32 %v2652, %v2692
    %v2718 = vadd.f32 %v2653, %v2692
    %v2719 = vadd.f32 %v2654, %v2692
    %v2720 = vadd.f32 %v2655, %v2692
    %v2721 = vadd.f32 %v2656, %v2692
    %v2722 = vadd.f32 %v2657, %v2692
    %v2723 = vadd.f32 %v2658, %v2692
    %v2724 = vadd.f32 %v2659, %v2692
    %v2725 = vadd.f32 %v2660, %v2692
    %v2726 = vadd.f32 %v2661, %v2692
    %v2727 = vadd.f32 %v2662, %v2692
    %v2728 = vadd.f32 %v2663, %v2692
    %v2729 = vadd.f32 %v2664, %v2692
    %v2730 = vadd.f32 %v2665, %v2692
    %v2731 = vadd.f32 %v2666, %v2692
    %v2732 = vadd.f32 %v2667, %v2692
    %v2733 = vadd.f32 %v2668, %v2692
    %v2734 = vadd.f32 %v2669, %v2692
    %v2735 = vadd.f32 %v2670, %v2692
    %v2736 = vadd.f32 %v2671, %v2692
    %v2737 = vadd.f32 %v2672, %v2692
    %v2738 = vadd.f32 %v2673, %v2692
    %v2739 = vadd.f32 %v2674, %v2692
    %v2740 = vadd.f32 %v2675, %v2692
    %v2741 = vadd.f32 %v2676, %v2692
    %v2742 = vadd.f32 %v2677, %v2692
    %v2743 = vadd.f32 %v2678, %v2692
    %v2744 = vadd.f32 %v2679, %v2692
    %v2745 = vadd.f32 %v2680, %v2692
    %v2746 = vadd.f32 %v2681, %v2692
    %v2747 = vadd.f32 %v2682, %v2692
    %v2748 = vadd.f32 %v2683, %v2692
    %v2749 = vadd.f32 %v2684, %v2692
    %v2750 = vadd.f32 %v2685, %v2692
    %v2751 = vadd.f32 %v2686, %v2692
    %v2752 = vadd.f32 %v2687, %v2692
    %v2753 = vadd.f32 %v2688, %v2692
    %v2754 = vadd.f32 %v2689, %v2692
    %v2755 = vadd.f32 %v2690, %v2692
    %v2756 = vadd.f32 %v2691, %v2692
    %v2757 = vmax.f32 %v2693, 0.0
    %v2758 = vmax.f32 %v2694, 0.0
    %v2759 = vmax.f32 %v2695, 0.0
    %v2760 = vmax.f32 %v2696, 0.0
    %v2761 = vmax.f32 %v2697, 0.0
    %v2762 = vmax.f32 %v2698, 0.0
    %v2763 = vmax.f32 %v2699, 0.0
    %v2764 = vmax.f32 %v2700, 0.0
    %v2765 = vmax.f32 %v2701, 0.0
    %v2766 = vmax.f32 %v2702, 0.0
    %v2767 = vmax.f32 %v2703, 0.0
    %v2768 = vmax.f32 %v2704, 0.0
    %v2769 = vmax.f32 %v2705, 0.0
    %v2770 = vmax.f32 %v2706, 0.0
    %v2771 = vmax.f32 %v2707, 0.0
    %v2772 = vmax.f32 %v2708, 0.0
    %v2773 = vmax.f32 %v2709, 0.0
    %v2774 = vmax.f32 %v2710, 0.0
    %v2775 = vmax.f32 %v2711, 0.0
    %v2776 = vmax.f32 %v2712, 0.0
    %v2777 = vmax.f32 %v2713, 0.0
    %v2778 = vmax.f32 %v2714, 0.0
    %v2779 = vmax.f32 %v2715, 0.0
    %v2780 = vmax.f32 %v2716, 0.0
    %v2781 = vmax.f32 %v2717, 0.0
    %v2782 = vmax.f32 %v2718, 0.0
    %v2783 = vmax.f32 %v2719, 0.0
    %v2784 = vmax.f32 %v2720, 0.0
    %v2785 = vmax.f32 %v2721, 0.0
    %v2786 = vmax.f32 %v2722, 0.0
    %v2787 = vmax.f32 %v2723, 0.0
    %v2788 = vmax.f32 %v2724, 0.0
    %v2789 = vmax.f32 %v2725, 0.0
    %v2790 = vmax.f32 %v2726, 0.0
    %v2791 = vmax.f32 %v2727, 0.0
    %v2792 = vmax.f32 %v2728, 0.0
    %v2793 = vmax.f32 %v2729, 0.0
    %v2794 = vmax.f32 %v2730, 0.0
    %v2795 = vmax.f32 %v2731, 0.0
    %v2796 = vmax.f32 %v2732, 0.0
    %v2797 = vmax.f32 %v2733, 0.0
    %v2798 = vmax.f32 %v2734, 0.0
    %v2799 = vmax.f32 %v2735, 0.0
    %v2800 = vmax.f32 %v2736, 0.0
    %v2801 = vmax.f32 %v2737, 0.0
    %v2802 = vmax.f32 %v2738, 0.0
    %v2803 = vmax.f32 %v2739, 0.0
    %v2804 = vmax.f32 %v2740, 0.0
    %v2805 = vmax.f32 %v2741, 0.0
    %v2806 = vmax.f32 %v2742, 0.0
    %v2807 = vmax.f32 %v2743, 0.0
    %v2808 = vmax.f32 %v2744, 0.0
    %v2809 = vmax.f32 %v2745, 0.0
    %v2810 = vmax.f32 %v2746, 0.0
    %v2811 = vmax.f32 %v2747, 0.0
    %v2812 = vmax.f32 %v2748, 0.0
    %v2813 = vmax.f32 %v2749, 0.0
    %v2814 = vmax.f32 %v2750, 0.0
    %v2815 = vmax.f32 %v2751, 0.0
    %v2816 = vmax.f32 %v2752, 0.0
    %v2817 = vmax.f32 %v2753, 0.0
    %v2818 = vmax.f32 %v2754, 0.0
    %v2819 = vmax.f32 %v2755, 0.0
    %v2820 = vmax.f32 %v2756, 0.0
    %v2885 = vrot.slane %v2757, 2
    %v2886 = vrot.slane %v2757, 4
    %v2887 = vrot.slane %v2757, 6
    %v2888 = vrot.slane %v2758, 2
    %v2889 = vrot.slane %v2758, 4
    %v2890 = vrot.slane %v2758, 6
    %v2891 = vrot.slane %v2759, 2
    %v2892 = vrot.slane %v2759, 4
    %v2893 = vrot.slane %v2759, 6
    %v2894 = vrot.slane %v2760, 2
    %v2895 = vrot.slane %v2760, 4
    %v2896 = vrot.slane %v2760, 6
    %v2897 = vrot.slane %v2761, 2
    %v2898 = vrot.slane %v2761, 4
    %v2899 = vrot.slane %v2761, 6
    %v2900 = vrot.slane %v2762, 2
    %v2901 = vrot.slane %v2762, 4
    %v2902 = vrot.slane %v2762, 6
    %v2903 = vrot.slane %v2763, 2
    %v2904 = vrot.slane %v2763, 4
    %v2905 = vrot.slane %v2763, 6
    %v2906 = vrot.slane %v2764, 2
    %v2907 = vrot.slane %v2764, 4
    %v2908 = vrot.slane %v2764, 6
    %v2909 = vrot.slane %v2765, 2
    %v2910 = vrot.slane %v2765, 4
    %v2911 = vrot.slane %v2765, 6
    %v2912 = vrot.slane %v2766, 2
    %v2913 = vrot.slane %v2766, 4
    %v2914 = vrot.slane %v2766, 6
    %v2915 = vrot.slane %v2767, 2
    %v2916 = vrot.slane %v2767, 4
    %v2917 = vrot.slane %v2767, 6
    %v2918 = vrot.slane %v2768, 2
    %v2919 = vrot.slane %v2768, 4
    %v2920 = vrot.slane %v2768, 6
    %v2921 = vrot.slane %v2769, 2
    %v2922 = vrot.slane %v2769, 4
    %v2923 = vrot.slane %v2769, 6
    %v2924 = vrot.slane %v2770, 2
    %v2925 = vrot.slane %v2770, 4
    %v2926 = vrot.slane %v2770, 6
    %v2927 = vrot.slane %v2771, 2
    %v2928 = vrot.slane %v2771, 4
    %v2929 = vrot.slane %v2771, 6
    %v2930 = vrot.slane %v2772, 2
    %v2931 = vrot.slane %v2772, 4
    %v2932 = vrot.slane %v2772, 6
    %v2933 = vrot.slane %v2773, 2
    %v2934 = vrot.slane %v2773, 4
    %v2935 = vrot.slane %v2773, 6
    %v2936 = vrot.slane %v2774, 2
    %v2937 = vrot.slane %v2774, 4
    %v2938 = vrot.slane %v2774, 6
    %v2939 = vrot.slane %v2775, 2
    %v2940 = vrot.slane %v2775, 4
    %v2941 = vrot.slane %v2775, 6
    %v2942 = vrot.slane %v2776, 2
    %v2943 = vrot.slane %v2776, 4
    %v2944 = vrot.slane %v2776, 6
    %v2945 = vrot.slane %v2777, 2
    %v2946 = vrot.slane %v2777, 4
    %v2947 = vrot.slane %v2777, 6
    %v2948 = vrot.slane %v2778, 2
    %v2949 = vrot.slane %v2778, 4
    %v2950 = vrot.slane %v2778, 6
    %v2951 = vrot.slane %v2779, 2
    %v2952 = vrot.slane %v2779, 4
    %v2953 = vrot.slane %v2779, 6
    %v2954 = vrot.slane %v2780, 2
    %v2955 = vrot.slane %v2780, 4
    %v2956 = vrot.slane %v2780, 6
    %v2957 = vrot.slane %v2781, 2
    %v2958 = vrot.slane %v2781, 4
    %v2959 = vrot.slane %v2781, 6
    %v2960 = vrot.slane %v2782, 2
    %v2961 = vrot.slane %v2782, 4
    %v2962 = vrot.slane %v2782, 6
    %v2963 = vrot.slane %v2783, 2
    %v2964 = vrot.slane %v2783, 4
    %v2965 = vrot.slane %v2783, 6
    %v2966 = vrot.slane %v2784, 2
    %v2967 = vrot.slane %v2784, 4
    %v2968 = vrot.slane %v2784, 6
    %v2969 = vrot.slane %v2785, 2
    %v2970 = vrot.slane %v2785, 4
    %v2971 = vrot.slane %v2785, 6
    %v2972 = vrot.slane %v2786, 2
    %v2973 = vrot.slane %v2786, 4
    %v2974 = vrot.slane %v2786, 6
    %v2975 = vrot.slane %v2787, 2
    %v2976 = vrot.slane %v2787, 4
    %v2977 = vrot.slane %v2787, 6
    %v2978 = vrot.slane %v2788, 2
    %v2979 = vrot.slane %v2788, 4
    %v2980 = vrot.slane %v2788, 6
    %v2981 = vrot.slane %v2789, 2
    %v2982 = vrot.slane %v2789, 4
    %v2983 = vrot.slane %v2789, 6
    %v2984 = vrot.slane %v2790, 2
    %v2985 = vrot.slane %v2790, 4
    %v2986 = vrot.slane %v2790, 6
    %v2987 = vrot.slane %v2791, 2
    %v2988 = vrot.slane %v2791, 4
    %v2989 = vrot.slane %v2791, 6
    %v2990 = vrot.slane %v2792, 2
    %v2991 = vrot.slane %v2792, 4
    %v2992 = vrot.slane %v2792, 6
    %v2993 = vrot.slane %v2793, 2
    %v2994 = vrot.slane %v2793, 4
    %v2995 = vrot.slane %v2793, 6
    %v2996 = vrot.slane %v2794, 2
    %v2997 = vrot.slane %v2794, 4
    %v2998 = vrot.slane %v2794, 6
    %v2999 = vrot.slane %v2795, 2
    %v3000 = vrot.slane %v2795, 4
    %v3001 = vrot.slane %v2795, 6
    %v3002 = vrot.slane %v2796, 2
    %v3003 = vrot.slane %v2796, 4
    %v3004 = vrot.slane %v2796, 6
    %v3005 = vrot.slane %v2797, 2
    %v3006 = vrot.slane %v2797, 4
    %v3007 = vrot.slane %v2797, 6
    %v3008 = vrot.slane %v2798, 2
    %v3009 = vrot.slane %v2798, 4
    %v3010 = vrot.slane %v2798, 6
    %v3011 = vrot.slane %v2799, 2
    %v3012 = vrot.slane %v2799, 4
    %v3013 = vrot.slane %v2799, 6
    %v3014 = vrot.slane %v2800, 2
    %v3015 = vrot.slane %v2800, 4
    %v3016 = vrot.slane %v2800, 6
    %v3017 = vrot.slane %v2801, 2
    %v3018 = vrot.slane %v2801, 4
    %v3019 = vrot.slane %v2801, 6
    %v3020 = vrot.slane %v2802, 2
    %v3021 = vrot.slane %v2802, 4
    %v3022 = vrot.slane %v2802, 6
    %v3023 = vrot.slane %v2803, 2
    %v3024 = vrot.slane %v2803, 4
    %v3025 = vrot.slane %v2803, 6
    %v3026 = vrot.slane %v2804, 2
    %v3027 = vrot.slane %v2804, 4
    %v3028 = vrot.slane %v2804, 6
    %v3029 = vrot.slane %v2805, 2
    %v3030 = vrot.slane %v2805, 4
    %v3031 = vrot.slane %v2805, 6
    %v3032 = vrot.slane %v2806, 2
    %v3033 = vrot.slane %v2806, 4
    %v3034 = vrot.slane %v2806, 6
    %v3035 = vrot.slane %v2807, 2
    %v3036 = vrot.slane %v2807, 4
    %v3037 = vrot.slane %v2807, 6
    %v3038 = vrot.slane %v2808, 2
    %v3039 = vrot.slane %v2808, 4
    %v3040 = vrot.slane %v2808, 6
    %v3041 = vrot.slane %v2809, 2
    %v3042 = vrot.slane %v2809, 4
    %v3043 = vrot.slane %v2809, 6
    %v3044 = vrot.slane %v2810, 2
    %v3045 = vrot.slane %v2810, 4
    %v3046 = vrot.slane %v2810, 6
    %v3047 = vrot.slane %v2811, 2
    %v3048 = vrot.slane %v2811, 4
    %v3049 = vrot.slane %v2811, 6
    %v3050 = vrot.slane %v2812, 2
    %v3051 = vrot.slane %v2812, 4
    %v3052 = vrot.slane %v2812, 6
    %v3053 = vrot.slane %v2813, 2
    %v3054 = vrot.slane %v2813, 4
    %v3055 = vrot.slane %v2813, 6
    %v3056 = vrot.slane %v2814, 2
    %v3057 = vrot.slane %v2814, 4
    %v3058 = vrot.slane %v2814, 6
    %v3059 = vrot.slane %v2815, 2
    %v3060 = vrot.slane %v2815, 4
    %v3061 = vrot.slane %v2815, 6
    %v3062 = vrot.slane %v2816, 2
    %v3063 = vrot.slane %v2816, 4
    %v3064 = vrot.slane %v2816, 6
    %v3065 = vrot.slane %v2817, 2
    %v3066 = vrot.slane %v2817, 4
    %v3067 = vrot.slane %v2817, 6
    %v3068 = vrot.slane %v2818, 2
    %v3069 = vrot.slane %v2818, 4
    %v3070 = vrot.slane %v2818, 6
    %v3071 = vrot.slane %v2819, 2
    %v3072 = vrot.slane %v2819, 4
    %v3073 = vrot.slane %v2819, 6
    %v3074 = vrot.slane %v2820, 2
    %v3075 = vrot.slane %v2820, 4
    %v3076 = vrot.slane %v2820, 6
    %vm3269 = vcmask 254976
    %v3270 = vsel %vm3269, %v2757, -inf
    %v3271 = vrot.slane %v3270, 4
    %v3272 = vmax.f32 %v3270, %v3271
    %v3273 = vrot.slane %v3272, 2
    %v3274 = vmax.f32 %v3272, %v3273
    %v3275 = vrot.slane %v3274, 1
    %v3276 = vmax.f32 %v3274, %v3275
    %v3277 = vsel %vm3269, %v2885, -inf
    %v3278 = vrot.slane %v3277, 4
    %v3279 = vmax.f32 %v3277, %v3278
    %v3280 = vrot.slane %v3279, 2
    %v3281 = vmax.f32 %v3279, %v3280
    %v3282 = vrot.slane %v3281, 1
    %v3283 = vmax.f32 %v3281, %v3282
    %v3284 = vsel %vm3269, %v2886, -inf
    %v3285 = vrot.slane %v3284, 4
    %v3286 = vmax.f32 %v3284, %v3285
    %v3287 = vrot.slane %v3286, 2
    %v3288 = vmax.f32 %v3286, %v3287
    %v3289 = vrot.slane %v3288, 1
    %v3290 = vmax.f32 %v3288, %v3289
    %v3291 = vsel %vm3269, %v2887, -inf
    %v3292 = vrot.slane %v3291, 4
    %v3293 = vmax.f32 %v3291, %v3292
    %v3294 = vrot.slane %v3293, 2
    %v3295 = vmax.f32 %v3293, %v3294
    %v3296 = vrot.slane %v3295, 1
    %v3297 = vmax.f32 %v3295, %v3296
    %v3298 = vsel %vm3269, %v2758, -inf
    %v3299 = vrot.slane %v3298, 4
    %v3300 = vmax.f32 %v3298, %v3299
    %v3301 = vrot.slane %v3300, 2
    %v3302 = vmax.f32 %v3300, %v3301
    %v3303 = vrot.slane %v3302, 1
    %v3304 = vmax.f32 %v3302, %v3303
    %v3305 = vsel %vm3269, %v2888, -inf
    %v3306 = vrot.slane %v3305, 4
    %v3307 = vmax.f32 %v3305, %v3306
    %v3308 = vrot.slane %v3307, 2
    %v3309 = vmax.f32 %v3307, %v3308
    %v3310 = vrot.slane %v3309, 1
    %v3311 = vmax.f32 %v3309, %v3310
    %v3312 = vsel %vm3269, %v2889, -inf
    %v3313 = vrot.slane %v3312, 4
    %v3314 = vmax.f32 %v3312, %v3313
    %v3315 = vrot.slane %v3314, 2
    %v3316 = vmax.f32 %v3314, %v3315
    %v3317 = vrot.slane %v3316, 1
    %v3318 = vmax.f32 %v3316, %v3317
    %v3319 = vsel %vm3269, %v2890, -inf
    %v3320 = vrot.slane %v3319, 4
    %v3321 = vmax.f32 %v3319, %v3320
    %v3322 = vrot.slane %v3321, 2
    %v3323 = vmax.f32 %v3321, %v3322
    %v3324 = vrot.slane %v3323, 1
    %v3325 = vmax.f32 %v3323, %v3324
    %v3326 = vsel %vm3269, %v2759, -inf
    %v3327 = vrot.slane %v3326, 4
    %v3328 = vmax.f32 %v3326, %v3327
    %v3329 = vrot.slane %v3328, 2
    %v3330 = vmax.f32 %v3328, %v3329
    %v3331 = vrot.slane %v3330, 1
    %v3332 = vmax.f32 %v3330, %v3331
    %v3333 = vsel %vm3269, %v2891, -inf
    %v3334 = vrot.slane %v3333, 4
    %v3335 = vmax.f32 %v3333, %v3334
    %v3336 = vrot.slane %v3335, 2
    %v3337 = vmax.f32 %v3335, %v3336
    %v3338 = vrot.slane %v3337, 1
    %v3339 = vmax.f32 %v3337, %v3338
    %v3340 = vsel %vm3269, %v2892, -inf
    %v3341 = vrot.slane %v3340, 4
    %v3342 = vmax.f32 %v3340, %v3341
    %v3343 = vrot.slane %v3342, 2
    %v3344 = vmax.f32 %v3342, %v3343
    %v3345 = vrot.slane %v3344, 1
    %v3346 = vmax.f32 %v3344, %v3345
    %v3347 = vsel %vm3269, %v2893, -inf
    %v3348 = vrot.slane %v3347, 4
    %v3349 = vmax.f32 %v3347, %v3348
    %v3350 = vrot.slane %v3349, 2
    %v3351 = vmax.f32 %v3349, %v3350
    %v3352 = vrot.slane %v3351, 1
    %v3353 = vmax.f32 %v3351, %v3352
    %v3354 = vsel %vm3269, %v2760, -inf
    %v3355 = vrot.slane %v3354, 4
    %v3356 = vmax.f32 %v3354, %v3355
    %v3357 = vrot.slane %v3356, 2
    %v3358 = vmax.f32 %v3356, %v3357
    %v3359 = vrot.slane %v3358, 1
    %v3360 = vmax.f32 %v3358, %v3359
    %v3361 = vsel %vm3269, %v2894, -inf
    %v3362 = vrot.slane %v3361, 4
    %v3363 = vmax.f32 %v3361, %v3362
    %v3364 = vrot.slane %v3363, 2
    %v3365 = vmax.f32 %v3363, %v3364
    %v3366 = vrot.slane %v3365, 1
    %v3367 = vmax.f32 %v3365, %v3366
    %v3368 = vsel %vm3269, %v2895, -inf
    %v3369 = vrot.slane %v3368, 4
    %v3370 = vmax.f32 %v3368, %v3369
    %v3371 = vrot.slane %v3370, 2
    %v3372 = vmax.f32 %v3370, %v3371
    %v3373 = vrot.slane %v3372, 1
    %v3374 = vmax.f32 %v3372, %v3373
    %v3375 = vsel %vm3269, %v2896, -inf
    %v3376 = vrot.slane %v3375, 4
    %v3377 = vmax.f32 %v3375, %v3376
    %v3378 = vrot.slane %v3377, 2
    %v3379 = vmax.f32 %v3377, %v3378
    %v3380 = vrot.slane %v3379, 1
    %v3381 = vmax.f32 %v3379, %v3380
    %v3382 = vsel %vm3269, %v2761, -inf
    %v3383 = vrot.slane %v3382, 4
    %v3384 = vmax.f32 %v3382, %v3383
    %v3385 = vrot.slane %v3384, 2
    %v3386 = vmax.f32 %v3384, %v3385
    %v3387 = vrot.slane %v3386, 1
    %v3388 = vmax.f32 %v3386, %v3387
    %v3389 = vsel %vm3269, %v2897, -inf
    %v3390 = vrot.slane %v3389, 4
    %v3391 = vmax.f32 %v3389, %v3390
    %v3392 = vrot.slane %v3391, 2
    %v3393 = vmax.f32 %v3391, %v3392
    %v3394 = vrot.slane %v3393, 1
    %v3395 = vmax.f32 %v3393, %v3394
    %v3396 = vsel %vm3269, %v2898, -inf
    %v3397 = vrot.slane %v3396, 4
    %v3398 = vmax.f32 %v3396, %v3397
    %v3399 = vrot.slane %v3398, 2
    %v3400 = vmax.f32 %v3398, %v3399
    %v3401 = vrot.slane %v3400, 1
    %v3402 = vmax.f32 %v3400, %v3401
    %v3403 = vsel %vm3269, %v2899, -inf
    %v3404 = vrot.slane %v3403, 4
    %v3405 = vmax.f32 %v3403, %v3404
    %v3406 = vrot.slane %v3405, 2
    %v3407 = vmax.f32 %v3405, %v3406
    %v3408 = vrot.slane %v3407, 1
    %v3409 = vmax.f32 %v3407, %v3408
    %v3410 = vsel %vm3269, %v2762, -inf
    %v3411 = vrot.slane %v3410, 4
    %v3412 = vmax.f32 %v3410, %v3411
    %v3413 = vrot.slane %v3412, 2
    %v3414 = vmax.f32 %v3412, %v3413
    %v3415 = vrot.slane %v3414, 1
    %v3416 = vmax.f32 %v3414, %v3415
    %v3417 = vsel %vm3269, %v2900, -inf
    %v3418 = vrot.slane %v3417, 4
    %v3419 = vmax.f32 %v3417, %v3418
    %v3420 = vrot.slane %v3419, 2
    %v3421 = vmax.f32 %v3419, %v3420
    %v3422 = vrot.slane %v3421, 1
    %v3423 = vmax.f32 %v3421, %v3422
    %v3424 = vsel %vm3269, %v2901, -inf
    %v3425 = vrot.slane %v3424, 4
    %v3426 = vmax.f32 %v3424, %v3425
    %v3427 = vrot.slane %v3426, 2
    %v3428 = vmax.f32 %v3426, %v3427
    %v3429 = vrot.slane %v3428, 1
    %v3430 = vmax.f32 %v3428, %v3429
    %v3431 = vsel %vm3269, %v2902, -inf
    %v3432 = vrot.slane %v3431, 4
    %v3433 = vmax.f32 %v3431, %v3432
    %v3434 = vrot.slane %v3433, 2
    %v3435 = vmax.f32 %v3433, %v3434
    %v3436 = vrot.slane %v3435, 1
    %v3437 = vmax.f32 %v3435, %v3436
    %v3438 = vsel %vm3269, %v2763, -inf
    %v3439 = vrot.slane %v3438, 4
    %v3440 = vmax.f32 %v3438, %v3439
    %v3441 = vrot.slane %v3440, 2
    %v3442 = vmax.f32 %v3440, %v3441
    %v3443 = vrot.slane %v3442, 1
    %v3444 = vmax.f32 %v3442, %v3443
    %v3445 = vsel %vm3269, %v2903, -inf
    %v3446 = vrot.slane %v3445, 4
    %v3447 = vmax.f32 %v3445, %v3446
    %v3448 = vrot.slane %v3447, 2
    %v3449 = vmax.f32 %v3447, %v3448
    %v3450 = vrot.slane %v3449, 1
    %v3451 = vmax.f32 %v3449, %v3450
    %v3452 = vsel %vm3269, %v2904, -inf
    %v3453 = vrot.slane %v3452, 4
    %v3454 = vmax.f32 %v3452, %v3453
    %v3455 = vrot.slane %v3454, 2
    %v3456 = vmax.f32 %v3454, %v3455
    %v3457 = vrot.slane %v3456, 1
    %v3458 = vmax.f32 %v3456, %v3457
    %v3459 = vsel %vm3269, %v2905, -inf
    %v3460 = vrot.slane %v3459, 4
    %v3461 = vmax.f32 %v3459, %v3460
    %v3462 = vrot.slane %v3461, 2
    %v3463 = vmax.f32 %v3461, %v3462
    %v3464 = vrot.slane %v3463, 1
    %v3465 = vmax.f32 %v3463, %v3464
    %v3466 = vsel %vm3269, %v2764, -inf
    %v3467 = vrot.slane %v3466, 4
    %v3468 = vmax.f32 %v3466, %v3467
    %v3469 = vrot.slane %v3468, 2
    %v3470 = vmax.f32 %v3468, %v3469
    %v3471 = vrot.slane %v3470, 1
    %v3472 = vmax.f32 %v3470, %v3471
    %v3473 = vsel %vm3269, %v2906, -inf
    %v3474 = vrot.slane %v3473, 4
    %v3475 = vmax.f32 %v3473, %v3474
    %v3476 = vrot.slane %v3475, 2
    %v3477 = vmax.f32 %v3475, %v3476
    %v3478 = vrot.slane %v3477, 1
    %v3479 = vmax.f32 %v3477, %v3478
    %v3480 = vsel %vm3269, %v2907, -inf
    %v3481 = vrot.slane %v3480, 4
    %v3482 = vmax.f32 %v3480, %v3481
    %v3483 = vrot.slane %v3482, 2
    %v3484 = vmax.f32 %v3482, %v3483
    %v3485 = vrot.slane %v3484, 1
    %v3486 = vmax.f32 %v3484, %v3485
    %v3487 = vsel %vm3269, %v2908, -inf
    %v3488 = vrot.slane %v3487, 4
    %v3489 = vmax.f32 %v3487, %v3488
    %v3490 = vrot.slane %v3489, 2
    %v3491 = vmax.f32 %v3489, %v3490
    %v3492 = vrot.slane %v3491, 1
    %v3493 = vmax.f32 %v3491, %v3492
    %v3494 = vsel %vm3269, %v2765, -inf
    %v3495 = vrot.slane %v3494, 4
    %v3496 = vmax.f32 %v3494, %v3495
    %v3497 = vrot.slane %v3496, 2
    %v3498 = vmax.f32 %v3496, %v3497
    %v3499 = vrot.slane %v3498, 1
    %v3500 = vmax.f32 %v3498, %v3499
    %v3501 = vsel %vm3269, %v2909, -inf
    %v3502 = vrot.slane %v3501, 4
    %v3503 = vmax.f32 %v3501, %v3502
    %v3504 = vrot.slane %v3503, 2
    %v3505 = vmax.f32 %v3503, %v3504
    %v3506 = vrot.slane %v3505, 1
    %v3507 = vmax.f32 %v3505, %v3506
    %v3508 = vsel %vm3269, %v2910, -inf
    %v3509 = vrot.slane %v3508, 4
    %v3510 = vmax.f32 %v3508, %v3509
    %v3511 = vrot.slane %v3510, 2
    %v3512 = vmax.f32 %v3510, %v3511
    %v3513 = vrot.slane %v3512, 1
    %v3514 = vmax.f32 %v3512, %v3513
    %v3515 = vsel %vm3269, %v2911, -inf
    %v3516 = vrot.slane %v3515, 4
    %v3517 = vmax.f32 %v3515, %v3516
    %v3518 = vrot.slane %v3517, 2
    %v3519 = vmax.f32 %v3517, %v3518
    %v3520 = vrot.slane %v3519, 1
    %v3521 = vmax.f32 %v3519, %v3520
    %v3522 = vsel %vm3269, %v2766, -inf
    %v3523 = vrot.slane %v3522, 4
    %v3524 = vmax.f32 %v3522, %v3523
    %v3525 = vrot.slane %v3524, 2
    %v3526 = vmax.f32 %v3524, %v3525
    %v3527 = vrot.slane %v3526, 1
    %v3528 = vmax.f32 %v3526, %v3527
    %v3529 = vsel %vm3269, %v2912, -inf
    %v3530 = vrot.slane %v3529, 4
    %v3531 = vmax.f32 %v3529, %v3530
    %v3532 = vrot.slane %v3531, 2
    %v3533 = vmax.f32 %v3531, %v3532
    %v3534 = vrot.slane %v3533, 1
    %v3535 = vmax.f32 %v3533, %v3534
    %v3536 = vsel %vm3269, %v2913, -inf
    %v3537 = vrot.slane %v3536, 4
    %v3538 = vmax.f32 %v3536, %v3537
    %v3539 = vrot.slane %v3538, 2
    %v3540 = vmax.f32 %v3538, %v3539
    %v3541 = vrot.slane %v3540, 1
    %v3542 = vmax.f32 %v3540, %v3541
    %v3543 = vsel %vm3269, %v2914, -inf
    %v3544 = vrot.slane %v3543, 4
    %v3545 = vmax.f32 %v3543, %v3544
    %v3546 = vrot.slane %v3545, 2
    %v3547 = vmax.f32 %v3545, %v3546
    %v3548 = vrot.slane %v3547, 1
    %v3549 = vmax.f32 %v3547, %v3548
    %v3550 = vsel %vm3269, %v2767, -inf
    %v3551 = vrot.slane %v3550, 4
    %v3552 = vmax.f32 %v3550, %v3551
    %v3553 = vrot.slane %v3552, 2
    %v3554 = vmax.f32 %v3552, %v3553
    %v3555 = vrot.slane %v3554, 1
    %v3556 = vmax.f32 %v3554, %v3555
    %v3557 = vsel %vm3269, %v2915, -inf
    %v3558 = vrot.slane %v3557, 4
    %v3559 = vmax.f32 %v3557, %v3558
    %v3560 = vrot.slane %v3559, 2
    %v3561 = vmax.f32 %v3559, %v3560
    %v3562 = vrot.slane %v3561, 1
    %v3563 = vmax.f32 %v3561, %v3562
    %v3564 = vsel %vm3269, %v2916, -inf
    %v3565 = vrot.slane %v3564, 4
    %v3566 = vmax.f32 %v3564, %v3565
    %v3567 = vrot.slane %v3566, 2
    %v3568 = vmax.f32 %v3566, %v3567
    %v3569 = vrot.slane %v3568, 1
    %v3570 = vmax.f32 %v3568, %v3569
    %v3571 = vsel %vm3269, %v2917, -inf
    %v3572 = vrot.slane %v3571, 4
    %v3573 = vmax.f32 %v3571, %v3572
    %v3574 = vrot.slane %v3573, 2
    %v3575 = vmax.f32 %v3573, %v3574
    %v3576 = vrot.slane %v3575, 1
    %v3577 = vmax.f32 %v3575, %v3576
    %v3578 = vsel %vm3269, %v2768, -inf
    %v3579 = vrot.slane %v3578, 4
    %v3580 = vmax.f32 %v3578, %v3579
    %v3581 = vrot.slane %v3580, 2
    %v3582 = vmax.f32 %v3580, %v3581
    %v3583 = vrot.slane %v3582, 1
    %v3584 = vmax.f32 %v3582, %v3583
    %v3585 = vsel %vm3269, %v2918, -inf
    %v3586 = vrot.slane %v3585, 4
    %v3587 = vmax.f32 %v3585, %v3586
    %v3588 = vrot.slane %v3587, 2
    %v3589 = vmax.f32 %v3587, %v3588
    %v3590 = vrot.slane %v3589, 1
    %v3591 = vmax.f32 %v3589, %v3590
    %v3592 = vsel %vm3269, %v2919, -inf
    %v3593 = vrot.slane %v3592, 4
    %v3594 = vmax.f32 %v3592, %v3593
    %v3595 = vrot.slane %v3594, 2
    %v3596 = vmax.f32 %v3594, %v3595
    %v3597 = vrot.slane %v3596, 1
    %v3598 = vmax.f32 %v3596, %v3597
    %v3599 = vsel %vm3269, %v2920, -inf
    %v3600 = vrot.slane %v3599, 4
    %v3601 = vmax.f32 %v3599, %v3600
    %v3602 = vrot.slane %v3601, 2
    %v3603 = vmax.f32 %v3601, %v3602
    %v3604 = vrot.slane %v3603, 1
    %v3605 = vmax.f32 %v3603, %v3604
    %v3606 = vsel %vm3269, %v2769, -inf
    %v3607 = vrot.slane %v3606, 4
    %v3608 = vmax.f32 %v3606, %v3607
    %v3609 = vrot.slane %v3608, 2
    %v3610 = vmax.f32 %v3608, %v3609
    %v3611 = vrot.slane %v3610, 1
    %v3612 = vmax.f32 %v3610, %v3611
    %v3613 = vsel %vm3269, %v2921, -inf
    %v3614 = vrot.slane %v3613, 4
    %v3615 = vmax.f32 %v3613, %v3614
    %v3616 = vrot.slane %v3615, 2
    %v3617 = vmax.f32 %v3615, %v3616
    %v3618 = vrot.slane %v3617, 1
    %v3619 = vmax.f32 %v3617, %v3618
    %v3620 = vsel %vm3269, %v2922, -inf
    %v3621 = vrot.slane %v3620, 4
    %v3622 = vmax.f32 %v3620, %v3621
    %v3623 = vrot.slane %v3622, 2
    %v3624 = vmax.f32 %v3622, %v3623
    %v3625 = vrot.slane %v3624, 1
    %v3626 = vmax.f32 %v3624, %v3625
    %v3627 = vsel %vm3269, %v2923, -inf
    %v3628 = vrot.slane %v3627, 4
    %v3629 = vmax.f32 %v3627, %v3628
    %v3630 = vrot.slane %v3629, 2
    %v3631 = vmax.f32 %v3629, %v3630
    %v3632 = vrot.slane %v3631, 1
    %v3633 = vmax.f32 %v3631, %v3632
    %v3634 = vsel %vm3269, %v2770, -inf
    %v3635 = vrot.slane %v3634, 4
    %v3636 = vmax.f32 %v3634, %v3635
    %v3637 = vrot.slane %v3636, 2
    %v3638 = vmax.f32 %v3636, %v3637
    %v3639 = vrot.slane %v3638, 1
    %v3640 = vmax.f32 %v3638, %v3639
    %v3641 = vsel %vm3269, %v2924, -inf
    %v3642 = vrot.slane %v3641, 4
    %v3643 = vmax.f32 %v3641, %v3642
    %v3644 = vrot.slane %v3643, 2
    %v3645 = vmax.f32 %v3643, %v3644
    %v3646 = vrot.slane %v3645, 1
    %v3647 = vmax.f32 %v3645, %v3646
    %v3648 = vsel %vm3269, %v2925, -inf
    %v3649 = vrot.slane %v3648, 4
    %v3650 = vmax.f32 %v3648, %v3649
    %v3651 = vrot.slane %v3650, 2
    %v3652 = vmax.f32 %v3650, %v3651
    %v3653 = vrot.slane %v3652, 1
    %v3654 = vmax.f32 %v3652, %v3653
    %v3655 = vsel %vm3269, %v2926, -inf
    %v3656 = vrot.slane %v3655, 4
    %v3657 = vmax.f32 %v3655, %v3656
    %v3658 = vrot.slane %v3657, 2
    %v3659 = vmax.f32 %v3657, %v3658
    %v3660 = vrot.slane %v3659, 1
    %v3661 = vmax.f32 %v3659, %v3660
    %v3662 = vsel %vm3269, %v2771, -inf
    %v3663 = vrot.slane %v3662, 4
    %v3664 = vmax.f32 %v3662, %v3663
    %v3665 = vrot.slane %v3664, 2
    %v3666 = vmax.f32 %v3664, %v3665
    %v3667 = vrot.slane %v3666, 1
    %v3668 = vmax.f32 %v3666, %v3667
    %v3669 = vsel %vm3269, %v2927, -inf
    %v3670 = vrot.slane %v3669, 4
    %v3671 = vmax.f32 %v3669, %v3670
    %v3672 = vrot.slane %v3671, 2
    %v3673 = vmax.f32 %v3671, %v3672
    %v3674 = vrot.slane %v3673, 1
    %v3675 = vmax.f32 %v3673, %v3674
    %v3676 = vsel %vm3269, %v2928, -inf
    %v3677 = vrot.slane %v3676, 4
    %v3678 = vmax.f32 %v3676, %v3677
    %v3679 = vrot.slane %v3678, 2
    %v3680 = vmax.f32 %v3678, %v3679
    %v3681 = vrot.slane %v3680, 1
    %v3682 = vmax.f32 %v3680, %v3681
    %v3683 = vsel %vm3269, %v2929, -inf
    %v3684 = vrot.slane %v3683, 4
    %v3685 = vmax.f32 %v3683, %v3684
    %v3686 = vrot.slane %v3685, 2
    %v3687 = vmax.f32 %v3685, %v3686
    %v3688 = vrot.slane %v3687, 1
    %v3689 = vmax.f32 %v3687, %v3688
    %v3690 = vsel %vm3269, %v2772, -inf
    %v3691 = vrot.slane %v3690, 4
    %v3692 = vmax.f32 %v3690, %v3691
    %v3693 = vrot.slane %v3692, 2
    %v3694 = vmax.f32 %v3692, %v3693
    %v3695 = vrot.slane %v3694, 1
    %v3696 = vmax.f32 %v3694, %v3695
    %v3697 = vsel %vm3269, %v2930, -inf
    %v3698 = vrot.slane %v3697, 4
    %v3699 = vmax.f32 %v3697, %v3698
    %v3700 = vrot.slane %v3699, 2
    %v3701 = vmax.f32 %v3699, %v3700
    %v3702 = vrot.slane %v3701, 1
    %v3703 = vmax.f32 %v3701, %v3702
    %v3704 = vsel %vm3269, %v2931, -inf
    %v3705 = vrot.slane %v3704, 4
    %v3706 = vmax.f32 %v3704, %v3705
    %v3707 = vrot.slane %v3706, 2
    %v3708 = vmax.f32 %v3706, %v3707
    %v3709 = vrot.slane %v3708, 1
    %v3710 = vmax.f32 %v3708, %v3709
    %v3711 = vsel %vm3269, %v2932, -inf
    %v3712 = vrot.slane %v3711, 4
    %v3713 = vmax.f32 %v3711, %v3712
    %v3714 = vrot.slane %v3713, 2
    %v3715 = vmax.f32 %v3713, %v3714
    %v3716 = vrot.slane %v3715, 1
    %v3717 = vmax.f32 %v3715, %v3716
    %v3718 = vsel %vm3269, %v2773, -inf
    %v3719 = vrot.slane %v3718, 4
    %v3720 = vmax.f32 %v3718, %v3719
    %v3721 = vrot.slane %v3720, 2
    %v3722 = vmax.f32 %v3720, %v3721
    %v3723 = vrot.slane %v3722, 1
    %v3724 = vmax.f32 %v3722, %v3723
    %v3725 = vsel %vm3269, %v2933, -inf
    %v3726 = vrot.slane %v3725, 4
    %v3727 = vmax.f32 %v3725, %v3726
    %v3728 = vrot.slane %v3727, 2
    %v3729 = vmax.f32 %v3727, %v3728
    %v3730 = vrot.slane %v3729, 1
    %v3731 = vmax.f32 %v3729, %v3730
    %v3732 = vsel %vm3269, %v2934, -inf
    %v3733 = vrot.slane %v3732, 4
    %v3734 = vmax.f32 %v3732, %v3733
    %v3735 = vrot.slane %v3734, 2
    %v3736 = vmax.f32 %v3734, %v3735
    %v3737 = vrot.slane %v3736, 1
    %v3738 = vmax.f32 %v3736, %v3737
    %v3739 = vsel %vm3269, %v2935, -inf
    %v3740 = vrot.slane %v3739, 4
    %v3741 = vmax.f32 %v3739, %v3740
    %v3742 = vrot.slane %v3741, 2
    %v3743 = vmax.f32 %v3741, %v3742
    %v3744 = vrot.slane %v3743, 1
    %v3745 = vmax.f32 %v3743, %v3744
    %v3746 = vsel %vm3269, %v2774, -inf
    %v3747 = vrot.slane %v3746, 4
    %v3748 = vmax.f32 %v3746, %v3747
    %v3749 = vrot.slane %v3748, 2
    %v3750 = vmax.f32 %v3748, %v3749
    %v3751 = vrot.slane %v3750, 1
    %v3752 = vmax.f32 %v3750, %v3751
    %v3753 = vsel %vm3269, %v2936, -inf
    %v3754 = vrot.slane %v3753, 4
    %v3755 = vmax.f32 %v3753, %v3754
    %v3756 = vrot.slane %v3755, 2
    %v3757 = vmax.f32 %v3755, %v3756
    %v3758 = vrot.slane %v3757, 1
    %v3759 = vmax.f32 %v3757, %v3758
    %v3760 = vsel %vm3269, %v2937, -inf
    %v3761 = vrot.slane %v3760, 4
    %v3762 = vmax.f32 %v3760, %v3761
    %v3763 = vrot.slane %v3762, 2
    %v3764 = vmax.f32 %v3762, %v3763
    %v3765 = vrot.slane %v3764, 1
    %v3766 = vmax.f32 %v3764, %v3765
    %v3767 = vsel %vm3269, %v2938, -inf
    %v3768 = vrot.slane %v3767, 4
    %v3769 = vmax.f32 %v3767, %v3768
    %v3770 = vrot.slane %v3769, 2
    %v3771 = vmax.f32 %v3769, %v3770
    %v3772 = vrot.slane %v3771, 1
    %v3773 = vmax.f32 %v3771, %v3772
    %v3774 = vsel %vm3269, %v2775, -inf
    %v3775 = vrot.slane %v3774, 4
    %v3776 = vmax.f32 %v3774, %v3775
    %v3777 = vrot.slane %v3776, 2
    %v3778 = vmax.f32 %v3776, %v3777
    %v3779 = vrot.slane %v3778, 1
    %v3780 = vmax.f32 %v3778, %v3779
    %v3781 = vsel %vm3269, %v2939, -inf
    %v3782 = vrot.slane %v3781, 4
    %v3783 = vmax.f32 %v3781, %v3782
    %v3784 = vrot.slane %v3783, 2
    %v3785 = vmax.f32 %v3783, %v3784
    %v3786 = vrot.slane %v3785, 1
    %v3787 = vmax.f32 %v3785, %v3786
    %v3788 = vsel %vm3269, %v2940, -inf
    %v3789 = vrot.slane %v3788, 4
    %v3790 = vmax.f32 %v3788, %v3789
    %v3791 = vrot.slane %v3790, 2
    %v3792 = vmax.f32 %v3790, %v3791
    %v3793 = vrot.slane %v3792, 1
    %v3794 = vmax.f32 %v3792, %v3793
    %v3795 = vsel %vm3269, %v2941, -inf
    %v3796 = vrot.slane %v3795, 4
    %v3797 = vmax.f32 %v3795, %v3796
    %v3798 = vrot.slane %v3797, 2
    %v3799 = vmax.f32 %v3797, %v3798
    %v3800 = vrot.slane %v3799, 1
    %v3801 = vmax.f32 %v3799, %v3800
    %v3802 = vsel %vm3269, %v2776, -inf
    %v3803 = vrot.slane %v3802, 4
    %v3804 = vmax.f32 %v3802, %v3803
    %v3805 = vrot.slane %v3804, 2
    %v3806 = vmax.f32 %v3804, %v3805
    %v3807 = vrot.slane %v3806, 1
    %v3808 = vmax.f32 %v3806, %v3807
    %v3809 = vsel %vm3269, %v2942, -inf
    %v3810 = vrot.slane %v3809, 4
    %v3811 = vmax.f32 %v3809, %v3810
    %v3812 = vrot.slane %v3811, 2
    %v3813 = vmax.f32 %v3811, %v3812
    %v3814 = vrot.slane %v3813, 1
    %v3815 = vmax.f32 %v3813, %v3814
    %v3816 = vsel %vm3269, %v2943, -inf
    %v3817 = vrot.slane %v3816, 4
    %v3818 = vmax.f32 %v3816, %v3817
    %v3819 = vrot.slane %v3818, 2
    %v3820 = vmax.f32 %v3818, %v3819
    %v3821 = vrot.slane %v3820, 1
    %v3822 = vmax.f32 %v3820, %v3821
    %v3823 = vsel %vm3269, %v2944, -inf
    %v3824 = vrot.slane %v3823, 4
    %v3825 = vmax.f32 %v3823, %v3824
    %v3826 = vrot.slane %v3825, 2
    %v3827 = vmax.f32 %v3825, %v3826
    %v3828 = vrot.slane %v3827, 1
    %v3829 = vmax.f32 %v3827, %v3828
    %v3830 = vsel %vm3269, %v2777, -inf
    %v3831 = vrot.slane %v3830, 4
    %v3832 = vmax.f32 %v3830, %v3831
    %v3833 = vrot.slane %v3832, 2
    %v3834 = vmax.f32 %v3832, %v3833
    %v3835 = vrot.slane %v3834, 1
    %v3836 = vmax.f32 %v3834, %v3835
    %v3837 = vsel %vm3269, %v2945, -inf
    %v3838 = vrot.slane %v3837, 4
    %v3839 = vmax.f32 %v3837, %v3838
    %v3840 = vrot.slane %v3839, 2
    %v3841 = vmax.f32 %v3839, %v3840
    %v3842 = vrot.slane %v3841, 1
    %v3843 = vmax.f32 %v3841, %v3842
    %v3844 = vsel %vm3269, %v2946, -inf
    %v3845 = vrot.slane %v3844, 4
    %v3846 = vmax.f32 %v3844, %v3845
    %v3847 = vrot.slane %v3846, 2
    %v3848 = vmax.f32 %v3846, %v3847
    %v3849 = vrot.slane %v3848, 1
    %v3850 = vmax.f32 %v3848, %v3849
    %v3851 = vsel %vm3269, %v2947, -inf
    %v3852 = vrot.slane %v3851, 4
    %v3853 = vmax.f32 %v3851, %v3852
    %v3854 = vrot.slane %v3853, 2
    %v3855 = vmax.f32 %v3853, %v3854
    %v3856 = vrot.slane %v3855, 1
    %v3857 = vmax.f32 %v3855, %v3856
    %v3858 = vsel %vm3269, %v2778, -inf
    %v3859 = vrot.slane %v3858, 4
    %v3860 = vmax.f32 %v3858, %v3859
    %v3861 = vrot.slane %v3860, 2
    %v3862 = vmax.f32 %v3860, %v3861
    %v3863 = vrot.slane %v3862, 1
    %v3864 = vmax.f32 %v3862, %v3863
    %v3865 = vsel %vm3269, %v2948, -inf
    %v3866 = vrot.slane %v3865, 4
    %v3867 = vmax.f32 %v3865, %v3866
    %v3868 = vrot.slane %v3867, 2
    %v3869 = vmax.f32 %v3867, %v3868
    %v3870 = vrot.slane %v3869, 1
    %v3871 = vmax.f32 %v3869, %v3870
    %v3872 = vsel %vm3269, %v2949, -inf
    %v3873 = vrot.slane %v3872, 4
    %v3874 = vmax.f32 %v3872, %v3873
    %v3875 = vrot.slane %v3874, 2
    %v3876 = vmax.f32 %v3874, %v3875
    %v3877 = vrot.slane %v3876, 1
    %v3878 = vmax.f32 %v3876, %v3877
    %v3879 = vsel %vm3269, %v2950, -inf
    %v3880 = vrot.slane %v3879, 4
    %v3881 = vmax.f32 %v3879, %v3880
    %v3882 = vrot.slane %v3881, 2
    %v3883 = vmax.f32 %v3881, %v3882
    %v3884 = vrot.slane %v3883, 1
    %v3885 = vmax.f32 %v3883, %v3884
    %v3886 = vsel %vm3269, %v2779, -inf
    %v3887 = vrot.slane %v3886, 4
    %v3888 = vmax.f32 %v3886, %v3887
    %v3889 = vrot.slane %v3888, 2
    %v3890 = vmax.f32 %v3888, %v3889
    %v3891 = vrot.slane %v3890, 1
    %v3892 = vmax.f32 %v3890, %v3891
    %v3893 = vsel %vm3269, %v2951, -inf
    %v3894 = vrot.slane %v3893, 4
    %v3895 = vmax.f32 %v3893, %v3894
    %v3896 = vrot.slane %v3895, 2
    %v3897 = vmax.f32 %v3895, %v3896
    %v3898 = vrot.slane %v3897, 1
    %v3899 = vmax.f32 %v3897, %v3898
    %v3900 = vsel %vm3269, %v2952, -inf
    %v3901 = vrot.slane %v3900, 4
    %v3902 = vmax.f32 %v3900, %v3901
    %v3903 = vrot.slane %v3902, 2
    %v3904 = vmax.f32 %v3902, %v3903
    %v3905 = vrot.slane %v3904, 1
    %v3906 = vmax.f32 %v3904, %v3905
    %v3907 = vsel %vm3269, %v2953, -inf
    %v3908 = vrot.slane %v3907, 4
    %v3909 = vmax.f32 %v3907, %v3908
    %v3910 = vrot.slane %v3909, 2
    %v3911 = vmax.f32 %v3909, %v3910
    %v3912 = vrot.slane %v3911, 1
    %v3913 = vmax.f32 %v3911, %v3912
    %v3914 = vsel %vm3269, %v2780, -inf
    %v3915 = vrot.slane %v3914, 4
    %v3916 = vmax.f32 %v3914, %v3915
    %v3917 = vrot.slane %v3916, 2
    %v3918 = vmax.f32 %v3916, %v3917
    %v3919 = vrot.slane %v3918, 1
    %v3920 = vmax.f32 %v3918, %v3919
    %v3921 = vsel %vm3269, %v2954, -inf
    %v3922 = vrot.slane %v3921, 4
    %v3923 = vmax.f32 %v3921, %v3922
    %v3924 = vrot.slane %v3923, 2
    %v3925 = vmax.f32 %v3923, %v3924
    %v3926 = vrot.slane %v3925, 1
    %v3927 = vmax.f32 %v3925, %v3926
    %v3928 = vsel %vm3269, %v2955, -inf
    %v3929 = vrot.slane %v3928, 4
    %v3930 = vmax.f32 %v3928, %v3929
    %v3931 = vrot.slane %v3930, 2
    %v3932 = vmax.f32 %v3930, %v3931
    %v3933 = vrot.slane %v3932, 1
    %v3934 = vmax.f32 %v3932, %v3933
    %v3935 = vsel %vm3269, %v2956, -inf
    %v3936 = vrot.slane %v3935, 4
    %v3937 = vmax.f32 %v3935, %v3936
    %v3938 = vrot.slane %v3937, 2
    %v3939 = vmax.f32 %v3937, %v3938
    %v3940 = vrot.slane %v3939, 1
    %v3941 = vmax.f32 %v3939, %v3940
    %v3942 = vsel %vm3269, %v2781, -inf
    %v3943 = vrot.slane %v3942, 4
    %v3944 = vmax.f32 %v3942, %v3943
    %v3945 = vrot.slane %v3944, 2
    %v3946 = vmax.f32 %v3944, %v3945
    %v3947 = vrot.slane %v3946, 1
    %v3948 = vmax.f32 %v3946, %v3947
    %v3949 = vsel %vm3269, %v2957, -inf
    %v3950 = vrot.slane %v3949, 4
    %v3951 = vmax.f32 %v3949, %v3950
    %v3952 = vrot.slane %v3951, 2
    %v3953 = vmax.f32 %v3951, %v3952
    %v3954 = vrot.slane %v3953, 1
    %v3955 = vmax.f32 %v3953, %v3954
    %v3956 = vsel %vm3269, %v2958, -inf
    %v3957 = vrot.slane %v3956, 4
    %v3958 = vmax.f32 %v3956, %v3957
    %v3959 = vrot.slane %v3958, 2
    %v3960 = vmax.f32 %v3958, %v3959
    %v3961 = vrot.slane %v3960, 1
    %v3962 = vmax.f32 %v3960, %v3961
    %v3963 = vsel %vm3269, %v2959, -inf
    %v3964 = vrot.slane %v3963, 4
    %v3965 = vmax.f32 %v3963, %v3964
    %v3966 = vrot.slane %v3965, 2
    %v3967 = vmax.f32 %v3965, %v3966
    %v3968 = vrot.slane %v3967, 1
    %v3969 = vmax.f32 %v3967, %v3968
    %v3970 = vsel %vm3269, %v2782, -inf
    %v3971 = vrot.slane %v3970, 4
    %v3972 = vmax.f32 %v3970, %v3971
    %v3973 = vrot.slane %v3972, 2
    %v3974 = vmax.f32 %v3972, %v3973
    %v3975 = vrot.slane %v3974, 1
    %v3976 = vmax.f32 %v3974, %v3975
    %v3977 = vsel %vm3269, %v2960, -inf
    %v3978 = vrot.slane %v3977, 4
    %v3979 = vmax.f32 %v3977, %v3978
    %v3980 = vrot.slane %v3979, 2
    %v3981 = vmax.f32 %v3979, %v3980
    %v3982 = vrot.slane %v3981, 1
    %v3983 = vmax.f32 %v3981, %v3982
    %v3984 = vsel %vm3269, %v2961, -inf
    %v3985 = vrot.slane %v3984, 4
    %v3986 = vmax.f32 %v3984, %v3985
    %v3987 = vrot.slane %v3986, 2
    %v3988 = vmax.f32 %v3986, %v3987
    %v3989 = vrot.slane %v3988, 1
    %v3990 = vmax.f32 %v3988, %v3989
    %v3991 = vsel %vm3269, %v2962, -inf
    %v3992 = vrot.slane %v3991, 4
    %v3993 = vmax.f32 %v3991, %v3992
    %v3994 = vrot.slane %v3993, 2
    %v3995 = vmax.f32 %v3993, %v3994
    %v3996 = vrot.slane %v3995, 1
    %v3997 = vmax.f32 %v3995, %v3996
    %v3998 = vsel %vm3269, %v2783, -inf
    %v3999 = vrot.slane %v3998, 4
    %v4000 = vmax.f32 %v3998, %v3999
    %v4001 = vrot.slane %v4000, 2
    %v4002 = vmax.f32 %v4000, %v4001
    %v4003 = vrot.slane %v4002, 1
    %v4004 = vmax.f32 %v4002, %v4003
    %v4005 = vsel %vm3269, %v2963, -inf
    %v4006 = vrot.slane %v4005, 4
    %v4007 = vmax.f32 %v4005, %v4006
    %v4008 = vrot.slane %v4007, 2
    %v4009 = vmax.f32 %v4007, %v4008
    %v4010 = vrot.slane %v4009, 1
    %v4011 = vmax.f32 %v4009, %v4010
    %v4012 = vsel %vm3269, %v2964, -inf
    %v4013 = vrot.slane %v4012, 4
    %v4014 = vmax.f32 %v4012, %v4013
    %v4015 = vrot.slane %v4014, 2
    %v4016 = vmax.f32 %v4014, %v4015
    %v4017 = vrot.slane %v4016, 1
    %v4018 = vmax.f32 %v4016, %v4017
    %v4019 = vsel %vm3269, %v2965, -inf
    %v4020 = vrot.slane %v4019, 4
    %v4021 = vmax.f32 %v4019, %v4020
    %v4022 = vrot.slane %v4021, 2
    %v4023 = vmax.f32 %v4021, %v4022
    %v4024 = vrot.slane %v4023, 1
    %v4025 = vmax.f32 %v4023, %v4024
    %v4026 = vsel %vm3269, %v2784, -inf
    %v4027 = vrot.slane %v4026, 4
    %v4028 = vmax.f32 %v4026, %v4027
    %v4029 = vrot.slane %v4028, 2
    %v4030 = vmax.f32 %v4028, %v4029
    %v4031 = vrot.slane %v4030, 1
    %v4032 = vmax.f32 %v4030, %v4031
    %v4033 = vsel %vm3269, %v2966, -inf
    %v4034 = vrot.slane %v4033, 4
    %v4035 = vmax.f32 %v4033, %v4034
    %v4036 = vrot.slane %v4035, 2
    %v4037 = vmax.f32 %v4035, %v4036
    %v4038 = vrot.slane %v4037, 1
    %v4039 = vmax.f32 %v4037, %v4038
    %v4040 = vsel %vm3269, %v2967, -inf
    %v4041 = vrot.slane %v4040, 4
    %v4042 = vmax.f32 %v4040, %v4041
    %v4043 = vrot.slane %v4042, 2
    %v4044 = vmax.f32 %v4042, %v4043
    %v4045 = vrot.slane %v4044, 1
    %v4046 = vmax.f32 %v4044, %v4045
    %v4047 = vsel %vm3269, %v2968, -inf
    %v4048 = vrot.slane %v4047, 4
    %v4049 = vmax.f32 %v4047, %v4048
    %v4050 = vrot.slane %v4049, 2
    %v4051 = vmax.f32 %v4049, %v4050
    %v4052 = vrot.slane %v4051, 1
    %v4053 = vmax.f32 %v4051, %v4052
    %v4054 = vsel %vm3269, %v2785, -inf
    %v4055 = vrot.slane %v4054, 4
    %v4056 = vmax.f32 %v4054, %v4055
    %v4057 = vrot.slane %v4056, 2
    %v4058 = vmax.f32 %v4056, %v4057
    %v4059 = vrot.slane %v4058, 1
    %v4060 = vmax.f32 %v4058, %v4059
    %v4061 = vsel %vm3269, %v2969, -inf
    %v4062 = vrot.slane %v4061, 4
    %v4063 = vmax.f32 %v4061, %v4062
    %v4064 = vrot.slane %v4063, 2
    %v4065 = vmax.f32 %v4063, %v4064
    %v4066 = vrot.slane %v4065, 1
    %v4067 = vmax.f32 %v4065, %v4066
    %v4068 = vsel %vm3269, %v2970, -inf
    %v4069 = vrot.slane %v4068, 4
    %v4070 = vmax.f32 %v4068, %v4069
    %v4071 = vrot.slane %v4070, 2
    %v4072 = vmax.f32 %v4070, %v4071
    %v4073 = vrot.slane %v4072, 1
    %v4074 = vmax.f32 %v4072, %v4073
    %v4075 = vsel %vm3269, %v2971, -inf
    %v4076 = vrot.slane %v4075, 4
    %v4077 = vmax.f32 %v4075, %v4076
    %v4078 = vrot.slane %v4077, 2
    %v4079 = vmax.f32 %v4077, %v4078
    %v4080 = vrot.slane %v4079, 1
    %v4081 = vmax.f32 %v4079, %v4080
    %v4082 = vsel %vm3269, %v2786, -inf
    %v4083 = vrot.slane %v4082, 4
    %v4084 = vmax.f32 %v4082, %v4083
    %v4085 = vrot.slane %v4084, 2
    %v4086 = vmax.f32 %v4084, %v4085
    %v4087 = vrot.slane %v4086, 1
    %v4088 = vmax.f32 %v4086, %v4087
    %v4089 = vsel %vm3269, %v2972, -inf
    %v4090 = vrot.slane %v4089, 4
    %v4091 = vmax.f32 %v4089, %v4090
    %v4092 = vrot.slane %v4091, 2
    %v4093 = vmax.f32 %v4091, %v4092
    %v4094 = vrot.slane %v4093, 1
    %v4095 = vmax.f32 %v4093, %v4094
    %v4096 = vsel %vm3269, %v2973, -inf
    %v4097 = vrot.slane %v4096, 4
    %v4098 = vmax.f32 %v4096, %v4097
    %v4099 = vrot.slane %v4098, 2
    %v4100 = vmax.f32 %v4098, %v4099
    %v4101 = vrot.slane %v4100, 1
    %v4102 = vmax.f32 %v4100, %v4101
    %v4103 = vsel %vm3269, %v2974, -inf
    %v4104 = vrot.slane %v4103, 4
    %v4105 = vmax.f32 %v4103, %v4104
    %v4106 = vrot.slane %v4105, 2
    %v4107 = vmax.f32 %v4105, %v4106
    %v4108 = vrot.slane %v4107, 1
    %v4109 = vmax.f32 %v4107, %v4108
    %v4110 = vsel %vm3269, %v2787, -inf
    %v4111 = vrot.slane %v4110, 4
    %v4112 = vmax.f32 %v4110, %v4111
    %v4113 = vrot.slane %v4112, 2
    %v4114 = vmax.f32 %v4112, %v4113
    %v4115 = vrot.slane %v4114, 1
    %v4116 = vmax.f32 %v4114, %v4115
    %v4117 = vsel %vm3269, %v2975, -inf
    %v4118 = vrot.slane %v4117, 4
    %v4119 = vmax.f32 %v4117, %v4118
    %v4120 = vrot.slane %v4119, 2
    %v4121 = vmax.f32 %v4119, %v4120
    %v4122 = vrot.slane %v4121, 1
    %v4123 = vmax.f32 %v4121, %v4122
    %v4124 = vsel %vm3269, %v2976, -inf
    %v4125 = vrot.slane %v4124, 4
    %v4126 = vmax.f32 %v4124, %v4125
    %v4127 = vrot.slane %v4126, 2
    %v4128 = vmax.f32 %v4126, %v4127
    %v4129 = vrot.slane %v4128, 1
    %v4130 = vmax.f32 %v4128, %v4129
    %v4131 = vsel %vm3269, %v2977, -inf
    %v4132 = vrot.slane %v4131, 4
    %v4133 = vmax.f32 %v4131, %v4132
    %v4134 = vrot.slane %v4133, 2
    %v4135 = vmax.f32 %v4133, %v4134
    %v4136 = vrot.slane %v4135, 1
    %v4137 = vmax.f32 %v4135, %v4136
    %v4138 = vsel %vm3269, %v2788, -inf
    %v4139 = vrot.slane %v4138, 4
    %v4140 = vmax.f32 %v4138, %v4139
    %v4141 = vrot.slane %v4140, 2
    %v4142 = vmax.f32 %v4140, %v4141
    %v4143 = vrot.slane %v4142, 1
    %v4144 = vmax.f32 %v4142, %v4143
    %v4145 = vsel %vm3269, %v2978, -inf
    %v4146 = vrot.slane %v4145, 4
    %v4147 = vmax.f32 %v4145, %v4146
    %v4148 = vrot.slane %v4147, 2
    %v4149 = vmax.f32 %v4147, %v4148
    %v4150 = vrot.slane %v4149, 1
    %v4151 = vmax.f32 %v4149, %v4150
    %v4152 = vsel %vm3269, %v2979, -inf
    %v4153 = vrot.slane %v4152, 4
    %v4154 = vmax.f32 %v4152, %v4153
    %v4155 = vrot.slane %v4154, 2
    %v4156 = vmax.f32 %v4154, %v4155
    %v4157 = vrot.slane %v4156, 1
    %v4158 = vmax.f32 %v4156, %v4157
    %v4159 = vsel %vm3269, %v2980, -inf
    %v4160 = vrot.slane %v4159, 4
    %v4161 = vmax.f32 %v4159, %v4160
    %v4162 = vrot.slane %v4161, 2
    %v4163 = vmax.f32 %v4161, %v4162
    %v4164 = vrot.slane %v4163, 1
    %v4165 = vmax.f32 %v4163, %v4164
    %v4166 = vsel %vm3269, %v2789, -inf
    %v4167 = vrot.slane %v4166, 4
    %v4168 = vmax.f32 %v4166, %v4167
    %v4169 = vrot.slane %v4168, 2
    %v4170 = vmax.f32 %v4168, %v4169
    %v4171 = vrot.slane %v4170, 1
    %v4172 = vmax.f32 %v4170, %v4171
    %v4173 = vsel %vm3269, %v2981, -inf
    %v4174 = vrot.slane %v4173, 4
    %v4175 = vmax.f32 %v4173, %v4174
    %v4176 = vrot.slane %v4175, 2
    %v4177 = vmax.f32 %v4175, %v4176
    %v4178 = vrot.slane %v4177, 1
    %v4179 = vmax.f32 %v4177, %v4178
    %v4180 = vsel %vm3269, %v2982, -inf
    %v4181 = vrot.slane %v4180, 4
    %v4182 = vmax.f32 %v4180, %v4181
    %v4183 = vrot.slane %v4182, 2
    %v4184 = vmax.f32 %v4182, %v4183
    %v4185 = vrot.slane %v4184, 1
    %v4186 = vmax.f32 %v4184, %v4185
    %v4187 = vsel %vm3269, %v2983, -inf
    %v4188 = vrot.slane %v4187, 4
    %v4189 = vmax.f32 %v4187, %v4188
    %v4190 = vrot.slane %v4189, 2
    %v4191 = vmax.f32 %v4189, %v4190
    %v4192 = vrot.slane %v4191, 1
    %v4193 = vmax.f32 %v4191, %v4192
    %v4194 = vsel %vm3269, %v2790, -inf
    %v4195 = vrot.slane %v4194, 4
    %v4196 = vmax.f32 %v4194, %v4195
    %v4197 = vrot.slane %v4196, 2
    %v4198 = vmax.f32 %v4196, %v4197
    %v4199 = vrot.slane %v4198, 1
    %v4200 = vmax.f32 %v4198, %v4199
    %v4201 = vsel %vm3269, %v2984, -inf
    %v4202 = vrot.slane %v4201, 4
    %v4203 = vmax.f32 %v4201, %v4202
    %v4204 = vrot.slane %v4203, 2
    %v4205 = vmax.f32 %v4203, %v4204
    %v4206 = vrot.slane %v4205, 1
    %v4207 = vmax.f32 %v4205, %v4206
    %v4208 = vsel %vm3269, %v2985, -inf
    %v4209 = vrot.slane %v4208, 4
    %v4210 = vmax.f32 %v4208, %v4209
    %v4211 = vrot.slane %v4210, 2
    %v4212 = vmax.f32 %v4210, %v4211
    %v4213 = vrot.slane %v4212, 1
    %v4214 = vmax.f32 %v4212, %v4213
    %v4215 = vsel %vm3269, %v2986, -inf
    %v4216 = vrot.slane %v4215, 4
    %v4217 = vmax.f32 %v4215, %v4216
    %v4218 = vrot.slane %v4217, 2
    %v4219 = vmax.f32 %v4217, %v4218
    %v4220 = vrot.slane %v4219, 1
    %v4221 = vmax.f32 %v4219, %v4220
    %v4222 = vsel %vm3269, %v2791, -inf
    %v4223 = vrot.slane %v4222, 4
    %v4224 = vmax.f32 %v4222, %v4223
    %v4225 = vrot.slane %v4224, 2
    %v4226 = vmax.f32 %v4224, %v4225
    %v4227 = vrot.slane %v4226, 1
    %v4228 = vmax.f32 %v4226, %v4227
    %v4229 = vsel %vm3269, %v2987, -inf
    %v4230 = vrot.slane %v4229, 4
    %v4231 = vmax.f32 %v4229, %v4230
    %v4232 = vrot.slane %v4231, 2
    %v4233 = vmax.f32 %v4231, %v4232
    %v4234 = vrot.slane %v4233, 1
    %v4235 = vmax.f32 %v4233, %v4234
    %v4236 = vsel %vm3269, %v2988, -inf
    %v4237 = vrot.slane %v4236, 4
    %v4238 = vmax.f32 %v4236, %v4237
    %v4239 = vrot.slane %v4238, 2
    %v4240 = vmax.f32 %v4238, %v4239
    %v4241 = vrot.slane %v4240, 1
    %v4242 = vmax.f32 %v4240, %v4241
    %v4243 = vsel %vm3269, %v2989, -inf
    %v4244 = vrot.slane %v4243, 4
    %v4245 = vmax.f32 %v4243, %v4244
    %v4246 = vrot.slane %v4245, 2
    %v4247 = vmax.f32 %v4245, %v4246
    %v4248 = vrot.slane %v4247, 1
    %v4249 = vmax.f32 %v4247, %v4248
    %v4250 = vsel %vm3269, %v2792, -inf
    %v4251 = vrot.slane %v4250, 4
    %v4252 = vmax.f32 %v4250, %v4251
    %v4253 = vrot.slane %v4252, 2
    %v4254 = vmax.f32 %v4252, %v4253
    %v4255 = vrot.slane %v4254, 1
    %v4256 = vmax.f32 %v4254, %v4255
    %v4257 = vsel %vm3269, %v2990, -inf
    %v4258 = vrot.slane %v4257, 4
    %v4259 = vmax.f32 %v4257, %v4258
    %v4260 = vrot.slane %v4259, 2
    %v4261 = vmax.f32 %v4259, %v4260
    %v4262 = vrot.slane %v4261, 1
    %v4263 = vmax.f32 %v4261, %v4262
    %v4264 = vsel %vm3269, %v2991, -inf
    %v4265 = vrot.slane %v4264, 4
    %v4266 = vmax.f32 %v4264, %v4265
    %v4267 = vrot.slane %v4266, 2
    %v4268 = vmax.f32 %v4266, %v4267
    %v4269 = vrot.slane %v4268, 1
    %v4270 = vmax.f32 %v4268, %v4269
    %v4271 = vsel %vm3269, %v2992, -inf
    %v4272 = vrot.slane %v4271, 4
    %v4273 = vmax.f32 %v4271, %v4272
    %v4274 = vrot.slane %v4273, 2
    %v4275 = vmax.f32 %v4273, %v4274
    %v4276 = vrot.slane %v4275, 1
    %v4277 = vmax.f32 %v4275, %v4276
    %v4278 = vsel %vm3269, %v2793, -inf
    %v4279 = vrot.slane %v4278, 4
    %v4280 = vmax.f32 %v4278, %v4279
    %v4281 = vrot.slane %v4280, 2
    %v4282 = vmax.f32 %v4280, %v4281
    %v4283 = vrot.slane %v4282, 1
    %v4284 = vmax.f32 %v4282, %v4283
    %v4285 = vsel %vm3269, %v2993, -inf
    %v4286 = vrot.slane %v4285, 4
    %v4287 = vmax.f32 %v4285, %v4286
    %v4288 = vrot.slane %v4287, 2
    %v4289 = vmax.f32 %v4287, %v4288
    %v4290 = vrot.slane %v4289, 1
    %v4291 = vmax.f32 %v4289, %v4290
    %v4292 = vsel %vm3269, %v2994, -inf
    %v4293 = vrot.slane %v4292, 4
    %v4294 = vmax.f32 %v4292, %v4293
    %v4295 = vrot.slane %v4294, 2
    %v4296 = vmax.f32 %v4294, %v4295
    %v4297 = vrot.slane %v4296, 1
    %v4298 = vmax.f32 %v4296, %v4297
    %v4299 = vsel %vm3269, %v2995, -inf
    %v4300 = vrot.slane %v4299, 4
    %v4301 = vmax.f32 %v4299, %v4300
    %v4302 = vrot.slane %v4301, 2
    %v4303 = vmax.f32 %v4301, %v4302
    %v4304 = vrot.slane %v4303, 1
    %v4305 = vmax.f32 %v4303, %v4304
    %v4306 = vsel %vm3269, %v2794, -inf
    %v4307 = vrot.slane %v4306, 4
    %v4308 = vmax.f32 %v4306, %v4307
    %v4309 = vrot.slane %v4308, 2
    %v4310 = vmax.f32 %v4308, %v4309
    %v4311 = vrot.slane %v4310, 1
    %v4312 = vmax.f32 %v4310, %v4311
    %v4313 = vsel %vm3269, %v2996, -inf
    %v4314 = vrot.slane %v4313, 4
    %v4315 = vmax.f32 %v4313, %v4314
    %v4316 = vrot.slane %v4315, 2
    %v4317 = vmax.f32 %v4315, %v4316
    %v4318 = vrot.slane %v4317, 1
    %v4319 = vmax.f32 %v4317, %v4318
    %v4320 = vsel %vm3269, %v2997, -inf
    %v4321 = vrot.slane %v4320, 4
    %v4322 = vmax.f32 %v4320, %v4321
    %v4323 = vrot.slane %v4322, 2
    %v4324 = vmax.f32 %v4322, %v4323
    %v4325 = vrot.slane %v4324, 1
    %v4326 = vmax.f32 %v4324, %v4325
    %v4327 = vsel %vm3269, %v2998, -inf
    %v4328 = vrot.slane %v4327, 4
    %v4329 = vmax.f32 %v4327, %v4328
    %v4330 = vrot.slane %v4329, 2
    %v4331 = vmax.f32 %v4329, %v4330
    %v4332 = vrot.slane %v4331, 1
    %v4333 = vmax.f32 %v4331, %v4332
    %v4334 = vsel %vm3269, %v2795, -inf
    %v4335 = vrot.slane %v4334, 4
    %v4336 = vmax.f32 %v4334, %v4335
    %v4337 = vrot.slane %v4336, 2
    %v4338 = vmax.f32 %v4336, %v4337
    %v4339 = vrot.slane %v4338, 1
    %v4340 = vmax.f32 %v4338, %v4339
    %v4341 = vsel %vm3269, %v2999, -inf
    %v4342 = vrot.slane %v4341, 4
    %v4343 = vmax.f32 %v4341, %v4342
    %v4344 = vrot.slane %v4343, 2
    %v4345 = vmax.f32 %v4343, %v4344
    %v4346 = vrot.slane %v4345, 1
    %v4347 = vmax.f32 %v4345, %v4346
    %v4348 = vsel %vm3269, %v3000, -inf
    %v4349 = vrot.slane %v4348, 4
    %v4350 = vmax.f32 %v4348, %v4349
    %v4351 = vrot.slane %v4350, 2
    %v4352 = vmax.f32 %v4350, %v4351
    %v4353 = vrot.slane %v4352, 1
    %v4354 = vmax.f32 %v4352, %v4353
    %v4355 = vsel %vm3269, %v3001, -inf
    %v4356 = vrot.slane %v4355, 4
    %v4357 = vmax.f32 %v4355, %v4356
    %v4358 = vrot.slane %v4357, 2
    %v4359 = vmax.f32 %v4357, %v4358
    %v4360 = vrot.slane %v4359, 1
    %v4361 = vmax.f32 %v4359, %v4360
    %v4362 = vsel %vm3269, %v2796, -inf
    %v4363 = vrot.slane %v4362, 4
    %v4364 = vmax.f32 %v4362, %v4363
    %v4365 = vrot.slane %v4364, 2
    %v4366 = vmax.f32 %v4364, %v4365
    %v4367 = vrot.slane %v4366, 1
    %v4368 = vmax.f32 %v4366, %v4367
    %v4369 = vsel %vm3269, %v3002, -inf
    %v4370 = vrot.slane %v4369, 4
    %v4371 = vmax.f32 %v4369, %v4370
    %v4372 = vrot.slane %v4371, 2
    %v4373 = vmax.f32 %v4371, %v4372
    %v4374 = vrot.slane %v4373, 1
    %v4375 = vmax.f32 %v4373, %v4374
    %v4376 = vsel %vm3269, %v3003, -inf
    %v4377 = vrot.slane %v4376, 4
    %v4378 = vmax.f32 %v4376, %v4377
    %v4379 = vrot.slane %v4378, 2
    %v4380 = vmax.f32 %v4378, %v4379
    %v4381 = vrot.slane %v4380, 1
    %v4382 = vmax.f32 %v4380, %v4381
    %v4383 = vsel %vm3269, %v3004, -inf
    %v4384 = vrot.slane %v4383, 4
    %v4385 = vmax.f32 %v4383, %v4384
    %v4386 = vrot.slane %v4385, 2
    %v4387 = vmax.f32 %v4385, %v4386
    %v4388 = vrot.slane %v4387, 1
    %v4389 = vmax.f32 %v4387, %v4388
    %v4390 = vsel %vm3269, %v2797, -inf
    %v4391 = vrot.slane %v4390, 4
    %v4392 = vmax.f32 %v4390, %v4391
    %v4393 = vrot.slane %v4392, 2
    %v4394 = vmax.f32 %v4392, %v4393
    %v4395 = vrot.slane %v4394, 1
    %v4396 = vmax.f32 %v4394, %v4395
    %v4397 = vsel %vm3269, %v3005, -inf
    %v4398 = vrot.slane %v4397, 4
    %v4399 = vmax.f32 %v4397, %v4398
    %v4400 = vrot.slane %v4399, 2
    %v4401 = vmax.f32 %v4399, %v4400
    %v4402 = vrot.slane %v4401, 1
    %v4403 = vmax.f32 %v4401, %v4402
    %v4404 = vsel %vm3269, %v3006, -inf
    %v4405 = vrot.slane %v4404, 4
    %v4406 = vmax.f32 %v4404, %v4405
    %v4407 = vrot.slane %v4406, 2
    %v4408 = vmax.f32 %v4406, %v4407
    %v4409 = vrot.slane %v4408, 1
    %v4410 = vmax.f32 %v4408, %v4409
    %v4411 = vsel %vm3269, %v3007, -inf
    %v4412 = vrot.slane %v4411, 4
    %v4413 = vmax.f32 %v4411, %v4412
    %v4414 = vrot.slane %v4413, 2
    %v4415 = vmax.f32 %v4413, %v4414
    %v4416 = vrot.slane %v4415, 1
    %v4417 = vmax.f32 %v4415, %v4416
    %v4418 = vsel %vm3269, %v2798, -inf
    %v4419 = vrot.slane %v4418, 4
    %v4420 = vmax.f32 %v4418, %v4419
    %v4421 = vrot.slane %v4420, 2
    %v4422 = vmax.f32 %v4420, %v4421
    %v4423 = vrot.slane %v4422, 1
    %v4424 = vmax.f32 %v4422, %v4423
    %v4425 = vsel %vm3269, %v3008, -inf
    %v4426 = vrot.slane %v4425, 4
    %v4427 = vmax.f32 %v4425, %v4426
    %v4428 = vrot.slane %v4427, 2
    %v4429 = vmax.f32 %v4427, %v4428
    %v4430 = vrot.slane %v4429, 1
    %v4431 = vmax.f32 %v4429, %v4430
    %v4432 = vsel %vm3269, %v3009, -inf
    %v4433 = vrot.slane %v4432, 4
    %v4434 = vmax.f32 %v4432, %v4433
    %v4435 = vrot.slane %v4434, 2
    %v4436 = vmax.f32 %v4434, %v4435
    %v4437 = vrot.slane %v4436, 1
    %v4438 = vmax.f32 %v4436, %v4437
    %v4439 = vsel %vm3269, %v3010, -inf
    %v4440 = vrot.slane %v4439, 4
    %v4441 = vmax.f32 %v4439, %v4440
    %v4442 = vrot.slane %v4441, 2
    %v4443 = vmax.f32 %v4441, %v4442
    %v4444 = vrot.slane %v4443, 1
    %v4445 = vmax.f32 %v4443, %v4444
    %v4446 = vsel %vm3269, %v2799, -inf
    %v4447 = vrot.slane %v4446, 4
    %v4448 = vmax.f32 %v4446, %v4447
    %v4449 = vrot.slane %v4448, 2
    %v4450 = vmax.f32 %v4448, %v4449
    %v4451 = vrot.slane %v4450, 1
    %v4452 = vmax.f32 %v4450, %v4451
    %v4453 = vsel %vm3269, %v3011, -inf
    %v4454 = vrot.slane %v4453, 4
    %v4455 = vmax.f32 %v4453, %v4454
    %v4456 = vrot.slane %v4455, 2
    %v4457 = vmax.f32 %v4455, %v4456
    %v4458 = vrot.slane %v4457, 1
    %v4459 = vmax.f32 %v4457, %v4458
    %v4460 = vsel %vm3269, %v3012, -inf
    %v4461 = vrot.slane %v4460, 4
    %v4462 = vmax.f32 %v4460, %v4461
    %v4463 = vrot.slane %v4462, 2
    %v4464 = vmax.f32 %v4462, %v4463
    %v4465 = vrot.slane %v4464, 1
    %v4466 = vmax.f32 %v4464, %v4465
    %v4467 = vsel %vm3269, %v3013, -inf
    %v4468 = vrot.slane %v4467, 4
    %v4469 = vmax.f32 %v4467, %v4468
    %v4470 = vrot.slane %v4469, 2
    %v4471 = vmax.f32 %v4469, %v4470
    %v4472 = vrot.slane %v4471, 1
    %v4473 = vmax.f32 %v4471, %v4472
    %v4474 = vsel %vm3269, %v2800, -inf
    %v4475 = vrot.slane %v4474, 4
    %v4476 = vmax.f32 %v4474, %v4475
    %v4477 = vrot.slane %v4476, 2
    %v4478 = vmax.f32 %v4476, %v4477
    %v4479 = vrot.slane %v4478, 1
    %v4480 = vmax.f32 %v4478, %v4479
    %v4481 = vsel %vm3269, %v3014, -inf
    %v4482 = vrot.slane %v4481, 4
    %v4483 = vmax.f32 %v4481, %v4482
    %v4484 = vrot.slane %v4483, 2
    %v4485 = vmax.f32 %v4483, %v4484
    %v4486 = vrot.slane %v4485, 1
    %v4487 = vmax.f32 %v4485, %v4486
    %v4488 = vsel %vm3269, %v3015, -inf
    %v4489 = vrot.slane %v4488, 4
    %v4490 = vmax.f32 %v4488, %v4489
    %v4491 = vrot.slane %v4490, 2
    %v4492 = vmax.f32 %v4490, %v4491
    %v4493 = vrot.slane %v4492, 1
    %v4494 = vmax.f32 %v4492, %v4493
    %v4495 = vsel %vm3269, %v3016, -inf
    %v4496 = vrot.slane %v4495, 4
    %v4497 = vmax.f32 %v4495, %v4496
    %v4498 = vrot.slane %v4497, 2
    %v4499 = vmax.f32 %v4497, %v4498
    %v4500 = vrot.slane %v4499, 1
    %v4501 = vmax.f32 %v4499, %v4500
    %v4502 = vsel %vm3269, %v2801, -inf
    %v4503 = vrot.slane %v4502, 4
    %v4504 = vmax.f32 %v4502, %v4503
    %v4505 = vrot.slane %v4504, 2
    %v4506 = vmax.f32 %v4504, %v4505
    %v4507 = vrot.slane %v4506, 1
    %v4508 = vmax.f32 %v4506, %v4507
    %v4509 = vsel %vm3269, %v3017, -inf
    %v4510 = vrot.slane %v4509, 4
    %v4511 = vmax.f32 %v4509, %v4510
    %v4512 = vrot.slane %v4511, 2
    %v4513 = vmax.f32 %v4511, %v4512
    %v4514 = vrot.slane %v4513, 1
    %v4515 = vmax.f32 %v4513, %v4514
    %v4516 = vsel %vm3269, %v3018, -inf
    %v4517 = vrot.slane %v4516, 4
    %v4518 = vmax.f32 %v4516, %v4517
    %v4519 = vrot.slane %v4518, 2
    %v4520 = vmax.f32 %v4518, %v4519
    %v4521 = vrot.slane %v4520, 1
    %v4522 = vmax.f32 %v4520, %v4521
    %v4523 = vsel %vm3269, %v3019, -inf
    %v4524 = vrot.slane %v4523, 4
    %v4525 = vmax.f32 %v4523, %v4524
    %v4526 = vrot.slane %v4525, 2
    %v4527 = vmax.f32 %v4525, %v4526
    %v4528 = vrot.slane %v4527, 1
    %v4529 = vmax.f32 %v4527, %v4528
    %v4530 = vsel %vm3269, %v2802, -inf
    %v4531 = vrot.slane %v4530, 4
    %v4532 = vmax.f32 %v4530, %v4531
    %v4533 = vrot.slane %v4532, 2
    %v4534 = vmax.f32 %v4532, %v4533
    %v4535 = vrot.slane %v4534, 1
    %v4536 = vmax.f32 %v4534, %v4535
    %v4537 = vsel %vm3269, %v3020, -inf
    %v4538 = vrot.slane %v4537, 4
    %v4539 = vmax.f32 %v4537, %v4538
    %v4540 = vrot.slane %v4539, 2
    %v4541 = vmax.f32 %v4539, %v4540
    %v4542 = vrot.slane %v4541, 1
    %v4543 = vmax.f32 %v4541, %v4542
    %v4544 = vsel %vm3269, %v3021, -inf
    %v4545 = vrot.slane %v4544, 4
    %v4546 = vmax.f32 %v4544, %v4545
    %v4547 = vrot.slane %v4546, 2
    %v4548 = vmax.f32 %v4546, %v4547
    %v4549 = vrot.slane %v4548, 1
    %v4550 = vmax.f32 %v4548, %v4549
    %v4551 = vsel %vm3269, %v3022, -inf
    %v4552 = vrot.slane %v4551, 4
    %v4553 = vmax.f32 %v4551, %v4552
    %v4554 = vrot.slane %v4553, 2
    %v4555 = vmax.f32 %v4553, %v4554
    %v4556 = vrot.slane %v4555, 1
    %v4557 = vmax.f32 %v4555, %v4556
    %v4558 = vsel %vm3269, %v2803, -inf
    %v4559 = vrot.slane %v4558, 4
    %v4560 = vmax.f32 %v4558, %v4559
    %v4561 = vrot.slane %v4560, 2
    %v4562 = vmax.f32 %v4560, %v4561
    %v4563 = vrot.slane %v4562, 1
    %v4564 = vmax.f32 %v4562, %v4563
    %v4565 = vsel %vm3269, %v3023, -inf
    %v4566 = vrot.slane %v4565, 4
    %v4567 = vmax.f32 %v4565, %v4566
    %v4568 = vrot.slane %v4567, 2
    %v4569 = vmax.f32 %v4567, %v4568
    %v4570 = vrot.slane %v4569, 1
    %v4571 = vmax.f32 %v4569, %v4570
    %v4572 = vsel %vm3269, %v3024, -inf
    %v4573 = vrot.slane %v4572, 4
    %v4574 = vmax.f32 %v4572, %v4573
    %v4575 = vrot.slane %v4574, 2
    %v4576 = vmax.f32 %v4574, %v4575
    %v4577 = vrot.slane %v4576, 1
    %v4578 = vmax.f32 %v4576, %v4577
    %v4579 = vsel %vm3269, %v3025, -inf
    %v4580 = vrot.slane %v4579, 4
    %v4581 = vmax.f32 %v4579, %v4580
    %v4582 = vrot.slane %v4581, 2
    %v4583 = vmax.f32 %v4581, %v4582
    %v4584 = vrot.slane %v4583, 1
    %v4585 = vmax.f32 %v4583, %v4584
    %v4586 = vsel %vm3269, %v2804, -inf
    %v4587 = vrot.slane %v4586, 4
    %v4588 = vmax.f32 %v4586, %v4587
    %v4589 = vrot.slane %v4588, 2
    %v4590 = vmax.f32 %v4588, %v4589
    %v4591 = vrot.slane %v4590, 1
    %v4592 = vmax.f32 %v4590, %v4591
    %v4593 = vsel %vm3269, %v3026, -inf
    %v4594 = vrot.slane %v4593, 4
    %v4595 = vmax.f32 %v4593, %v4594
    %v4596 = vrot.slane %v4595, 2
    %v4597 = vmax.f32 %v4595, %v4596
    %v4598 = vrot.slane %v4597, 1
    %v4599 = vmax.f32 %v4597, %v4598
    %v4600 = vsel %vm3269, %v3027, -inf
    %v4601 = vrot.slane %v4600, 4
    %v4602 = vmax.f32 %v4600, %v4601
    %v4603 = vrot.slane %v4602, 2
    %v4604 = vmax.f32 %v4602, %v4603
    %v4605 = vrot.slane %v4604, 1
    %v4606 = vmax.f32 %v4604, %v4605
    %v4607 = vsel %vm3269, %v3028, -inf
    %v4608 = vrot.slane %v4607, 4
    %v4609 = vmax.f32 %v4607, %v4608
    %v4610 = vrot.slane %v4609, 2
    %v4611 = vmax.f32 %v4609, %v4610
    %v4612 = vrot.slane %v4611, 1
    %v4613 = vmax.f32 %v4611, %v4612
    %v4614 = vsel %vm3269, %v2805, -inf
    %v4615 = vrot.slane %v4614, 4
    %v4616 = vmax.f32 %v4614, %v4615
    %v4617 = vrot.slane %v4616, 2
    %v4618 = vmax.f32 %v4616, %v4617
    %v4619 = vrot.slane %v4618, 1
    %v4620 = vmax.f32 %v4618, %v4619
    %v4621 = vsel %vm3269, %v3029, -inf
    %v4622 = vrot.slane %v4621, 4
    %v4623 = vmax.f32 %v4621, %v4622
    %v4624 = vrot.slane %v4623, 2
    %v4625 = vmax.f32 %v4623, %v4624
    %v4626 = vrot.slane %v4625, 1
    %v4627 = vmax.f32 %v4625, %v4626
    %v4628 = vsel %vm3269, %v3030, -inf
    %v4629 = vrot.slane %v4628, 4
    %v4630 = vmax.f32 %v4628, %v4629
    %v4631 = vrot.slane %v4630, 2
    %v4632 = vmax.f32 %v4630, %v4631
    %v4633 = vrot.slane %v4632, 1
    %v4634 = vmax.f32 %v4632, %v4633
    %v4635 = vsel %vm3269, %v3031, -inf
    %v4636 = vrot.slane %v4635, 4
    %v4637 = vmax.f32 %v4635, %v4636
    %v4638 = vrot.slane %v4637, 2
    %v4639 = vmax.f32 %v4637, %v4638
    %v4640 = vrot.slane %v4639, 1
    %v4641 = vmax.f32 %v4639, %v4640
    %v4642 = vsel %vm3269, %v2806, -inf
    %v4643 = vrot.slane %v4642, 4
    %v4644 = vmax.f32 %v4642, %v4643
    %v4645 = vrot.slane %v4644, 2
    %v4646 = vmax.f32 %v4644, %v4645
    %v4647 = vrot.slane %v4646, 1
    %v4648 = vmax.f32 %v4646, %v4647
    %v4649 = vsel %vm3269, %v3032, -inf
    %v4650 = vrot.slane %v4649, 4
    %v4651 = vmax.f32 %v4649, %v4650
    %v4652 = vrot.slane %v4651, 2
    %v4653 = vmax.f32 %v4651, %v4652
    %v4654 = vrot.slane %v4653, 1
    %v4655 = vmax.f32 %v4653, %v4654
    %v4656 = vsel %vm3269, %v3033, -inf
    %v4657 = vrot.slane %v4656, 4
    %v4658 = vmax.f32 %v4656, %v4657
    %v4659 = vrot.slane %v4658, 2
    %v4660 = vmax.f32 %v4658, %v4659
    %v4661 = vrot.slane %v4660, 1
    %v4662 = vmax.f32 %v4660, %v4661
    %v4663 = vsel %vm3269, %v3034, -inf
    %v4664 = vrot.slane %v4663, 4
    %v4665 = vmax.f32 %v4663, %v4664
    %v4666 = vrot.slane %v4665, 2
    %v4667 = vmax.f32 %v4665, %v4666
    %v4668 = vrot.slane %v4667, 1
    %v4669 = vmax.f32 %v4667, %v4668
    %v4670 = vsel %vm3269, %v2807, -inf
    %v4671 = vrot.slane %v4670, 4
    %v4672 = vmax.f32 %v4670, %v4671
    %v4673 = vrot.slane %v4672, 2
    %v4674 = vmax.f32 %v4672, %v4673
    %v4675 = vrot.slane %v4674, 1
    %v4676 = vmax.f32 %v4674, %v4675
    %v4677 = vsel %vm3269, %v3035, -inf
    %v4678 = vrot.slane %v4677, 4
    %v4679 = vmax.f32 %v4677, %v4678
    %v4680 = vrot.slane %v4679, 2
    %v4681 = vmax.f32 %v4679, %v4680
    %v4682 = vrot.slane %v4681, 1
    %v4683 = vmax.f32 %v4681, %v4682
    %v4684 = vsel %vm3269, %v3036, -inf
    %v4685 = vrot.slane %v4684, 4
    %v4686 = vmax.f32 %v4684, %v4685
    %v4687 = vrot.slane %v4686, 2
    %v4688 = vmax.f32 %v4686, %v4687
    %v4689 = vrot.slane %v4688, 1
    %v4690 = vmax.f32 %v4688, %v4689
    %v4691 = vsel %vm3269, %v3037, -inf
    %v4692 = vrot.slane %v4691, 4
    %v4693 = vmax.f32 %v4691, %v4692
    %v4694 = vrot.slane %v4693, 2
    %v4695 = vmax.f32 %v4693, %v4694
    %v4696 = vrot.slane %v4695, 1
    %v4697 = vmax.f32 %v4695, %v4696
    %v4698 = vsel %vm3269, %v2808, -inf
    %v4699 = vrot.slane %v4698, 4
    %v4700 = vmax.f32 %v4698, %v4699
    %v4701 = vrot.slane %v4700, 2
    %v4702 = vmax.f32 %v4700, %v4701
    %v4703 = vrot.slane %v4702, 1
    %v4704 = vmax.f32 %v4702, %v4703
    %v4705 = vsel %vm3269, %v3038, -inf
    %v4706 = vrot.slane %v4705, 4
    %v4707 = vmax.f32 %v4705, %v4706
    %v4708 = vrot.slane %v4707, 2
    %v4709 = vmax.f32 %v4707, %v4708
    %v4710 = vrot.slane %v4709, 1
    %v4711 = vmax.f32 %v4709, %v4710
    %v4712 = vsel %vm3269, %v3039, -inf
    %v4713 = vrot.slane %v4712, 4
    %v4714 = vmax.f32 %v4712, %v4713
    %v4715 = vrot.slane %v4714, 2
    %v4716 = vmax.f32 %v4714, %v4715
    %v4717 = vrot.slane %v4716, 1
    %v4718 = vmax.f32 %v4716, %v4717
    %v4719 = vsel %vm3269, %v3040, -inf
    %v4720 = vrot.slane %v4719, 4
    %v4721 = vmax.f32 %v4719, %v4720
    %v4722 = vrot.slane %v4721, 2
    %v4723 = vmax.f32 %v4721, %v4722
    %v4724 = vrot.slane %v4723, 1
    %v4725 = vmax.f32 %v4723, %v4724
    %v4726 = vsel %vm3269, %v2809, -inf
    %v4727 = vrot.slane %v4726, 4
    %v4728 = vmax.f32 %v4726, %v4727
    %v4729 = vrot.slane %v4728, 2
    %v4730 = vmax.f32 %v4728, %v4729
    %v4731 = vrot.slane %v4730, 1
    %v4732 = vmax.f32 %v4730, %v4731
    %v4733 = vsel %vm3269, %v3041, -inf
    %v4734 = vrot.slane %v4733, 4
    %v4735 = vmax.f32 %v4733, %v4734
    %v4736 = vrot.slane %v4735, 2
    %v4737 = vmax.f32 %v4735, %v4736
    %v4738 = vrot.slane %v4737, 1
    %v4739 = vmax.f32 %v4737, %v4738
    %v4740 = vsel %vm3269, %v3042, -inf
    %v4741 = vrot.slane %v4740, 4
    %v4742 = vmax.f32 %v4740, %v4741
    %v4743 = vrot.slane %v4742, 2
    %v4744 = vmax.f32 %v4742, %v4743
    %v4745 = vrot.slane %v4744, 1
    %v4746 = vmax.f32 %v4744, %v4745
    %v4747 = vsel %vm3269, %v3043, -inf
    %v4748 = vrot.slane %v4747, 4
    %v4749 = vmax.f32 %v4747, %v4748
    %v4750 = vrot.slane %v4749, 2
    %v4751 = vmax.f32 %v4749, %v4750
    %v4752 = vrot.slane %v4751, 1
    %v4753 = vmax.f32 %v4751, %v4752
    %v4754 = vsel %vm3269, %v2810, -inf
    %v4755 = vrot.slane %v4754, 4
    %v4756 = vmax.f32 %v4754, %v4755
    %v4757 = vrot.slane %v4756, 2
    %v4758 = vmax.f32 %v4756, %v4757
    %v4759 = vrot.slane %v4758, 1
    %v4760 = vmax.f32 %v4758, %v4759
    %v4761 = vsel %vm3269, %v3044, -inf
    %v4762 = vrot.slane %v4761, 4
    %v4763 = vmax.f32 %v4761, %v4762
    %v4764 = vrot.slane %v4763, 2
    %v4765 = vmax.f32 %v4763, %v4764
    %v4766 = vrot.slane %v4765, 1
    %v4767 = vmax.f32 %v4765, %v4766
    %v4768 = vsel %vm3269, %v3045, -inf
    %v4769 = vrot.slane %v4768, 4
    %v4770 = vmax.f32 %v4768, %v4769
    %v4771 = vrot.slane %v4770, 2
    %v4772 = vmax.f32 %v4770, %v4771
    %v4773 = vrot.slane %v4772, 1
    %v4774 = vmax.f32 %v4772, %v4773
    %v4775 = vsel %vm3269, %v3046, -inf
    %v4776 = vrot.slane %v4775, 4
    %v4777 = vmax.f32 %v4775, %v4776
    %v4778 = vrot.slane %v4777, 2
    %v4779 = vmax.f32 %v4777, %v4778
    %v4780 = vrot.slane %v4779, 1
    %v4781 = vmax.f32 %v4779, %v4780
    %v4782 = vsel %vm3269, %v2811, -inf
    %v4783 = vrot.slane %v4782, 4
    %v4784 = vmax.f32 %v4782, %v4783
    %v4785 = vrot.slane %v4784, 2
    %v4786 = vmax.f32 %v4784, %v4785
    %v4787 = vrot.slane %v4786, 1
    %v4788 = vmax.f32 %v4786, %v4787
    %v4789 = vsel %vm3269, %v3047, -inf
    %v4790 = vrot.slane %v4789, 4
    %v4791 = vmax.f32 %v4789, %v4790
    %v4792 = vrot.slane %v4791, 2
    %v4793 = vmax.f32 %v4791, %v4792
    %v4794 = vrot.slane %v4793, 1
    %v4795 = vmax.f32 %v4793, %v4794
    %v4796 = vsel %vm3269, %v3048, -inf
    %v4797 = vrot.slane %v4796, 4
    %v4798 = vmax.f32 %v4796, %v4797
    %v4799 = vrot.slane %v4798, 2
    %v4800 = vmax.f32 %v4798, %v4799
    %v4801 = vrot.slane %v4800, 1
    %v4802 = vmax.f32 %v4800, %v4801
    %v4803 = vsel %vm3269, %v3049, -inf
    %v4804 = vrot.slane %v4803, 4
    %v4805 = vmax.f32 %v4803, %v4804
    %v4806 = vrot.slane %v4805, 2
    %v4807 = vmax.f32 %v4805, %v4806
    %v4808 = vrot.slane %v4807, 1
    %v4809 = vmax.f32 %v4807, %v4808
    %v4810 = vsel %vm3269, %v2812, -inf
    %v4811 = vrot.slane %v4810, 4
    %v4812 = vmax.f32 %v4810, %v4811
    %v4813 = vrot.slane %v4812, 2
    %v4814 = vmax.f32 %v4812, %v4813
    %v4815 = vrot.slane %v4814, 1
    %v4816 = vmax.f32 %v4814, %v4815
    %v4817 = vsel %vm3269, %v3050, -inf
    %v4818 = vrot.slane %v4817, 4
    %v4819 = vmax.f32 %v4817, %v4818
    %v4820 = vrot.slane %v4819, 2
    %v4821 = vmax.f32 %v4819, %v4820
    %v4822 = vrot.slane %v4821, 1
    %v4823 = vmax.f32 %v4821, %v4822
    %v4824 = vsel %vm3269, %v3051, -inf
    %v4825 = vrot.slane %v4824, 4
    %v4826 = vmax.f32 %v4824, %v4825
    %v4827 = vrot.slane %v4826, 2
    %v4828 = vmax.f32 %v4826, %v4827
    %v4829 = vrot.slane %v4828, 1
    %v4830 = vmax.f32 %v4828, %v4829
    %v4831 = vsel %vm3269, %v3052, -inf
    %v4832 = vrot.slane %v4831, 4
    %v4833 = vmax.f32 %v4831, %v4832
    %v4834 = vrot.slane %v4833, 2
    %v4835 = vmax.f32 %v4833, %v4834
    %v4836 = vrot.slane %v4835, 1
    %v4837 = vmax.f32 %v4835, %v4836
    %v4838 = vsel %vm3269, %v2813, -inf
    %v4839 = vrot.slane %v4838, 4
    %v4840 = vmax.f32 %v4838, %v4839
    %v4841 = vrot.slane %v4840, 2
    %v4842 = vmax.f32 %v4840, %v4841
    %v4843 = vrot.slane %v4842, 1
    %v4844 = vmax.f32 %v4842, %v4843
    %v4845 = vsel %vm3269, %v3053, -inf
    %v4846 = vrot.slane %v4845, 4
    %v4847 = vmax.f32 %v4845, %v4846
    %v4848 = vrot.slane %v4847, 2
    %v4849 = vmax.f32 %v4847, %v4848
    %v4850 = vrot.slane %v4849, 1
    %v4851 = vmax.f32 %v4849, %v4850
    %v4852 = vsel %vm3269, %v3054, -inf
    %v4853 = vrot.slane %v4852, 4
    %v4854 = vmax.f32 %v4852, %v4853
    %v4855 = vrot.slane %v4854, 2
    %v4856 = vmax.f32 %v4854, %v4855
    %v4857 = vrot.slane %v4856, 1
    %v4858 = vmax.f32 %v4856, %v4857
    %v4859 = vsel %vm3269, %v3055, -inf
    %v4860 = vrot.slane %v4859, 4
    %v4861 = vmax.f32 %v4859, %v4860
    %v4862 = vrot.slane %v4861, 2
    %v4863 = vmax.f32 %v4861, %v4862
    %v4864 = vrot.slane %v4863, 1
    %v4865 = vmax.f32 %v4863, %v4864
    %v4866 = vsel %vm3269, %v2814, -inf
    %v4867 = vrot.slane %v4866, 4
    %v4868 = vmax.f32 %v4866, %v4867
    %v4869 = vrot.slane %v4868, 2
    %v4870 = vmax.f32 %v4868, %v4869
    %v4871 = vrot.slane %v4870, 1
    %v4872 = vmax.f32 %v4870, %v4871
    %v4873 = vsel %vm3269, %v3056, -inf
    %v4874 = vrot.slane %v4873, 4
    %v4875 = vmax.f32 %v4873, %v4874
    %v4876 = vrot.slane %v4875, 2
    %v4877 = vmax.f32 %v4875, %v4876
    %v4878 = vrot.slane %v4877, 1
    %v4879 = vmax.f32 %v4877, %v4878
    %v4880 = vsel %vm3269, %v3057, -inf
    %v4881 = vrot.slane %v4880, 4
    %v4882 = vmax.f32 %v4880, %v4881
    %v4883 = vrot.slane %v4882, 2
    %v4884 = vmax.f32 %v4882, %v4883
    %v4885 = vrot.slane %v4884, 1
    %v4886 = vmax.f32 %v4884, %v4885
    %v4887 = vsel %vm3269, %v3058, -inf
    %v4888 = vrot.slane %v4887, 4
    %v4889 = vmax.f32 %v4887, %v4888
    %v4890 = vrot.slane %v4889, 2
    %v4891 = vmax.f32 %v4889, %v4890
    %v4892 = vrot.slane %v4891, 1
    %v4893 = vmax.f32 %v4891, %v4892
    %v4894 = vsel %vm3269, %v2815, -inf
    %v4895 = vrot.slane %v4894, 4
    %v4896 = vmax.f32 %v4894, %v4895
    %v4897 = vrot.slane %v4896, 2
    %v4898 = vmax.f32 %v4896, %v4897
    %v4899 = vrot.slane %v4898, 1
    %v4900 = vmax.f32 %v4898, %v4899
    %v4901 = vsel %vm3269, %v3059, -inf
    %v4902 = vrot.slane %v4901, 4
    %v4903 = vmax.f32 %v4901, %v4902
    %v4904 = vrot.slane %v4903, 2
    %v4905 = vmax.f32 %v4903, %v4904
    %v4906 = vrot.slane %v4905, 1
    %v4907 = vmax.f32 %v4905, %v4906
    %v4908 = vsel %vm3269, %v3060, -inf
    %v4909 = vrot.slane %v4908, 4
    %v4910 = vmax.f32 %v4908, %v4909
    %v4911 = vrot.slane %v4910, 2
    %v4912 = vmax.f32 %v4910, %v4911
    %v4913 = vrot.slane %v4912, 1
    %v4914 = vmax.f32 %v4912, %v4913
    %v4915 = vsel %vm3269, %v3061, -inf
    %v4916 = vrot.slane %v4915, 4
    %v4917 = vmax.f32 %v4915, %v4916
    %v4918 = vrot.slane %v4917, 2
    %v4919 = vmax.f32 %v4917, %v4918
    %v4920 = vrot.slane %v4919, 1
    %v4921 = vmax.f32 %v4919, %v4920
    %v4922 = vsel %vm3269, %v2816, -inf
    %v4923 = vrot.slane %v4922, 4
    %v4924 = vmax.f32 %v4922, %v4923
    %v4925 = vrot.slane %v4924, 2
    %v4926 = vmax.f32 %v4924, %v4925
    %v4927 = vrot.slane %v4926, 1
    %v4928 = vmax.f32 %v4926, %v4927
    %v4929 = vsel %vm3269, %v3062, -inf
    %v4930 = vrot.slane %v4929, 4
    %v4931 = vmax.f32 %v4929, %v4930
    %v4932 = vrot.slane %v4931, 2
    %v4933 = vmax.f32 %v4931, %v4932
    %v4934 = vrot.slane %v4933, 1
    %v4935 = vmax.f32 %v4933, %v4934
    %v4936 = vsel %vm3269, %v3063, -inf
    %v4937 = vrot.slane %v4936, 4
    %v4938 = vmax.f32 %v4936, %v4937
    %v4939 = vrot.slane %v4938, 2
    %v4940 = vmax.f32 %v4938, %v4939
    %v4941 = vrot.slane %v4940, 1
    %v4942 = vmax.f32 %v4940, %v4941
    %v4943 = vsel %vm3269, %v3064, -inf
    %v4944 = vrot.slane %v4943, 4
    %v4945 = vmax.f32 %v4943, %v4944
    %v4946 = vrot.slane %v4945, 2
    %v4947 = vmax.f32 %v4945, %v4946
    %v4948 = vrot.slane %v4947, 1
    %v4949 = vmax.f32 %v4947, %v4948
    %v4950 = vsel %vm3269, %v2817, -inf
    %v4951 = vrot.slane %v4950, 4
    %v4952 = vmax.f32 %v4950, %v4951
    %v4953 = vrot.slane %v4952, 2
    %v4954 = vmax.f32 %v4952, %v4953
    %v4955 = vrot.slane %v4954, 1
    %v4956 = vmax.f32 %v4954, %v4955
    %v4957 = vsel %vm3269, %v3065, -inf
    %v4958 = vrot.slane %v4957, 4
    %v4959 = vmax.f32 %v4957, %v4958
    %v4960 = vrot.slane %v4959, 2
    %v4961 = vmax.f32 %v4959, %v4960
    %v4962 = vrot.slane %v4961, 1
    %v4963 = vmax.f32 %v4961, %v4962
    %v4964 = vsel %vm3269, %v3066, -inf
    %v4965 = vrot.slane %v4964, 4
    %v4966 = vmax.f32 %v4964, %v4965
    %v4967 = vrot.slane %v4966, 2
    %v4968 = vmax.f32 %v4966, %v4967
    %v4969 = vrot.slane %v4968, 1
    %v4970 = vmax.f32 %v4968, %v4969
    %v4971 = vsel %vm3269, %v3067, -inf
    %v4972 = vrot.slane %v4971, 4
    %v4973 = vmax.f32 %v4971, %v4972
    %v4974 = vrot.slane %v4973, 2
    %v4975 = vmax.f32 %v4973, %v4974
    %v4976 = vrot.slane %v4975, 1
    %v4977 = vmax.f32 %v4975, %v4976
    %v4978 = vsel %vm3269, %v2818, -inf
    %v4979 = vrot.slane %v4978, 4
    %v4980 = vmax.f32 %v4978, %v4979
    %v4981 = vrot.slane %v4980, 2
    %v4982 = vmax.f32 %v4980, %v4981
    %v4983 = vrot.slane %v4982, 1
    %v4984 = vmax.f32 %v4982, %v4983
    %v4985 = vsel %vm3269, %v3068, -inf
    %v4986 = vrot.slane %v4985, 4
    %v4987 = vmax.f32 %v4985, %v4986
    %v4988 = vrot.slane %v4987, 2
    %v4989 = vmax.f32 %v4987, %v4988
    %v4990 = vrot.slane %v4989, 1
    %v4991 = vmax.f32 %v4989, %v4990
    %v4992 = vsel %vm3269, %v3069, -inf
    %v4993 = vrot.slane %v4992, 4
    %v4994 = vmax.f32 %v4992, %v4993
    %v4995 = vrot.slane %v4994, 2
    %v4996 = vmax.f32 %v4994, %v4995
    %v4997 = vrot.slane %v4996, 1
    %v4998 = vmax.f32 %v4996, %v4997
    %v4999 = vsel %vm3269, %v3070, -inf
    %v5000 = vrot.slane %v4999, 4
    %v5001 = vmax.f32 %v4999, %v5000
    %v5002 = vrot.slane %v5001, 2
    %v5003 = vmax.f32 %v5001, %v5002
    %v5004 = vrot.slane %v5003, 1
    %v5005 = vmax.f32 %v5003, %v5004
    %v5006 = vsel %vm3269, %v2819, -inf
    %v5007 = vrot.slane %v5006, 4
    %v5008 = vmax.f32 %v5006, %v5007
    %v5009 = vrot.slane %v5008, 2
    %v5010 = vmax.f32 %v5008, %v5009
    %v5011 = vrot.slane %v5010, 1
    %v5012 = vmax.f32 %v5010, %v5011
    %v5013 = vsel %vm3269, %v3071, -inf
    %v5014 = vrot.slane %v5013, 4
    %v5015 = vmax.f32 %v5013, %v5014
    %v5016 = vrot.slane %v5015, 2
    %v5017 = vmax.f32 %v5015, %v5016
    %v5018 = vrot.slane %v5017, 1
    %v5019 = vmax.f32 %v5017, %v5018
    %v5020 = vsel %vm3269, %v3072, -inf
    %v5021 = vrot.slane %v5020, 4
    %v5022 = vmax.f32 %v5020, %v5021
    %v5023 = vrot.slane %v5022, 2
    %v5024 = vmax.f32 %v5022, %v5023
    %v5025 = vrot.slane %v5024, 1
    %v5026 = vmax.f32 %v5024, %v5025
    %v5027 = vsel %vm3269, %v3073, -inf
    %v5028 = vrot.slane %v5027, 4
    %v5029 = vmax.f32 %v5027, %v5028
    %v5030 = vrot.slane %v5029, 2
    %v5031 = vmax.f32 %v5029, %v5030
    %v5032 = vrot.slane %v5031, 1
    %v5033 = vmax.f32 %v5031, %v5032
    %v5034 = vsel %vm3269, %v2820, -inf
    %v5035 = vrot.slane %v5034, 4
    %v5036 = vmax.f32 %v5034, %v5035
    %v5037 = vrot.slane %v5036, 2
    %v5038 = vmax.f32 %v5036, %v5037
    %v5039 = vrot.slane %v5038, 1
    %v5040 = vmax.f32 %v5038, %v5039
    %v5041 = vsel %vm3269, %v3074, -inf
    %v5042 = vrot.slane %v5041, 4
    %v5043 = vmax.f32 %v5041, %v5042
    %v5044 = vrot.slane %v5043, 2
    %v5045 = vmax.f32 %v5043, %v5044
    %v5046 = vrot.slane %v5045, 1
    %v5047 = vmax.f32 %v5045, %v5046
    %v5048 = vsel %vm3269, %v3075, -inf
    %v5049 = vrot.slane %v5048, 4
    %v5050 = vmax.f32 %v5048, %v5049
    %v5051 = vrot.slane %v5050, 2
    %v5052 = vmax.f32 %v5050, %v5051
    %v5053 = vrot.slane %v5052, 1
    %v5054 = vmax.f32 %v5052, %v5053
    %v5055 = vsel %vm3269, %v3076, -inf
    %v5056 = vrot.slane %v5055, 4
    %v5057 = vmax.f32 %v5055, %v5056
    %v5058 = vrot.slane %v5057, 2
    %v5059 = vmax.f32 %v5057, %v5058
    %v5060 = vrot.slane %v5059, 1
    %v5061 = vmax.f32 %v5059, %v5060
    %vm5062 = vcmask 261120
    %v5063 = vsel %vm5062, %v3276, -inf
    %v5064 = vsel %vm5062, %v3332, -inf
    %v5065 = vmax.f32 %v5063, %v5064
    %v5066 = vsel %vm5062, %v3283, -inf
    %v5067 = vsel %vm5062, %v3339, -inf
    %v5068 = vmax.f32 %v5066, %v5067
    %v5069 = vsel %vm5062, %v3290, -inf
    %v5070 = vsel %vm5062, %v3346, -inf
    %v5071 = vmax.f32 %v5069, %v5070
    %v5072 = vsel %vm5062, %v3297, -inf
    %v5073 = vsel %vm5062, %v3353, -inf
    %v5074 = vmax.f32 %v5072, %v5073
    %v5075 = vsel %vm5062, %v3304, -inf
    %v5076 = vsel %vm5062, %v3360, -inf
    %v5077 = vmax.f32 %v5075, %v5076
    %v5078 = vsel %vm5062, %v3311, -inf
    %v5079 = vsel %vm5062, %v3367, -inf
    %v5080 = vmax.f32 %v5078, %v5079
    %v5081 = vsel %vm5062, %v3318, -inf
    %v5082 = vsel %vm5062, %v3374, -inf
    %v5083 = vmax.f32 %v5081, %v5082
    %v5084 = vsel %vm5062, %v3325, -inf
    %v5085 = vsel %vm5062, %v3381, -inf
    %v5086 = vmax.f32 %v5084, %v5085
    %v5087 = vsel %vm5062, %v3388, -inf
    %v5088 = vsel %vm5062, %v3444, -inf
    %v5089 = vmax.f32 %v5087, %v5088
    %v5090 = vsel %vm5062, %v3395, -inf
    %v5091 = vsel %vm5062, %v3451, -inf
    %v5092 = vmax.f32 %v5090, %v5091
    %v5093 = vsel %vm5062, %v3402, -inf
    %v5094 = vsel %vm5062, %v3458, -inf
    %v5095 = vmax.f32 %v5093, %v5094
    %v5096 = vsel %vm5062, %v3409, -inf
    %v5097 = vsel %vm5062, %v3465, -inf
    %v5098 = vmax.f32 %v5096, %v5097
    %v5099 = vsel %vm5062, %v3416, -inf
    %v5100 = vsel %vm5062, %v3472, -inf
    %v5101 = vmax.f32 %v5099, %v5100
    %v5102 = vsel %vm5062, %v3423, -inf
    %v5103 = vsel %vm5062, %v3479, -inf
    %v5104 = vmax.f32 %v5102, %v5103
    %v5105 = vsel %vm5062, %v3430, -inf
    %v5106 = vsel %vm5062, %v3486, -inf
    %v5107 = vmax.f32 %v5105, %v5106
    %v5108 = vsel %vm5062, %v3437, -inf
    %v5109 = vsel %vm5062, %v3493, -inf
    %v5110 = vmax.f32 %v5108, %v5109
    %v5111 = vsel %vm5062, %v3500, -inf
    %v5112 = vsel %vm5062, %v3556, -inf
    %v5113 = vmax.f32 %v5111, %v5112
    %v5114 = vsel %vm5062, %v3507, -inf
    %v5115 = vsel %vm5062, %v3563, -inf
    %v5116 = vmax.f32 %v5114, %v5115
    %v5117 = vsel %vm5062, %v3514, -inf
    %v5118 = vsel %vm5062, %v3570, -inf
    %v5119 = vmax.f32 %v5117, %v5118
    %v5120 = vsel %vm5062, %v3521, -inf
    %v5121 = vsel %vm5062, %v3577, -inf
    %v5122 = vmax.f32 %v5120, %v5121
    %v5123 = vsel %vm5062, %v3528, -inf
    %v5124 = vsel %vm5062, %v3584, -inf
    %v5125 = vmax.f32 %v5123, %v5124
    %v5126 = vsel %vm5062, %v3535, -inf
    %v5127 = vsel %vm5062, %v3591, -inf
    %v5128 = vmax.f32 %v5126, %v5127
    %v5129 = vsel %vm5062, %v3542, -inf
    %v5130 = vsel %vm5062, %v3598, -inf
    %v5131 = vmax.f32 %v5129, %v5130
    %v5132 = vsel %vm5062, %v3549, -inf
    %v5133 = vsel %vm5062, %v3605, -inf
    %v5134 = vmax.f32 %v5132, %v5133
    %v5135 = vsel %vm5062, %v3612, -inf
    %v5136 = vsel %vm5062, %v3668, -inf
    %v5137 = vmax.f32 %v5135, %v5136
    %v5138 = vsel %vm5062, %v3619, -inf
    %v5139 = vsel %vm5062, %v3675, -inf
    %v5140 = vmax.f32 %v5138, %v5139
    %v5141 = vsel %vm5062, %v3626, -inf
    %v5142 = vsel %vm5062, %v3682, -inf
    %v5143 = vmax.f32 %v5141, %v5142
    %v5144 = vsel %vm5062, %v3633, -inf
    %v5145 = vsel %vm5062, %v3689, -inf
    %v5146 = vmax.f32 %v5144, %v5145
    %v5147 = vsel %vm5062, %v3640, -inf
    %v5148 = vsel %vm5062, %v3696, -inf
    %v5149 = vmax.f32 %v5147, %v5148
    %v5150 = vsel %vm5062, %v3647, -inf
    %v5151 = vsel %vm5062, %v3703, -inf
    %v5152 = vmax.f32 %v5150, %v5151
    %v5153 = vsel %vm5062, %v3654, -inf
    %v5154 = vsel %vm5062, %v3710, -inf
    %v5155 = vmax.f32 %v5153, %v5154
    %v5156 = vsel %vm5062, %v3661, -inf
    %v5157 = vsel %vm5062, %v3717, -inf
    %v5158 = vmax.f32 %v5156, %v5157
    %v5159 = vsel %vm5062, %v3724, -inf
    %v5160 = vsel %vm5062, %v3780, -inf
    %v5161 = vmax.f32 %v5159, %v5160
    %v5162 = vsel %vm5062, %v3731, -inf
    %v5163 = vsel %vm5062, %v3787, -inf
    %v5164 = vmax.f32 %v5162, %v5163
    %v5165 = vsel %vm5062, %v3738, -inf
    %v5166 = vsel %vm5062, %v3794, -inf
    %v5167 = vmax.f32 %v5165, %v5166
    %v5168 = vsel %vm5062, %v3745, -inf
    %v5169 = vsel %vm5062, %v3801, -inf
    %v5170 = vmax.f32 %v5168, %v5169
    %v5171 = vsel %vm5062, %v3752, -inf
    %v5172 = vsel %vm5062, %v3808, -inf
    %v5173 = vmax.f32 %v5171, %v5172
    %v5174 = vsel %vm5062, %v3759, -inf
    %v5175 = vsel %vm5062, %v3815, -inf
    %v5176 = vmax.f32 %v5174, %v5175
    %v5177 = vsel %vm5062, %v3766, -inf
    %v5178 = vsel %vm5062, %v3822, -inf
    %v5179 = vmax.f32 %v5177, %v5178
    %v5180 = vsel %vm5062, %v3773, -inf
    %v5181 = vsel %vm5062, %v3829, -inf
    %v5182 = vmax.f32 %v5180, %v5181
    %v5183 = vsel %vm5062, %v3836, -inf
    %v5184 = vsel %vm5062, %v3892, -inf
    %v5185 = vmax.f32 %v5183, %v5184
    %v5186 = vsel %vm5062, %v3843, -inf
    %v5187 = vsel %vm5062, %v3899, -inf
    %v5188 = vmax.f32 %v5186, %v5187
    %v5189 = vsel %vm5062, %v3850, -inf
    %v5190 = vsel %vm5062, %v3906, -inf
    %v5191 = vmax.f32 %v5189, %v5190
    %v5192 = vsel %vm5062, %v3857, -inf
    %v5193 = vsel %vm5062, %v3913, -inf
    %v5194 = vmax.f32 %v5192, %v5193
    %v5195 = vsel %vm5062, %v3864, -inf
    %v5196 = vsel %vm5062, %v3920, -inf
    %v5197 = vmax.f32 %v5195, %v5196
    %v5198 = vsel %vm5062, %v3871, -inf
    %v5199 = vsel %vm5062, %v3927, -inf
    %v5200 = vmax.f32 %v5198, %v5199
    %v5201 = vsel %vm5062, %v3878, -inf
    %v5202 = vsel %vm5062, %v3934, -inf
    %v5203 = vmax.f32 %v5201, %v5202
    %v5204 = vsel %vm5062, %v3885, -inf
    %v5205 = vsel %vm5062, %v3941, -inf
    %v5206 = vmax.f32 %v5204, %v5205
    %v5207 = vsel %vm5062, %v3948, -inf
    %v5208 = vsel %vm5062, %v4004, -inf
    %v5209 = vmax.f32 %v5207, %v5208
    %v5210 = vsel %vm5062, %v3955, -inf
    %v5211 = vsel %vm5062, %v4011, -inf
    %v5212 = vmax.f32 %v5210, %v5211
    %v5213 = vsel %vm5062, %v3962, -inf
    %v5214 = vsel %vm5062, %v4018, -inf
    %v5215 = vmax.f32 %v5213, %v5214
    %v5216 = vsel %vm5062, %v3969, -inf
    %v5217 = vsel %vm5062, %v4025, -inf
    %v5218 = vmax.f32 %v5216, %v5217
    %v5219 = vsel %vm5062, %v3976, -inf
    %v5220 = vsel %vm5062, %v4032, -inf
    %v5221 = vmax.f32 %v5219, %v5220
    %v5222 = vsel %vm5062, %v3983, -inf
    %v5223 = vsel %vm5062, %v4039, -inf
    %v5224 = vmax.f32 %v5222, %v5223
    %v5225 = vsel %vm5062, %v3990, -inf
    %v5226 = vsel %vm5062, %v4046, -inf
    %v5227 = vmax.f32 %v5225, %v5226
    %v5228 = vsel %vm5062, %v3997, -inf
    %v5229 = vsel %vm5062, %v4053, -inf
    %v5230 = vmax.f32 %v5228, %v5229
    %v5231 = vsel %vm5062, %v4060, -inf
    %v5232 = vsel %vm5062, %v4116, -inf
    %v5233 = vmax.f32 %v5231, %v5232
    %v5234 = vsel %vm5062, %v4067, -inf
    %v5235 = vsel %vm5062, %v4123, -inf
    %v5236 = vmax.f32 %v5234, %v5235
    %v5237 = vsel %vm5062, %v4074, -inf
    %v5238 = vsel %vm5062, %v4130, -inf
    %v5239 = vmax.f32 %v5237, %v5238
    %v5240 = vsel %vm5062, %v4081, -inf
    %v5241 = vsel %vm5062, %v4137, -inf
    %v5242 = vmax.f32 %v5240, %v5241
    %v5243 = vsel %vm5062, %v4088, -inf
    %v5244 = vsel %vm5062, %v4144, -inf
    %v5245 = vmax.f32 %v5243, %v5244
    %v5246 = vsel %vm5062, %v4095, -inf
    %v5247 = vsel %vm5062, %v4151, -inf
    %v5248 = vmax.f32 %v5246, %v5247
    %v5249 = vsel %vm5062, %v4102, -inf
    %v5250 = vsel %vm5062, %v4158, -inf
    %v5251 = vmax.f32 %v5249, %v5250
    %v5252 = vsel %vm5062, %v4109, -inf
    %v5253 = vsel %vm5062, %v4165, -inf
    %v5254 = vmax.f32 %v5252, %v5253
    %v5255 = vsel %vm5062, %v4172, -inf
    %v5256 = vsel %vm5062, %v4228, -inf
    %v5257 = vmax.f32 %v5255, %v5256
    %v5258 = vsel %vm5062, %v4179, -inf
    %v5259 = vsel %vm5062, %v4235, -inf
    %v5260 = vmax.f32 %v5258, %v5259
    %v5261 = vsel %vm5062, %v4186, -inf
    %v5262 = vsel %vm5062, %v4242, -inf
    %v5263 = vmax.f32 %v5261, %v5262
    %v5264 = vsel %vm5062, %v4193, -inf
    %v5265 = vsel %vm5062, %v4249, -inf
    %v5266 = vmax.f32 %v5264, %v5265
    %v5267 = vsel %vm5062, %v4200, -inf
    %v5268 = vsel %vm5062, %v4256, -inf
    %v5269 = vmax.f32 %v5267, %v5268
    %v5270 = vsel %vm5062, %v4207, -inf
    %v5271 = vsel %vm5062, %v4263, -inf
    %v5272 = vmax.f32 %v5270, %v5271
    %v5273 = vsel %vm5062, %v4214, -inf
    %v5274 = vsel %vm5062, %v4270, -inf
    %v5275 = vmax.f32 %v5273, %v5274
    %v5276 = vsel %vm5062, %v4221, -inf
    %v5277 = vsel %vm5062, %v4277, -inf
    %v5278 = vmax.f32 %v5276, %v5277
    %v5279 = vsel %vm5062, %v4284, -inf
    %v5280 = vsel %vm5062, %v4340, -inf
    %v5281 = vmax.f32 %v5279, %v5280
    %v5282 = vsel %vm5062, %v4291, -inf
    %v5283 = vsel %vm5062, %v4347, -inf
    %v5284 = vmax.f32 %v5282, %v5283
    %v5285 = vsel %vm5062, %v4298, -inf
    %v5286 = vsel %vm5062, %v4354, -inf
    %v5287 = vmax.f32 %v5285, %v5286
    %v5288 = vsel %vm5062, %v4305, -inf
    %v5289 = vsel %vm5062, %v4361, -inf
    %v5290 = vmax.f32 %v5288, %v5289
    %v5291 = vsel %vm5062, %v4312, -inf
    %v5292 = vsel %vm5062, %v4368, -inf
    %v5293 = vmax.f32 %v5291, %v5292
    %v5294 = vsel %vm5062, %v4319, -inf
    %v5295 = vsel %vm5062, %v4375, -inf
    %v5296 = vmax.f32 %v5294, %v5295
    %v5297 = vsel %vm5062, %v4326, -inf
    %v5298 = vsel %vm5062, %v4382, -inf
    %v5299 = vmax.f32 %v5297, %v5298
    %v5300 = vsel %vm5062, %v4333, -inf
    %v5301 = vsel %vm5062, %v4389, -inf
    %v5302 = vmax.f32 %v5300, %v5301
    %v5303 = vsel %vm5062, %v4396, -inf
    %v5304 = vsel %vm5062, %v4452, -inf
    %v5305 = vmax.f32 %v5303, %v5304
    %v5306 = vsel %vm5062, %v4403, -inf
    %v5307 = vsel %vm5062, %v4459, -inf
    %v5308 = vmax.f32 %v5306, %v5307
    %v5309 = vsel %vm5062, %v4410, -inf
    %v5310 = vsel %vm5062, %v4466, -inf
    %v5311 = vmax.f32 %v5309, %v5310
    %v5312 = vsel %vm5062, %v4417, -inf
    %v5313 = vsel %vm5062, %v4473, -inf
    %v5314 = vmax.f32 %v5312, %v5313
    %v5315 = vsel %vm5062, %v4424, -inf
    %v5316 = vsel %vm5062, %v4480, -inf
    %v5317 = vmax.f32 %v5315, %v5316
    %v5318 = vsel %vm5062, %v4431, -inf
    %v5319 = vsel %vm5062, %v4487, -inf
    %v5320 = vmax.f32 %v5318, %v5319
    %v5321 = vsel %vm5062, %v4438, -inf
    %v5322 = vsel %vm5062, %v4494, -inf
    %v5323 = vmax.f32 %v5321, %v5322
    %v5324 = vsel %vm5062, %v4445, -inf
    %v5325 = vsel %vm5062, %v4501, -inf
    %v5326 = vmax.f32 %v5324, %v5325
    %v5327 = vsel %vm5062, %v4508, -inf
    %v5328 = vsel %vm5062, %v4564, -inf
    %v5329 = vmax.f32 %v5327, %v5328
    %v5330 = vsel %vm5062, %v4515, -inf
    %v5331 = vsel %vm5062, %v4571, -inf
    %v5332 = vmax.f32 %v5330, %v5331
    %v5333 = vsel %vm5062, %v4522, -inf
    %v5334 = vsel %vm5062, %v4578, -inf
    %v5335 = vmax.f32 %v5333, %v5334
    %v5336 = vsel %vm5062, %v4529, -inf
    %v5337 = vsel %vm5062, %v4585, -inf
    %v5338 = vmax.f32 %v5336, %v5337
    %v5339 = vsel %vm5062, %v4536, -inf
    %v5340 = vsel %vm5062, %v4592, -inf
    %v5341 = vmax.f32 %v5339, %v5340
    %v5342 = vsel %vm5062, %v4543, -inf
    %v5343 = vsel %vm5062, %v4599, -inf
    %v5344 = vmax.f32 %v5342, %v5343
    %v5345 = vsel %vm5062, %v4550, -inf
    %v5346 = vsel %vm5062, %v4606, -inf
    %v5347 = vmax.f32 %v5345, %v5346
    %v5348 = vsel %vm5062, %v4557, -inf
    %v5349 = vsel %vm5062, %v4613, -inf
    %v5350 = vmax.f32 %v5348, %v5349
    %v5351 = vsel %vm5062, %v4620, -inf
    %v5352 = vsel %vm5062, %v4676, -inf
    %v5353 = vmax.f32 %v5351, %v5352
    %v5354 = vsel %vm5062, %v4627, -inf
    %v5355 = vsel %vm5062, %v4683, -inf
    %v5356 = vmax.f32 %v5354, %v5355
    %v5357 = vsel %vm5062, %v4634, -inf
    %v5358 = vsel %vm5062, %v4690, -inf
    %v5359 = vmax.f32 %v5357, %v5358
    %v5360 = vsel %vm5062, %v4641, -inf
    %v5361 = vsel %vm5062, %v4697, -inf
    %v5362 = vmax.f32 %v5360, %v5361
    %v5363 = vsel %vm5062, %v4648, -inf
    %v5364 = vsel %vm5062, %v4704, -inf
    %v5365 = vmax.f32 %v5363, %v5364
    %v5366 = vsel %vm5062, %v4655, -inf
    %v5367 = vsel %vm5062, %v4711, -inf
    %v5368 = vmax.f32 %v5366, %v5367
    %v5369 = vsel %vm5062, %v4662, -inf
    %v5370 = vsel %vm5062, %v4718, -inf
    %v5371 = vmax.f32 %v5369, %v5370
    %v5372 = vsel %vm5062, %v4669, -inf
    %v5373 = vsel %vm5062, %v4725, -inf
    %v5374 = vmax.f32 %v5372, %v5373
    %v5375 = vsel %vm5062, %v4732, -inf
    %v5376 = vsel %vm5062, %v4788, -inf
    %v5377 = vmax.f32 %v5375, %v5376
    %v5378 = vsel %vm5062, %v4739, -inf
    %v5379 = vsel %vm5062, %v4795, -inf
    %v5380 = vmax.f32 %v5378, %v5379
    %v5381 = vsel %vm5062, %v4746, -inf
    %v5382 = vsel %vm5062, %v4802, -inf
    %v5383 = vmax.f32 %v5381, %v5382
    %v5384 = vsel %vm5062, %v4753, -inf
    %v5385 = vsel %vm5062, %v4809, -inf
    %v5386 = vmax.f32 %v5384, %v5385
    %v5387 = vsel %vm5062, %v4760, -inf
    %v5388 = vsel %vm5062, %v4816, -inf
    %v5389 = vmax.f32 %v5387, %v5388
    %v5390 = vsel %vm5062, %v4767, -inf
    %v5391 = vsel %vm5062, %v4823, -inf
    %v5392 = vmax.f32 %v5390, %v5391
    %v5393 = vsel %vm5062, %v4774, -inf
    %v5394 = vsel %vm5062, %v4830, -inf
    %v5395 = vmax.f32 %v5393, %v5394
    %v5396 = vsel %vm5062, %v4781, -inf
    %v5397 = vsel %vm5062, %v4837, -inf
    %v5398 = vmax.f32 %v5396, %v5397
    %v5399 = vsel %vm5062, %v4844, -inf
    %v5400 = vsel %vm5062, %v4900, -inf
    %v5401 = vmax.f32 %v5399, %v5400
    %v5402 = vsel %vm5062, %v4851, -inf
    %v5403 = vsel %vm5062, %v4907, -inf
    %v5404 = vmax.f32 %v5402, %v5403
    %v5405 = vsel %vm5062, %v4858, -inf
    %v5406 = vsel %vm5062, %v4914, -inf
    %v5407 = vmax.f32 %v5405, %v5406
    %v5408 = vsel %vm5062, %v4865, -inf
    %v5409 = vsel %vm5062, %v4921, -inf
    %v5410 = vmax.f32 %v5408, %v5409
    %v5411 = vsel %vm5062, %v4872, -inf
    %v5412 = vsel %vm5062, %v4928, -inf
    %v5413 = vmax.f32 %v5411, %v5412
    %v5414 = vsel %vm5062, %v4879, -inf
    %v5415 = vsel %vm5062, %v4935, -inf
    %v5416 = vmax.f32 %v5414, %v5415
    %v5417 = vsel %vm5062, %v4886, -inf
    %v5418 = vsel %vm5062, %v4942, -inf
    %v5419 = vmax.f32 %v5417, %v5418
    %v5420 = vsel %vm5062, %v4893, -inf
    %v5421 = vsel %vm5062, %v4949, -inf
    %v5422 = vmax.f32 %v5420, %v5421
    %v5423 = vsel %vm5062, %v4956, -inf
    %v5424 = vsel %vm5062, %v5012, -inf
    %v5425 = vmax.f32 %v5423, %v5424
    %v5426 = vsel %vm5062, %v4963, -inf
    %v5427 = vsel %vm5062, %v5019, -inf
    %v5428 = vmax.f32 %v5426, %v5427
    %v5429 = vsel %vm5062, %v4970, -inf
    %v5430 = vsel %vm5062, %v5026, -inf
    %v5431 = vmax.f32 %v5429, %v5430
    %v5432 = vsel %vm5062, %v4977, -inf
    %v5433 = vsel %vm5062, %v5033, -inf
    %v5434 = vmax.f32 %v5432, %v5433
    %v5435 = vsel %vm5062, %v4984, -inf
    %v5436 = vsel %vm5062, %v5040, -inf
    %v5437 = vmax.f32 %v5435, %v5436
    %v5438 = vsel %vm5062, %v4991, -inf
    %v5439 = vsel %vm5062, %v5047, -inf
    %v5440 = vmax.f32 %v5438, %v5439
    %v5441 = vsel %vm5062, %v4998, -inf
    %v5442 = vsel %vm5062, %v5054, -inf
    %v5443 = vmax.f32 %v5441, %v5442
    %v5444 = vsel %vm5062, %v5005, -inf
    %v5445 = vsel %vm5062, %v5061, -inf
    %v5446 = vmax.f32 %v5444, %v5445
    %v5447 = vpack.c.bf16 %v5065, %v5065
    %v5448 = vpack.c.bf16 %v5068, %v5068
    %v5449 = vpack.c.bf16 %v5071, %v5071
    %v5450 = vpack.c.bf16 %v5074, %v5074
    %v5451 = vpack.c.bf16 %v5077, %v5077
    %v5452 = vpack.c.bf16 %v5080, %v5080
    %v5453 = vpack.c.bf16 %v5083, %v5083
    %v5454 = vpack.c.bf16 %v5086, %v5086
    %v5455 = vpack.c.bf16 %v5089, %v5089
    %v5456 = vpack.c.bf16 %v5092, %v5092
    %v5457 = vpack.c.bf16 %v5095, %v5095
    %v5458 = vpack.c.bf16 %v5098, %v5098
    %v5459 = vpack.c.bf16 %v5101, %v5101
    %v5460 = vpack.c.bf16 %v5104, %v5104
    %v5461 = vpack.c.bf16 %v5107, %v5107
    %v5462 = vpack.c.bf16 %v5110, %v5110
    %v5463 = vpack.c.bf16 %v5113, %v5113
    %v5464 = vpack.c.bf16 %v5116, %v5116
    %v5465 = vpack.c.bf16 %v5119, %v5119
    %v5466 = vpack.c.bf16 %v5122, %v5122
    %v5467 = vpack.c.bf16 %v5125, %v5125
    %v5468 = vpack.c.bf16 %v5128, %v5128
    %v5469 = vpack.c.bf16 %v5131, %v5131
    %v5470 = vpack.c.bf16 %v5134, %v5134
    %v5471 = vpack.c.bf16 %v5137, %v5137
    %v5472 = vpack.c.bf16 %v5140, %v5140
    %v5473 = vpack.c.bf16 %v5143, %v5143
    %v5474 = vpack.c.bf16 %v5146, %v5146
    %v5475 = vpack.c.bf16 %v5149, %v5149
    %v5476 = vpack.c.bf16 %v5152, %v5152
    %v5477 = vpack.c.bf16 %v5155, %v5155
    %v5478 = vpack.c.bf16 %v5158, %v5158
    %v5479 = vpack.c.bf16 %v5161, %v5161
    %v5480 = vpack.c.bf16 %v5164, %v5164
    %v5481 = vpack.c.bf16 %v5167, %v5167
    %v5482 = vpack.c.bf16 %v5170, %v5170
    %v5483 = vpack.c.bf16 %v5173, %v5173
    %v5484 = vpack.c.bf16 %v5176, %v5176
    %v5485 = vpack.c.bf16 %v5179, %v5179
    %v5486 = vpack.c.bf16 %v5182, %v5182
    %v5487 = vpack.c.bf16 %v5185, %v5185
    %v5488 = vpack.c.bf16 %v5188, %v5188
    %v5489 = vpack.c.bf16 %v5191, %v5191
    %v5490 = vpack.c.bf16 %v5194, %v5194
    %v5491 = vpack.c.bf16 %v5197, %v5197
    %v5492 = vpack.c.bf16 %v5200, %v5200
    %v5493 = vpack.c.bf16 %v5203, %v5203
    %v5494 = vpack.c.bf16 %v5206, %v5206
    %v5495 = vpack.c.bf16 %v5209, %v5209
    %v5496 = vpack.c.bf16 %v5212, %v5212
    %v5497 = vpack.c.bf16 %v5215, %v5215
    %v5498 = vpack.c.bf16 %v5218, %v5218
    %v5499 = vpack.c.bf16 %v5221, %v5221
    %v5500 = vpack.c.bf16 %v5224, %v5224
    %v5501 = vpack.c.bf16 %v5227, %v5227
    %v5502 = vpack.c.bf16 %v5230, %v5230
    %v5503 = vpack.c.bf16 %v5233, %v5233
    %v5504 = vpack.c.bf16 %v5236, %v5236
    %v5505 = vpack.c.bf16 %v5239, %v5239
    %v5506 = vpack.c.bf16 %v5242, %v5242
    %v5507 = vpack.c.bf16 %v5245, %v5245
    %v5508 = vpack.c.bf16 %v5248, %v5248
    %v5509 = vpack.c.bf16 %v5251, %v5251
    %v5510 = vpack.c.bf16 %v5254, %v5254
    %v5511 = vpack.c.bf16 %v5257, %v5257
    %v5512 = vpack.c.bf16 %v5260, %v5260
    %v5513 = vpack.c.bf16 %v5263, %v5263
    %v5514 = vpack.c.bf16 %v5266, %v5266
    %v5515 = vpack.c.bf16 %v5269, %v5269
    %v5516 = vpack.c.bf16 %v5272, %v5272
    %v5517 = vpack.c.bf16 %v5275, %v5275
    %v5518 = vpack.c.bf16 %v5278, %v5278
    %v5519 = vpack.c.bf16 %v5281, %v5281
    %v5520 = vpack.c.bf16 %v5284, %v5284
    %v5521 = vpack.c.bf16 %v5287, %v5287
    %v5522 = vpack.c.bf16 %v5290, %v5290
    %v5523 = vpack.c.bf16 %v5293, %v5293
    %v5524 = vpack.c.bf16 %v5296, %v5296
    %v5525 = vpack.c.bf16 %v5299, %v5299
    %v5526 = vpack.c.bf16 %v5302, %v5302
    %v5527 = vpack.c.bf16 %v5305, %v5305
    %v5528 = vpack.c.bf16 %v5308, %v5308
    %v5529 = vpack.c.bf16 %v5311, %v5311
    %v5530 = vpack.c.bf16 %v5314, %v5314
    %v5531 = vpack.c.bf16 %v5317, %v5317
    %v5532 = vpack.c.bf16 %v5320, %v5320
    %v5533 = vpack.c.bf16 %v5323, %v5323
    %v5534 = vpack.c.bf16 %v5326, %v5326
    %v5535 = vpack.c.bf16 %v5329, %v5329
    %v5536 = vpack.c.bf16 %v5332, %v5332
    %v5537 = vpack.c.bf16 %v5335, %v5335
    %v5538 = vpack.c.bf16 %v5338, %v5338
    %v5539 = vpack.c.bf16 %v5341, %v5341
    %v5540 = vpack.c.bf16 %v5344, %v5344
    %v5541 = vpack.c.bf16 %v5347, %v5347
    %v5542 = vpack.c.bf16 %v5350, %v5350
    %v5543 = vpack.c.bf16 %v5353, %v5353
    %v5544 = vpack.c.bf16 %v5356, %v5356
    %v5545 = vpack.c.bf16 %v5359, %v5359
    %v5546 = vpack.c.bf16 %v5362, %v5362
    %v5547 = vpack.c.bf16 %v5365, %v5365
    %v5548 = vpack.c.bf16 %v5368, %v5368
    %v5549 = vpack.c.bf16 %v5371, %v5371
    %v5550 = vpack.c.bf16 %v5374, %v5374
    %v5551 = vpack.c.bf16 %v5377, %v5377
    %v5552 = vpack.c.bf16 %v5380, %v5380
    %v5553 = vpack.c.bf16 %v5383, %v5383
    %v5554 = vpack.c.bf16 %v5386, %v5386
    %v5555 = vpack.c.bf16 %v5389, %v5389
    %v5556 = vpack.c.bf16 %v5392, %v5392
    %v5557 = vpack.c.bf16 %v5395, %v5395
    %v5558 = vpack.c.bf16 %v5398, %v5398
    %v5559 = vpack.c.bf16 %v5401, %v5401
    %v5560 = vpack.c.bf16 %v5404, %v5404
    %v5561 = vpack.c.bf16 %v5407, %v5407
    %v5562 = vpack.c.bf16 %v5410, %v5410
    %v5563 = vpack.c.bf16 %v5413, %v5413
    %v5564 = vpack.c.bf16 %v5416, %v5416
    %v5565 = vpack.c.bf16 %v5419, %v5419
    %v5566 = vpack.c.bf16 %v5422, %v5422
    %v5567 = vpack.c.bf16 %v5425, %v5425
    %v5568 = vpack.c.bf16 %v5428, %v5428
    %v5569 = vpack.c.bf16 %v5431, %v5431
    %v5570 = vpack.c.bf16 %v5434, %v5434
    %v5571 = vpack.c.bf16 %v5437, %v5437
    %v5572 = vpack.c.bf16 %v5440, %v5440
    %v5573 = vpack.c.bf16 %v5443, %v5443
    %v5574 = vpack.c.bf16 %v5446, %v5446
    %v5703 = vperm.slane %v5447, 0
    %v5704 = vperm.slane %v5448, 0
    %v5705 = vperm.slane %v5449, 0
    %v5706 = vperm.slane %v5450, 0
    %v5707 = vperm.slane %v5451, 0
    %v5708 = vperm.slane %v5452, 0
    %v5709 = vperm.slane %v5453, 0
    %v5710 = vperm.slane %v5454, 0
    %v5711 = vperm.slane %v5455, 0
    %v5712 = vperm.slane %v5456, 0
    %v5713 = vperm.slane %v5457, 0
    %v5714 = vperm.slane %v5458, 0
    %v5715 = vperm.slane %v5459, 0
    %v5716 = vperm.slane %v5460, 0
    %v5717 = vperm.slane %v5461, 0
    %v5718 = vperm.slane %v5462, 0
    %v5719 = vperm.slane %v5463, 0
    %v5720 = vperm.slane %v5464, 0
    %v5721 = vperm.slane %v5465, 0
    %v5722 = vperm.slane %v5466, 0
    %v5723 = vperm.slane %v5467, 0
    %v5724 = vperm.slane %v5468, 0
    %v5725 = vperm.slane %v5469, 0
    %v5726 = vperm.slane %v5470, 0
    %v5727 = vperm.slane %v5471, 0
    %v5728 = vperm.slane %v5472, 0
    %v5729 = vperm.slane %v5473, 0
    %v5730 = vperm.slane %v5474, 0
    %v5731 = vperm.slane %v5475, 0
    %v5732 = vperm.slane %v5476, 0
    %v5733 = vperm.slane %v5477, 0
    %v5734 = vperm.slane %v5478, 0
    %v5735 = vperm.slane %v5479, 0
    %v5736 = vperm.slane %v5480, 0
    %v5737 = vperm.slane %v5481, 0
    %v5738 = vperm.slane %v5482, 0
    %v5739 = vperm.slane %v5483, 0
    %v5740 = vperm.slane %v5484, 0
    %v5741 = vperm.slane %v5485, 0
    %v5742 = vperm.slane %v5486, 0
    %v5743 = vperm.slane %v5487, 0
    %v5744 = vperm.slane %v5488, 0
    %v5745 = vperm.slane %v5489, 0
    %v5746 = vperm.slane %v5490, 0
    %v5747 = vperm.slane %v5491, 0
    %v5748 = vperm.slane %v5492, 0
    %v5749 = vperm.slane %v5493, 0
    %v5750 = vperm.slane %v5494, 0
    %v5751 = vperm.slane %v5495, 0
    %v5752 = vperm.slane %v5496, 0
    %v5753 = vperm.slane %v5497, 0
    %v5754 = vperm.slane %v5498, 0
    %v5755 = vperm.slane %v5499, 0
    %v5756 = vperm.slane %v5500, 0
    %v5757 = vperm.slane %v5501, 0
    %v5758 = vperm.slane %v5502, 0
    %v5759 = vperm.slane %v5503, 0
    %v5760 = vperm.slane %v5504, 0
    %v5761 = vperm.slane %v5505, 0
    %v5762 = vperm.slane %v5506, 0
    %v5763 = vperm.slane %v5507, 0
    %v5764 = vperm.slane %v5508, 0
    %v5765 = vperm.slane %v5509, 0
    %v5766 = vperm.slane %v5510, 0
    %v5767 = vperm.slane %v5511, 0
    %v5768 = vperm.slane %v5512, 0
    %v5769 = vperm.slane %v5513, 0
    %v5770 = vperm.slane %v5514, 0
    %v5771 = vperm.slane %v5515, 0
    %v5772 = vperm.slane %v5516, 0
    %v5773 = vperm.slane %v5517, 0
    %v5774 = vperm.slane %v5518, 0
    %v5775 = vperm.slane %v5519, 0
    %v5776 = vperm.slane %v5520, 0
    %v5777 = vperm.slane %v5521, 0
    %v5778 = vperm.slane %v5522, 0
    %v5779 = vperm.slane %v5523, 0
    %v5780 = vperm.slane %v5524, 0
    %v5781 = vperm.slane %v5525, 0
    %v5782 = vperm.slane %v5526, 0
    %v5783 = vperm.slane %v5527, 0
    %v5784 = vperm.slane %v5528, 0
    %v5785 = vperm.slane %v5529, 0
    %v5786 = vperm.slane %v5530, 0
    %v5787 = vperm.slane %v5531, 0
    %v5788 = vperm.slane %v5532, 0
    %v5789 = vperm.slane %v5533, 0
    %v5790 = vperm.slane %v5534, 0
    %v5791 = vperm.slane %v5535, 0
    %v5792 = vperm.slane %v5536, 0
    %v5793 = vperm.slane %v5537, 0
    %v5794 = vperm.slane %v5538, 0
    %v5795 = vperm.slane %v5539, 0
    %v5796 = vperm.slane %v5540, 0
    %v5797 = vperm.slane %v5541, 0
    %v5798 = vperm.slane %v5542, 0
    %v5799 = vperm.slane %v5543, 0
    %v5800 = vperm.slane %v5544, 0
    %v5801 = vperm.slane %v5545, 0
    %v5802 = vperm.slane %v5546, 0
    %v5803 = vperm.slane %v5547, 0
    %v5804 = vperm.slane %v5548, 0
    %v5805 = vperm.slane %v5549, 0
    %v5806 = vperm.slane %v5550, 0
    %v5807 = vperm.slane %v5551, 0
    %v5808 = vperm.slane %v5552, 0
    %v5809 = vperm.slane %v5553, 0
    %v5810 = vperm.slane %v5554, 0
    %v5811 = vperm.slane %v5555, 0
    %v5812 = vperm.slane %v5556, 0
    %v5813 = vperm.slane %v5557, 0
    %v5814 = vperm.slane %v5558, 0
    %v5815 = vperm.slane %v5559, 0
    %v5816 = vperm.slane %v5560, 0
    %v5817 = vperm.slane %v5561, 0
    %v5818 = vperm.slane %v5562, 0
    %v5819 = vperm.slane %v5563, 0
    %v5820 = vperm.slane %v5564, 0
    %v5821 = vperm.slane %v5565, 0
    %v5822 = vperm.slane %v5566, 0
    %v5823 = vperm.slane %v5567, 0
    %v5824 = vperm.slane %v5568, 0
    %v5825 = vperm.slane %v5569, 0
    %v5826 = vperm.slane %v5570, 0
    %v5827 = vperm.slane %v5571, 0
    %v5828 = vperm.slane %v5572, 0
    %v5829 = vperm.slane %v5573, 0
    %v5830 = vperm.slane %v5574, 0
    %v5831 = vunpack.c.l.b16 %v5703
    %v5832 = vunpack.c.l.b16 %v5704
    %v5833 = vunpack.c.l.b16 %v5705
    %v5834 = vunpack.c.l.b16 %v5706
    %v5835 = vunpack.c.l.b16 %v5707
    %v5836 = vunpack.c.l.b16 %v5708
    %v5837 = vunpack.c.l.b16 %v5709
    %v5838 = vunpack.c.l.b16 %v5710
    %v5839 = vunpack.c.l.b16 %v5711
    %v5840 = vunpack.c.l.b16 %v5712
    %v5841 = vunpack.c.l.b16 %v5713
    %v5842 = vunpack.c.l.b16 %v5714
    %v5843 = vunpack.c.l.b16 %v5715
    %v5844 = vunpack.c.l.b16 %v5716
    %v5845 = vunpack.c.l.b16 %v5717
    %v5846 = vunpack.c.l.b16 %v5718
    %v5847 = vunpack.c.l.b16 %v5719
    %v5848 = vunpack.c.l.b16 %v5720
    %v5849 = vunpack.c.l.b16 %v5721
    %v5850 = vunpack.c.l.b16 %v5722
    %v5851 = vunpack.c.l.b16 %v5723
    %v5852 = vunpack.c.l.b16 %v5724
    %v5853 = vunpack.c.l.b16 %v5725
    %v5854 = vunpack.c.l.b16 %v5726
    %v5855 = vunpack.c.l.b16 %v5727
    %v5856 = vunpack.c.l.b16 %v5728
    %v5857 = vunpack.c.l.b16 %v5729
    %v5858 = vunpack.c.l.b16 %v5730
    %v5859 = vunpack.c.l.b16 %v5731
    %v5860 = vunpack.c.l.b16 %v5732
    %v5861 = vunpack.c.l.b16 %v5733
    %v5862 = vunpack.c.l.b16 %v5734
    %v5863 = vunpack.c.l.b16 %v5735
    %v5864 = vunpack.c.l.b16 %v5736
    %v5865 = vunpack.c.l.b16 %v5737
    %v5866 = vunpack.c.l.b16 %v5738
    %v5867 = vunpack.c.l.b16 %v5739
    %v5868 = vunpack.c.l.b16 %v5740
    %v5869 = vunpack.c.l.b16 %v5741
    %v5870 = vunpack.c.l.b16 %v5742
    %v5871 = vunpack.c.l.b16 %v5743
    %v5872 = vunpack.c.l.b16 %v5744
    %v5873 = vunpack.c.l.b16 %v5745
    %v5874 = vunpack.c.l.b16 %v5746
    %v5875 = vunpack.c.l.b16 %v5747
    %v5876 = vunpack.c.l.b16 %v5748
    %v5877 = vunpack.c.l.b16 %v5749
    %v5878 = vunpack.c.l.b16 %v5750
    %v5879 = vunpack.c.l.b16 %v5751
    %v5880 = vunpack.c.l.b16 %v5752
    %v5881 = vunpack.c.l.b16 %v5753
    %v5882 = vunpack.c.l.b16 %v5754
    %v5883 = vunpack.c.l.b16 %v5755
    %v5884 = vunpack.c.l.b16 %v5756
    %v5885 = vunpack.c.l.b16 %v5757
    %v5886 = vunpack.c.l.b16 %v5758
    %v5887 = vunpack.c.l.b16 %v5759
    %v5888 = vunpack.c.l.b16 %v5760
    %v5889 = vunpack.c.l.b16 %v5761
    %v5890 = vunpack.c.l.b16 %v5762
    %v5891 = vunpack.c.l.b16 %v5763
    %v5892 = vunpack.c.l.b16 %v5764
    %v5893 = vunpack.c.l.b16 %v5765
    %v5894 = vunpack.c.l.b16 %v5766
    %v5895 = vunpack.c.l.b16 %v5767
    %v5896 = vunpack.c.l.b16 %v5768
    %v5897 = vunpack.c.l.b16 %v5769
    %v5898 = vunpack.c.l.b16 %v5770
    %v5899 = vunpack.c.l.b16 %v5771
    %v5900 = vunpack.c.l.b16 %v5772
    %v5901 = vunpack.c.l.b16 %v5773
    %v5902 = vunpack.c.l.b16 %v5774
    %v5903 = vunpack.c.l.b16 %v5775
    %v5904 = vunpack.c.l.b16 %v5776
    %v5905 = vunpack.c.l.b16 %v5777
    %v5906 = vunpack.c.l.b16 %v5778
    %v5907 = vunpack.c.l.b16 %v5779
    %v5908 = vunpack.c.l.b16 %v5780
    %v5909 = vunpack.c.l.b16 %v5781
    %v5910 = vunpack.c.l.b16 %v5782
    %v5911 = vunpack.c.l.b16 %v5783
    %v5912 = vunpack.c.l.b16 %v5784
    %v5913 = vunpack.c.l.b16 %v5785
    %v5914 = vunpack.c.l.b16 %v5786
    %v5915 = vunpack.c.l.b16 %v5787
    %v5916 = vunpack.c.l.b16 %v5788
    %v5917 = vunpack.c.l.b16 %v5789
    %v5918 = vunpack.c.l.b16 %v5790
    %v5919 = vunpack.c.l.b16 %v5791
    %v5920 = vunpack.c.l.b16 %v5792
    %v5921 = vunpack.c.l.b16 %v5793
    %v5922 = vunpack.c.l.b16 %v5794
    %v5923 = vunpack.c.l.b16 %v5795
    %v5924 = vunpack.c.l.b16 %v5796
    %v5925 = vunpack.c.l.b16 %v5797
    %v5926 = vunpack.c.l.b16 %v5798
    %v5927 = vunpack.c.l.b16 %v5799
    %v5928 = vunpack.c.l.b16 %v5800
    %v5929 = vunpack.c.l.b16 %v5801
    %v5930 = vunpack.c.l.b16 %v5802
    %v5931 = vunpack.c.l.b16 %v5803
    %v5932 = vunpack.c.l.b16 %v5804
    %v5933 = vunpack.c.l.b16 %v5805
    %v5934 = vunpack.c.l.b16 %v5806
    %v5935 = vunpack.c.l.b16 %v5807
    %v5936 = vunpack.c.l.b16 %v5808
    %v5937 = vunpack.c.l.b16 %v5809
    %v5938 = vunpack.c.l.b16 %v5810
    %v5939 = vunpack.c.l.b16 %v5811
    %v5940 = vunpack.c.l.b16 %v5812
    %v5941 = vunpack.c.l.b16 %v5813
    %v5942 = vunpack.c.l.b16 %v5814
    %v5943 = vunpack.c.l.b16 %v5815
    %v5944 = vunpack.c.l.b16 %v5816
    %v5945 = vunpack.c.l.b16 %v5817
    %v5946 = vunpack.c.l.b16 %v5818
    %v5947 = vunpack.c.l.b16 %v5819
    %v5948 = vunpack.c.l.b16 %v5820
    %v5949 = vunpack.c.l.b16 %v5821
    %v5950 = vunpack.c.l.b16 %v5822
    %v5951 = vunpack.c.l.b16 %v5823
    %v5952 = vunpack.c.l.b16 %v5824
    %v5953 = vunpack.c.l.b16 %v5825
    %v5954 = vunpack.c.l.b16 %v5826
    %v5955 = vunpack.c.l.b16 %v5827
    %v5956 = vunpack.c.l.b16 %v5828
    %v5957 = vunpack.c.l.b16 %v5829
    %v5958 = vunpack.c.l.b16 %v5830
    %vm5959 = vcmask 1041409
    %v5960 = vsel %vm5959, %v5832, %v5831
    %vm5961 = vcmask 1042434
    %v5962 = vsel %vm5961, %v5833, %v5960
    %vm5963 = vcmask 1043459
    %v5964 = vsel %vm5963, %v5834, %v5962
    %vm5965 = vcmask 1044484
    %v5966 = vsel %vm5965, %v5835, %v5964
    %vm5967 = vcmask 1045509
    %v5968 = vsel %vm5967, %v5836, %v5966
    %vm5969 = vcmask 1046534
    %v5970 = vsel %vm5969, %v5837, %v5968
    %vm5971 = vcmask 1047559
    %v5972 = vsel %vm5971, %v5838, %v5970
    %v5973 = vsel %vm5959, %v5840, %v5839
    %v5974 = vsel %vm5961, %v5841, %v5973
    %v5975 = vsel %vm5963, %v5842, %v5974
    %v5976 = vsel %vm5965, %v5843, %v5975
    %v5977 = vsel %vm5967, %v5844, %v5976
    %v5978 = vsel %vm5969, %v5845, %v5977
    %v5979 = vsel %vm5971, %v5846, %v5978
    %v5980 = vsel %vm5959, %v5848, %v5847
    %v5981 = vsel %vm5961, %v5849, %v5980
    %v5982 = vsel %vm5963, %v5850, %v5981
    %v5983 = vsel %vm5965, %v5851, %v5982
    %v5984 = vsel %vm5967, %v5852, %v5983
    %v5985 = vsel %vm5969, %v5853, %v5984
    %v5986 = vsel %vm5971, %v5854, %v5985
    %v5987 = vsel %vm5959, %v5856, %v5855
    %v5988 = vsel %vm5961, %v5857, %v5987
    %v5989 = vsel %vm5963, %v5858, %v5988
    %v5990 = vsel %vm5965, %v5859, %v5989
    %v5991 = vsel %vm5967, %v5860, %v5990
    %v5992 = vsel %vm5969, %v5861, %v5991
    %v5993 = vsel %vm5971, %v5862, %v5992
    %v5994 = vsel %vm5959, %v5864, %v5863
    %v5995 = vsel %vm5961, %v5865, %v5994
    %v5996 = vsel %vm5963, %v5866, %v5995
    %v5997 = vsel %vm5965, %v5867, %v5996
    %v5998 = vsel %vm5967, %v5868, %v5997
    %v5999 = vsel %vm5969, %v5869, %v5998
    %v6000 = vsel %vm5971, %v5870, %v5999
    %v6001 = vsel %vm5959, %v5872, %v5871
    %v6002 = vsel %vm5961, %v5873, %v6001
    %v6003 = vsel %vm5963, %v5874, %v6002
    %v6004 = vsel %vm5965, %v5875, %v6003
    %v6005 = vsel %vm5967, %v5876, %v6004
    %v6006 = vsel %vm5969, %v5877, %v6005
    %v6007 = vsel %vm5971, %v5878, %v6006
    %v6008 = vsel %vm5959, %v5880, %v5879
    %v6009 = vsel %vm5961, %v5881, %v6008
    %v6010 = vsel %vm5963, %v5882, %v6009
    %v6011 = vsel %vm5965, %v5883, %v6010
    %v6012 = vsel %vm5967, %v5884, %v6011
    %v6013 = vsel %vm5969, %v5885, %v6012
    %v6014 = vsel %vm5971, %v5886, %v6013
    %v6015 = vsel %vm5959, %v5888, %v5887
    %v6016 = vsel %vm5961, %v5889, %v6015
    %v6017 = vsel %vm5963, %v5890, %v6016
    %v6018 = vsel %vm5965, %v5891, %v6017
    %v6019 = vsel %vm5967, %v5892, %v6018
    %v6020 = vsel %vm5969, %v5893, %v6019
    %v6021 = vsel %vm5971, %v5894, %v6020
    %v6022 = vsel %vm5959, %v5896, %v5895
    %v6023 = vsel %vm5961, %v5897, %v6022
    %v6024 = vsel %vm5963, %v5898, %v6023
    %v6025 = vsel %vm5965, %v5899, %v6024
    %v6026 = vsel %vm5967, %v5900, %v6025
    %v6027 = vsel %vm5969, %v5901, %v6026
    %v6028 = vsel %vm5971, %v5902, %v6027
    %v6029 = vsel %vm5959, %v5904, %v5903
    %v6030 = vsel %vm5961, %v5905, %v6029
    %v6031 = vsel %vm5963, %v5906, %v6030
    %v6032 = vsel %vm5965, %v5907, %v6031
    %v6033 = vsel %vm5967, %v5908, %v6032
    %v6034 = vsel %vm5969, %v5909, %v6033
    %v6035 = vsel %vm5971, %v5910, %v6034
    %v6036 = vsel %vm5959, %v5912, %v5911
    %v6037 = vsel %vm5961, %v5913, %v6036
    %v6038 = vsel %vm5963, %v5914, %v6037
    %v6039 = vsel %vm5965, %v5915, %v6038
    %v6040 = vsel %vm5967, %v5916, %v6039
    %v6041 = vsel %vm5969, %v5917, %v6040
    %v6042 = vsel %vm5971, %v5918, %v6041
    %v6043 = vsel %vm5959, %v5920, %v5919
    %v6044 = vsel %vm5961, %v5921, %v6043
    %v6045 = vsel %vm5963, %v5922, %v6044
    %v6046 = vsel %vm5965, %v5923, %v6045
    %v6047 = vsel %vm5967, %v5924, %v6046
    %v6048 = vsel %vm5969, %v5925, %v6047
    %v6049 = vsel %vm5971, %v5926, %v6048
    %v6050 = vsel %vm5959, %v5928, %v5927
    %v6051 = vsel %vm5961, %v5929, %v6050
    %v6052 = vsel %vm5963, %v5930, %v6051
    %v6053 = vsel %vm5965, %v5931, %v6052
    %v6054 = vsel %vm5967, %v5932, %v6053
    %v6055 = vsel %vm5969, %v5933, %v6054
    %v6056 = vsel %vm5971, %v5934, %v6055
    %v6057 = vsel %vm5959, %v5936, %v5935
    %v6058 = vsel %vm5961, %v5937, %v6057
    %v6059 = vsel %vm5963, %v5938, %v6058
    %v6060 = vsel %vm5965, %v5939, %v6059
    %v6061 = vsel %vm5967, %v5940, %v6060
    %v6062 = vsel %vm5969, %v5941, %v6061
    %v6063 = vsel %vm5971, %v5942, %v6062
    %v6064 = vsel %vm5959, %v5944, %v5943
    %v6065 = vsel %vm5961, %v5945, %v6064
    %v6066 = vsel %vm5963, %v5946, %v6065
    %v6067 = vsel %vm5965, %v5947, %v6066
    %v6068 = vsel %vm5967, %v5948, %v6067
    %v6069 = vsel %vm5969, %v5949, %v6068
    %v6070 = vsel %vm5971, %v5950, %v6069
    %v6071 = vsel %vm5959, %v5952, %v5951
    %v6072 = vsel %vm5961, %v5953, %v6071
    %v6073 = vsel %vm5963, %v5954, %v6072
    %v6074 = vsel %vm5965, %v5955, %v6073
    %v6075 = vsel %vm5967, %v5956, %v6074
    %v6076 = vsel %vm5969, %v5957, %v6075
    %v6077 = vsel %vm5971, %v5958, %v6076
    %v6078 = vpack.c.b16 %v5972, %v5972
    %v6079 = vpack.c.b16 %v5979, %v5979
    %v6080 = vpack.c.b16 %v5986, %v5986
    %v6081 = vpack.c.b16 %v5993, %v5993
    %v6082 = vpack.c.b16 %v6000, %v6000
    %v6083 = vpack.c.b16 %v6007, %v6007
    %v6084 = vpack.c.b16 %v6014, %v6014
    %v6085 = vpack.c.b16 %v6021, %v6021
    %v6086 = vpack.c.b16 %v6028, %v6028
    %v6087 = vpack.c.b16 %v6035, %v6035
    %v6088 = vpack.c.b16 %v6042, %v6042
    %v6089 = vpack.c.b16 %v6049, %v6049
    %v6090 = vpack.c.b16 %v6056, %v6056
    %v6091 = vpack.c.b16 %v6063, %v6063
    %v6092 = vpack.c.b16 %v6070, %v6070
    %v6093 = vpack.c.b16 %v6077, %v6077
    %v6095 = vshrl.u32 0, 16
    %v6097 = vrot.slane %v6095, 7
    %v6098 = vshll.u32 0, 16
    %v6100 = vor.u32 %v6097, %v6098
    %v6102 = vshrl.u32 %v6078, 16
    %v6104 = vrot.slane %v6102, 7
    %v6105 = vshll.u32 %v6078, 16
    %v6107 = vor.u32 %v6104, %v6105
    %v6109 = vshrl.u32 %v6079, 16
    %v6111 = vrot.slane %v6109, 7
    %v6112 = vshll.u32 %v6079, 16
    %v6114 = vor.u32 %v6111, %v6112
    %v6116 = vshrl.u32 %v6080, 16
    %v6118 = vrot.slane %v6116, 7
    %v6119 = vshll.u32 %v6080, 16
    %v6121 = vor.u32 %v6118, %v6119
    %v6123 = vshrl.u32 %v6081, 16
    %v6125 = vrot.slane %v6123, 7
    %v6126 = vshll.u32 %v6081, 16
    %v6128 = vor.u32 %v6125, %v6126
    %v6130 = vshrl.u32 %v6082, 16
    %v6132 = vrot.slane %v6130, 7
    %v6133 = vshll.u32 %v6082, 16
    %v6135 = vor.u32 %v6132, %v6133
    %v6137 = vshrl.u32 %v6083, 16
    %v6139 = vrot.slane %v6137, 7
    %v6140 = vshll.u32 %v6083, 16
    %v6142 = vor.u32 %v6139, %v6140
    %v6144 = vshrl.u32 %v6084, 16
    %v6146 = vrot.slane %v6144, 7
    %v6147 = vshll.u32 %v6084, 16
    %v6149 = vor.u32 %v6146, %v6147
    %v6151 = vshrl.u32 %v6085, 16
    %v6153 = vrot.slane %v6151, 7
    %v6154 = vshll.u32 %v6085, 16
    %v6156 = vor.u32 %v6153, %v6154
    %v6158 = vshrl.u32 %v6086, 16
    %v6160 = vrot.slane %v6158, 7
    %v6161 = vshll.u32 %v6086, 16
    %v6163 = vor.u32 %v6160, %v6161
    %v6165 = vshrl.u32 %v6087, 16
    %v6167 = vrot.slane %v6165, 7
    %v6168 = vshll.u32 %v6087, 16
    %v6170 = vor.u32 %v6167, %v6168
    %v6172 = vshrl.u32 %v6088, 16
    %v6174 = vrot.slane %v6172, 7
    %v6175 = vshll.u32 %v6088, 16
    %v6177 = vor.u32 %v6174, %v6175
    %v6179 = vshrl.u32 %v6089, 16
    %v6181 = vrot.slane %v6179, 7
    %v6182 = vshll.u32 %v6089, 16
    %v6184 = vor.u32 %v6181, %v6182
    %v6186 = vshrl.u32 %v6090, 16
    %v6188 = vrot.slane %v6186, 7
    %v6189 = vshll.u32 %v6090, 16
    %v6191 = vor.u32 %v6188, %v6189
    %v6193 = vshrl.u32 %v6091, 16
    %v6195 = vrot.slane %v6193, 7
    %v6196 = vshll.u32 %v6091, 16
    %v6198 = vor.u32 %v6195, %v6196
    %v6200 = vshrl.u32 %v6092, 16
    %v6202 = vrot.slane %v6200, 7
    %v6203 = vshll.u32 %v6092, 16
    %v6205 = vor.u32 %v6202, %v6203
    %v6207 = vshrl.u32 %v6093, 16
    %v6209 = vrot.slane %v6207, 7
    %v6210 = vshll.u32 %v6093, 16
    %v6212 = vor.u32 %v6209, %v6210
    %vm6230 = vcmask 1040384
    %vm6231 = vsmask.f32 256
    %vm6232 = vmand %vm6230, %vm6231
    %v6233 = vsel %vm6232, 0, %v6100
    %v6234 = vsel %vm6232, 0, %v6107
    %v6235 = vsel %vm6232, 0, %v6114
    %v6236 = vsel %vm6232, 0, %v6121
    %v6237 = vsel %vm6232, 0, %v6128
    %v6238 = vsel %vm6232, 0, %v6135
    %v6239 = vsel %vm6232, 0, %v6142
    %v6240 = vsel %vm6232, 0, %v6149
    %v6241 = vsel %vm6232, 0, %v6156
    %v6242 = vsel %vm6232, 0, %v6163
    %v6243 = vsel %vm6232, 0, %v6170
    %v6244 = vsel %vm6232, 0, %v6177
    %v6245 = vsel %vm6232, 0, %v6184
    %v6246 = vsel %vm6232, 0, %v6191
    %v6247 = vsel %vm6232, 0, %v6198
    %v6248 = vsel %vm6232, 0, %v6205
    %v6249 = vsel %vm6232, 0, %v6212
    %vm6250 = vcmask 1044480
    %vm6251 = vsmask.f32 4352
    %vm6252 = vmand %vm6250, %vm6251
    %v6253 = vsel %vm6252, %v6233, 0
    %v6254 = vsel %vm6252, %v6234, 0
    %v6255 = vsel %vm6252, %v6235, 0
    %v6256 = vsel %vm6252, %v6236, 0
    %v6257 = vsel %vm6252, %v6237, 0
    %v6258 = vsel %vm6252, %v6238, 0
    %v6259 = vsel %vm6252, %v6239, 0
    %v6260 = vsel %vm6252, %v6240, 0
    %v6261 = vsel %vm6252, %v6241, 0
    %v6262 = vsel %vm6252, %v6242, 0
    %v6263 = vsel %vm6252, %v6243, 0
    %v6264 = vsel %vm6252, %v6244, 0
    %v6265 = vsel %vm6252, %v6245, 0
    %v6266 = vsel %vm6252, %v6246, 0
    %v6267 = vsel %vm6252, %v6247, 0
    %v6268 = vsel %vm6252, %v6248, 0
    %v6269 = vsel %vm6252, %v6249, 0
    %v6270 = vld [vmem:[%s3] sm:$0xf]
    %v6271 = vld [vmem:[%s3 + $0x4] sm:$0xf]
    %v6272 = vld [vmem:[%s3 + $0x8] sm:$0xf]
    %v6273 = vld [vmem:[%s3 + $0xc] sm:$0xf]
    %v6289 = vunpack.c.l.b16 %v6253
    %v6290 = vunpack.c.h.b16 %v6253
    %v6291 = vunpack.c.l.b16 %v6254
    %v6292 = vunpack.c.h.b16 %v6254
    %v6293 = vunpack.c.l.b16 %v6255
    %v6294 = vunpack.c.h.b16 %v6255
    %v6295 = vunpack.c.l.b16 %v6256
    %v6296 = vunpack.c.h.b16 %v6256
    %v6297 = vunpack.c.l.b16 %v6257
    %v6298 = vunpack.c.h.b16 %v6257
    %v6299 = vunpack.c.l.b16 %v6258
    %v6300 = vunpack.c.h.b16 %v6258
    %v6301 = vunpack.c.l.b16 %v6259
    %v6302 = vunpack.c.h.b16 %v6259
    %v6303 = vunpack.c.l.b16 %v6260
    %v6304 = vunpack.c.h.b16 %v6260
    %v6305 = vunpack.c.l.b16 %v6262
    %v6306 = vunpack.c.h.b16 %v6262
    %v6307 = vunpack.c.l.b16 %v6263
    %v6308 = vunpack.c.h.b16 %v6263
    %v6309 = vunpack.c.l.b16 %v6264
    %v6310 = vunpack.c.h.b16 %v6264
    %v6311 = vunpack.c.l.b16 %v6265
    %v6312 = vunpack.c.h.b16 %v6265
    %v6313 = vunpack.c.l.b16 %v6266
    %v6314 = vunpack.c.h.b16 %v6266
    %v6315 = vunpack.c.l.b16 %v6267
    %v6316 = vunpack.c.h.b16 %v6267
    %v6317 = vunpack.c.l.b16 %v6268
    %v6318 = vunpack.c.h.b16 %v6268
    %v6319 = vpack.c.b16 %v6289, %v6289
    %v6320 = vpack.c.b16 %v6290, %v6290
    %v6321 = vpack.c.b16 %v6291, %v6291
    %v6322 = vpack.c.b16 %v6292, %v6292
    %v6323 = vpack.c.b16 %v6293, %v6293
    %v6324 = vpack.c.b16 %v6294, %v6294
    %v6325 = vpack.c.b16 %v6295, %v6295
    %v6326 = vpack.c.b16 %v6296, %v6296
    %v6327 = vpack.c.b16 %v6297, %v6297
    %v6328 = vpack.c.b16 %v6298, %v6298
    %v6329 = vpack.c.b16 %v6299, %v6299
    %v6330 = vpack.c.b16 %v6300, %v6300
    %v6331 = vpack.c.b16 %v6301, %v6301
    %v6332 = vpack.c.b16 %v6302, %v6302
    %v6333 = vpack.c.b16 %v6303, %v6303
    %v6334 = vpack.c.b16 %v6304, %v6304
    %v6335 = vpack.c.b16 %v6305, %v6305
    %v6336 = vpack.c.b16 %v6306, %v6306
    %v6337 = vpack.c.b16 %v6307, %v6307
    %v6338 = vpack.c.b16 %v6308, %v6308
    %v6339 = vpack.c.b16 %v6309, %v6309
    %v6340 = vpack.c.b16 %v6310, %v6310
    %v6341 = vpack.c.b16 %v6311, %v6311
    %v6342 = vpack.c.b16 %v6312, %v6312
    %v6343 = vpack.c.b16 %v6313, %v6313
    %v6344 = vpack.c.b16 %v6314, %v6314
    %v6345 = vpack.c.b16 %v6315, %v6315
    %v6346 = vpack.c.b16 %v6316, %v6316
    %v6347 = vpack.c.b16 %v6317, %v6317
    %v6348 = vpack.c.b16 %v6318, %v6318
    %vm6349 = vsmask.f32 3328
    %vm6350 = vsmask.f32 7440
    %vm6351 = vmor %vm6349, %vm6350
    %v6353 = vshrl.u32 %v6319, 16
    %v6355 = vrot.slane %v6353, 4
    %v6356 = vshll.u32 %v6319, 16
    %v6358 = vrot.slane %v6356, 5
    %v6359 = vor.u32 %v6355, %v6358
    %v6360 = vrot.slane %v6359, 4
    %v6362 = vshll.u32 %v6320, 16
    %v6364 = vrot.slane %v6362, 5
    %v6365 = vsel %vm6351, %v6360, %v6364
    %v6367 = vshrl.u32 %v6321, 16
    %v6369 = vrot.slane %v6367, 4
    %v6370 = vshll.u32 %v6321, 16
    %v6372 = vrot.slane %v6370, 5
    %v6373 = vor.u32 %v6369, %v6372
    %v6374 = vrot.slane %v6373, 4
    %v6376 = vshll.u32 %v6322, 16
    %v6378 = vrot.slane %v6376, 5
    %v6379 = vsel %vm6351, %v6374, %v6378
    %v6381 = vshrl.u32 %v6323, 16
    %v6383 = vrot.slane %v6381, 4
    %v6384 = vshll.u32 %v6323, 16
    %v6386 = vrot.slane %v6384, 5
    %v6387 = vor.u32 %v6383, %v6386
    %v6388 = vrot.slane %v6387, 4
    %v6390 = vshll.u32 %v6324, 16
    %v6392 = vrot.slane %v6390, 5
    %v6393 = vsel %vm6351, %v6388, %v6392
    %v6395 = vshrl.u32 %v6325, 16
    %v6397 = vrot.slane %v6395, 4
    %v6398 = vshll.u32 %v6325, 16
    %v6400 = vrot.slane %v6398, 5
    %v6401 = vor.u32 %v6397, %v6400
    %v6402 = vrot.slane %v6401, 4
    %v6404 = vshll.u32 %v6326, 16
    %v6406 = vrot.slane %v6404, 5
    %v6407 = vsel %vm6351, %v6402, %v6406
    %v6409 = vshrl.u32 %v6327, 16
    %v6411 = vrot.slane %v6409, 4
    %v6412 = vshll.u32 %v6327, 16
    %v6414 = vrot.slane %v6412, 5
    %v6415 = vor.u32 %v6411, %v6414
    %v6416 = vrot.slane %v6415, 4
    %v6418 = vshll.u32 %v6328, 16
    %v6420 = vrot.slane %v6418, 5
    %v6421 = vsel %vm6351, %v6416, %v6420
    %v6423 = vshrl.u32 %v6329, 16
    %v6425 = vrot.slane %v6423, 4
    %v6426 = vshll.u32 %v6329, 16
    %v6428 = vrot.slane %v6426, 5
    %v6429 = vor.u32 %v6425, %v6428
    %v6430 = vrot.slane %v6429, 4
    %v6432 = vshll.u32 %v6330, 16
    %v6434 = vrot.slane %v6432, 5
    %v6435 = vsel %vm6351, %v6430, %v6434
    %v6437 = vshrl.u32 %v6331, 16
    %v6439 = vrot.slane %v6437, 4
    %v6440 = vshll.u32 %v6331, 16
    %v6442 = vrot.slane %v6440, 5
    %v6443 = vor.u32 %v6439, %v6442
    %v6444 = vrot.slane %v6443, 4
    %v6446 = vshll.u32 %v6332, 16
    %v6448 = vrot.slane %v6446, 5
    %v6449 = vsel %vm6351, %v6444, %v6448
    %v6451 = vshrl.u32 %v6333, 16
    %v6453 = vrot.slane %v6451, 4
    %v6454 = vshll.u32 %v6333, 16
    %v6456 = vrot.slane %v6454, 5
    %v6457 = vor.u32 %v6453, %v6456
    %v6458 = vrot.slane %v6457, 4
    %v6460 = vshll.u32 %v6334, 16
    %v6462 = vrot.slane %v6460, 5
    %v6463 = vsel %vm6351, %v6458, %v6462
    %v6465 = vshrl.u32 %v6335, 16
    %v6467 = vrot.slane %v6465, 4
    %v6468 = vshll.u32 %v6335, 16
    %v6470 = vrot.slane %v6468, 5
    %v6471 = vor.u32 %v6467, %v6470
    %v6472 = vrot.slane %v6471, 4
    %v6474 = vshll.u32 %v6336, 16
    %v6476 = vrot.slane %v6474, 5
    %v6477 = vsel %vm6351, %v6472, %v6476
    %v6479 = vshrl.u32 %v6337, 16
    %v6481 = vrot.slane %v6479, 4
    %v6482 = vshll.u32 %v6337, 16
    %v6484 = vrot.slane %v6482, 5
    %v6485 = vor.u32 %v6481, %v6484
    %v6486 = vrot.slane %v6485, 4
    %v6488 = vshll.u32 %v6338, 16
    %v6490 = vrot.slane %v6488, 5
    %v6491 = vsel %vm6351, %v6486, %v6490
    %v6493 = vshrl.u32 %v6339, 16
    %v6495 = vrot.slane %v6493, 4
    %v6496 = vshll.u32 %v6339, 16
    %v6498 = vrot.slane %v6496, 5
    %v6499 = vor.u32 %v6495, %v6498
    %v6500 = vrot.slane %v6499, 4
    %v6502 = vshll.u32 %v6340, 16
    %v6504 = vrot.slane %v6502, 5
    %v6505 = vsel %vm6351, %v6500, %v6504
    %v6507 = vshrl.u32 %v6341, 16
    %v6509 = vrot.slane %v6507, 4
    %v6510 = vshll.u32 %v6341, 16
    %v6512 = vrot.slane %v6510, 5
    %v6513 = vor.u32 %v6509, %v6512
    %v6514 = vrot.slane %v6513, 4
    %v6516 = vshll.u32 %v6342, 16
    %v6518 = vrot.slane %v6516, 5
    %v6519 = vsel %vm6351, %v6514, %v6518
    %v6521 = vshrl.u32 %v6343, 16
    %v6523 = vrot.slane %v6521, 4
    %v6524 = vshll.u32 %v6343, 16
    %v6526 = vrot.slane %v6524, 5
    %v6527 = vor.u32 %v6523, %v6526
    %v6528 = vrot.slane %v6527, 4
    %v6530 = vshll.u32 %v6344, 16
    %v6532 = vrot.slane %v6530, 5
    %v6533 = vsel %vm6351, %v6528, %v6532
    %v6535 = vshrl.u32 %v6345, 16
    %v6537 = vrot.slane %v6535, 4
    %v6538 = vshll.u32 %v6345, 16
    %v6540 = vrot.slane %v6538, 5
    %v6541 = vor.u32 %v6537, %v6540
    %v6542 = vrot.slane %v6541, 4
    %v6544 = vshll.u32 %v6346, 16
    %v6546 = vrot.slane %v6544, 5
    %v6547 = vsel %vm6351, %v6542, %v6546
    %v6549 = vshrl.u32 %v6347, 16
    %v6551 = vrot.slane %v6549, 4
    %v6552 = vshll.u32 %v6347, 16
    %v6554 = vrot.slane %v6552, 5
    %v6555 = vor.u32 %v6551, %v6554
    %v6556 = vrot.slane %v6555, 4
    %v6558 = vshll.u32 %v6348, 16
    %v6560 = vrot.slane %v6558, 5
    %v6561 = vsel %vm6351, %v6556, %v6560
    %v6562 = vld [vmem:[%s3 + $0x10] sm:$0xf]
    %v6563 = vld [vmem:[%s3 + $0x14] sm:$0xf]
    %v6564 = vld [vmem:[%s3 + $0x18] sm:$0xf]
    %v6565 = vld [vmem:[%s3 + $0x1c] sm:$0xf]
    %v6566 = vunpack.c.l.b16 %v6365
    %v6567 = vunpack.c.l.b16 %v6379
    %v6568 = vunpack.c.l.b16 %v6393
    %v6569 = vunpack.c.l.b16 %v6407
    %v6570 = vunpack.c.l.b16 %v6421
    %v6571 = vunpack.c.l.b16 %v6435
    %v6572 = vunpack.c.l.b16 %v6449
    %v6573 = vunpack.c.l.b16 %v6463
    %v6574 = vunpack.c.l.b16 %v6477
    %v6575 = vunpack.c.l.b16 %v6491
    %v6576 = vunpack.c.l.b16 %v6505
    %v6577 = vunpack.c.l.b16 %v6519
    %v6578 = vunpack.c.l.b16 %v6533
    %v6579 = vunpack.c.l.b16 %v6547
    %v6580 = vunpack.c.l.b16 %v6561
    %v6581 = vpack.c.b16 %v6567, %v6566
    %v6582 = vpack.c.b16 %v6569, %v6568
    %v6583 = vpack.c.b16 %v6571, %v6570
    %v6584 = vpack.c.b16 %v6573, %v6572
    %v6585 = vpack.c.b16 %v6574, %v6566
    %v6586 = vpack.c.b16 %v6576, %v6575
    %v6587 = vpack.c.b16 %v6578, %v6577
    %v6588 = vpack.c.b16 %v6580, %v6579
    %v6593 = vunpack.c.l.b16 %v6562
    %v6594 = vunpack.c.l.b16 %v6563
    %v6595 = vunpack.c.l.b16 %v6564
    %v6596 = vunpack.c.l.b16 %v6565
    %v6597 = vpack.c.b16 %v6594, %v6593
    %v6598 = vpack.c.b16 %v6596, %v6595
    %v6602 = vsel %vm5062, %v6581, 0
    %v6605 = vsel %vm5062, %v6582, 0
    %v6608 = vsel %vm5062, %v6583, 0
    %v6611 = vsel %vm5062, %v6584, 0
    %v6614 = vsel %vm5062, %v6585, 0
    %v6617 = vsel %vm5062, %v6586, 0
    %v6620 = vsel %vm5062, %v6587, 0
    %v6623 = vsel %vm5062, %v6588, 0
    %6625 = vmatpush.bf16.msra.mxu0 0
    %6626 = vmatpush.bf16.msra.mxu0 0
    %6627 = vmatpush.bf16.msra.mxu0 0
    %6628 = vmatpush.bf16.msra.mxu0 0
    %6629 = vmatpush.bf16.msra.mxu0 0
    %6630 = vmatpush.bf16.msra.mxu0 0
    %6631 = vmatpush.bf16.msra.mxu0 %v6598
    %6632 = vmatpush.bf16.msra.mxu0 %v6597
    %6633 = vmatmul.bf16.gmra.mxu0 %v6602
    %v6634 = vpop.f32.mrf.mxu0
    %v6635 = vadd.f32 0.0, %v6634
    %v6636 = vpop.f32.mrf.mxu0
    %v6637 = vadd.f32 0.0, %v6636
    %6638 = vmatmul.bf16.gmra.mxu0 %v6605
    %v6639 = vpop.f32.mrf.mxu0
    %v6640 = vadd.f32 0.0, %v6639
    %v6641 = vpop.f32.mrf.mxu0
    %v6642 = vadd.f32 0.0, %v6641
    %6643 = vmatmul.bf16.gmra.mxu0 %v6608
    %v6644 = vpop.f32.mrf.mxu0
    %v6645 = vadd.f32 0.0, %v6644
    %v6646 = vpop.f32.mrf.mxu0
    %v6647 = vadd.f32 0.0, %v6646
    %6648 = vmatmul.bf16.gmra.mxu0 %v6611
    %v6649 = vpop.f32.mrf.mxu0
    %v6650 = vadd.f32 0.0, %v6649
    %v6651 = vpop.f32.mrf.mxu0
    %v6652 = vadd.f32 0.0, %v6651
    %6653 = vmatmul.bf16.gmra.mxu0 %v6614
    %v6654 = vpop.f32.mrf.mxu0
    %v6655 = vadd.f32 0.0, %v6654
    %v6656 = vpop.f32.mrf.mxu0
    %v6657 = vadd.f32 0.0, %v6656
    %6658 = vmatmul.bf16.gmra.mxu0 %v6617
    %v6659 = vpop.f32.mrf.mxu0
    %v6660 = vadd.f32 0.0, %v6659
    %v6661 = vpop.f32.mrf.mxu0
    %v6662 = vadd.f32 0.0, %v6661
    %6663 = vmatmul.bf16.gmra.mxu0 %v6620
    %v6664 = vpop.f32.mrf.mxu0
    %v6665 = vadd.f32 0.0, %v6664
    %v6666 = vpop.f32.mrf.mxu0
    %v6667 = vadd.f32 0.0, %v6666
    %6668 = vmatmul.bf16.gmra.mxu0 %v6623
    %v6669 = vpop.f32.mrf.mxu0
    %v6670 = vadd.f32 0.0, %v6669
    %v6671 = vpop.f32.mrf.mxu0
    %v6672 = vadd.f32 0.0, %v6671
    %6673 = vdwg.mxu0
    %v6674 = vpack.c.b16 %v6291, %v6289
    %v6675 = vpack.c.b16 %v6295, %v6293
    %v6676 = vpack.c.b16 %v6299, %v6297
    %v6677 = vpack.c.b16 %v6303, %v6301
    %v6678 = vpack.c.b16 %v6305, %v6289
    %v6679 = vpack.c.b16 %v6309, %v6307
    %v6680 = vpack.c.b16 %v6313, %v6311
    %v6681 = vpack.c.b16 %v6317, %v6315
    %v6686 = vunpack.c.l.b16 %v6270
    %v6687 = vunpack.c.l.b16 %v6271
    %v6688 = vunpack.c.l.b16 %v6272
    %v6689 = vunpack.c.l.b16 %v6273
    %v6690 = vpack.c.b16 %v6687, %v6686
    %v6691 = vpack.c.b16 %v6689, %v6688
    %v6695 = vsel %vm5062, %v6674, 0
    %v6698 = vsel %vm5062, %v6675, 0
    %v6701 = vsel %vm5062, %v6676, 0
    %v6704 = vsel %vm5062, %v6677, 0
    %v6707 = vsel %vm5062, %v6678, 0
    %v6710 = vsel %vm5062, %v6679, 0
    %v6713 = vsel %vm5062, %v6680, 0
    %v6716 = vsel %vm5062, %v6681, 0
    %6718 = vmatpush.bf16.msra.mxu0 0
    %6719 = vmatpush.bf16.msra.mxu0 0
    %6720 = vmatpush.bf16.msra.mxu0 0
    %6721 = vmatpush.bf16.msra.mxu0 0
    %6722 = vmatpush.bf16.msra.mxu0 0
    %6723 = vmatpush.bf16.msra.mxu0 0
    %6724 = vmatpush.bf16.msra.mxu0 %v6691
    %6725 = vmatpush.bf16.msra.mxu0 %v6690
    %6726 = vmatmul.bf16.gmra.mxu0 %v6695
    %v6727 = vpop.f32.mrf.mxu0
    %v6728 = vadd.f32 %v6635, %v6727
    %v6729 = vpop.f32.mrf.mxu0
    %v6730 = vadd.f32 %v6637, %v6729
    %6731 = vmatmul.bf16.gmra.mxu0 %v6698
    %v6732 = vpop.f32.mrf.mxu0
    %v6733 = vadd.f32 %v6640, %v6732
    %v6734 = vpop.f32.mrf.mxu0
    %v6735 = vadd.f32 %v6642, %v6734
    %6736 = vmatmul.bf16.gmra.mxu0 %v6701
    %v6737 = vpop.f32.mrf.mxu0
    %v6738 = vadd.f32 %v6645, %v6737
    %v6739 = vpop.f32.mrf.mxu0
    %v6740 = vadd.f32 %v6647, %v6739
    %6741 = vmatmul.bf16.gmra.mxu0 %v6704
    %v6742 = vpop.f32.mrf.mxu0
    %v6743 = vadd.f32 %v6650, %v6742
    %v6744 = vpop.f32.mrf.mxu0
    %v6745 = vadd.f32 %v6652, %v6744
    %6746 = vmatmul.bf16.gmra.mxu0 %v6707
    %v6747 = vpop.f32.mrf.mxu0
    %v6748 = vadd.f32 %v6655, %v6747
    %v6749 = vpop.f32.mrf.mxu0
    %v6750 = vadd.f32 %v6657, %v6749
    %6751 = vmatmul.bf16.gmra.mxu0 %v6710
    %v6752 = vpop.f32.mrf.mxu0
    %v6753 = vadd.f32 %v6660, %v6752
    %v6754 = vpop.f32.mrf.mxu0
    %v6755 = vadd.f32 %v6662, %v6754
    %6756 = vmatmul.bf16.gmra.mxu0 %v6713
    %v6757 = vpop.f32.mrf.mxu0
    %v6758 = vadd.f32 %v6665, %v6757
    %v6759 = vpop.f32.mrf.mxu0
    %v6760 = vadd.f32 %v6667, %v6759
    %6761 = vmatmul.bf16.gmra.mxu0 %v6716
    %v6762 = vpop.f32.mrf.mxu0
    %v6763 = vadd.f32 %v6670, %v6762
    %v6764 = vpop.f32.mrf.mxu0
    %v6765 = vadd.f32 %v6672, %v6764
    %6766 = vdwg.mxu0
    %vm6767 = vcmask 1042432
    %vm6768 = vcmask 1046532
    %vm6769 = vmor %vm6767, %vm6768
    %v6770 = vrot.slane %v6319, 5
    %v6771 = vrot.slane %v6770, 4
    %v6772 = vrot.slane %v6320, 5
    %v6773 = vsel %vm6769, %v6771, %v6772
    %v6774 = vrot.slane %v6321, 5
    %v6775 = vrot.slane %v6774, 4
    %v6776 = vrot.slane %v6322, 5
    %v6777 = vsel %vm6769, %v6775, %v6776
    %v6778 = vrot.slane %v6323, 5
    %v6779 = vrot.slane %v6778, 4
    %v6780 = vrot.slane %v6324, 5
    %v6781 = vsel %vm6769, %v6779, %v6780
    %v6782 = vrot.slane %v6325, 5
    %v6783 = vrot.slane %v6782, 4
    %v6784 = vrot.slane %v6326, 5
    %v6785 = vsel %vm6769, %v6783, %v6784
    %v6786 = vrot.slane %v6327, 5
    %v6787 = vrot.slane %v6786, 4
    %v6788 = vrot.slane %v6328, 5
    %v6789 = vsel %vm6769, %v6787, %v6788
    %v6790 = vrot.slane %v6329, 5
    %v6791 = vrot.slane %v6790, 4
    %v6792 = vrot.slane %v6330, 5
    %v6793 = vsel %vm6769, %v6791, %v6792
    %v6794 = vrot.slane %v6331, 5
    %v6795 = vrot.slane %v6794, 4
    %v6796 = vrot.slane %v6332, 5
    %v6797 = vsel %vm6769, %v6795, %v6796
    %v6798 = vrot.slane %v6333, 5
    %v6799 = vrot.slane %v6798, 4
    %v6800 = vrot.slane %v6334, 5
    %v6801 = vsel %vm6769, %v6799, %v6800
    %v6802 = vrot.slane %v6335, 5
    %v6803 = vrot.slane %v6802, 4
    %v6804 = vrot.slane %v6336, 5
    %v6805 = vsel %vm6769, %v6803, %v6804
    %v6806 = vrot.slane %v6337, 5
    %v6807 = vrot.slane %v6806, 4
    %v6808 = vrot.slane %v6338, 5
    %v6809 = vsel %vm6769, %v6807, %v6808
    %v6810 = vrot.slane %v6339, 5
    %v6811 = vrot.slane %v6810, 4
    %v6812 = vrot.slane %v6340, 5
    %v6813 = vsel %vm6769, %v6811, %v6812
    %v6814 = vrot.slane %v6341, 5
    %v6815 = vrot.slane %v6814, 4
    %v6816 = vrot.slane %v6342, 5
    %v6817 = vsel %vm6769, %v6815, %v6816
    %v6818 = vrot.slane %v6343, 5
    %v6819 = vrot.slane %v6818, 4
    %v6820 = vrot.slane %v6344, 5
    %v6821 = vsel %vm6769, %v6819, %v6820
    %v6822 = vrot.slane %v6345, 5
    %v6823 = vrot.slane %v6822, 4
    %v6824 = vrot.slane %v6346, 5
    %v6825 = vsel %vm6769, %v6823, %v6824
    %v6826 = vrot.slane %v6347, 5
    %v6827 = vrot.slane %v6826, 4
    %v6828 = vrot.slane %v6348, 5
    %v6829 = vsel %vm6769, %v6827, %v6828
    %v6830 = vld [vmem:[%s3 + $0x20] sm:$0xf]
    %v6831 = vld [vmem:[%s3 + $0x24] sm:$0xf]
    %v6832 = vld [vmem:[%s3 + $0x28] sm:$0xf]
    %v6833 = vld [vmem:[%s3 + $0x2c] sm:$0xf]
    %v6834 = vunpack.c.l.b16 %v6773
    %v6835 = vunpack.c.l.b16 %v6777
    %v6836 = vunpack.c.l.b16 %v6781
    %v6837 = vunpack.c.l.b16 %v6785
    %v6838 = vunpack.c.l.b16 %v6789
    %v6839 = vunpack.c.l.b16 %v6793
    %v6840 = vunpack.c.l.b16 %v6797
    %v6841 = vunpack.c.l.b16 %v6801
    %v6842 = vunpack.c.l.b16 %v6805
    %v6843 = vunpack.c.l.b16 %v6809
    %v6844 = vunpack.c.l.b16 %v6813
    %v6845 = vunpack.c.l.b16 %v6817
    %v6846 = vunpack.c.l.b16 %v6821
    %v6847 = vunpack.c.l.b16 %v6825
    %v6848 = vunpack.c.l.b16 %v6829
    %v6849 = vpack.c.b16 %v6835, %v6834
    %v6850 = vpack.c.b16 %v6837, %v6836
    %v6851 = vpack.c.b16 %v6839, %v6838
    %v6852 = vpack.c.b16 %v6841, %v6840
    %v6853 = vpack.c.b16 %v6842, %v6834
    %v6854 = vpack.c.b16 %v6844, %v6843
    %v6855 = vpack.c.b16 %v6846, %v6845
    %v6856 = vpack.c.b16 %v6848, %v6847
    %v6861 = vunpack.c.l.b16 %v6830
    %v6862 = vunpack.c.l.b16 %v6831
    %v6863 = vunpack.c.l.b16 %v6832
    %v6864 = vunpack.c.l.b16 %v6833
    %v6865 = vpack.c.b16 %v6862, %v6861
    %v6866 = vpack.c.b16 %v6864, %v6863
    %v6870 = vsel %vm5062, %v6849, 0
    %v6873 = vsel %vm5062, %v6850, 0
    %v6876 = vsel %vm5062, %v6851, 0
    %v6879 = vsel %vm5062, %v6852, 0
    %v6882 = vsel %vm5062, %v6853, 0
    %v6885 = vsel %vm5062, %v6854, 0
    %v6888 = vsel %vm5062, %v6855, 0
    %v6891 = vsel %vm5062, %v6856, 0
    %6893 = vmatpush.bf16.msra.mxu0 0
    %6894 = vmatpush.bf16.msra.mxu0 0
    %6895 = vmatpush.bf16.msra.mxu0 0
    %6896 = vmatpush.bf16.msra.mxu0 0
    %6897 = vmatpush.bf16.msra.mxu0 0
    %6898 = vmatpush.bf16.msra.mxu0 0
    %6899 = vmatpush.bf16.msra.mxu0 %v6866
    %6900 = vmatpush.bf16.msra.mxu0 %v6865
    %6901 = vmatmul.bf16.gmra.mxu0 %v6870
    %v6902 = vpop.f32.mrf.mxu0
    %v6903 = vadd.f32 0.0, %v6902
    %v6904 = vpop.f32.mrf.mxu0
    %v6905 = vadd.f32 0.0, %v6904
    %6906 = vmatmul.bf16.gmra.mxu0 %v6873
    %v6907 = vpop.f32.mrf.mxu0
    %v6908 = vadd.f32 0.0, %v6907
    %v6909 = vpop.f32.mrf.mxu0
    %v6910 = vadd.f32 0.0, %v6909
    %6911 = vmatmul.bf16.gmra.mxu0 %v6876
    %v6912 = vpop.f32.mrf.mxu0
    %v6913 = vadd.f32 0.0, %v6912
    %v6914 = vpop.f32.mrf.mxu0
    %v6915 = vadd.f32 0.0, %v6914
    %6916 = vmatmul.bf16.gmra.mxu0 %v6879
    %v6917 = vpop.f32.mrf.mxu0
    %v6918 = vadd.f32 0.0, %v6917
    %v6919 = vpop.f32.mrf.mxu0
    %v6920 = vadd.f32 0.0, %v6919
    %6921 = vmatmul.bf16.gmra.mxu0 %v6882
    %v6922 = vpop.f32.mrf.mxu0
    %v6923 = vadd.f32 0.0, %v6922
    %v6924 = vpop.f32.mrf.mxu0
    %v6925 = vadd.f32 0.0, %v6924
    %6926 = vmatmul.bf16.gmra.mxu0 %v6885
    %v6927 = vpop.f32.mrf.mxu0
    %v6928 = vadd.f32 0.0, %v6927
    %v6929 = vpop.f32.mrf.mxu0
    %v6930 = vadd.f32 0.0, %v6929
    %6931 = vmatmul.bf16.gmra.mxu0 %v6888
    %v6932 = vpop.f32.mrf.mxu0
    %v6933 = vadd.f32 0.0, %v6932
    %v6934 = vpop.f32.mrf.mxu0
    %v6935 = vadd.f32 0.0, %v6934
    %6936 = vmatmul.bf16.gmra.mxu0 %v6891
    %v6937 = vpop.f32.mrf.mxu0
    %v6938 = vadd.f32 0.0, %v6937
    %v6939 = vpop.f32.mrf.mxu0
    %v6940 = vadd.f32 0.0, %v6939
    %6941 = vdwg.mxu0
    %v6942 = vadd.f32 %v6728, %v6903
    %v6943 = vadd.f32 %v6730, %v6905
    %v6944 = vadd.f32 %v6733, %v6908
    %v6945 = vadd.f32 %v6735, %v6910
    %v6946 = vadd.f32 %v6738, %v6913
    %v6947 = vadd.f32 %v6740, %v6915
    %v6948 = vadd.f32 %v6743, %v6918
    %v6949 = vadd.f32 %v6745, %v6920
    %v6950 = vadd.f32 %v6748, %v6923
    %v6951 = vadd.f32 %v6750, %v6925
    %v6952 = vadd.f32 %v6753, %v6928
    %v6953 = vadd.f32 %v6755, %v6930
    %v6954 = vadd.f32 %v6758, %v6933
    %v6955 = vadd.f32 %v6760, %v6935
    %v6956 = vadd.f32 %v6763, %v6938
    %v6957 = vadd.f32 %v6765, %v6940
    %v6958 = vld [vmem:[%s3 + $0x30] sm:$0xf]
    %v6959 = vld [vmem:[%s3 + $0x34] sm:$0xf]
    %v6960 = vld [vmem:[%s3 + $0x38] sm:$0xf]
    %v6961 = vld [vmem:[%s3 + $0x3c] sm:$0xf]
    %v6964 = vunpack.c.l.b16 %v6261
    %v6965 = vunpack.c.l.b16 %v6269
    %v6966 = vpack.c.b16 %v6293, %v6291
    %v6967 = vpack.c.b16 %v6297, %v6295
    %v6968 = vpack.c.b16 %v6301, %v6299
    %v6969 = vpack.c.b16 %v6964, %v6303
    %v6970 = vpack.c.b16 %v6307, %v6305
    %v6971 = vpack.c.b16 %v6311, %v6309
    %v6972 = vpack.c.b16 %v6315, %v6313
    %v6973 = vpack.c.b16 %v6965, %v6317
    %v6978 = vunpack.c.l.b16 %v6958
    %v6979 = vunpack.c.l.b16 %v6959
    %v6980 = vunpack.c.l.b16 %v6960
    %v6981 = vunpack.c.l.b16 %v6961
    %v6982 = vpack.c.b16 %v6979, %v6978
    %v6983 = vpack.c.b16 %v6981, %v6980
    %v6987 = vsel %vm5062, %v6966, 0
    %v6990 = vsel %vm5062, %v6967, 0
    %v6993 = vsel %vm5062, %v6968, 0
    %v6996 = vsel %vm5062, %v6969, 0
    %v6999 = vsel %vm5062, %v6970, 0
    %v7002 = vsel %vm5062, %v6971, 0
    %v7005 = vsel %vm5062, %v6972, 0
    %v7008 = vsel %vm5062, %v6973, 0
    %7010 = vmatpush.bf16.msra.mxu0 0
    %7011 = vmatpush.bf16.msra.mxu0 0
    %7012 = vmatpush.bf16.msra.mxu0 0
    %7013 = vmatpush.bf16.msra.mxu0 0
    %7014 = vmatpush.bf16.msra.mxu0 0
    %7015 = vmatpush.bf16.msra.mxu0 0
    %7016 = vmatpush.bf16.msra.mxu0 %v6983
    %7017 = vmatpush.bf16.msra.mxu0 %v6982
    %7018 = vmatmul.bf16.gmra.mxu0 %v6987
    %v7019 = vpop.f32.mrf.mxu0
    %v7020 = vadd.f32 0.0, %v7019
    %v7021 = vpop.f32.mrf.mxu0
    %v7022 = vadd.f32 0.0, %v7021
    %7023 = vmatmul.bf16.gmra.mxu0 %v6990
    %v7024 = vpop.f32.mrf.mxu0
    %v7025 = vadd.f32 0.0, %v7024
    %v7026 = vpop.f32.mrf.mxu0
    %v7027 = vadd.f32 0.0, %v7026
    %7028 = vmatmul.bf16.gmra.mxu0 %v6993
    %v7029 = vpop.f32.mrf.mxu0
    %v7030 = vadd.f32 0.0, %v7029
    %v7031 = vpop.f32.mrf.mxu0
    %v7032 = vadd.f32 0.0, %v7031
    %7033 = vmatmul.bf16.gmra.mxu0 %v6996
    %v7034 = vpop.f32.mrf.mxu0
    %v7035 = vadd.f32 0.0, %v7034
    %v7036 = vpop.f32.mrf.mxu0
    %v7037 = vadd.f32 0.0, %v7036
    %7038 = vmatmul.bf16.gmra.mxu0 %v6999
    %v7039 = vpop.f32.mrf.mxu0
    %v7040 = vadd.f32 0.0, %v7039
    %v7041 = vpop.f32.mrf.mxu0
    %v7042 = vadd.f32 0.0, %v7041
    %7043 = vmatmul.bf16.gmra.mxu0 %v7002
    %v7044 = vpop.f32.mrf.mxu0
    %v7045 = vadd.f32 0.0, %v7044
    %v7046 = vpop.f32.mrf.mxu0
    %v7047 = vadd.f32 0.0, %v7046
    %7048 = vmatmul.bf16.gmra.mxu0 %v7005
    %v7049 = vpop.f32.mrf.mxu0
    %v7050 = vadd.f32 0.0, %v7049
    %v7051 = vpop.f32.mrf.mxu0
    %v7052 = vadd.f32 0.0, %v7051
    %7053 = vmatmul.bf16.gmra.mxu0 %v7008
    %v7054 = vpop.f32.mrf.mxu0
    %v7055 = vadd.f32 0.0, %v7054
    %v7056 = vpop.f32.mrf.mxu0
    %v7057 = vadd.f32 0.0, %v7056
    %7058 = vdwg.mxu0
    %v7059 = vadd.f32 %v6942, %v7020
    %v7060 = vadd.f32 %v6943, %v7022
    %v7061 = vadd.f32 %v6944, %v7025
    %v7062 = vadd.f32 %v6945, %v7027
    %v7063 = vadd.f32 %v6946, %v7030
    %v7064 = vadd.f32 %v6947, %v7032
    %v7065 = vadd.f32 %v6948, %v7035
    %v7066 = vadd.f32 %v6949, %v7037
    %v7067 = vadd.f32 %v6950, %v7040
    %v7068 = vadd.f32 %v6951, %v7042
    %v7069 = vadd.f32 %v6952, %v7045
    %v7070 = vadd.f32 %v6953, %v7047
    %v7071 = vadd.f32 %v6954, %v7050
    %v7072 = vadd.f32 %v6955, %v7052
    %v7073 = vadd.f32 %v6956, %v7055
    %v7074 = vadd.f32 %v6957, %v7057
    %v7075 = vunpack.c.h.b16 %v6261
    %v7076 = vunpack.c.h.b16 %v6269
    %v7077 = vpack.c.b16 %v6964, %v6964
    %v7078 = vpack.c.b16 %v7075, %v7075
    %v7079 = vpack.c.b16 %v6965, %v6965
    %v7080 = vpack.c.b16 %v7076, %v7076
    %v7082 = vshrl.u32 %v7077, 16
    %v7084 = vrot.slane %v7082, 4
    %v7085 = vshll.u32 %v7077, 16
    %v7087 = vrot.slane %v7085, 5
    %v7088 = vor.u32 %v7084, %v7087
    %v7089 = vrot.slane %v7088, 4
    %v7091 = vshll.u32 %v7078, 16
    %v7093 = vrot.slane %v7091, 5
    %v7094 = vsel %vm6351, %v7089, %v7093
    %v7096 = vshrl.u32 %v7079, 16
    %v7098 = vrot.slane %v7096, 4
    %v7099 = vshll.u32 %v7079, 16
    %v7101 = vrot.slane %v7099, 5
    %v7102 = vor.u32 %v7098, %v7101
    %v7103 = vrot.slane %v7102, 4
    %v7105 = vshll.u32 %v7080, 16
    %v7107 = vrot.slane %v7105, 5
    %v7108 = vsel %vm6351, %v7103, %v7107
    %v7109 = vld [vmem:[%s3 + $0x40] sm:$0xf]
    %v7110 = vld [vmem:[%s3 + $0x44] sm:$0xf]
    %v7111 = vld [vmem:[%s3 + $0x48] sm:$0xf]
    %v7112 = vld [vmem:[%s3 + $0x4c] sm:$0xf]
    %v7113 = vunpack.c.l.b16 %v7094
    %v7114 = vunpack.c.l.b16 %v7108
    %v7115 = vpack.c.b16 %v6568, %v6567
    %v7116 = vpack.c.b16 %v6570, %v6569
    %v7117 = vpack.c.b16 %v6572, %v6571
    %v7118 = vpack.c.b16 %v7113, %v6573
    %v7119 = vpack.c.b16 %v6575, %v6574
    %v7120 = vpack.c.b16 %v6577, %v6576
    %v7121 = vpack.c.b16 %v6579, %v6578
    %v7122 = vpack.c.b16 %v7114, %v6580
    %v7127 = vunpack.c.l.b16 %v7109
    %v7128 = vunpack.c.l.b16 %v7110
    %v7129 = vunpack.c.l.b16 %v7111
    %v7130 = vunpack.c.l.b16 %v7112
    %v7131 = vpack.c.b16 %v7128, %v7127
    %v7132 = vpack.c.b16 %v7130, %v7129
    %v7136 = vsel %vm5062, %v7115, 0
    %v7139 = vsel %vm5062, %v7116, 0
    %v7142 = vsel %vm5062, %v7117, 0
    %v7145 = vsel %vm5062, %v7118, 0
    %v7148 = vsel %vm5062, %v7119, 0
    %v7151 = vsel %vm5062, %v7120, 0
    %v7154 = vsel %vm5062, %v7121, 0
    %v7157 = vsel %vm5062, %v7122, 0
    %7159 = vmatpush.bf16.msra.mxu0 0
    %7160 = vmatpush.bf16.msra.mxu0 0
    %7161 = vmatpush.bf16.msra.mxu0 0
    %7162 = vmatpush.bf16.msra.mxu0 0
    %7163 = vmatpush.bf16.msra.mxu0 0
    %7164 = vmatpush.bf16.msra.mxu0 0
    %7165 = vmatpush.bf16.msra.mxu0 %v7132
    %7166 = vmatpush.bf16.msra.mxu0 %v7131
    %7167 = vmatmul.bf16.gmra.mxu0 %v7136
    %v7168 = vpop.f32.mrf.mxu0
    %v7169 = vadd.f32 0.0, %v7168
    %v7170 = vpop.f32.mrf.mxu0
    %v7171 = vadd.f32 0.0, %v7170
    %7172 = vmatmul.bf16.gmra.mxu0 %v7139
    %v7173 = vpop.f32.mrf.mxu0
    %v7174 = vadd.f32 0.0, %v7173
    %v7175 = vpop.f32.mrf.mxu0
    %v7176 = vadd.f32 0.0, %v7175
    %7177 = vmatmul.bf16.gmra.mxu0 %v7142
    %v7178 = vpop.f32.mrf.mxu0
    %v7179 = vadd.f32 0.0, %v7178
    %v7180 = vpop.f32.mrf.mxu0
    %v7181 = vadd.f32 0.0, %v7180
    %7182 = vmatmul.bf16.gmra.mxu0 %v7145
    %v7183 = vpop.f32.mrf.mxu0
    %v7184 = vadd.f32 0.0, %v7183
    %v7185 = vpop.f32.mrf.mxu0
    %v7186 = vadd.f32 0.0, %v7185
    %7187 = vmatmul.bf16.gmra.mxu0 %v7148
    %v7188 = vpop.f32.mrf.mxu0
    %v7189 = vadd.f32 0.0, %v7188
    %v7190 = vpop.f32.mrf.mxu0
    %v7191 = vadd.f32 0.0, %v7190
    %7192 = vmatmul.bf16.gmra.mxu0 %v7151
    %v7193 = vpop.f32.mrf.mxu0
    %v7194 = vadd.f32 0.0, %v7193
    %v7195 = vpop.f32.mrf.mxu0
    %v7196 = vadd.f32 0.0, %v7195
    %7197 = vmatmul.bf16.gmra.mxu0 %v7154
    %v7198 = vpop.f32.mrf.mxu0
    %v7199 = vadd.f32 0.0, %v7198
    %v7200 = vpop.f32.mrf.mxu0
    %v7201 = vadd.f32 0.0, %v7200
    %7202 = vmatmul.bf16.gmra.mxu0 %v7157
    %v7203 = vpop.f32.mrf.mxu0
    %v7204 = vadd.f32 0.0, %v7203
    %v7205 = vpop.f32.mrf.mxu0
    %v7206 = vadd.f32 0.0, %v7205
    %7207 = vdwg.mxu0
    %v7208 = vadd.f32 %v7059, %v7169
    %v7209 = vadd.f32 %v7060, %v7171
    %v7210 = vadd.f32 %v7061, %v7174
    %v7211 = vadd.f32 %v7062, %v7176
    %v7212 = vadd.f32 %v7063, %v7179
    %v7213 = vadd.f32 %v7064, %v7181
    %v7214 = vadd.f32 %v7065, %v7184
    %v7215 = vadd.f32 %v7066, %v7186
    %v7216 = vadd.f32 %v7067, %v7189
    %v7217 = vadd.f32 %v7068, %v7191
    %v7218 = vadd.f32 %v7069, %v7194
    %v7219 = vadd.f32 %v7070, %v7196
    %v7220 = vadd.f32 %v7071, %v7199
    %v7221 = vadd.f32 %v7072, %v7201
    %v7222 = vadd.f32 %v7073, %v7204
    %v7223 = vadd.f32 %v7074, %v7206
    %v7224 = vrot.slane %v7077, 5
    %v7225 = vrot.slane %v7224, 4
    %v7226 = vrot.slane %v7078, 5
    %v7227 = vsel %vm6769, %v7225, %v7226
    %v7228 = vrot.slane %v7079, 5
    %v7229 = vrot.slane %v7228, 4
    %v7230 = vrot.slane %v7080, 5
    %v7231 = vsel %vm6769, %v7229, %v7230
    %v7232 = vld [vmem:[%s3 + $0x50] sm:$0xf]
    %v7233 = vld [vmem:[%s3 + $0x54] sm:$0xf]
    %v7234 = vld [vmem:[%s3 + $0x58] sm:$0xf]
    %v7235 = vld [vmem:[%s3 + $0x5c] sm:$0xf]
    %v7236 = vunpack.c.l.b16 %v7227
    %v7237 = vunpack.c.l.b16 %v7231
    %v7238 = vpack.c.b16 %v6836, %v6835
    %v7239 = vpack.c.b16 %v6838, %v6837
    %v7240 = vpack.c.b16 %v6840, %v6839
    %v7241 = vpack.c.b16 %v7236, %v6841
    %v7242 = vpack.c.b16 %v6843, %v6842
    %v7243 = vpack.c.b16 %v6845, %v6844
    %v7244 = vpack.c.b16 %v6847, %v6846
    %v7245 = vpack.c.b16 %v7237, %v6848
    %v7250 = vunpack.c.l.b16 %v7232
    %v7251 = vunpack.c.l.b16 %v7233
    %v7252 = vunpack.c.l.b16 %v7234
    %v7253 = vunpack.c.l.b16 %v7235
    %v7254 = vpack.c.b16 %v7251, %v7250
    %v7255 = vpack.c.b16 %v7253, %v7252
    %v7259 = vsel %vm5062, %v7238, 0
    %v7262 = vsel %vm5062, %v7239, 0
    %v7265 = vsel %vm5062, %v7240, 0
    %v7268 = vsel %vm5062, %v7241, 0
    %v7271 = vsel %vm5062, %v7242, 0
    %v7274 = vsel %vm5062, %v7243, 0
    %v7277 = vsel %vm5062, %v7244, 0
    %v7280 = vsel %vm5062, %v7245, 0
    %7282 = vmatpush.bf16.msra.mxu0 0
    %7283 = vmatpush.bf16.msra.mxu0 0
    %7284 = vmatpush.bf16.msra.mxu0 0
    %7285 = vmatpush.bf16.msra.mxu0 0
    %7286 = vmatpush.bf16.msra.mxu0 0
    %7287 = vmatpush.bf16.msra.mxu0 0
    %7288 = vmatpush.bf16.msra.mxu0 %v7255
    %7289 = vmatpush.bf16.msra.mxu0 %v7254
    %7290 = vmatmul.bf16.gmra.mxu0 %v7259
    %v7291 = vpop.f32.mrf.mxu0
    %v7292 = vadd.f32 0.0, %v7291
    %v7293 = vpop.f32.mrf.mxu0
    %v7294 = vadd.f32 0.0, %v7293
    %7295 = vmatmul.bf16.gmra.mxu0 %v7262
    %v7296 = vpop.f32.mrf.mxu0
    %v7297 = vadd.f32 0.0, %v7296
    %v7298 = vpop.f32.mrf.mxu0
    %v7299 = vadd.f32 0.0, %v7298
    %7300 = vmatmul.bf16.gmra.mxu0 %v7265
    %v7301 = vpop.f32.mrf.mxu0
    %v7302 = vadd.f32 0.0, %v7301
    %v7303 = vpop.f32.mrf.mxu0
    %v7304 = vadd.f32 0.0, %v7303
    %7305 = vmatmul.bf16.gmra.mxu0 %v7268
    %v7306 = vpop.f32.mrf.mxu0
    %v7307 = vadd.f32 0.0, %v7306
    %v7308 = vpop.f32.mrf.mxu0
    %v7309 = vadd.f32 0.0, %v7308
    %7310 = vmatmul.bf16.gmra.mxu0 %v7271
    %v7311 = vpop.f32.mrf.mxu0
    %v7312 = vadd.f32 0.0, %v7311
    %v7313 = vpop.f32.mrf.mxu0
    %v7314 = vadd.f32 0.0, %v7313
    %7315 = vmatmul.bf16.gmra.mxu0 %v7274
    %v7316 = vpop.f32.mrf.mxu0
    %v7317 = vadd.f32 0.0, %v7316
    %v7318 = vpop.f32.mrf.mxu0
    %v7319 = vadd.f32 0.0, %v7318
    %7320 = vmatmul.bf16.gmra.mxu0 %v7277
    %v7321 = vpop.f32.mrf.mxu0
    %v7322 = vadd.f32 0.0, %v7321
    %v7323 = vpop.f32.mrf.mxu0
    %v7324 = vadd.f32 0.0, %v7323
    %7325 = vmatmul.bf16.gmra.mxu0 %v7280
    %v7326 = vpop.f32.mrf.mxu0
    %v7327 = vadd.f32 0.0, %v7326
    %v7328 = vpop.f32.mrf.mxu0
    %v7329 = vadd.f32 0.0, %v7328
    %7330 = vdwg.mxu0
    %v7331 = vadd.f32 %v7208, %v7292
    %v7332 = vadd.f32 %v7209, %v7294
    %v7333 = vadd.f32 %v7210, %v7297
    %v7334 = vadd.f32 %v7211, %v7299
    %v7335 = vadd.f32 %v7212, %v7302
    %v7336 = vadd.f32 %v7213, %v7304
    %v7337 = vadd.f32 %v7214, %v7307
    %v7338 = vadd.f32 %v7215, %v7309
    %v7339 = vadd.f32 %v7216, %v7312
    %v7340 = vadd.f32 %v7217, %v7314
    %v7341 = vadd.f32 %v7218, %v7317
    %v7342 = vadd.f32 %v7219, %v7319
    %v7343 = vadd.f32 %v7220, %v7322
    %v7344 = vadd.f32 %v7221, %v7324
    %v7345 = vadd.f32 %v7222, %v7327
    %v7346 = vadd.f32 %v7223, %v7329
    %v7347 = vld [vmem:[%s3 + $0x60] sm:$0xf]
    %v7348 = vld [vmem:[%s3 + $0x64] sm:$0xf]
    %v7349 = vld [vmem:[%s3 + $0x68] sm:$0xf]
    %v7350 = vld [vmem:[%s3 + $0x6c] sm:$0xf]
    %v7351 = vpack.c.b16 %v6289, %v6964
    %v7352 = vpack.c.b16 %v6289, %v6965
    %v7357 = vunpack.c.l.b16 %v7347
    %v7358 = vunpack.c.l.b16 %v7348
    %v7359 = vunpack.c.l.b16 %v7349
    %v7360 = vunpack.c.l.b16 %v7350
    %v7361 = vpack.c.b16 %v7358, %v7357
    %v7362 = vpack.c.b16 %v7360, %v7359
    %v7366 = vsel %vm5062, %v7351, 0
    %v7369 = vsel %vm5062, %v7352, 0
    %7371 = vmatpush.bf16.msra.mxu0 0
    %7372 = vmatpush.bf16.msra.mxu0 0
    %7373 = vmatpush.bf16.msra.mxu0 0
    %7374 = vmatpush.bf16.msra.mxu0 0
    %7375 = vmatpush.bf16.msra.mxu0 0
    %7376 = vmatpush.bf16.msra.mxu0 0
    %7377 = vmatpush.bf16.msra.mxu0 %v7362
    %7378 = vmatpush.bf16.msra.mxu0 %v7361
    %7379 = vmatmul.bf16.gmra.mxu0 %v6698
    %v7380 = vpop.f32.mrf.mxu0
    %v7381 = vadd.f32 0.0, %v7380
    %v7382 = vpop.f32.mrf.mxu0
    %v7383 = vadd.f32 0.0, %v7382
    %7384 = vmatmul.bf16.gmra.mxu0 %v6701
    %v7385 = vpop.f32.mrf.mxu0
    %v7386 = vadd.f32 0.0, %v7385
    %v7387 = vpop.f32.mrf.mxu0
    %v7388 = vadd.f32 0.0, %v7387
    %7389 = vmatmul.bf16.gmra.mxu0 %v6704
    %v7390 = vpop.f32.mrf.mxu0
    %v7391 = vadd.f32 0.0, %v7390
    %v7392 = vpop.f32.mrf.mxu0
    %v7393 = vadd.f32 0.0, %v7392
    %7394 = vmatmul.bf16.gmra.mxu0 %v7366
    %v7395 = vpop.f32.mrf.mxu0
    %v7396 = vadd.f32 0.0, %v7395
    %v7397 = vpop.f32.mrf.mxu0
    %v7398 = vadd.f32 0.0, %v7397
    %7399 = vmatmul.bf16.gmra.mxu0 %v6710
    %v7400 = vpop.f32.mrf.mxu0
    %v7401 = vadd.f32 0.0, %v7400
    %v7402 = vpop.f32.mrf.mxu0
    %v7403 = vadd.f32 0.0, %v7402
    %7404 = vmatmul.bf16.gmra.mxu0 %v6713
    %v7405 = vpop.f32.mrf.mxu0
    %v7406 = vadd.f32 0.0, %v7405
    %v7407 = vpop.f32.mrf.mxu0
    %v7408 = vadd.f32 0.0, %v7407
    %7409 = vmatmul.bf16.gmra.mxu0 %v6716
    %v7410 = vpop.f32.mrf.mxu0
    %v7411 = vadd.f32 0.0, %v7410
    %v7412 = vpop.f32.mrf.mxu0
    %v7413 = vadd.f32 0.0, %v7412
    %7414 = vmatmul.bf16.gmra.mxu0 %v7369
    %v7415 = vpop.f32.mrf.mxu0
    %v7416 = vadd.f32 0.0, %v7415
    %v7417 = vpop.f32.mrf.mxu0
    %v7418 = vadd.f32 0.0, %v7417
    %7419 = vdwg.mxu0
    %v7420 = vadd.f32 %v7331, %v7381
    %v7421 = vadd.f32 %v7332, %v7383
    %v7422 = vadd.f32 %v7333, %v7386
    %v7423 = vadd.f32 %v7334, %v7388
    %v7424 = vadd.f32 %v7335, %v7391
    %v7425 = vadd.f32 %v7336, %v7393
    %v7426 = vadd.f32 %v7337, %v7396
    %v7427 = vadd.f32 %v7338, %v7398
    %v7428 = vadd.f32 %v7339, %v7401
    %v7429 = vadd.f32 %v7340, %v7403
    %v7430 = vadd.f32 %v7341, %v7406
    %v7431 = vadd.f32 %v7342, %v7408
    %v7432 = vadd.f32 %v7343, %v7411
    %v7433 = vadd.f32 %v7344, %v7413
    %v7434 = vadd.f32 %v7345, %v7416
    %v7435 = vadd.f32 %v7346, %v7418
    %v7436 = vld [vmem:[%s3 + $0x70] sm:$0xf]
    %v7437 = vld [vmem:[%s3 + $0x74] sm:$0xf]
    %v7438 = vld [vmem:[%s3 + $0x78] sm:$0xf]
    %v7439 = vld [vmem:[%s3 + $0x7c] sm:$0xf]
    %v7440 = vpack.c.b16 %v6566, %v7113
    %v7441 = vpack.c.b16 %v6566, %v7114
    %v7446 = vunpack.c.l.b16 %v7436
    %v7447 = vunpack.c.l.b16 %v7437
    %v7448 = vunpack.c.l.b16 %v7438
    %v7449 = vunpack.c.l.b16 %v7439
    %v7450 = vpack.c.b16 %v7447, %v7446
    %v7451 = vpack.c.b16 %v7449, %v7448
    %v7455 = vsel %vm5062, %v7440, 0
    %v7458 = vsel %vm5062, %v7441, 0
    %7460 = vmatpush.bf16.msra.mxu0 0
    %7461 = vmatpush.bf16.msra.mxu0 0
    %7462 = vmatpush.bf16.msra.mxu0 0
    %7463 = vmatpush.bf16.msra.mxu0 0
    %7464 = vmatpush.bf16.msra.mxu0 0
    %7465 = vmatpush.bf16.msra.mxu0 0
    %7466 = vmatpush.bf16.msra.mxu0 %v7451
    %7467 = vmatpush.bf16.msra.mxu0 %v7450
    %7468 = vmatmul.bf16.gmra.mxu0 %v6605
    %v7469 = vpop.f32.mrf.mxu0
    %v7470 = vadd.f32 0.0, %v7469
    %v7471 = vpop.f32.mrf.mxu0
    %v7472 = vadd.f32 0.0, %v7471
    %7473 = vmatmul.bf16.gmra.mxu0 %v6608
    %v7474 = vpop.f32.mrf.mxu0
    %v7475 = vadd.f32 0.0, %v7474
    %v7476 = vpop.f32.mrf.mxu0
    %v7477 = vadd.f32 0.0, %v7476
    %7478 = vmatmul.bf16.gmra.mxu0 %v6611
    %v7479 = vpop.f32.mrf.mxu0
    %v7480 = vadd.f32 0.0, %v7479
    %v7481 = vpop.f32.mrf.mxu0
    %v7482 = vadd.f32 0.0, %v7481
    %7483 = vmatmul.bf16.gmra.mxu0 %v7455
    %v7484 = vpop.f32.mrf.mxu0
    %v7485 = vadd.f32 0.0, %v7484
    %v7486 = vpop.f32.mrf.mxu0
    %v7487 = vadd.f32 0.0, %v7486
    %7488 = vmatmul.bf16.gmra.mxu0 %v6617
    %v7489 = vpop.f32.mrf.mxu0
    %v7490 = vadd.f32 0.0, %v7489
    %v7491 = vpop.f32.mrf.mxu0
    %v7492 = vadd.f32 0.0, %v7491
    %7493 = vmatmul.bf16.gmra.mxu0 %v6620
    %v7494 = vpop.f32.mrf.mxu0
    %v7495 = vadd.f32 0.0, %v7494
    %v7496 = vpop.f32.mrf.mxu0
    %v7497 = vadd.f32 0.0, %v7496
    %7498 = vmatmul.bf16.gmra.mxu0 %v6623
    %v7499 = vpop.f32.mrf.mxu0
    %v7500 = vadd.f32 0.0, %v7499
    %v7501 = vpop.f32.mrf.mxu0
    %v7502 = vadd.f32 0.0, %v7501
    %7503 = vmatmul.bf16.gmra.mxu0 %v7458
    %v7504 = vpop.f32.mrf.mxu0
    %v7505 = vadd.f32 0.0, %v7504
    %v7506 = vpop.f32.mrf.mxu0
    %v7507 = vadd.f32 0.0, %v7506
    %7508 = vdwg.mxu0
    %v7509 = vadd.f32 %v7420, %v7470
    %v7510 = vadd.f32 %v7421, %v7472
    %v7511 = vadd.f32 %v7422, %v7475
    %v7512 = vadd.f32 %v7423, %v7477
    %v7513 = vadd.f32 %v7424, %v7480
    %v7514 = vadd.f32 %v7425, %v7482
    %v7515 = vadd.f32 %v7426, %v7485
    %v7516 = vadd.f32 %v7427, %v7487
    %v7517 = vadd.f32 %v7428, %v7490
    %v7518 = vadd.f32 %v7429, %v7492
    %v7519 = vadd.f32 %v7430, %v7495
    %v7520 = vadd.f32 %v7431, %v7497
    %v7521 = vadd.f32 %v7432, %v7500
    %v7522 = vadd.f32 %v7433, %v7502
    %v7523 = vadd.f32 %v7434, %v7505
    %v7524 = vadd.f32 %v7435, %v7507
    %v7525 = vld [vmem:[%s3 + $0x80] sm:$0xf]
    %v7526 = vld [vmem:[%s3 + $0x84] sm:$0xf]
    %v7527 = vld [vmem:[%s3 + $0x88] sm:$0xf]
    %v7528 = vld [vmem:[%s3 + $0x8c] sm:$0xf]
    %v7529 = vpack.c.b16 %v6834, %v7236
    %v7530 = vpack.c.b16 %v6834, %v7237
    %v7535 = vunpack.c.l.b16 %v7525
    %v7536 = vunpack.c.l.b16 %v7526
    %v7537 = vunpack.c.l.b16 %v7527
    %v7538 = vunpack.c.l.b16 %v7528
    %v7539 = vpack.c.b16 %v7536, %v7535
    %v7540 = vpack.c.b16 %v7538, %v7537
    %v7544 = vsel %vm5062, %v7529, 0
    %v7547 = vsel %vm5062, %v7530, 0
    %7549 = vmatpush.bf16.msra.mxu0 0
    %7550 = vmatpush.bf16.msra.mxu0 0
    %7551 = vmatpush.bf16.msra.mxu0 0
    %7552 = vmatpush.bf16.msra.mxu0 0
    %7553 = vmatpush.bf16.msra.mxu0 0
    %7554 = vmatpush.bf16.msra.mxu0 0
    %7555 = vmatpush.bf16.msra.mxu0 %v7540
    %7556 = vmatpush.bf16.msra.mxu0 %v7539
    %7557 = vmatmul.bf16.gmra.mxu0 %v6873
    %v7558 = vpop.f32.mrf.mxu0
    %v7559 = vadd.f32 0.0, %v7558
    %v7560 = vpop.f32.mrf.mxu0
    %v7561 = vadd.f32 0.0, %v7560
    %7562 = vmatmul.bf16.gmra.mxu0 %v6876
    %v7563 = vpop.f32.mrf.mxu0
    %v7564 = vadd.f32 0.0, %v7563
    %v7565 = vpop.f32.mrf.mxu0
    %v7566 = vadd.f32 0.0, %v7565
    %7567 = vmatmul.bf16.gmra.mxu0 %v6879
    %v7568 = vpop.f32.mrf.mxu0
    %v7569 = vadd.f32 0.0, %v7568
    %v7570 = vpop.f32.mrf.mxu0
    %v7571 = vadd.f32 0.0, %v7570
    %7572 = vmatmul.bf16.gmra.mxu0 %v7544
    %v7573 = vpop.f32.mrf.mxu0
    %v7574 = vadd.f32 0.0, %v7573
    %v7575 = vpop.f32.mrf.mxu0
    %v7576 = vadd.f32 0.0, %v7575
    %7577 = vmatmul.bf16.gmra.mxu0 %v6885
    %v7578 = vpop.f32.mrf.mxu0
    %v7579 = vadd.f32 0.0, %v7578
    %v7580 = vpop.f32.mrf.mxu0
    %v7581 = vadd.f32 0.0, %v7580
    %7582 = vmatmul.bf16.gmra.mxu0 %v6888
    %v7583 = vpop.f32.mrf.mxu0
    %v7584 = vadd.f32 0.0, %v7583
    %v7585 = vpop.f32.mrf.mxu0
    %v7586 = vadd.f32 0.0, %v7585
    %7587 = vmatmul.bf16.gmra.mxu0 %v6891
    %v7588 = vpop.f32.mrf.mxu0
    %v7589 = vadd.f32 0.0, %v7588
    %v7590 = vpop.f32.mrf.mxu0
    %v7591 = vadd.f32 0.0, %v7590
    %7592 = vmatmul.bf16.gmra.mxu0 %v7547
    %v7593 = vpop.f32.mrf.mxu0
    %v7594 = vadd.f32 0.0, %v7593
    %v7595 = vpop.f32.mrf.mxu0
    %v7596 = vadd.f32 0.0, %v7595
    %7597 = vdwg.mxu0
    %v7598 = vadd.f32 %v7509, %v7559
    %v7599 = vadd.f32 %v7510, %v7561
    %v7600 = vadd.f32 %v7511, %v7564
    %v7601 = vadd.f32 %v7512, %v7566
    %v7602 = vadd.f32 %v7513, %v7569
    %v7603 = vadd.f32 %v7514, %v7571
    %v7604 = vadd.f32 %v7515, %v7574
    %v7605 = vadd.f32 %v7516, %v7576
    %v7606 = vadd.f32 %v7517, %v7579
    %v7607 = vadd.f32 %v7518, %v7581
    %v7608 = vadd.f32 %v7519, %v7584
    %v7609 = vadd.f32 %v7520, %v7586
    %v7610 = vadd.f32 %v7521, %v7589
    %v7611 = vadd.f32 %v7522, %v7591
    %v7612 = vadd.f32 %v7523, %v7594
    %v7613 = vadd.f32 %v7524, %v7596
    %v7614 = vld [vmem:[%s4] sm:$0x3]
    %v7615 = vperm.slane %v7614, 0
    %v7616 = vmul.f32 %v7598, %v7615
    %v7617 = vmul.f32 %v7599, %v7615
    %v7618 = vmul.f32 %v7600, %v7615
    %v7619 = vmul.f32 %v7601, %v7615
    %v7620 = vmul.f32 %v7602, %v7615
    %v7621 = vmul.f32 %v7603, %v7615
    %v7622 = vmul.f32 %v7604, %v7615
    %v7623 = vmul.f32 %v7605, %v7615
    %v7624 = vmul.f32 %v7606, %v7615
    %v7625 = vmul.f32 %v7607, %v7615
    %v7626 = vmul.f32 %v7608, %v7615
    %v7627 = vmul.f32 %v7609, %v7615
    %v7628 = vmul.f32 %v7610, %v7615
    %v7629 = vmul.f32 %v7611, %v7615
    %v7630 = vmul.f32 %v7612, %v7615
    %v7631 = vmul.f32 %v7613, %v7615
    %v7632 = vperm.slane %v7614, 1
    %v7633 = vadd.f32 %v7616, %v7632
    %v7634 = vadd.f32 %v7617, %v7632
    %v7635 = vadd.f32 %v7618, %v7632
    %v7636 = vadd.f32 %v7619, %v7632
    %v7637 = vadd.f32 %v7620, %v7632
    %v7638 = vadd.f32 %v7621, %v7632
    %v7639 = vadd.f32 %v7622, %v7632
    %v7640 = vadd.f32 %v7623, %v7632
    %v7641 = vadd.f32 %v7624, %v7632
    %v7642 = vadd.f32 %v7625, %v7632
    %v7643 = vadd.f32 %v7626, %v7632
    %v7644 = vadd.f32 %v7627, %v7632
    %v7645 = vadd.f32 %v7628, %v7632
    %v7646 = vadd.f32 %v7629, %v7632
    %v7647 = vadd.f32 %v7630, %v7632
    %v7648 = vadd.f32 %v7631, %v7632
    %v7649 = vmax.f32 %v7633, 0.0
    %v7650 = vmax.f32 %v7634, 0.0
    %v7651 = vmax.f32 %v7635, 0.0
    %v7652 = vmax.f32 %v7636, 0.0
    %v7653 = vmax.f32 %v7637, 0.0
    %v7654 = vmax.f32 %v7638, 0.0
    %v7655 = vmax.f32 %v7639, 0.0
    %v7656 = vmax.f32 %v7640, 0.0
    %v7657 = vmax.f32 %v7641, 0.0
    %v7658 = vmax.f32 %v7642, 0.0
    %v7659 = vmax.f32 %v7643, 0.0
    %v7660 = vmax.f32 %v7644, 0.0
    %v7661 = vmax.f32 %v7645, 0.0
    %v7662 = vmax.f32 %v7646, 0.0
    %v7663 = vmax.f32 %v7647, 0.0
    %v7664 = vmax.f32 %v7648, 0.0
    %v7681 = vrot.slane %v7649, 2
    %v7682 = vrot.slane %v7649, 4
    %v7683 = vrot.slane %v7649, 6
    %v7684 = vrot.slane %v7650, 2
    %v7685 = vrot.slane %v7650, 4
    %v7686 = vrot.slane %v7650, 6
    %v7687 = vrot.slane %v7651, 2
    %v7688 = vrot.slane %v7651, 4
    %v7689 = vrot.slane %v7651, 6
    %v7690 = vrot.slane %v7652, 2
    %v7691 = vrot.slane %v7652, 4
    %v7692 = vrot.slane %v7652, 6
    %v7693 = vrot.slane %v7653, 2
    %v7694 = vrot.slane %v7653, 4
    %v7695 = vrot.slane %v7653, 6
    %v7696 = vrot.slane %v7654, 2
    %v7697 = vrot.slane %v7654, 4
    %v7698 = vrot.slane %v7654, 6
    %v7699 = vrot.slane %v7655, 2
    %v7700 = vrot.slane %v7655, 4
    %v7701 = vrot.slane %v7655, 6
    %v7702 = vrot.slane %v7656, 2
    %v7703 = vrot.slane %v7656, 4
    %v7704 = vrot.slane %v7656, 6
    %v7705 = vrot.slane %v7657, 2
    %v7706 = vrot.slane %v7657, 4
    %v7707 = vrot.slane %v7657, 6
    %v7708 = vrot.slane %v7658, 2
    %v7709 = vrot.slane %v7658, 4
    %v7710 = vrot.slane %v7658, 6
    %v7711 = vrot.slane %v7659, 2
    %v7712 = vrot.slane %v7659, 4
    %v7713 = vrot.slane %v7659, 6
    %v7714 = vrot.slane %v7660, 2
    %v7715 = vrot.slane %v7660, 4
    %v7716 = vrot.slane %v7660, 6
    %v7717 = vrot.slane %v7661, 2
    %v7718 = vrot.slane %v7661, 4
    %v7719 = vrot.slane %v7661, 6
    %v7720 = vrot.slane %v7662, 2
    %v7721 = vrot.slane %v7662, 4
    %v7722 = vrot.slane %v7662, 6
    %v7723 = vrot.slane %v7663, 2
    %v7724 = vrot.slane %v7663, 4
    %v7725 = vrot.slane %v7663, 6
    %v7726 = vrot.slane %v7664, 2
    %v7727 = vrot.slane %v7664, 4
    %v7728 = vrot.slane %v7664, 6
    %vm7777 = vcmask 517120
    %v7778 = vsel %vm7777, %v7649, -inf
    %v7779 = vrot.slane %v7778, 4
    %v7780 = vmax.f32 %v7778, %v7779
    %v7781 = vrot.slane %v7780, 2
    %v7782 = vmax.f32 %v7780, %v7781
    %v7783 = vrot.slane %v7782, 1
    %v7784 = vmax.f32 %v7782, %v7783
    %v7785 = vsel %vm7777, %v7681, -inf
    %v7786 = vrot.slane %v7785, 4
    %v7787 = vmax.f32 %v7785, %v7786
    %v7788 = vrot.slane %v7787, 2
    %v7789 = vmax.f32 %v7787, %v7788
    %v7790 = vrot.slane %v7789, 1
    %v7791 = vmax.f32 %v7789, %v7790
    %v7792 = vsel %vm7777, %v7682, -inf
    %v7793 = vrot.slane %v7792, 4
    %v7794 = vmax.f32 %v7792, %v7793
    %v7795 = vrot.slane %v7794, 2
    %v7796 = vmax.f32 %v7794, %v7795
    %v7797 = vrot.slane %v7796, 1
    %v7798 = vmax.f32 %v7796, %v7797
    %v7799 = vsel %vm7777, %v7683, -inf
    %v7800 = vrot.slane %v7799, 4
    %v7801 = vmax.f32 %v7799, %v7800
    %v7802 = vrot.slane %v7801, 2
    %v7803 = vmax.f32 %v7801, %v7802
    %v7804 = vrot.slane %v7803, 1
    %v7805 = vmax.f32 %v7803, %v7804
    %v7806 = vsel %vm7777, %v7650, -inf
    %v7807 = vrot.slane %v7806, 4
    %v7808 = vmax.f32 %v7806, %v7807
    %v7809 = vrot.slane %v7808, 2
    %v7810 = vmax.f32 %v7808, %v7809
    %v7811 = vrot.slane %v7810, 1
    %v7812 = vmax.f32 %v7810, %v7811
    %v7813 = vsel %vm7777, %v7684, -inf
    %v7814 = vrot.slane %v7813, 4
    %v7815 = vmax.f32 %v7813, %v7814
    %v7816 = vrot.slane %v7815, 2
    %v7817 = vmax.f32 %v7815, %v7816
    %v7818 = vrot.slane %v7817, 1
    %v7819 = vmax.f32 %v7817, %v7818
    %v7820 = vsel %vm7777, %v7685, -inf
    %v7821 = vrot.slane %v7820, 4
    %v7822 = vmax.f32 %v7820, %v7821
    %v7823 = vrot.slane %v7822, 2
    %v7824 = vmax.f32 %v7822, %v7823
    %v7825 = vrot.slane %v7824, 1
    %v7826 = vmax.f32 %v7824, %v7825
    %v7827 = vsel %vm7777, %v7686, -inf
    %v7828 = vrot.slane %v7827, 4
    %v7829 = vmax.f32 %v7827, %v7828
    %v7830 = vrot.slane %v7829, 2
    %v7831 = vmax.f32 %v7829, %v7830
    %v7832 = vrot.slane %v7831, 1
    %v7833 = vmax.f32 %v7831, %v7832
    %v7834 = vsel %vm7777, %v7651, -inf
    %v7835 = vrot.slane %v7834, 4
    %v7836 = vmax.f32 %v7834, %v7835
    %v7837 = vrot.slane %v7836, 2
    %v7838 = vmax.f32 %v7836, %v7837
    %v7839 = vrot.slane %v7838, 1
    %v7840 = vmax.f32 %v7838, %v7839
    %v7841 = vsel %vm7777, %v7687, -inf
    %v7842 = vrot.slane %v7841, 4
    %v7843 = vmax.f32 %v7841, %v7842
    %v7844 = vrot.slane %v7843, 2
    %v7845 = vmax.f32 %v7843, %v7844
    %v7846 = vrot.slane %v7845, 1
    %v7847 = vmax.f32 %v7845, %v7846
    %v7848 = vsel %vm7777, %v7688, -inf
    %v7849 = vrot.slane %v7848, 4
    %v7850 = vmax.f32 %v7848, %v7849
    %v7851 = vrot.slane %v7850, 2
    %v7852 = vmax.f32 %v7850, %v7851
    %v7853 = vrot.slane %v7852, 1
    %v7854 = vmax.f32 %v7852, %v7853
    %v7855 = vsel %vm7777, %v7689, -inf
    %v7856 = vrot.slane %v7855, 4
    %v7857 = vmax.f32 %v7855, %v7856
    %v7858 = vrot.slane %v7857, 2
    %v7859 = vmax.f32 %v7857, %v7858
    %v7860 = vrot.slane %v7859, 1
    %v7861 = vmax.f32 %v7859, %v7860
    %v7862 = vsel %vm7777, %v7652, -inf
    %v7863 = vrot.slane %v7862, 4
    %v7864 = vmax.f32 %v7862, %v7863
    %v7865 = vrot.slane %v7864, 2
    %v7866 = vmax.f32 %v7864, %v7865
    %v7867 = vrot.slane %v7866, 1
    %v7868 = vmax.f32 %v7866, %v7867
    %v7869 = vsel %vm7777, %v7690, -inf
    %v7870 = vrot.slane %v7869, 4
    %v7871 = vmax.f32 %v7869, %v7870
    %v7872 = vrot.slane %v7871, 2
    %v7873 = vmax.f32 %v7871, %v7872
    %v7874 = vrot.slane %v7873, 1
    %v7875 = vmax.f32 %v7873, %v7874
    %v7876 = vsel %vm7777, %v7691, -inf
    %v7877 = vrot.slane %v7876, 4
    %v7878 = vmax.f32 %v7876, %v7877
    %v7879 = vrot.slane %v7878, 2
    %v7880 = vmax.f32 %v7878, %v7879
    %v7881 = vrot.slane %v7880, 1
    %v7882 = vmax.f32 %v7880, %v7881
    %v7883 = vsel %vm7777, %v7692, -inf
    %v7884 = vrot.slane %v7883, 4
    %v7885 = vmax.f32 %v7883, %v7884
    %v7886 = vrot.slane %v7885, 2
    %v7887 = vmax.f32 %v7885, %v7886
    %v7888 = vrot.slane %v7887, 1
    %v7889 = vmax.f32 %v7887, %v7888
    %v7890 = vsel %vm7777, %v7653, -inf
    %v7891 = vrot.slane %v7890, 4
    %v7892 = vmax.f32 %v7890, %v7891
    %v7893 = vrot.slane %v7892, 2
    %v7894 = vmax.f32 %v7892, %v7893
    %v7895 = vrot.slane %v7894, 1
    %v7896 = vmax.f32 %v7894, %v7895
    %v7897 = vsel %vm7777, %v7693, -inf
    %v7898 = vrot.slane %v7897, 4
    %v7899 = vmax.f32 %v7897, %v7898
    %v7900 = vrot.slane %v7899, 2
    %v7901 = vmax.f32 %v7899, %v7900
    %v7902 = vrot.slane %v7901, 1
    %v7903 = vmax.f32 %v7901, %v7902
    %v7904 = vsel %vm7777, %v7694, -inf
    %v7905 = vrot.slane %v7904, 4
    %v7906 = vmax.f32 %v7904, %v7905
    %v7907 = vrot.slane %v7906, 2
    %v7908 = vmax.f32 %v7906, %v7907
    %v7909 = vrot.slane %v7908, 1
    %v7910 = vmax.f32 %v7908, %v7909
    %v7911 = vsel %vm7777, %v7695, -inf
    %v7912 = vrot.slane %v7911, 4
    %v7913 = vmax.f32 %v7911, %v7912
    %v7914 = vrot.slane %v7913, 2
    %v7915 = vmax.f32 %v7913, %v7914
    %v7916 = vrot.slane %v7915, 1
    %v7917 = vmax.f32 %v7915, %v7916
    %v7918 = vsel %vm7777, %v7654, -inf
    %v7919 = vrot.slane %v7918, 4
    %v7920 = vmax.f32 %v7918, %v7919
    %v7921 = vrot.slane %v7920, 2
    %v7922 = vmax.f32 %v7920, %v7921
    %v7923 = vrot.slane %v7922, 1
    %v7924 = vmax.f32 %v7922, %v7923
    %v7925 = vsel %vm7777, %v7696, -inf
    %v7926 = vrot.slane %v7925, 4
    %v7927 = vmax.f32 %v7925, %v7926
    %v7928 = vrot.slane %v7927, 2
    %v7929 = vmax.f32 %v7927, %v7928
    %v7930 = vrot.slane %v7929, 1
    %v7931 = vmax.f32 %v7929, %v7930
    %v7932 = vsel %vm7777, %v7697, -inf
    %v7933 = vrot.slane %v7932, 4
    %v7934 = vmax.f32 %v7932, %v7933
    %v7935 = vrot.slane %v7934, 2
    %v7936 = vmax.f32 %v7934, %v7935
    %v7937 = vrot.slane %v7936, 1
    %v7938 = vmax.f32 %v7936, %v7937
    %v7939 = vsel %vm7777, %v7698, -inf
    %v7940 = vrot.slane %v7939, 4
    %v7941 = vmax.f32 %v7939, %v7940
    %v7942 = vrot.slane %v7941, 2
    %v7943 = vmax.f32 %v7941, %v7942
    %v7944 = vrot.slane %v7943, 1
    %v7945 = vmax.f32 %v7943, %v7944
    %v7946 = vsel %vm7777, %v7655, -inf
    %v7947 = vrot.slane %v7946, 4
    %v7948 = vmax.f32 %v7946, %v7947
    %v7949 = vrot.slane %v7948, 2
    %v7950 = vmax.f32 %v7948, %v7949
    %v7951 = vrot.slane %v7950, 1
    %v7952 = vmax.f32 %v7950, %v7951
    %v7953 = vsel %vm7777, %v7699, -inf
    %v7954 = vrot.slane %v7953, 4
    %v7955 = vmax.f32 %v7953, %v7954
    %v7956 = vrot.slane %v7955, 2
    %v7957 = vmax.f32 %v7955, %v7956
    %v7958 = vrot.slane %v7957, 1
    %v7959 = vmax.f32 %v7957, %v7958
    %v7960 = vsel %vm7777, %v7700, -inf
    %v7961 = vrot.slane %v7960, 4
    %v7962 = vmax.f32 %v7960, %v7961
    %v7963 = vrot.slane %v7962, 2
    %v7964 = vmax.f32 %v7962, %v7963
    %v7965 = vrot.slane %v7964, 1
    %v7966 = vmax.f32 %v7964, %v7965
    %v7967 = vsel %vm7777, %v7701, -inf
    %v7968 = vrot.slane %v7967, 4
    %v7969 = vmax.f32 %v7967, %v7968
    %v7970 = vrot.slane %v7969, 2
    %v7971 = vmax.f32 %v7969, %v7970
    %v7972 = vrot.slane %v7971, 1
    %v7973 = vmax.f32 %v7971, %v7972
    %v7974 = vsel %vm7777, %v7656, -inf
    %v7975 = vrot.slane %v7974, 4
    %v7976 = vmax.f32 %v7974, %v7975
    %v7977 = vrot.slane %v7976, 2
    %v7978 = vmax.f32 %v7976, %v7977
    %v7979 = vrot.slane %v7978, 1
    %v7980 = vmax.f32 %v7978, %v7979
    %v7981 = vsel %vm7777, %v7702, -inf
    %v7982 = vrot.slane %v7981, 4
    %v7983 = vmax.f32 %v7981, %v7982
    %v7984 = vrot.slane %v7983, 2
    %v7985 = vmax.f32 %v7983, %v7984
    %v7986 = vrot.slane %v7985, 1
    %v7987 = vmax.f32 %v7985, %v7986
    %v7988 = vsel %vm7777, %v7703, -inf
    %v7989 = vrot.slane %v7988, 4
    %v7990 = vmax.f32 %v7988, %v7989
    %v7991 = vrot.slane %v7990, 2
    %v7992 = vmax.f32 %v7990, %v7991
    %v7993 = vrot.slane %v7992, 1
    %v7994 = vmax.f32 %v7992, %v7993
    %v7995 = vsel %vm7777, %v7704, -inf
    %v7996 = vrot.slane %v7995, 4
    %v7997 = vmax.f32 %v7995, %v7996
    %v7998 = vrot.slane %v7997, 2
    %v7999 = vmax.f32 %v7997, %v7998
    %v8000 = vrot.slane %v7999, 1
    %v8001 = vmax.f32 %v7999, %v8000
    %v8002 = vsel %vm7777, %v7657, -inf
    %v8003 = vrot.slane %v8002, 4
    %v8004 = vmax.f32 %v8002, %v8003
    %v8005 = vrot.slane %v8004, 2
    %v8006 = vmax.f32 %v8004, %v8005
    %v8007 = vrot.slane %v8006, 1
    %v8008 = vmax.f32 %v8006, %v8007
    %v8009 = vsel %vm7777, %v7705, -inf
    %v8010 = vrot.slane %v8009, 4
    %v8011 = vmax.f32 %v8009, %v8010
    %v8012 = vrot.slane %v8011, 2
    %v8013 = vmax.f32 %v8011, %v8012
    %v8014 = vrot.slane %v8013, 1
    %v8015 = vmax.f32 %v8013, %v8014
    %v8016 = vsel %vm7777, %v7706, -inf
    %v8017 = vrot.slane %v8016, 4
    %v8018 = vmax.f32 %v8016, %v8017
    %v8019 = vrot.slane %v8018, 2
    %v8020 = vmax.f32 %v8018, %v8019
    %v8021 = vrot.slane %v8020, 1
    %v8022 = vmax.f32 %v8020, %v8021
    %v8023 = vsel %vm7777, %v7707, -inf
    %v8024 = vrot.slane %v8023, 4
    %v8025 = vmax.f32 %v8023, %v8024
    %v8026 = vrot.slane %v8025, 2
    %v8027 = vmax.f32 %v8025, %v8026
    %v8028 = vrot.slane %v8027, 1
    %v8029 = vmax.f32 %v8027, %v8028
    %v8030 = vsel %vm7777, %v7658, -inf
    %v8031 = vrot.slane %v8030, 4
    %v8032 = vmax.f32 %v8030, %v8031
    %v8033 = vrot.slane %v8032, 2
    %v8034 = vmax.f32 %v8032, %v8033
    %v8035 = vrot.slane %v8034, 1
    %v8036 = vmax.f32 %v8034, %v8035
    %v8037 = vsel %vm7777, %v7708, -inf
    %v8038 = vrot.slane %v8037, 4
    %v8039 = vmax.f32 %v8037, %v8038
    %v8040 = vrot.slane %v8039, 2
    %v8041 = vmax.f32 %v8039, %v8040
    %v8042 = vrot.slane %v8041, 1
    %v8043 = vmax.f32 %v8041, %v8042
    %v8044 = vsel %vm7777, %v7709, -inf
    %v8045 = vrot.slane %v8044, 4
    %v8046 = vmax.f32 %v8044, %v8045
    %v8047 = vrot.slane %v8046, 2
    %v8048 = vmax.f32 %v8046, %v8047
    %v8049 = vrot.slane %v8048, 1
    %v8050 = vmax.f32 %v8048, %v8049
    %v8051 = vsel %vm7777, %v7710, -inf
    %v8052 = vrot.slane %v8051, 4
    %v8053 = vmax.f32 %v8051, %v8052
    %v8054 = vrot.slane %v8053, 2
    %v8055 = vmax.f32 %v8053, %v8054
    %v8056 = vrot.slane %v8055, 1
    %v8057 = vmax.f32 %v8055, %v8056
    %v8058 = vsel %vm7777, %v7659, -inf
    %v8059 = vrot.slane %v8058, 4
    %v8060 = vmax.f32 %v8058, %v8059
    %v8061 = vrot.slane %v8060, 2
    %v8062 = vmax.f32 %v8060, %v8061
    %v8063 = vrot.slane %v8062, 1
    %v8064 = vmax.f32 %v8062, %v8063
    %v8065 = vsel %vm7777, %v7711, -inf
    %v8066 = vrot.slane %v8065, 4
    %v8067 = vmax.f32 %v8065, %v8066
    %v8068 = vrot.slane %v8067, 2
    %v8069 = vmax.f32 %v8067, %v8068
    %v8070 = vrot.slane %v8069, 1
    %v8071 = vmax.f32 %v8069, %v8070
    %v8072 = vsel %vm7777, %v7712, -inf
    %v8073 = vrot.slane %v8072, 4
    %v8074 = vmax.f32 %v8072, %v8073
    %v8075 = vrot.slane %v8074, 2
    %v8076 = vmax.f32 %v8074, %v8075
    %v8077 = vrot.slane %v8076, 1
    %v8078 = vmax.f32 %v8076, %v8077
    %v8079 = vsel %vm7777, %v7713, -inf
    %v8080 = vrot.slane %v8079, 4
    %v8081 = vmax.f32 %v8079, %v8080
    %v8082 = vrot.slane %v8081, 2
    %v8083 = vmax.f32 %v8081, %v8082
    %v8084 = vrot.slane %v8083, 1
    %v8085 = vmax.f32 %v8083, %v8084
    %v8086 = vsel %vm7777, %v7660, -inf
    %v8087 = vrot.slane %v8086, 4
    %v8088 = vmax.f32 %v8086, %v8087
    %v8089 = vrot.slane %v8088, 2
    %v8090 = vmax.f32 %v8088, %v8089
    %v8091 = vrot.slane %v8090, 1
    %v8092 = vmax.f32 %v8090, %v8091
    %v8093 = vsel %vm7777, %v7714, -inf
    %v8094 = vrot.slane %v8093, 4
    %v8095 = vmax.f32 %v8093, %v8094
    %v8096 = vrot.slane %v8095, 2
    %v8097 = vmax.f32 %v8095, %v8096
    %v8098 = vrot.slane %v8097, 1
    %v8099 = vmax.f32 %v8097, %v8098
    %v8100 = vsel %vm7777, %v7715, -inf
    %v8101 = vrot.slane %v8100, 4
    %v8102 = vmax.f32 %v8100, %v8101
    %v8103 = vrot.slane %v8102, 2
    %v8104 = vmax.f32 %v8102, %v8103
    %v8105 = vrot.slane %v8104, 1
    %v8106 = vmax.f32 %v8104, %v8105
    %v8107 = vsel %vm7777, %v7716, -inf
    %v8108 = vrot.slane %v8107, 4
    %v8109 = vmax.f32 %v8107, %v8108
    %v8110 = vrot.slane %v8109, 2
    %v8111 = vmax.f32 %v8109, %v8110
    %v8112 = vrot.slane %v8111, 1
    %v8113 = vmax.f32 %v8111, %v8112
    %v8114 = vsel %vm7777, %v7661, -inf
    %v8115 = vrot.slane %v8114, 4
    %v8116 = vmax.f32 %v8114, %v8115
    %v8117 = vrot.slane %v8116, 2
    %v8118 = vmax.f32 %v8116, %v8117
    %v8119 = vrot.slane %v8118, 1
    %v8120 = vmax.f32 %v8118, %v8119
    %v8121 = vsel %vm7777, %v7717, -inf
    %v8122 = vrot.slane %v8121, 4
    %v8123 = vmax.f32 %v8121, %v8122
    %v8124 = vrot.slane %v8123, 2
    %v8125 = vmax.f32 %v8123, %v8124
    %v8126 = vrot.slane %v8125, 1
    %v8127 = vmax.f32 %v8125, %v8126
    %v8128 = vsel %vm7777, %v7718, -inf
    %v8129 = vrot.slane %v8128, 4
    %v8130 = vmax.f32 %v8128, %v8129
    %v8131 = vrot.slane %v8130, 2
    %v8132 = vmax.f32 %v8130, %v8131
    %v8133 = vrot.slane %v8132, 1
    %v8134 = vmax.f32 %v8132, %v8133
    %v8135 = vsel %vm7777, %v7719, -inf
    %v8136 = vrot.slane %v8135, 4
    %v8137 = vmax.f32 %v8135, %v8136
    %v8138 = vrot.slane %v8137, 2
    %v8139 = vmax.f32 %v8137, %v8138
    %v8140 = vrot.slane %v8139, 1
    %v8141 = vmax.f32 %v8139, %v8140
    %v8142 = vsel %vm7777, %v7662, -inf
    %v8143 = vrot.slane %v8142, 4
    %v8144 = vmax.f32 %v8142, %v8143
    %v8145 = vrot.slane %v8144, 2
    %v8146 = vmax.f32 %v8144, %v8145
    %v8147 = vrot.slane %v8146, 1
    %v8148 = vmax.f32 %v8146, %v8147
    %v8149 = vsel %vm7777, %v7720, -inf
    %v8150 = vrot.slane %v8149, 4
    %v8151 = vmax.f32 %v8149, %v8150
    %v8152 = vrot.slane %v8151, 2
    %v8153 = vmax.f32 %v8151, %v8152
    %v8154 = vrot.slane %v8153, 1
    %v8155 = vmax.f32 %v8153, %v8154
    %v8156 = vsel %vm7777, %v7721, -inf
    %v8157 = vrot.slane %v8156, 4
    %v8158 = vmax.f32 %v8156, %v8157
    %v8159 = vrot.slane %v8158, 2
    %v8160 = vmax.f32 %v8158, %v8159
    %v8161 = vrot.slane %v8160, 1
    %v8162 = vmax.f32 %v8160, %v8161
    %v8163 = vsel %vm7777, %v7722, -inf
    %v8164 = vrot.slane %v8163, 4
    %v8165 = vmax.f32 %v8163, %v8164
    %v8166 = vrot.slane %v8165, 2
    %v8167 = vmax.f32 %v8165, %v8166
    %v8168 = vrot.slane %v8167, 1
    %v8169 = vmax.f32 %v8167, %v8168
    %v8170 = vsel %vm7777, %v7663, -inf
    %v8171 = vrot.slane %v8170, 4
    %v8172 = vmax.f32 %v8170, %v8171
    %v8173 = vrot.slane %v8172, 2
    %v8174 = vmax.f32 %v8172, %v8173
    %v8175 = vrot.slane %v8174, 1
    %v8176 = vmax.f32 %v8174, %v8175
    %v8177 = vsel %vm7777, %v7723, -inf
    %v8178 = vrot.slane %v8177, 4
    %v8179 = vmax.f32 %v8177, %v8178
    %v8180 = vrot.slane %v8179, 2
    %v8181 = vmax.f32 %v8179, %v8180
    %v8182 = vrot.slane %v8181, 1
    %v8183 = vmax.f32 %v8181, %v8182
    %v8184 = vsel %vm7777, %v7724, -inf
    %v8185 = vrot.slane %v8184, 4
    %v8186 = vmax.f32 %v8184, %v8185
    %v8187 = vrot.slane %v8186, 2
    %v8188 = vmax.f32 %v8186, %v8187
    %v8189 = vrot.slane %v8188, 1
    %v8190 = vmax.f32 %v8188, %v8189
    %v8191 = vsel %vm7777, %v7725, -inf
    %v8192 = vrot.slane %v8191, 4
    %v8193 = vmax.f32 %v8191, %v8192
    %v8194 = vrot.slane %v8193, 2
    %v8195 = vmax.f32 %v8193, %v8194
    %v8196 = vrot.slane %v8195, 1
    %v8197 = vmax.f32 %v8195, %v8196
    %v8198 = vsel %vm7777, %v7664, -inf
    %v8199 = vrot.slane %v8198, 4
    %v8200 = vmax.f32 %v8198, %v8199
    %v8201 = vrot.slane %v8200, 2
    %v8202 = vmax.f32 %v8200, %v8201
    %v8203 = vrot.slane %v8202, 1
    %v8204 = vmax.f32 %v8202, %v8203
    %v8205 = vsel %vm7777, %v7726, -inf
    %v8206 = vrot.slane %v8205, 4
    %v8207 = vmax.f32 %v8205, %v8206
    %v8208 = vrot.slane %v8207, 2
    %v8209 = vmax.f32 %v8207, %v8208
    %v8210 = vrot.slane %v8209, 1
    %v8211 = vmax.f32 %v8209, %v8210
    %v8212 = vsel %vm7777, %v7727, -inf
    %v8213 = vrot.slane %v8212, 4
    %v8214 = vmax.f32 %v8212, %v8213
    %v8215 = vrot.slane %v8214, 2
    %v8216 = vmax.f32 %v8214, %v8215
    %v8217 = vrot.slane %v8216, 1
    %v8218 = vmax.f32 %v8216, %v8217
    %v8219 = vsel %vm7777, %v7728, -inf
    %v8220 = vrot.slane %v8219, 4
    %v8221 = vmax.f32 %v8219, %v8220
    %v8222 = vrot.slane %v8221, 2
    %v8223 = vmax.f32 %v8221, %v8222
    %v8224 = vrot.slane %v8223, 1
    %v8225 = vmax.f32 %v8223, %v8224
    %vm8226 = vcmask 523264
    %v8227 = vsel %vm8226, %v7784, -inf
    %v8228 = vsel %vm8226, %v7812, -inf
    %v8229 = vmax.f32 %v8227, %v8228
    %v8230 = vsel %vm8226, %v7791, -inf
    %v8231 = vsel %vm8226, %v7819, -inf
    %v8232 = vmax.f32 %v8230, %v8231
    %v8233 = vsel %vm8226, %v7798, -inf
    %v8234 = vsel %vm8226, %v7826, -inf
    %v8235 = vmax.f32 %v8233, %v8234
    %v8236 = vsel %vm8226, %v7805, -inf
    %v8237 = vsel %vm8226, %v7833, -inf
    %v8238 = vmax.f32 %v8236, %v8237
    %v8239 = vsel %vm8226, %v7840, -inf
    %v8240 = vsel %vm8226, %v7868, -inf
    %v8241 = vmax.f32 %v8239, %v8240
    %v8242 = vsel %vm8226, %v7847, -inf
    %v8243 = vsel %vm8226, %v7875, -inf
    %v8244 = vmax.f32 %v8242, %v8243
    %v8245 = vsel %vm8226, %v7854, -inf
    %v8246 = vsel %vm8226, %v7882, -inf
    %v8247 = vmax.f32 %v8245, %v8246
    %v8248 = vsel %vm8226, %v7861, -inf
    %v8249 = vsel %vm8226, %v7889, -inf
    %v8250 = vmax.f32 %v8248, %v8249
    %v8251 = vsel %vm8226, %v7896, -inf
    %v8252 = vsel %vm8226, %v7924, -inf
    %v8253 = vmax.f32 %v8251, %v8252
    %v8254 = vsel %vm8226, %v7903, -inf
    %v8255 = vsel %vm8226, %v7931, -inf
    %v8256 = vmax.f32 %v8254, %v8255
    %v8257 = vsel %vm8226, %v7910, -inf
    %v8258 = vsel %vm8226, %v7938, -inf
    %v8259 = vmax.f32 %v8257, %v8258
    %v8260 = vsel %vm8226, %v7917, -inf
    %v8261 = vsel %vm8226, %v7945, -inf
    %v8262 = vmax.f32 %v8260, %v8261
    %v8263 = vsel %vm8226, %v7952, -inf
    %v8264 = vsel %vm8226, %v7980, -inf
    %v8265 = vmax.f32 %v8263, %v8264
    %v8266 = vsel %vm8226, %v7959, -inf
    %v8267 = vsel %vm8226, %v7987, -inf
    %v8268 = vmax.f32 %v8266, %v8267
    %v8269 = vsel %vm8226, %v7966, -inf
    %v8270 = vsel %vm8226, %v7994, -inf
    %v8271 = vmax.f32 %v8269, %v8270
    %v8272 = vsel %vm8226, %v7973, -inf
    %v8273 = vsel %vm8226, %v8001, -inf
    %v8274 = vmax.f32 %v8272, %v8273
    %v8275 = vsel %vm8226, %v8008, -inf
    %v8276 = vsel %vm8226, %v8036, -inf
    %v8277 = vmax.f32 %v8275, %v8276
    %v8278 = vsel %vm8226, %v8015, -inf
    %v8279 = vsel %vm8226, %v8043, -inf
    %v8280 = vmax.f32 %v8278, %v8279
    %v8281 = vsel %vm8226, %v8022, -inf
    %v8282 = vsel %vm8226, %v8050, -inf
    %v8283 = vmax.f32 %v8281, %v8282
    %v8284 = vsel %vm8226, %v8029, -inf
    %v8285 = vsel %vm8226, %v8057, -inf
    %v8286 = vmax.f32 %v8284, %v8285
    %v8287 = vsel %vm8226, %v8064, -inf
    %v8288 = vsel %vm8226, %v8092, -inf
    %v8289 = vmax.f32 %v8287, %v8288
    %v8290 = vsel %vm8226, %v8071, -inf
    %v8291 = vsel %vm8226, %v8099, -inf
    %v8292 = vmax.f32 %v8290, %v8291
    %v8293 = vsel %vm8226, %v8078, -inf
    %v8294 = vsel %vm8226, %v8106, -inf
    %v8295 = vmax.f32 %v8293, %v8294
    %v8296 = vsel %vm8226, %v8085, -inf
    %v8297 = vsel %vm8226, %v8113, -inf
    %v8298 = vmax.f32 %v8296, %v8297
    %v8299 = vsel %vm8226, %v8120, -inf
    %v8300 = vsel %vm8226, %v8148, -inf
    %v8301 = vmax.f32 %v8299, %v8300
    %v8302 = vsel %vm8226, %v8127, -inf
    %v8303 = vsel %vm8226, %v8155, -inf
    %v8304 = vmax.f32 %v8302, %v8303
    %v8305 = vsel %vm8226, %v8134, -inf
    %v8306 = vsel %vm8226, %v8162, -inf
    %v8307 = vmax.f32 %v8305, %v8306
    %v8308 = vsel %vm8226, %v8141, -inf
    %v8309 = vsel %vm8226, %v8169, -inf
    %v8310 = vmax.f32 %v8308, %v8309
    %v8311 = vsel %vm8226, %v8176, -inf
    %v8312 = vsel %vm8226, %v8204, -inf
    %v8313 = vmax.f32 %v8311, %v8312
    %v8314 = vsel %vm8226, %v8183, -inf
    %v8315 = vsel %vm8226, %v8211, -inf
    %v8316 = vmax.f32 %v8314, %v8315
    %v8317 = vsel %vm8226, %v8190, -inf
    %v8318 = vsel %vm8226, %v8218, -inf
    %v8319 = vmax.f32 %v8317, %v8318
    %v8320 = vsel %vm8226, %v8197, -inf
    %v8321 = vsel %vm8226, %v8225, -inf
    %v8322 = vmax.f32 %v8320, %v8321
    %v8323 = vpack.c.bf16 %v8229, %v8229
    %v8324 = vpack.c.bf16 %v8232, %v8232
    %v8325 = vpack.c.bf16 %v8235, %v8235
    %v8326 = vpack.c.bf16 %v8238, %v8238
    %v8327 = vpack.c.bf16 %v8241, %v8241
    %v8328 = vpack.c.bf16 %v8244, %v8244
    %v8329 = vpack.c.bf16 %v8247, %v8247
    %v8330 = vpack.c.bf16 %v8250, %v8250
    %v8331 = vpack.c.bf16 %v8253, %v8253
    %v8332 = vpack.c.bf16 %v8256, %v8256
    %v8333 = vpack.c.bf16 %v8259, %v8259
    %v8334 = vpack.c.bf16 %v8262, %v8262
    %v8335 = vpack.c.bf16 %v8265, %v8265
    %v8336 = vpack.c.bf16 %v8268, %v8268
    %v8337 = vpack.c.bf16 %v8271, %v8271
    %v8338 = vpack.c.bf16 %v8274, %v8274
    %v8339 = vpack.c.bf16 %v8277, %v8277
    %v8340 = vpack.c.bf16 %v8280, %v8280
    %v8341 = vpack.c.bf16 %v8283, %v8283
    %v8342 = vpack.c.bf16 %v8286, %v8286
    %v8343 = vpack.c.bf16 %v8289, %v8289
    %v8344 = vpack.c.bf16 %v8292, %v8292
    %v8345 = vpack.c.bf16 %v8295, %v8295
    %v8346 = vpack.c.bf16 %v8298, %v8298
    %v8347 = vpack.c.bf16 %v8301, %v8301
    %v8348 = vpack.c.bf16 %v8304, %v8304
    %v8349 = vpack.c.bf16 %v8307, %v8307
    %v8350 = vpack.c.bf16 %v8310, %v8310
    %v8351 = vpack.c.bf16 %v8313, %v8313
    %v8352 = vpack.c.bf16 %v8316, %v8316
    %v8353 = vpack.c.bf16 %v8319, %v8319
    %v8354 = vpack.c.bf16 %v8322, %v8322
    %v8387 = vperm.slane %v8323, 0
    %v8388 = vperm.slane %v8324, 0
    %v8389 = vperm.slane %v8325, 0
    %v8390 = vperm.slane %v8326, 0
    %v8391 = vperm.slane %v8327, 0
    %v8392 = vperm.slane %v8328, 0
    %v8393 = vperm.slane %v8329, 0
    %v8394 = vperm.slane %v8330, 0
    %v8395 = vperm.slane %v8331, 0
    %v8396 = vperm.slane %v8332, 0
    %v8397 = vperm.slane %v8333, 0
    %v8398 = vperm.slane %v8334, 0
    %v8399 = vperm.slane %v8335, 0
    %v8400 = vperm.slane %v8336, 0
    %v8401 = vperm.slane %v8337, 0
    %v8402 = vperm.slane %v8338, 0
    %v8403 = vperm.slane %v8339, 0
    %v8404 = vperm.slane %v8340, 0
    %v8405 = vperm.slane %v8341, 0
    %v8406 = vperm.slane %v8342, 0
    %v8407 = vperm.slane %v8343, 0
    %v8408 = vperm.slane %v8344, 0
    %v8409 = vperm.slane %v8345, 0
    %v8410 = vperm.slane %v8346, 0
    %v8411 = vperm.slane %v8347, 0
    %v8412 = vperm.slane %v8348, 0
    %v8413 = vperm.slane %v8349, 0
    %v8414 = vperm.slane %v8350, 0
    %v8415 = vperm.slane %v8351, 0
    %v8416 = vperm.slane %v8352, 0
    %v8417 = vperm.slane %v8353, 0
    %v8418 = vperm.slane %v8354, 0
    %v8419 = vunpack.c.l.b16 %v8387
    %v8420 = vunpack.c.l.b16 %v8388
    %v8421 = vunpack.c.l.b16 %v8389
    %v8422 = vunpack.c.l.b16 %v8390
    %v8423 = vunpack.c.l.b16 %v8391
    %v8424 = vunpack.c.l.b16 %v8392
    %v8425 = vunpack.c.l.b16 %v8393
    %v8426 = vunpack.c.l.b16 %v8394
    %v8427 = vunpack.c.l.b16 %v8395
    %v8428 = vunpack.c.l.b16 %v8396
    %v8429 = vunpack.c.l.b16 %v8397
    %v8430 = vunpack.c.l.b16 %v8398
    %v8431 = vunpack.c.l.b16 %v8399
    %v8432 = vunpack.c.l.b16 %v8400
    %v8433 = vunpack.c.l.b16 %v8401
    %v8434 = vunpack.c.l.b16 %v8402
    %v8435 = vunpack.c.l.b16 %v8403
    %v8436 = vunpack.c.l.b16 %v8404
    %v8437 = vunpack.c.l.b16 %v8405
    %v8438 = vunpack.c.l.b16 %v8406
    %v8439 = vunpack.c.l.b16 %v8407
    %v8440 = vunpack.c.l.b16 %v8408
    %v8441 = vunpack.c.l.b16 %v8409
    %v8442 = vunpack.c.l.b16 %v8410
    %v8443 = vunpack.c.l.b16 %v8411
    %v8444 = vunpack.c.l.b16 %v8412
    %v8445 = vunpack.c.l.b16 %v8413
    %v8446 = vunpack.c.l.b16 %v8414
    %v8447 = vunpack.c.l.b16 %v8415
    %v8448 = vunpack.c.l.b16 %v8416
    %v8449 = vunpack.c.l.b16 %v8417
    %v8450 = vunpack.c.l.b16 %v8418
    %v8451 = vsel %vm5959, %v8420, %v8419
    %v8452 = vsel %vm5961, %v8421, %v8451
    %v8453 = vsel %vm5963, %v8422, %v8452
    %v8454 = vsel %vm5959, %v8424, %v8423
    %v8455 = vsel %vm5961, %v8425, %v8454
    %v8456 = vsel %vm5963, %v8426, %v8455
    %v8457 = vsel %vm5959, %v8428, %v8427
    %v8458 = vsel %vm5961, %v8429, %v8457
    %v8459 = vsel %vm5963, %v8430, %v8458
    %v8460 = vsel %vm5959, %v8432, %v8431
    %v8461 = vsel %vm5961, %v8433, %v8460
    %v8462 = vsel %vm5963, %v8434, %v8461
    %v8463 = vsel %vm5959, %v8436, %v8435
    %v8464 = vsel %vm5961, %v8437, %v8463
    %v8465 = vsel %vm5963, %v8438, %v8464
    %v8466 = vsel %vm5959, %v8440, %v8439
    %v8467 = vsel %vm5961, %v8441, %v8466
    %v8468 = vsel %vm5963, %v8442, %v8467
    %v8469 = vsel %vm5959, %v8444, %v8443
    %v8470 = vsel %vm5961, %v8445, %v8469
    %v8471 = vsel %vm5963, %v8446, %v8470
    %v8472 = vsel %vm5959, %v8448, %v8447
    %v8473 = vsel %vm5961, %v8449, %v8472
    %v8474 = vsel %vm5963, %v8450, %v8473
    %v8475 = vpack.c.b16 %v8453, %v8453
    %v8476 = vpack.c.b16 %v8456, %v8456
    %v8477 = vpack.c.b16 %v8459, %v8459
    %v8478 = vpack.c.b16 %v8462, %v8462
    %v8479 = vpack.c.b16 %v8465, %v8465
    %v8480 = vpack.c.b16 %v8468, %v8468
    %v8481 = vpack.c.b16 %v8471, %v8471
    %v8482 = vpack.c.b16 %v8474, %v8474
    %v8484 = vshrl.u32 %v8475, 16
    %v8486 = vrot.slane %v8484, 7
    %v8487 = vshll.u32 %v8475, 16
    %v8489 = vor.u32 %v8486, %v8487
    %v8491 = vshrl.u32 %v8476, 16
    %v8493 = vrot.slane %v8491, 7
    %v8494 = vshll.u32 %v8476, 16
    %v8496 = vor.u32 %v8493, %v8494
    %v8498 = vshrl.u32 %v8477, 16
    %v8500 = vrot.slane %v8498, 7
    %v8501 = vshll.u32 %v8477, 16
    %v8503 = vor.u32 %v8500, %v8501
    %v8505 = vshrl.u32 %v8478, 16
    %v8507 = vrot.slane %v8505, 7
    %v8508 = vshll.u32 %v8478, 16
    %v8510 = vor.u32 %v8507, %v8508
    %v8512 = vshrl.u32 %v8479, 16
    %v8514 = vrot.slane %v8512, 7
    %v8515 = vshll.u32 %v8479, 16
    %v8517 = vor.u32 %v8514, %v8515
    %v8519 = vshrl.u32 %v8480, 16
    %v8521 = vrot.slane %v8519, 7
    %v8522 = vshll.u32 %v8480, 16
    %v8524 = vor.u32 %v8521, %v8522
    %v8526 = vshrl.u32 %v8481, 16
    %v8528 = vrot.slane %v8526, 7
    %v8529 = vshll.u32 %v8481, 16
    %v8531 = vor.u32 %v8528, %v8529
    %v8533 = vshrl.u32 %v8482, 16
    %v8535 = vrot.slane %v8533, 7
    %v8536 = vshll.u32 %v8482, 16
    %v8538 = vor.u32 %v8535, %v8536
    %v8547 = vsel %vm6232, 0, %v8489
    %v8548 = vsel %vm6232, 0, %v8496
    %v8549 = vsel %vm6232, 0, %v8503
    %v8550 = vsel %vm6232, 0, %v8510
    %v8551 = vsel %vm6232, 0, %v8517
    %v8552 = vsel %vm6232, 0, %v8524
    %v8553 = vsel %vm6232, 0, %v8531
    %v8554 = vsel %vm6232, 0, %v8538
    %vm8555 = vsmask.f32 2304
    %vm8556 = vmand %vm6767, %vm8555
    %v8557 = vsel %vm8556, %v6233, 0
    %v8558 = vsel %vm8556, %v8547, 0
    %v8559 = vsel %vm8556, %v8548, 0
    %v8560 = vsel %vm8556, %v8549, 0
    %v8561 = vsel %vm8556, %v8550, 0
    %v8562 = vsel %vm8556, %v8551, 0
    %v8563 = vsel %vm8556, %v8552, 0
    %v8564 = vsel %vm8556, %v8553, 0
    %v8565 = vsel %vm8556, %v8554, 0
    %v8566 = vld [vmem:[#allocation2] sm:$0xf]
    %v8567 = vld [vmem:[#allocation2 + $0x4] sm:$0xf]
    %v8568 = vld [vmem:[#allocation2 + $0x8] sm:$0xf]
    %v8569 = vld [vmem:[#allocation2 + $0xc] sm:$0xf]
    %v8570 = vld [vmem:[#allocation2 + $0x10] sm:$0xf]
    %v8571 = vld [vmem:[#allocation2 + $0x14] sm:$0xf]
    %v8572 = vld [vmem:[#allocation2 + $0x18] sm:$0xf]
    %v8573 = vld [vmem:[#allocation2 + $0x1c] sm:$0xf]
    %v8581 = vrot.slane %v8557, 2
    %v8582 = vrot.slane %v8558, 2
    %v8583 = vrot.slane %v8559, 2
    %v8584 = vrot.slane %v8560, 2
    %v8585 = vrot.slane %v8562, 2
    %v8586 = vrot.slane %v8563, 2
    %v8587 = vrot.slane %v8564, 2
    %vm8588 = vsmask.f32 1280
    %vm8589 = vsmask.f32 3336
    %vm8590 = vmor %vm8588, %vm8589
    %vm8591 = vsmask.f32 5392
    %vm8592 = vmor %vm8590, %vm8591
    %vm8593 = vsmask.f32 7448
    %vm8594 = vmor %vm8592, %vm8593
    %v8596 = vshrl.u32 %v8557, 16
    %v8598 = vrot.slane %v8596, 6
    %v8599 = vshll.u32 %v8557, 16
    %v8601 = vrot.slane %v8599, 7
    %v8602 = vor.u32 %v8598, %v8601
    %v8603 = vrot.slane %v8602, 2
    %v8605 = vshll.u32 %v8581, 16
    %v8607 = vrot.slane %v8605, 7
    %v8608 = vsel %vm8594, %v8603, %v8607
    %v8610 = vshrl.u32 %v8558, 16
    %v8612 = vrot.slane %v8610, 6
    %v8613 = vshll.u32 %v8558, 16
    %v8615 = vrot.slane %v8613, 7
    %v8616 = vor.u32 %v8612, %v8615
    %v8617 = vrot.slane %v8616, 2
    %v8619 = vshll.u32 %v8582, 16
    %v8621 = vrot.slane %v8619, 7
    %v8622 = vsel %vm8594, %v8617, %v8621
    %v8624 = vshrl.u32 %v8559, 16
    %v8626 = vrot.slane %v8624, 6
    %v8627 = vshll.u32 %v8559, 16
    %v8629 = vrot.slane %v8627, 7
    %v8630 = vor.u32 %v8626, %v8629
    %v8631 = vrot.slane %v8630, 2
    %v8633 = vshll.u32 %v8583, 16
    %v8635 = vrot.slane %v8633, 7
    %v8636 = vsel %vm8594, %v8631, %v8635
    %v8638 = vshrl.u32 %v8560, 16
    %v8640 = vrot.slane %v8638, 6
    %v8641 = vshll.u32 %v8560, 16
    %v8643 = vrot.slane %v8641, 7
    %v8644 = vor.u32 %v8640, %v8643
    %v8645 = vrot.slane %v8644, 2
    %v8647 = vshll.u32 %v8584, 16
    %v8649 = vrot.slane %v8647, 7
    %v8650 = vsel %vm8594, %v8645, %v8649
    %v8652 = vshrl.u32 %v8562, 16
    %v8654 = vrot.slane %v8652, 6
    %v8655 = vshll.u32 %v8562, 16
    %v8657 = vrot.slane %v8655, 7
    %v8658 = vor.u32 %v8654, %v8657
    %v8659 = vrot.slane %v8658, 2
    %v8661 = vshll.u32 %v8585, 16
    %v8663 = vrot.slane %v8661, 7
    %v8664 = vsel %vm8594, %v8659, %v8663
    %v8666 = vshrl.u32 %v8563, 16
    %v8668 = vrot.slane %v8666, 6
    %v8669 = vshll.u32 %v8563, 16
    %v8671 = vrot.slane %v8669, 7
    %v8672 = vor.u32 %v8668, %v8671
    %v8673 = vrot.slane %v8672, 2
    %v8675 = vshll.u32 %v8586, 16
    %v8677 = vrot.slane %v8675, 7
    %v8678 = vsel %vm8594, %v8673, %v8677
    %v8680 = vshrl.u32 %v8564, 16
    %v8682 = vrot.slane %v8680, 6
    %v8683 = vshll.u32 %v8564, 16
    %v8685 = vrot.slane %v8683, 7
    %v8686 = vor.u32 %v8682, %v8685
    %v8687 = vrot.slane %v8686, 2
    %v8689 = vshll.u32 %v8587, 16
    %v8691 = vrot.slane %v8689, 7
    %v8692 = vsel %vm8594, %v8687, %v8691
    %v8693 = vld [vmem:[#allocation2 + $0x20] sm:$0xf]
    %v8694 = vld [vmem:[#allocation2 + $0x24] sm:$0xf]
    %v8695 = vld [vmem:[#allocation2 + $0x28] sm:$0xf]
    %v8696 = vld [vmem:[#allocation2 + $0x2c] sm:$0xf]
    %v8697 = vld [vmem:[#allocation2 + $0x30] sm:$0xf]
    %v8698 = vld [vmem:[#allocation2 + $0x34] sm:$0xf]
    %v8699 = vld [vmem:[#allocation2 + $0x38] sm:$0xf]
    %v8700 = vld [vmem:[#allocation2 + $0x3c] sm:$0xf]
    %8702 = vst [vmem:[#allocation1] ss:$4 sm:$0xff] %v8608
    %s8704 = scalar_lea.vmem [#allocation1], 1
    %8705 = vst [vmem:[%s8704] ss:$4 sm:$0xff] %v8622
    %s8707 = scalar_lea.vmem [#allocation1], 2
    %8708 = vst [vmem:[%s8707] ss:$4 sm:$0xff] %v8636
    %s8710 = scalar_lea.vmem [#allocation1], 3
    %8711 = vst [vmem:[%s8710] ss:$4 sm:$0xff] %v8650
    %s8712 = scalar_lea.vmem [#allocation1], 32
    %8713 = vst [vmem:[%s8712] ss:$4 sm:$0xff] %v8608
    %s8715 = scalar_lea.vmem [#allocation1], 33
    %8716 = vst [vmem:[%s8715] ss:$4 sm:$0xff] %v8664
    %s8718 = scalar_lea.vmem [#allocation1], 34
    %8719 = vst [vmem:[%s8718] ss:$4 sm:$0xff] %v8678
    %s8721 = scalar_lea.vmem [#allocation1], 35
    %8722 = vst [vmem:[%s8721] ss:$4 sm:$0xff] %v8692
    %v8723 = vld.sshfl [vmem:[#allocation1] sm:$0xff pattern:$0x73625140]
    %v8724 = vld.sshfl [vmem:[#allocation1 + $0x20] sm:$0xff pattern:$0x73625140]
    %v8733 = vunpack.c.l.b16 %v8693
    %v8734 = vunpack.c.l.b16 %v8694
    %v8735 = vunpack.c.l.b16 %v8695
    %v8736 = vunpack.c.l.b16 %v8696
    %v8737 = vunpack.c.l.b16 %v8697
    %v8738 = vunpack.c.l.b16 %v8698
    %v8739 = vunpack.c.l.b16 %v8699
    %v8740 = vunpack.c.l.b16 %v8700
    %v8741 = vpack.c.b16 %v8734, %v8733
    %v8742 = vpack.c.b16 %v8736, %v8735
    %v8743 = vpack.c.b16 %v8738, %v8737
    %v8744 = vpack.c.b16 %v8740, %v8739
    %v8749 = vsel %vm8226, %v8723, 0
    %v8751 = vsel %vm8226, %v8724, 0
    %8753 = vmatpush.bf16.msra.mxu0 0
    %8754 = vmatpush.bf16.msra.mxu0 0
    %8755 = vmatpush.bf16.msra.mxu0 0
    %8756 = vmatpush.bf16.msra.mxu0 0
    %8757 = vmatpush.bf16.msra.mxu0 %v8744
    %8758 = vmatpush.bf16.msra.mxu0 %v8743
    %8759 = vmatpush.bf16.msra.mxu0 %v8742
    %8760 = vmatpush.bf16.msra.mxu0 %v8741
    %8761 = vmatmul.bf16.gmra.mxu0 %v8749
    %v8762 = vpop.f32.mrf.mxu0
    %v8763 = vadd.f32 0.0, %v8762
    %v8764 = vpop.f32.mrf.mxu0
    %v8765 = vadd.f32 0.0, %v8764
    %8766 = vmatmul.bf16.gmra.mxu0 %v8751
    %v8767 = vpop.f32.mrf.mxu0
    %v8768 = vadd.f32 0.0, %v8767
    %v8769 = vpop.f32.mrf.mxu0
    %v8770 = vadd.f32 0.0, %v8769
    %8771 = vdwg.mxu0
    %8772 = vst [vmem:[#allocation1] ss:$4 sm:$0xff] %v8557
    %s8773 = scalar_lea.vmem [#allocation1], 1
    %8774 = vst [vmem:[%s8773] ss:$4 sm:$0xff] %v8558
    %s8775 = scalar_lea.vmem [#allocation1], 2
    %8776 = vst [vmem:[%s8775] ss:$4 sm:$0xff] %v8559
    %s8777 = scalar_lea.vmem [#allocation1], 3
    %8778 = vst [vmem:[%s8777] ss:$4 sm:$0xff] %v8560
    %s8779 = scalar_lea.vmem [#allocation1], 32
    %8780 = vst [vmem:[%s8779] ss:$4 sm:$0xff] %v8557
    %s8781 = scalar_lea.vmem [#allocation1], 33
    %8782 = vst [vmem:[%s8781] ss:$4 sm:$0xff] %v8562
    %s8783 = scalar_lea.vmem [#allocation1], 34
    %8784 = vst [vmem:[%s8783] ss:$4 sm:$0xff] %v8563
    %s8785 = scalar_lea.vmem [#allocation1], 35
    %8786 = vst [vmem:[%s8785] ss:$4 sm:$0xff] %v8564
    %v8787 = vld.sshfl [vmem:[#allocation1] sm:$0xff pattern:$0x73625140]
    %v8788 = vld.sshfl [vmem:[#allocation1 + $0x20] sm:$0xff pattern:$0x73625140]
    %v8797 = vunpack.c.l.b16 %v8566
    %v8798 = vunpack.c.l.b16 %v8567
    %v8799 = vunpack.c.l.b16 %v8568
    %v8800 = vunpack.c.l.b16 %v8569
    %v8801 = vunpack.c.l.b16 %v8570
    %v8802 = vunpack.c.l.b16 %v8571
    %v8803 = vunpack.c.l.b16 %v8572
    %v8804 = vunpack.c.l.b16 %v8573
    %v8805 = vpack.c.b16 %v8798, %v8797
    %v8806 = vpack.c.b16 %v8800, %v8799
    %v8807 = vpack.c.b16 %v8802, %v8801
    %v8808 = vpack.c.b16 %v8804, %v8803
    %v8813 = vsel %vm8226, %v8787, 0
    %v8815 = vsel %vm8226, %v8788, 0
    %8817 = vmatpush.bf16.msra.mxu0 0
    %8818 = vmatpush.bf16.msra.mxu0 0
    %8819 = vmatpush.bf16.msra.mxu0 0
    %8820 = vmatpush.bf16.msra.mxu0 0
    %8821 = vmatpush.bf16.msra.mxu0 %v8808
    %8822 = vmatpush.bf16.msra.mxu0 %v8807
    %8823 = vmatpush.bf16.msra.mxu0 %v8806
    %8824 = vmatpush.bf16.msra.mxu0 %v8805
    %8825 = vmatmul.bf16.gmra.mxu0 %v8813
    %v8826 = vpop.f32.mrf.mxu0
    %v8827 = vadd.f32 %v8763, %v8826
    %v8828 = vpop.f32.mrf.mxu0
    %v8829 = vadd.f32 %v8765, %v8828
    %8830 = vmatmul.bf16.gmra.mxu0 %v8815
    %v8831 = vpop.f32.mrf.mxu0
    %v8832 = vadd.f32 %v8768, %v8831
    %v8833 = vpop.f32.mrf.mxu0
    %v8834 = vadd.f32 %v8770, %v8833
    %8835 = vdwg.mxu0
    %vm8836 = vcmask 1042434
    %vm8837 = vmor %vm6230, %vm8836
    %vm8838 = vcmask 1044484
    %vm8839 = vmor %vm8837, %vm8838
    %vm8840 = vcmask 1046534
    %vm8841 = vmor %vm8839, %vm8840
    %v8842 = vrot.slane %v8557, 7
    %v8843 = vrot.slane %v8842, 2
    %v8844 = vrot.slane %v8581, 7
    %v8845 = vsel %vm8841, %v8843, %v8844
    %v8846 = vrot.slane %v8558, 7
    %v8847 = vrot.slane %v8846, 2
    %v8848 = vrot.slane %v8582, 7
    %v8849 = vsel %vm8841, %v8847, %v8848
    %v8850 = vrot.slane %v8559, 7
    %v8851 = vrot.slane %v8850, 2
    %v8852 = vrot.slane %v8583, 7
    %v8853 = vsel %vm8841, %v8851, %v8852
    %v8854 = vrot.slane %v8560, 7
    %v8855 = vrot.slane %v8854, 2
    %v8856 = vrot.slane %v8584, 7
    %v8857 = vsel %vm8841, %v8855, %v8856
    %v8858 = vrot.slane %v8562, 7
    %v8859 = vrot.slane %v8858, 2
    %v8860 = vrot.slane %v8585, 7
    %v8861 = vsel %vm8841, %v8859, %v8860
    %v8862 = vrot.slane %v8563, 7
    %v8863 = vrot.slane %v8862, 2
    %v8864 = vrot.slane %v8586, 7
    %v8865 = vsel %vm8841, %v8863, %v8864
    %v8866 = vrot.slane %v8564, 7
    %v8867 = vrot.slane %v8866, 2
    %v8868 = vrot.slane %v8587, 7
    %v8869 = vsel %vm8841, %v8867, %v8868
    %v8870 = vld [vmem:[#allocation2 + $0x40] sm:$0xf]
    %v8871 = vld [vmem:[#allocation2 + $0x44] sm:$0xf]
    %v8872 = vld [vmem:[#allocation2 + $0x48] sm:$0xf]
    %v8873 = vld [vmem:[#allocation2 + $0x4c] sm:$0xf]
    %v8874 = vld [vmem:[#allocation2 + $0x50] sm:$0xf]
    %v8875 = vld [vmem:[#allocation2 + $0x54] sm:$0xf]
    %v8876 = vld [vmem:[#allocation2 + $0x58] sm:$0xf]
    %v8877 = vld [vmem:[#allocation2 + $0x5c] sm:$0xf]
    %8879 = vst [vmem:[#allocation1] ss:$4 sm:$0xff] %v8845
    %s8881 = scalar_lea.vmem [#allocation1], 1
    %8882 = vst [vmem:[%s8881] ss:$4 sm:$0xff] %v8849
    %s8884 = scalar_lea.vmem [#allocation1], 2
    %8885 = vst [vmem:[%s8884] ss:$4 sm:$0xff] %v8853
    %s8887 = scalar_lea.vmem [#allocation1], 3
    %8888 = vst [vmem:[%s8887] ss:$4 sm:$0xff] %v8857
    %s8889 = scalar_lea.vmem [#allocation1], 32
    %8890 = vst [vmem:[%s8889] ss:$4 sm:$0xff] %v8845
    %s8892 = scalar_lea.vmem [#allocation1], 33
    %8893 = vst [vmem:[%s8892] ss:$4 sm:$0xff] %v8861
    %s8895 = scalar_lea.vmem [#allocation1], 34
    %8896 = vst [vmem:[%s8895] ss:$4 sm:$0xff] %v8865
    %s8898 = scalar_lea.vmem [#allocation1], 35
    %8899 = vst [vmem:[%s8898] ss:$4 sm:$0xff] %v8869
    %v8900 = vld.sshfl [vmem:[#allocation1] sm:$0xff pattern:$0x73625140]
    %v8901 = vld.sshfl [vmem:[#allocation1 + $0x20] sm:$0xff pattern:$0x73625140]
    %v8910 = vunpack.c.l.b16 %v8870
    %v8911 = vunpack.c.l.b16 %v8871
    %v8912 = vunpack.c.l.b16 %v8872
    %v8913 = vunpack.c.l.b16 %v8873
    %v8914 = vunpack.c.l.b16 %v8874
    %v8915 = vunpack.c.l.b16 %v8875
    %v8916 = vunpack.c.l.b16 %v8876
    %v8917 = vunpack.c.l.b16 %v8877
    %v8918 = vpack.c.b16 %v8911, %v8910
    %v8919 = vpack.c.b16 %v8913, %v8912
    %v8920 = vpack.c.b16 %v8915, %v8914
    %v8921 = vpack.c.b16 %v8917, %v8916
    %v8926 = vsel %vm8226, %v8900, 0
    %v8928 = vsel %vm8226, %v8901, 0
    %8930 = vmatpush.bf16.msra.mxu0 0
    %8931 = vmatpush.bf16.msra.mxu0 0
    %8932 = vmatpush.bf16.msra.mxu0 0
    %8933 = vmatpush.bf16.msra.mxu0 0
    %8934 = vmatpush.bf16.msra.mxu0 %v8921
    %8935 = vmatpush.bf16.msra.mxu0 %v8920
    %8936 = vmatpush.bf16.msra.mxu0 %v8919
    %8937 = vmatpush.bf16.msra.mxu0 %v8918
    %8938 = vmatmul.bf16.gmra.mxu0 %v8926
    %v8939 = vpop.f32.mrf.mxu0
    %v8940 = vadd.f32 0.0, %v8939
    %v8941 = vpop.f32.mrf.mxu0
    %v8942 = vadd.f32 0.0, %v8941
    %8943 = vmatmul.bf16.gmra.mxu0 %v8928
    %v8944 = vpop.f32.mrf.mxu0
    %v8945 = vadd.f32 0.0, %v8944
    %v8946 = vpop.f32.mrf.mxu0
    %v8947 = vadd.f32 0.0, %v8946
    %8948 = vdwg.mxu0
    %v8949 = vadd.f32 %v8827, %v8940
    %v8950 = vadd.f32 %v8829, %v8942
    %v8951 = vadd.f32 %v8832, %v8945
    %v8952 = vadd.f32 %v8834, %v8947
    %v8953 = vld [vmem:[#allocation2 + $0x60] sm:$0xf]
    %v8954 = vld [vmem:[#allocation2 + $0x64] sm:$0xf]
    %v8955 = vld [vmem:[#allocation2 + $0x68] sm:$0xf]
    %v8956 = vld [vmem:[#allocation2 + $0x6c] sm:$0xf]
    %v8957 = vld [vmem:[#allocation2 + $0x70] sm:$0xf]
    %v8958 = vld [vmem:[#allocation2 + $0x74] sm:$0xf]
    %v8959 = vld [vmem:[#allocation2 + $0x78] sm:$0xf]
    %v8960 = vld [vmem:[#allocation2 + $0x7c] sm:$0xf]
    %8961 = vst [vmem:[#allocation1] ss:$4 sm:$0xff] %v8558
    %s8962 = scalar_lea.vmem [#allocation1], 1
    %8963 = vst [vmem:[%s8962] ss:$4 sm:$0xff] %v8559
    %s8964 = scalar_lea.vmem [#allocation1], 2
    %8965 = vst [vmem:[%s8964] ss:$4 sm:$0xff] %v8560
    %s8967 = scalar_lea.vmem [#allocation1], 3
    %8968 = vst [vmem:[%s8967] ss:$4 sm:$0xff] %v8561
    %s8969 = scalar_lea.vmem [#allocation1], 32
    %8970 = vst [vmem:[%s8969] ss:$4 sm:$0xff] %v8562
    %s8971 = scalar_lea.vmem [#allocation1], 33
    %8972 = vst [vmem:[%s8971] ss:$4 sm:$0xff] %v8563
    %s8973 = scalar_lea.vmem [#allocation1], 34
    %8974 = vst [vmem:[%s8973] ss:$4 sm:$0xff] %v8564
    %s8976 = scalar_lea.vmem [#allocation1], 35
    %8977 = vst [vmem:[%s8976] ss:$4 sm:$0xff] %v8565
    %v8978 = vld.sshfl [vmem:[#allocation1] sm:$0xff pattern:$0x73625140]
    %v8979 = vld.sshfl [vmem:[#allocation1 + $0x20] sm:$0xff pattern:$0x73625140]
    %v8988 = vunpack.c.l.b16 %v8953
    %v8989 = vunpack.c.l.b16 %v8954
    %v8990 = vunpack.c.l.b16 %v8955
    %v8991 = vunpack.c.l.b16 %v8956
    %v8992 = vunpack.c.l.b16 %v8957
    %v8993 = vunpack.c.l.b16 %v8958
    %v8994 = vunpack.c.l.b16 %v8959
    %v8995 = vunpack.c.l.b16 %v8960
    %v8996 = vpack.c.b16 %v8989, %v8988
    %v8997 = vpack.c.b16 %v8991, %v8990
    %v8998 = vpack.c.b16 %v8993, %v8992
    %v8999 = vpack.c.b16 %v8995, %v8994
    %v9004 = vsel %vm8226, %v8978, 0
    %v9006 = vsel %vm8226, %v8979, 0
    %9008 = vmatpush.bf16.msra.mxu0 0
    %9009 = vmatpush.bf16.msra.mxu0 0
    %9010 = vmatpush.bf16.msra.mxu0 0
    %9011 = vmatpush.bf16.msra.mxu0 0
    %9012 = vmatpush.bf16.msra.mxu0 %v8999
    %9013 = vmatpush.bf16.msra.mxu0 %v8998
    %9014 = vmatpush.bf16.msra.mxu0 %v8997
    %9015 = vmatpush.bf16.msra.mxu0 %v8996
    %9016 = vmatmul.bf16.gmra.mxu0 %v9004
    %v9017 = vpop.f32.mrf.mxu0
    %v9018 = vadd.f32 0.0, %v9017
    %v9019 = vpop.f32.mrf.mxu0
    %v9020 = vadd.f32 0.0, %v9019
    %9021 = vmatmul.bf16.gmra.mxu0 %v9006
    %v9022 = vpop.f32.mrf.mxu0
    %v9023 = vadd.f32 0.0, %v9022
    %v9024 = vpop.f32.mrf.mxu0
    %v9025 = vadd.f32 0.0, %v9024
    %9026 = vdwg.mxu0
    %v9027 = vadd.f32 %v8949, %v9018
    %v9028 = vadd.f32 %v8950, %v9020
    %v9029 = vadd.f32 %v8951, %v9023
    %v9030 = vadd.f32 %v8952, %v9025
    %v9033 = vrot.slane %v8561, 2
    %v9034 = vrot.slane %v8565, 2
    %v9035 = vshrl.u32 %v8561, 16
    %v9037 = vrot.slane %v9035, 6
    %v9038 = vshll.u32 %v8561, 16
    %v9040 = vrot.slane %v9038, 7
    %v9041 = vor.u32 %v9037, %v9040
    %v9042 = vrot.slane %v9041, 2
    %v9044 = vshll.u32 %v9033, 16
    %v9046 = vrot.slane %v9044, 7
    %v9047 = vsel %vm8594, %v9042, %v9046
    %v9048 = vshrl.u32 %v8565, 16
    %v9050 = vrot.slane %v9048, 6
    %v9051 = vshll.u32 %v8565, 16
    %v9053 = vrot.slane %v9051, 7
    %v9054 = vor.u32 %v9050, %v9053
    %v9055 = vrot.slane %v9054, 2
    %v9057 = vshll.u32 %v9034, 16
    %v9059 = vrot.slane %v9057, 7
    %v9060 = vsel %vm8594, %v9055, %v9059
    %v9061 = vld [vmem:[#allocation2 + $0x80] sm:$0xf]
    %v9062 = vld [vmem:[#allocation2 + $0x84] sm:$0xf]
    %v9063 = vld [vmem:[#allocation2 + $0x88] sm:$0xf]
    %v9064 = vld [vmem:[#allocation2 + $0x8c] sm:$0xf]
    %v9065 = vld [vmem:[#allocation2 + $0x90] sm:$0xf]
    %v9066 = vld [vmem:[#allocation2 + $0x94] sm:$0xf]
    %v9067 = vld [vmem:[#allocation2 + $0x98] sm:$0xf]
    %v9068 = vld [vmem:[#allocation2 + $0x9c] sm:$0xf]
    %9069 = vst [vmem:[#allocation1] ss:$4 sm:$0xff] %v8622
    %s9070 = scalar_lea.vmem [#allocation1], 1
    %9071 = vst [vmem:[%s9070] ss:$4 sm:$0xff] %v8636
    %s9072 = scalar_lea.vmem [#allocation1], 2
    %9073 = vst [vmem:[%s9072] ss:$4 sm:$0xff] %v8650
    %s9075 = scalar_lea.vmem [#allocation1], 3
    %9076 = vst [vmem:[%s9075] ss:$4 sm:$0xff] %v9047
    %s9077 = scalar_lea.vmem [#allocation1], 32
    %9078 = vst [vmem:[%s9077] ss:$4 sm:$0xff] %v8664
    %s9079 = scalar_lea.vmem [#allocation1], 33
    %9080 = vst [vmem:[%s9079] ss:$4 sm:$0xff] %v8678
    %s9081 = scalar_lea.vmem [#allocation1], 34
    %9082 = vst [vmem:[%s9081] ss:$4 sm:$0xff] %v8692
    %s9084 = scalar_lea.vmem [#allocation1], 35
    %9085 = vst [vmem:[%s9084] ss:$4 sm:$0xff] %v9060
    %v9086 = vld.sshfl [vmem:[#allocation1] sm:$0xff pattern:$0x73625140]
    %v9087 = vld.sshfl [vmem:[#allocation1 + $0x20] sm:$0xff pattern:$0x73625140]
    %v9096 = vunpack.c.l.b16 %v9061
    %v9097 = vunpack.c.l.b16 %v9062
    %v9098 = vunpack.c.l.b16 %v9063
    %v9099 = vunpack.c.l.b16 %v9064
    %v9100 = vunpack.c.l.b16 %v9065
    %v9101 = vunpack.c.l.b16 %v9066
    %v9102 = vunpack.c.l.b16 %v9067
    %v9103 = vunpack.c.l.b16 %v9068
    %v9104 = vpack.c.b16 %v9097, %v9096
    %v9105 = vpack.c.b16 %v9099, %v9098
    %v9106 = vpack.c.b16 %v9101, %v9100
    %v9107 = vpack.c.b16 %v9103, %v9102
    %v9112 = vsel %vm8226, %v9086, 0
    %v9114 = vsel %vm8226, %v9087, 0
    %9116 = vmatpush.bf16.msra.mxu0 0
    %9117 = vmatpush.bf16.msra.mxu0 0
    %9118 = vmatpush.bf16.msra.mxu0 0
    %9119 = vmatpush.bf16.msra.mxu0 0
    %9120 = vmatpush.bf16.msra.mxu0 %v9107
    %9121 = vmatpush.bf16.msra.mxu0 %v9106
    %9122 = vmatpush.bf16.msra.mxu0 %v9105
    %9123 = vmatpush.bf16.msra.mxu0 %v9104
    %9124 = vmatmul.bf16.gmra.mxu0 %v9112
    %v9125 = vpop.f32.mrf.mxu0
    %v9126 = vadd.f32 0.0, %v9125
    %v9127 = vpop.f32.mrf.mxu0
    %v9128 = vadd.f32 0.0, %v9127
    %9129 = vmatmul.bf16.gmra.mxu0 %v9114
    %v9130 = vpop.f32.mrf.mxu0
    %v9131 = vadd.f32 0.0, %v9130
    %v9132 = vpop.f32.mrf.mxu0
    %v9133 = vadd.f32 0.0, %v9132
    %9134 = vdwg.mxu0
    %v9135 = vadd.f32 %v9027, %v9126
    %v9136 = vadd.f32 %v9028, %v9128
    %v9137 = vadd.f32 %v9029, %v9131
    %v9138 = vadd.f32 %v9030, %v9133
    %v9139 = vrot.slane %v8561, 7
    %v9140 = vrot.slane %v9139, 2
    %v9141 = vrot.slane %v9033, 7
    %v9142 = vsel %vm8841, %v9140, %v9141
    %v9143 = vrot.slane %v8565, 7
    %v9144 = vrot.slane %v9143, 2
    %v9145 = vrot.slane %v9034, 7
    %v9146 = vsel %vm8841, %v9144, %v9145
    %v9147 = vld [vmem:[#allocation2 + $0xa0] sm:$0xf]
    %v9148 = vld [vmem:[#allocation2 + $0xa4] sm:$0xf]
    %v9149 = vld [vmem:[#allocation2 + $0xa8] sm:$0xf]
    %v9150 = vld [vmem:[#allocation2 + $0xac] sm:$0xf]
    %v9151 = vld [vmem:[#allocation2 + $0xb0] sm:$0xf]
    %v9152 = vld [vmem:[#allocation2 + $0xb4] sm:$0xf]
    %v9153 = vld [vmem:[#allocation2 + $0xb8] sm:$0xf]
    %v9154 = vld [vmem:[#allocation2 + $0xbc] sm:$0xf]
    %9155 = vst [vmem:[#allocation1] ss:$4 sm:$0xff] %v8849
    %s9156 = scalar_lea.vmem [#allocation1], 1
    %9157 = vst [vmem:[%s9156] ss:$4 sm:$0xff] %v8853
    %s9158 = scalar_lea.vmem [#allocation1], 2
    %9159 = vst [vmem:[%s9158] ss:$4 sm:$0xff] %v8857
    %s9161 = scalar_lea.vmem [#allocation1], 3
    %9162 = vst [vmem:[%s9161] ss:$4 sm:$0xff] %v9142
    %s9163 = scalar_lea.vmem [#allocation1], 32
    %9164 = vst [vmem:[%s9163] ss:$4 sm:$0xff] %v8861
    %s9165 = scalar_lea.vmem [#allocation1], 33
    %9166 = vst [vmem:[%s9165] ss:$4 sm:$0xff] %v8865
    %s9167 = scalar_lea.vmem [#allocation1], 34
    %9168 = vst [vmem:[%s9167] ss:$4 sm:$0xff] %v8869
    %s9170 = scalar_lea.vmem [#allocation1], 35
    %9171 = vst [vmem:[%s9170] ss:$4 sm:$0xff] %v9146
    %v9172 = vld.sshfl [vmem:[#allocation1] sm:$0xff pattern:$0x73625140]
    %v9173 = vld.sshfl [vmem:[#allocation1 + $0x20] sm:$0xff pattern:$0x73625140]
    %v9182 = vunpack.c.l.b16 %v9147
    %v9183 = vunpack.c.l.b16 %v9148
    %v9184 = vunpack.c.l.b16 %v9149
    %v9185 = vunpack.c.l.b16 %v9150
    %v9186 = vunpack.c.l.b16 %v9151
    %v9187 = vunpack.c.l.b16 %v9152
    %v9188 = vunpack.c.l.b16 %v9153
    %v9189 = vunpack.c.l.b16 %v9154
    %v9190 = vpack.c.b16 %v9183, %v9182
    %v9191 = vpack.c.b16 %v9185, %v9184
    %v9192 = vpack.c.b16 %v9187, %v9186
    %v9193 = vpack.c.b16 %v9189, %v9188
    %v9198 = vsel %vm8226, %v9172, 0
    %v9200 = vsel %vm8226, %v9173, 0
    %9202 = vmatpush.bf16.msra.mxu0 0
    %9203 = vmatpush.bf16.msra.mxu0 0
    %9204 = vmatpush.bf16.msra.mxu0 0
    %9205 = vmatpush.bf16.msra.mxu0 0
    %9206 = vmatpush.bf16.msra.mxu0 %v9193
    %9207 = vmatpush.bf16.msra.mxu0 %v9192
    %9208 = vmatpush.bf16.msra.mxu0 %v9191
    %9209 = vmatpush.bf16.msra.mxu0 %v9190
    %9210 = vmatmul.bf16.gmra.mxu0 %v9198
    %v9211 = vpop.f32.mrf.mxu0
    %v9212 = vadd.f32 0.0, %v9211
    %v9213 = vpop.f32.mrf.mxu0
    %v9214 = vadd.f32 0.0, %v9213
    %9215 = vmatmul.bf16.gmra.mxu0 %v9200
    %v9216 = vpop.f32.mrf.mxu0
    %v9217 = vadd.f32 0.0, %v9216
    %v9218 = vpop.f32.mrf.mxu0
    %v9219 = vadd.f32 0.0, %v9218
    %9220 = vdwg.mxu0
    %v9221 = vadd.f32 %v9135, %v9212
    %v9222 = vadd.f32 %v9136, %v9214
    %v9223 = vadd.f32 %v9137, %v9217
    %v9224 = vadd.f32 %v9138, %v9219
    %v9225 = vld [vmem:[#allocation2 + $0xc0] sm:$0xf]
    %v9226 = vld [vmem:[#allocation2 + $0xc4] sm:$0xf]
    %v9227 = vld [vmem:[#allocation2 + $0xc8] sm:$0xf]
    %v9228 = vld [vmem:[#allocation2 + $0xcc] sm:$0xf]
    %v9229 = vld [vmem:[#allocation2 + $0xd0] sm:$0xf]
    %v9230 = vld [vmem:[#allocation2 + $0xd4] sm:$0xf]
    %v9231 = vld [vmem:[#allocation2 + $0xd8] sm:$0xf]
    %v9232 = vld [vmem:[#allocation2 + $0xdc] sm:$0xf]
    %9233 = vst [vmem:[#allocation1] ss:$4 sm:$0xff] %v8559
    %s9234 = scalar_lea.vmem [#allocation1], 1
    %9235 = vst [vmem:[%s9234] ss:$4 sm:$0xff] %v8560
    %s9236 = scalar_lea.vmem [#allocation1], 2
    %9237 = vst [vmem:[%s9236] ss:$4 sm:$0xff] %v8561
    %s9238 = scalar_lea.vmem [#allocation1], 3
    %9239 = vst [vmem:[%s9238] ss:$4 sm:$0xff] %v8557
    %s9240 = scalar_lea.vmem [#allocation1], 32
    %9241 = vst [vmem:[%s9240] ss:$4 sm:$0xff] %v8563
    %s9242 = scalar_lea.vmem [#allocation1], 33
    %9243 = vst [vmem:[%s9242] ss:$4 sm:$0xff] %v8564
    %s9244 = scalar_lea.vmem [#allocation1], 34
    %9245 = vst [vmem:[%s9244] ss:$4 sm:$0xff] %v8565
    %s9246 = scalar_lea.vmem [#allocation1], 35
    %9247 = vst [vmem:[%s9246] ss:$4 sm:$0xff] %v8557
    %v9248 = vld.sshfl [vmem:[#allocation1] sm:$0xff pattern:$0x73625140]
    %v9249 = vld.sshfl [vmem:[#allocation1 + $0x20] sm:$0xff pattern:$0x73625140]
    %v9258 = vunpack.c.l.b16 %v9225
    %v9259 = vunpack.c.l.b16 %v9226
    %v9260 = vunpack.c.l.b16 %v9227
    %v9261 = vunpack.c.l.b16 %v9228
    %v9262 = vunpack.c.l.b16 %v9229
    %v9263 = vunpack.c.l.b16 %v9230
    %v9264 = vunpack.c.l.b16 %v9231
    %v9265 = vunpack.c.l.b16 %v9232
    %v9266 = vpack.c.b16 %v9259, %v9258
    %v9267 = vpack.c.b16 %v9261, %v9260
    %v9268 = vpack.c.b16 %v9263, %v9262
    %v9269 = vpack.c.b16 %v9265, %v9264
    %v9274 = vsel %vm8226, %v9248, 0
    %v9276 = vsel %vm8226, %v9249, 0
    %9278 = vmatpush.bf16.msra.mxu0 0
    %9279 = vmatpush.bf16.msra.mxu0 0
    %9280 = vmatpush.bf16.msra.mxu0 0
    %9281 = vmatpush.bf16.msra.mxu0 0
    %9282 = vmatpush.bf16.msra.mxu0 %v9269
    %9283 = vmatpush.bf16.msra.mxu0 %v9268
    %9284 = vmatpush.bf16.msra.mxu0 %v9267
    %9285 = vmatpush.bf16.msra.mxu0 %v9266
    %9286 = vmatmul.bf16.gmra.mxu0 %v9274
    %v9287 = vpop.f32.mrf.mxu0
    %v9288 = vadd.f32 0.0, %v9287
    %v9289 = vpop.f32.mrf.mxu0
    %v9290 = vadd.f32 0.0, %v9289
    %9291 = vmatmul.bf16.gmra.mxu0 %v9276
    %v9292 = vpop.f32.mrf.mxu0
    %v9293 = vadd.f32 0.0, %v9292
    %v9294 = vpop.f32.mrf.mxu0
    %v9295 = vadd.f32 0.0, %v9294
    %9296 = vdwg.mxu0
    %v9297 = vadd.f32 %v9221, %v9288
    %v9298 = vadd.f32 %v9222, %v9290
    %v9299 = vadd.f32 %v9223, %v9293
    %v9300 = vadd.f32 %v9224, %v9295
    %v9301 = vld [vmem:[#allocation2 + $0xe0] sm:$0xf]
    %v9302 = vld [vmem:[#allocation2 + $0xe4] sm:$0xf]
    %v9303 = vld [vmem:[#allocation2 + $0xe8] sm:$0xf]
    %v9304 = vld [vmem:[#allocation2 + $0xec] sm:$0xf]
    %v9305 = vld [vmem:[#allocation2 + $0xf0] sm:$0xf]
    %v9306 = vld [vmem:[#allocation2 + $0xf4] sm:$0xf]
    %v9307 = vld [vmem:[#allocation2 + $0xf8] sm:$0xf]
    %v9308 = vld [vmem:[#allocation2 + $0xfc] sm:$0xf]
    %9309 = vst [vmem:[#allocation1] ss:$4 sm:$0xff] %v8636
    %s9310 = scalar_lea.vmem [#allocation1], 1
    %9311 = vst [vmem:[%s9310] ss:$4 sm:$0xff] %v8650
    %s9312 = scalar_lea.vmem [#allocation1], 2
    %9313 = vst [vmem:[%s9312] ss:$4 sm:$0xff] %v9047
    %s9314 = scalar_lea.vmem [#allocation1], 3
    %9315 = vst [vmem:[%s9314] ss:$4 sm:$0xff] %v8608
    %s9316 = scalar_lea.vmem [#allocation1], 32
    %9317 = vst [vmem:[%s9316] ss:$4 sm:$0xff] %v8678
    %s9318 = scalar_lea.vmem [#allocation1], 33
    %9319 = vst [vmem:[%s9318] ss:$4 sm:$0xff] %v8692
    %s9320 = scalar_lea.vmem [#allocation1], 34
    %9321 = vst [vmem:[%s9320] ss:$4 sm:$0xff] %v9060
    %s9322 = scalar_lea.vmem [#allocation1], 35
    %9323 = vst [vmem:[%s9322] ss:$4 sm:$0xff] %v8608
    %v9324 = vld.sshfl [vmem:[#allocation1] sm:$0xff pattern:$0x73625140]
    %v9325 = vld.sshfl [vmem:[#allocation1 + $0x20] sm:$0xff pattern:$0x73625140]
    %v9334 = vunpack.c.l.b16 %v9301
    %v9335 = vunpack.c.l.b16 %v9302
    %v9336 = vunpack.c.l.b16 %v9303
    %v9337 = vunpack.c.l.b16 %v9304
    %v9338 = vunpack.c.l.b16 %v9305
    %v9339 = vunpack.c.l.b16 %v9306
    %v9340 = vunpack.c.l.b16 %v9307
    %v9341 = vunpack.c.l.b16 %v9308
    %v9342 = vpack.c.b16 %v9335, %v9334
    %v9343 = vpack.c.b16 %v9337, %v9336
    %v9344 = vpack.c.b16 %v9339, %v9338
    %v9345 = vpack.c.b16 %v9341, %v9340
    %v9350 = vsel %vm8226, %v9324, 0
    %v9352 = vsel %vm8226, %v9325, 0
    %9354 = vmatpush.bf16.msra.mxu0 0
    %9355 = vmatpush.bf16.msra.mxu0 0
    %9356 = vmatpush.bf16.msra.mxu0 0
    %9357 = vmatpush.bf16.msra.mxu0 0
    %9358 = vmatpush.bf16.msra.mxu0 %v9345
    %9359 = vmatpush.bf16.msra.mxu0 %v9344
    %9360 = vmatpush.bf16.msra.mxu0 %v9343
    %9361 = vmatpush.bf16.msra.mxu0 %v9342
    %9362 = vmatmul.bf16.gmra.mxu0 %v9350
    %v9363 = vpop.f32.mrf.mxu0
    %v9364 = vadd.f32 0.0, %v9363
    %v9365 = vpop.f32.mrf.mxu0
    %v9366 = vadd.f32 0.0, %v9365
    %9367 = vmatmul.bf16.gmra.mxu0 %v9352
    %v9368 = vpop.f32.mrf.mxu0
    %v9369 = vadd.f32 0.0, %v9368
    %v9370 = vpop.f32.mrf.mxu0
    %v9371 = vadd.f32 0.0, %v9370
    %9372 = vdwg.mxu0
    %v9373 = vadd.f32 %v9297, %v9364
    %v9374 = vadd.f32 %v9298, %v9366
    %v9375 = vadd.f32 %v9299, %v9369
    %v9376 = vadd.f32 %v9300, %v9371
    %v9377 = vld [vmem:[#allocation2 + $0x100] sm:$0xf]
    %v9378 = vld [vmem:[#allocation2 + $0x104] sm:$0xf]
    %v9379 = vld [vmem:[#allocation2 + $0x108] sm:$0xf]
    %v9380 = vld [vmem:[#allocation2 + $0x10c] sm:$0xf]
    %v9381 = vld [vmem:[#allocation2 + $0x110] sm:$0xf]
    %v9382 = vld [vmem:[#allocation2 + $0x114] sm:$0xf]
    %v9383 = vld [vmem:[#allocation2 + $0x118] sm:$0xf]
    %v9384 = vld [vmem:[#allocation2 + $0x11c] sm:$0xf]
    %9385 = vst [vmem:[#allocation1] ss:$4 sm:$0xff] %v8853
    %s9386 = scalar_lea.vmem [#allocation1], 1
    %9387 = vst [vmem:[%s9386] ss:$4 sm:$0xff] %v8857
    %s9388 = scalar_lea.vmem [#allocation1], 2
    %9389 = vst [vmem:[%s9388] ss:$4 sm:$0xff] %v9142
    %s9390 = scalar_lea.vmem [#allocation1], 3
    %9391 = vst [vmem:[%s9390] ss:$4 sm:$0xff] %v8845
    %s9392 = scalar_lea.vmem [#allocation1], 32
    %9393 = vst [vmem:[%s9392] ss:$4 sm:$0xff] %v8865
    %s9394 = scalar_lea.vmem [#allocation1], 33
    %9395 = vst [vmem:[%s9394] ss:$4 sm:$0xff] %v8869
    %s9396 = scalar_lea.vmem [#allocation1], 34
    %9397 = vst [vmem:[%s9396] ss:$4 sm:$0xff] %v9146
    %s9398 = scalar_lea.vmem [#allocation1], 35
    %9399 = vst [vmem:[%s9398] ss:$4 sm:$0xff] %v8845
    %v9400 = vld.sshfl [vmem:[#allocation1] sm:$0xff pattern:$0x73625140]
    %v9401 = vld.sshfl [vmem:[#allocation1 + $0x20] sm:$0xff pattern:$0x73625140]
    %v9410 = vunpack.c.l.b16 %v9377
    %v9411 = vunpack.c.l.b16 %v9378
    %v9412 = vunpack.c.l.b16 %v9379
    %v9413 = vunpack.c.l.b16 %v9380
    %v9414 = vunpack.c.l.b16 %v9381
    %v9415 = vunpack.c.l.b16 %v9382
    %v9416 = vunpack.c.l.b16 %v9383
    %v9417 = vunpack.c.l.b16 %v9384
    %v9418 = vpack.c.b16 %v9411, %v9410
    %v9419 = vpack.c.b16 %v9413, %v9412
    %v9420 = vpack.c.b16 %v9415, %v9414
    %v9421 = vpack.c.b16 %v9417, %v9416
    %v9426 = vsel %vm8226, %v9400, 0
    %v9428 = vsel %vm8226, %v9401, 0
    %9430 = vmatpush.bf16.msra.mxu0 0
    %9431 = vmatpush.bf16.msra.mxu0 0
    %9432 = vmatpush.bf16.msra.mxu0 0
    %9433 = vmatpush.bf16.msra.mxu0 0
    %9434 = vmatpush.bf16.msra.mxu0 %v9421
    %9435 = vmatpush.bf16.msra.mxu0 %v9420
    %9436 = vmatpush.bf16.msra.mxu0 %v9419
    %9437 = vmatpush.bf16.msra.mxu0 %v9418
    %9438 = vmatmul.bf16.gmra.mxu0 %v9426
    %v9439 = vpop.f32.mrf.mxu0
    %v9440 = vadd.f32 0.0, %v9439
    %v9441 = vpop.f32.mrf.mxu0
    %v9442 = vadd.f32 0.0, %v9441
    %9443 = vmatmul.bf16.gmra.mxu0 %v9428
    %v9444 = vpop.f32.mrf.mxu0
    %v9445 = vadd.f32 0.0, %v9444
    %v9446 = vpop.f32.mrf.mxu0
    %v9447 = vadd.f32 0.0, %v9446
    %9448 = vdwg.mxu0
    %v9449 = vadd.f32 %v9373, %v9440
    %v9450 = vadd.f32 %v9374, %v9442
    %v9451 = vadd.f32 %v9375, %v9445
    %v9452 = vadd.f32 %v9376, %v9447
    %v9453 = vld [vmem:[%s6] sm:$0x3]
    %v9454 = vperm.slane %v9453, 0
    %v9455 = vmul.f32 %v9449, %v9454
    %v9456 = vmul.f32 %v9450, %v9454
    %v9457 = vmul.f32 %v9451, %v9454
    %v9458 = vmul.f32 %v9452, %v9454
    %v9459 = vperm.slane %v9453, 1
    %v9460 = vadd.f32 %v9455, %v9459
    %v9461 = vadd.f32 %v9456, %v9459
    %v9462 = vadd.f32 %v9457, %v9459
    %v9463 = vadd.f32 %v9458, %v9459
    %v9464 = vmax.f32 %v9460, 0.0
    %v9465 = vmax.f32 %v9461, 0.0
    %v9466 = vmax.f32 %v9462, 0.0
    %v9467 = vmax.f32 %v9463, 0.0
    %v9472 = vrot.slane %v9464, 2
    %v9473 = vrot.slane %v9464, 4
    %v9474 = vrot.slane %v9464, 6
    %v9475 = vrot.slane %v9465, 2
    %v9476 = vrot.slane %v9465, 4
    %v9477 = vrot.slane %v9465, 6
    %v9478 = vrot.slane %v9466, 2
    %v9479 = vrot.slane %v9466, 4
    %v9480 = vrot.slane %v9466, 6
    %v9481 = vrot.slane %v9467, 2
    %v9482 = vrot.slane %v9467, 4
    %v9483 = vrot.slane %v9467, 6
    %vm9496 = vcmask 1041408
    %v9497 = vsel %vm9496, %v9464, -inf
    %v9498 = vrot.slane %v9497, 4
    %v9499 = vmax.f32 %v9497, %v9498
    %v9500 = vrot.slane %v9499, 2
    %v9501 = vmax.f32 %v9499, %v9500
    %v9502 = vrot.slane %v9501, 1
    %v9503 = vmax.f32 %v9501, %v9502
    %v9504 = vsel %vm9496, %v9472, -inf
    %v9505 = vrot.slane %v9504, 4
    %v9506 = vmax.f32 %v9504, %v9505
    %v9507 = vrot.slane %v9506, 2
    %v9508 = vmax.f32 %v9506, %v9507
    %v9509 = vrot.slane %v9508, 1
    %v9510 = vmax.f32 %v9508, %v9509
    %v9511 = vsel %vm9496, %v9473, -inf
    %v9512 = vrot.slane %v9511, 4
    %v9513 = vmax.f32 %v9511, %v9512
    %v9514 = vrot.slane %v9513, 2
    %v9515 = vmax.f32 %v9513, %v9514
    %v9516 = vrot.slane %v9515, 1
    %v9517 = vmax.f32 %v9515, %v9516
    %v9518 = vsel %vm9496, %v9474, -inf
    %v9519 = vrot.slane %v9518, 4
    %v9520 = vmax.f32 %v9518, %v9519
    %v9521 = vrot.slane %v9520, 2
    %v9522 = vmax.f32 %v9520, %v9521
    %v9523 = vrot.slane %v9522, 1
    %v9524 = vmax.f32 %v9522, %v9523
    %v9525 = vsel %vm9496, %v9465, -inf
    %v9526 = vrot.slane %v9525, 4
    %v9527 = vmax.f32 %v9525, %v9526
    %v9528 = vrot.slane %v9527, 2
    %v9529 = vmax.f32 %v9527, %v9528
    %v9530 = vrot.slane %v9529, 1
    %v9531 = vmax.f32 %v9529, %v9530
    %v9532 = vsel %vm9496, %v9475, -inf
    %v9533 = vrot.slane %v9532, 4
    %v9534 = vmax.f32 %v9532, %v9533
    %v9535 = vrot.slane %v9534, 2
    %v9536 = vmax.f32 %v9534, %v9535
    %v9537 = vrot.slane %v9536, 1
    %v9538 = vmax.f32 %v9536, %v9537
    %v9539 = vsel %vm9496, %v9476, -inf
    %v9540 = vrot.slane %v9539, 4
    %v9541 = vmax.f32 %v9539, %v9540
    %v9542 = vrot.slane %v9541, 2
    %v9543 = vmax.f32 %v9541, %v9542
    %v9544 = vrot.slane %v9543, 1
    %v9545 = vmax.f32 %v9543, %v9544
    %v9546 = vsel %vm9496, %v9477, -inf
    %v9547 = vrot.slane %v9546, 4
    %v9548 = vmax.f32 %v9546, %v9547
    %v9549 = vrot.slane %v9548, 2
    %v9550 = vmax.f32 %v9548, %v9549
    %v9551 = vrot.slane %v9550, 1
    %v9552 = vmax.f32 %v9550, %v9551
    %v9553 = vsel %vm9496, %v9466, -inf
    %v9554 = vrot.slane %v9553, 4
    %v9555 = vmax.f32 %v9553, %v9554
    %v9556 = vrot.slane %v9555, 2
    %v9557 = vmax.f32 %v9555, %v9556
    %v9558 = vrot.slane %v9557, 1
    %v9559 = vmax.f32 %v9557, %v9558
    %v9560 = vsel %vm9496, %v9478, -inf
    %v9561 = vrot.slane %v9560, 4
    %v9562 = vmax.f32 %v9560, %v9561
    %v9563 = vrot.slane %v9562, 2
    %v9564 = vmax.f32 %v9562, %v9563
    %v9565 = vrot.slane %v9564, 1
    %v9566 = vmax.f32 %v9564, %v9565
    %v9567 = vsel %vm9496, %v9479, -inf
    %v9568 = vrot.slane %v9567, 4
    %v9569 = vmax.f32 %v9567, %v9568
    %v9570 = vrot.slane %v9569, 2
    %v9571 = vmax.f32 %v9569, %v9570
    %v9572 = vrot.slane %v9571, 1
    %v9573 = vmax.f32 %v9571, %v9572
    %v9574 = vsel %vm9496, %v9480, -inf
    %v9575 = vrot.slane %v9574, 4
    %v9576 = vmax.f32 %v9574, %v9575
    %v9577 = vrot.slane %v9576, 2
    %v9578 = vmax.f32 %v9576, %v9577
    %v9579 = vrot.slane %v9578, 1
    %v9580 = vmax.f32 %v9578, %v9579
    %v9581 = vsel %vm9496, %v9467, -inf
    %v9582 = vrot.slane %v9581, 4
    %v9583 = vmax.f32 %v9581, %v9582
    %v9584 = vrot.slane %v9583, 2
    %v9585 = vmax.f32 %v9583, %v9584
    %v9586 = vrot.slane %v9585, 1
    %v9587 = vmax.f32 %v9585, %v9586
    %v9588 = vsel %vm9496, %v9481, -inf
    %v9589 = vrot.slane %v9588, 4
    %v9590 = vmax.f32 %v9588, %v9589
    %v9591 = vrot.slane %v9590, 2
    %v9592 = vmax.f32 %v9590, %v9591
    %v9593 = vrot.slane %v9592, 1
    %v9594 = vmax.f32 %v9592, %v9593
    %v9595 = vsel %vm9496, %v9482, -inf
    %v9596 = vrot.slane %v9595, 4
    %v9597 = vmax.f32 %v9595, %v9596
    %v9598 = vrot.slane %v9597, 2
    %v9599 = vmax.f32 %v9597, %v9598
    %v9600 = vrot.slane %v9599, 1
    %v9601 = vmax.f32 %v9599, %v9600
    %v9602 = vsel %vm9496, %v9483, -inf
    %v9603 = vrot.slane %v9602, 4
    %v9604 = vmax.f32 %v9602, %v9603
    %v9605 = vrot.slane %v9604, 2
    %v9606 = vmax.f32 %v9604, %v9605
    %v9607 = vrot.slane %v9606, 1
    %v9608 = vmax.f32 %v9606, %v9607
    %v9609 = vmax.f32 %v9503, %v9517
    %v9610 = vmax.f32 %v9510, %v9524
    %v9611 = vmax.f32 %v9531, %v9545
    %v9612 = vmax.f32 %v9538, %v9552
    %v9613 = vmax.f32 %v9559, %v9573
    %v9614 = vmax.f32 %v9566, %v9580
    %v9615 = vmax.f32 %v9587, %v9601
    %v9616 = vmax.f32 %v9594, %v9608
    %v9617 = vpack.c.bf16 %v9609, %v9609
    %v9618 = vpack.c.bf16 %v9610, %v9610
    %v9619 = vpack.c.bf16 %v9611, %v9611
    %v9620 = vpack.c.bf16 %v9612, %v9612
    %v9621 = vpack.c.bf16 %v9613, %v9613
    %v9622 = vpack.c.bf16 %v9614, %v9614
    %v9623 = vpack.c.bf16 %v9615, %v9615
    %v9624 = vpack.c.bf16 %v9616, %v9616
    %v9633 = vperm.slane %v9617, 0
    %v9634 = vperm.slane %v9618, 0
    %v9635 = vperm.slane %v9619, 0
    %v9636 = vperm.slane %v9620, 0
    %v9637 = vperm.slane %v9621, 0
    %v9638 = vperm.slane %v9622, 0
    %v9639 = vperm.slane %v9623, 0
    %v9640 = vperm.slane %v9624, 0
    %v9641 = vunpack.c.l.b16 %v9633
    %v9642 = vunpack.c.l.b16 %v9634
    %v9643 = vunpack.c.l.b16 %v9635
    %v9644 = vunpack.c.l.b16 %v9636
    %v9645 = vunpack.c.l.b16 %v9637
    %v9646 = vunpack.c.l.b16 %v9638
    %v9647 = vunpack.c.l.b16 %v9639
    %v9648 = vunpack.c.l.b16 %v9640
    %v9649 = vsel %vm5959, %v9642, %v9641
    %v9650 = vsel %vm5959, %v9644, %v9643
    %v9651 = vsel %vm5959, %v9646, %v9645
    %v9652 = vsel %vm5959, %v9648, %v9647
    %v9653 = vpack.c.b16 %v9649, %v9649
    %v9654 = vpack.c.b16 %v9650, %v9650
    %v9655 = vpack.c.b16 %v9651, %v9651
    %v9656 = vpack.c.b16 %v9652, %v9652
    %v9658 = vshrl.u32 %v9653, 16
    %v9660 = vrot.slane %v9658, 7
    %v9661 = vshll.u32 %v9653, 16
    %v9663 = vor.u32 %v9660, %v9661
    %v9665 = vshrl.u32 %v9654, 16
    %v9667 = vrot.slane %v9665, 7
    %v9668 = vshll.u32 %v9654, 16
    %v9670 = vor.u32 %v9667, %v9668
    %v9672 = vshrl.u32 %v9655, 16
    %v9674 = vrot.slane %v9672, 7
    %v9675 = vshll.u32 %v9655, 16
    %v9677 = vor.u32 %v9674, %v9675
    %v9679 = vshrl.u32 %v9656, 16
    %v9681 = vrot.slane %v9679, 7
    %v9682 = vshll.u32 %v9656, 16
    %v9684 = vor.u32 %v9681, %v9682
    %v9689 = vsel %vm6232, 0, %v9663
    %v9690 = vsel %vm6232, 0, %v9670
    %v9691 = vsel %vm6232, 0, %v9677
    %v9692 = vsel %vm6232, 0, %v9684
    %vm9693 = vcmask 1041408
    %vm9694 = vmand %vm9693, %vm8588
    %v9695 = vsel %vm9694, %v6233, 0
    %v9696 = vsel %vm9694, %v9689, 0
    %v9697 = vsel %vm9694, %v9690, 0
    %v9698 = vsel %vm9694, %v9691, 0
    %v9699 = vsel %vm9694, %v9692, 0
    %v9700 = vld [vmem:[#allocation5] sm:$0xff]
    %v9701 = vld [vmem:[#allocation5 + $0x8] sm:$0xff]
    %v9702 = vld [vmem:[#allocation5 + $0x10] sm:$0xff]
    %v9703 = vld [vmem:[#allocation5 + $0x18] sm:$0xff]
    %v9704 = vld [vmem:[#allocation5 + $0x20] sm:$0xff]
    %v9705 = vld [vmem:[#allocation5 + $0x28] sm:$0xff]
    %v9706 = vld [vmem:[#allocation5 + $0x30] sm:$0xff]
    %v9707 = vld [vmem:[#allocation5 + $0x38] sm:$0xff]
    %v9708 = vld [vmem:[#allocation5 + $0x40] sm:$0xff]
    %v9709 = vld [vmem:[#allocation5 + $0x48] sm:$0xff]
    %v9710 = vld [vmem:[#allocation5 + $0x50] sm:$0xff]
    %v9711 = vld [vmem:[#allocation5 + $0x58] sm:$0xff]
    %v9712 = vld [vmem:[#allocation5 + $0x60] sm:$0xff]
    %v9713 = vld [vmem:[#allocation5 + $0x68] sm:$0xff]
    %v9714 = vld [vmem:[#allocation5 + $0x70] sm:$0xff]
    %v9715 = vld [vmem:[#allocation5 + $0x78] sm:$0xff]
    %v9719 = vrot.slane %v9695, 1
    %v9720 = vrot.slane %v9696, 1
    %v9721 = vrot.slane %v9698, 1
    %vm9722 = vsmask.f32 1284
    %vm9723 = vmor %vm6231, %vm9722
    %vm9724 = vsmask.f32 2312
    %vm9725 = vmor %vm9723, %vm9724
    %vm9726 = vsmask.f32 3340
    %vm9727 = vmor %vm9725, %vm9726
    %vm9728 = vsmask.f32 4368
    %vm9729 = vmor %vm9727, %vm9728
    %vm9730 = vsmask.f32 5396
    %vm9731 = vmor %vm9729, %vm9730
    %vm9732 = vsmask.f32 6424
    %vm9733 = vmor %vm9731, %vm9732
    %vm9734 = vsmask.f32 7452
    %vm9735 = vmor %vm9733, %vm9734
    %v9737 = vshrl.u32 %v9695, 16
    %v9739 = vrot.slane %v9737, 7
    %v9740 = vrot.slane %v9739, 1
    %v9742 = vshll.u32 %v9719, 16
    %v9744 = vsel %vm9735, %v9740, %v9742
    %v9746 = vshrl.u32 %v9696, 16
    %v9748 = vrot.slane %v9746, 7
    %v9749 = vrot.slane %v9748, 1
    %v9751 = vshll.u32 %v9720, 16
    %v9753 = vsel %vm9735, %v9749, %v9751
    %v9755 = vshrl.u32 %v9698, 16
    %v9757 = vrot.slane %v9755, 7
    %v9758 = vrot.slane %v9757, 1
    %v9760 = vshll.u32 %v9721, 16
    %v9762 = vsel %vm9735, %v9758, %v9760
    %v9763 = vld [vmem:[#allocation5 + $0x80] sm:$0xff]
    %v9764 = vld [vmem:[#allocation5 + $0x88] sm:$0xff]
    %v9765 = vld [vmem:[#allocation5 + $0x90] sm:$0xff]
    %v9766 = vld [vmem:[#allocation5 + $0x98] sm:$0xff]
    %v9767 = vld [vmem:[#allocation5 + $0xa0] sm:$0xff]
    %v9768 = vld [vmem:[#allocation5 + $0xa8] sm:$0xff]
    %v9769 = vld [vmem:[#allocation5 + $0xb0] sm:$0xff]
    %v9770 = vld [vmem:[#allocation5 + $0xb8] sm:$0xff]
    %v9771 = vld [vmem:[#allocation5 + $0xc0] sm:$0xff]
    %v9772 = vld [vmem:[#allocation5 + $0xc8] sm:$0xff]
    %v9773 = vld [vmem:[#allocation5 + $0xd0] sm:$0xff]
    %v9774 = vld [vmem:[#allocation5 + $0xd8] sm:$0xff]
    %v9775 = vld [vmem:[#allocation5 + $0xe0] sm:$0xff]
    %v9776 = vld [vmem:[#allocation5 + $0xe8] sm:$0xff]
    %v9777 = vld [vmem:[#allocation5 + $0xf0] sm:$0xff]
    %v9778 = vld [vmem:[#allocation5 + $0xf8] sm:$0xff]
    %9780 = vst [vmem:[#allocation1] ss:$9 sm:$0xff] %v9744
    %s9782 = scalar_lea.vmem [#allocation1], 1
    %9783 = vst [vmem:[%s9782] ss:$9 sm:$0xff] %v9753
    %s9784 = scalar_lea.vmem [#allocation1], 2
    %9785 = vst [vmem:[%s9784] ss:$9 sm:$0xff] %v9744
    %s9787 = scalar_lea.vmem [#allocation1], 3
    %9788 = vst [vmem:[%s9787] ss:$9 sm:$0xff] %v9762
    %v9789 = vld [vmem:[#allocation1] sm:$0xff]
    %v9807 = vunpack.c.l.b16 %v9763
    %v9808 = vunpack.c.h.b16 %v9763
    %v9809 = vunpack.c.l.b16 %v9764
    %v9810 = vunpack.c.h.b16 %v9764
    %v9811 = vunpack.c.l.b16 %v9765
    %v9812 = vunpack.c.h.b16 %v9765
    %v9813 = vunpack.c.l.b16 %v9766
    %v9814 = vunpack.c.h.b16 %v9766
    %v9815 = vunpack.c.l.b16 %v9767
    %v9816 = vunpack.c.h.b16 %v9767
    %v9817 = vunpack.c.l.b16 %v9768
    %v9818 = vunpack.c.h.b16 %v9768
    %v9819 = vunpack.c.l.b16 %v9769
    %v9820 = vunpack.c.h.b16 %v9769
    %v9821 = vunpack.c.l.b16 %v9770
    %v9822 = vunpack.c.h.b16 %v9770
    %v9823 = vunpack.c.l.b16 %v9771
    %v9824 = vunpack.c.h.b16 %v9771
    %v9825 = vunpack.c.l.b16 %v9772
    %v9826 = vunpack.c.h.b16 %v9772
    %v9827 = vunpack.c.l.b16 %v9773
    %v9828 = vunpack.c.h.b16 %v9773
    %v9829 = vunpack.c.l.b16 %v9774
    %v9830 = vunpack.c.h.b16 %v9774
    %v9831 = vunpack.c.l.b16 %v9775
    %v9832 = vunpack.c.h.b16 %v9775
    %v9833 = vunpack.c.l.b16 %v9776
    %v9834 = vunpack.c.h.b16 %v9776
    %v9835 = vunpack.c.l.b16 %v9777
    %v9836 = vunpack.c.h.b16 %v9777
    %v9837 = vunpack.c.l.b16 %v9778
    %v9838 = vunpack.c.h.b16 %v9778
    %v9839 = vpack.c.b16 %v9809, %v9807
    %v9840 = vpack.c.b16 %v9810, %v9808
    %v9841 = vpack.c.b16 %v9813, %v9811
    %v9842 = vpack.c.b16 %v9814, %v9812
    %v9843 = vpack.c.b16 %v9817, %v9815
    %v9844 = vpack.c.b16 %v9818, %v9816
    %v9845 = vpack.c.b16 %v9821, %v9819
    %v9846 = vpack.c.b16 %v9822, %v9820
    %v9847 = vpack.c.b16 %v9825, %v9823
    %v9848 = vpack.c.b16 %v9826, %v9824
    %v9849 = vpack.c.b16 %v9829, %v9827
    %v9850 = vpack.c.b16 %v9830, %v9828
    %v9851 = vpack.c.b16 %v9833, %v9831
    %v9852 = vpack.c.b16 %v9834, %v9832
    %v9853 = vpack.c.b16 %v9837, %v9835
    %v9854 = vpack.c.b16 %v9838, %v9836
    %9871 = vmatpush.bf16.msra.mxu0 %v9853
    %9872 = vmatpush.bf16.msra.mxu0 %v9851
    %9873 = vmatpush.bf16.msra.mxu0 %v9849
    %9874 = vmatpush.bf16.msra.mxu0 %v9847
    %9875 = vmatpush.bf16.msra.mxu0 %v9845
    %9876 = vmatpush.bf16.msra.mxu0 %v9843
    %9877 = vmatpush.bf16.msra.mxu0 %v9841
    %9878 = vmatpush.bf16.msra.mxu0 %v9839
    %9879 = vmatmul.bf16.gmra.mxu0 %v9789
    %v9880 = vpop.f32.mrf.mxu0
    %v9881 = vadd.f32 0.0, %v9880
    %v9882 = vpop.f32.mrf.mxu0
    %9883 = vdwg.mxu0
    %9884 = vmatpush.bf16.msra.mxu0 %v9854
    %9885 = vmatpush.bf16.msra.mxu0 %v9852
    %9886 = vmatpush.bf16.msra.mxu0 %v9850
    %9887 = vmatpush.bf16.msra.mxu0 %v9848
    %9888 = vmatpush.bf16.msra.mxu0 %v9846
    %9889 = vmatpush.bf16.msra.mxu0 %v9844
    %9890 = vmatpush.bf16.msra.mxu0 %v9842
    %9891 = vmatpush.bf16.msra.mxu0 %v9840
    %9892 = vmatmul.bf16.gmra.mxu0 %v9789
    %v9893 = vpop.f32.mrf.mxu0
    %v9894 = vadd.f32 0.0, %v9893
    %v9895 = vpop.f32.mrf.mxu0
    %9896 = vdwg.mxu0
    %9897 = vst [vmem:[#allocation1] ss:$9 sm:$0xff] %v9695
    %s9898 = scalar_lea.vmem [#allocation1], 1
    %9899 = vst [vmem:[%s9898] ss:$9 sm:$0xff] %v9696
    %s9900 = scalar_lea.vmem [#allocation1], 2
    %9901 = vst [vmem:[%s9900] ss:$9 sm:$0xff] %v9695
    %s9902 = scalar_lea.vmem [#allocation1], 3
    %9903 = vst [vmem:[%s9902] ss:$9 sm:$0xff] %v9698
    %v9904 = vld [vmem:[#allocation1] sm:$0xff]
    %v9922 = vunpack.c.l.b16 %v9700
    %v9923 = vunpack.c.h.b16 %v9700
    %v9924 = vunpack.c.l.b16 %v9701
    %v9925 = vunpack.c.h.b16 %v9701
    %v9926 = vunpack.c.l.b16 %v9702
    %v9927 = vunpack.c.h.b16 %v9702
    %v9928 = vunpack.c.l.b16 %v9703
    %v9929 = vunpack.c.h.b16 %v9703
    %v9930 = vunpack.c.l.b16 %v9704
    %v9931 = vunpack.c.h.b16 %v9704
    %v9932 = vunpack.c.l.b16 %v9705
    %v9933 = vunpack.c.h.b16 %v9705
    %v9934 = vunpack.c.l.b16 %v9706
    %v9935 = vunpack.c.h.b16 %v9706
    %v9936 = vunpack.c.l.b16 %v9707
    %v9937 = vunpack.c.h.b16 %v9707
    %v9938 = vunpack.c.l.b16 %v9708
    %v9939 = vunpack.c.h.b16 %v9708
    %v9940 = vunpack.c.l.b16 %v9709
    %v9941 = vunpack.c.h.b16 %v9709
    %v9942 = vunpack.c.l.b16 %v9710
    %v9943 = vunpack.c.h.b16 %v9710
    %v9944 = vunpack.c.l.b16 %v9711
    %v9945 = vunpack.c.h.b16 %v9711
    %v9946 = vunpack.c.l.b16 %v9712
    %v9947 = vunpack.c.h.b16 %v9712
    %v9948 = vunpack.c.l.b16 %v9713
    %v9949 = vunpack.c.h.b16 %v9713
    %v9950 = vunpack.c.l.b16 %v9714
    %v9951 = vunpack.c.h.b16 %v9714
    %v9952 = vunpack.c.l.b16 %v9715
    %v9953 = vunpack.c.h.b16 %v9715
    %v9954 = vpack.c.b16 %v9924, %v9922
    %v9955 = vpack.c.b16 %v9925, %v9923
    %v9956 = vpack.c.b16 %v9928, %v9926
    %v9957 = vpack.c.b16 %v9929, %v9927
    %v9958 = vpack.c.b16 %v9932, %v9930
    %v9959 = vpack.c.b16 %v9933, %v9931
    %v9960 = vpack.c.b16 %v9936, %v9934
    %v9961 = vpack.c.b16 %v9937, %v9935
    %v9962 = vpack.c.b16 %v9940, %v9938
    %v9963 = vpack.c.b16 %v9941, %v9939
    %v9964 = vpack.c.b16 %v9944, %v9942
    %v9965 = vpack.c.b16 %v9945, %v9943
    %v9966 = vpack.c.b16 %v9948, %v9946
    %v9967 = vpack.c.b16 %v9949, %v9947
    %v9968 = vpack.c.b16 %v9952, %v9950
    %v9969 = vpack.c.b16 %v9953, %v9951
    %9986 = vmatpush.bf16.msra.mxu0 %v9968
    %9987 = vmatpush.bf16.msra.mxu0 %v9966
    %9988 = vmatpush.bf16.msra.mxu0 %v9964
    %9989 = vmatpush.bf16.msra.mxu0 %v9962
    %9990 = vmatpush.bf16.msra.mxu0 %v9960
    %9991 = vmatpush.bf16.msra.mxu0 %v9958
    %9992 = vmatpush.bf16.msra.mxu0 %v9956
    %9993 = vmatpush.bf16.msra.mxu0 %v9954
    %9994 = vmatmul.bf16.gmra.mxu0 %v9904
    %v9995 = vpop.f32.mrf.mxu0
    %v9996 = vadd.f32 %v9881, %v9995
    %v9997 = vpop.f32.mrf.mxu0
    %9998 = vdwg.mxu0
    %9999 = vmatpush.bf16.msra.mxu0 %v9969
    %10000 = vmatpush.bf16.msra.mxu0 %v9967
    %10001 = vmatpush.bf16.msra.mxu0 %v9965
    %10002 = vmatpush.bf16.msra.mxu0 %v9963
    %10003 = vmatpush.bf16.msra.mxu0 %v9961
    %10004 = vmatpush.bf16.msra.mxu0 %v9959
    %10005 = vmatpush.bf16.msra.mxu0 %v9957
    %10006 = vmatpush.bf16.msra.mxu0 %v9955
    %10007 = vmatmul.bf16.gmra.mxu0 %v9904
    %v10008 = vpop.f32.mrf.mxu0
    %v10009 = vadd.f32 %v9894, %v10008
    %v10010 = vpop.f32.mrf.mxu0
    %10011 = vdwg.mxu0
    %10012 = vst [vmem:[#allocation1] sm:$0xff] %v9695
    %s10013 = scalar_lea.vmem [#allocation1], 1
    %v10014 = vld [vmem:[%s10013] ss:$9 sm:$0xff]
    %10015 = vst [vmem:[#allocation1] sm:$0xff] %v9696
    %v10016 = vld [vmem:[%s10013] ss:$9 sm:$0xff]
    %10017 = vst [vmem:[#allocation1] sm:$0xff] %v9695
    %v10018 = vld [vmem:[%s10013] ss:$9 sm:$0xff]
    %10019 = vst [vmem:[#allocation1] sm:$0xff] %v9698
    %v10020 = vld [vmem:[%s10013] ss:$9 sm:$0xff]
    %v10021 = vld [vmem:[#allocation5 + $0x100] sm:$0xff]
    %v10022 = vld [vmem:[#allocation5 + $0x108] sm:$0xff]
    %v10023 = vld [vmem:[#allocation5 + $0x110] sm:$0xff]
    %v10024 = vld [vmem:[#allocation5 + $0x118] sm:$0xff]
    %v10025 = vld [vmem:[#allocation5 + $0x120] sm:$0xff]
    %v10026 = vld [vmem:[#allocation5 + $0x128] sm:$0xff]
    %v10027 = vld [vmem:[#allocation5 + $0x130] sm:$0xff]
    %v10028 = vld [vmem:[#allocation5 + $0x138] sm:$0xff]
    %v10029 = vld [vmem:[#allocation5 + $0x140] sm:$0xff]
    %v10030 = vld [vmem:[#allocation5 + $0x148] sm:$0xff]
    %v10031 = vld [vmem:[#allocation5 + $0x150] sm:$0xff]
    %v10032 = vld [vmem:[#allocation5 + $0x158] sm:$0xff]
    %v10033 = vld [vmem:[#allocation5 + $0x160] sm:$0xff]
    %v10034 = vld [vmem:[#allocation5 + $0x168] sm:$0xff]
    %v10035 = vld [vmem:[#allocation5 + $0x170] sm:$0xff]
    %v10036 = vld [vmem:[#allocation5 + $0x178] sm:$0xff]
    %10037 = vst [vmem:[#allocation1] ss:$9 sm:$0xff] %v10014
    %s10038 = scalar_lea.vmem [#allocation1], 1
    %10039 = vst [vmem:[%s10038] ss:$9 sm:$0xff] %v10016
    %s10040 = scalar_lea.vmem [#allocation1], 2
    %10041 = vst [vmem:[%s10040] ss:$9 sm:$0xff] %v10018
    %s10042 = scalar_lea.vmem [#allocation1], 3
    %10043 = vst [vmem:[%s10042] ss:$9 sm:$0xff] %v10020
    %v10044 = vld [vmem:[#allocation1] sm:$0xff]
    %v10062 = vunpack.c.l.b16 %v10021
    %v10063 = vunpack.c.h.b16 %v10021
    %v10064 = vunpack.c.l.b16 %v10022
    %v10065 = vunpack.c.h.b16 %v10022
    %v10066 = vunpack.c.l.b16 %v10023
    %v10067 = vunpack.c.h.b16 %v10023
    %v10068 = vunpack.c.l.b16 %v10024
    %v10069 = vunpack.c.h.b16 %v10024
    %v10070 = vunpack.c.l.b16 %v10025
    %v10071 = vunpack.c.h.b16 %v10025
    %v10072 = vunpack.c.l.b16 %v10026
    %v10073 = vunpack.c.h.b16 %v10026
    %v10074 = vunpack.c.l.b16 %v10027
    %v10075 = vunpack.c.h.b16 %v10027
    %v10076 = vunpack.c.l.b16 %v10028
    %v10077 = vunpack.c.h.b16 %v10028
    %v10078 = vunpack.c.l.b16 %v10029
    %v10079 = vunpack.c.h.b16 %v10029
    %v10080 = vunpack.c.l.b16 %v10030
    %v10081 = vunpack.c.h.b16 %v10030
    %v10082 = vunpack.c.l.b16 %v10031
    %v10083 = vunpack.c.h.b16 %v10031
    %v10084 = vunpack.c.l.b16 %v10032
    %v10085 = vunpack.c.h.b16 %v10032
    %v10086 = vunpack.c.l.b16 %v10033
    %v10087 = vunpack.c.h.b16 %v10033
    %v10088 = vunpack.c.l.b16 %v10034
    %v10089 = vunpack.c.h.b16 %v10034
    %v10090 = vunpack.c.l.b16 %v10035
    %v10091 = vunpack.c.h.b16 %v10035
    %v10092 = vunpack.c.l.b16 %v10036
    %v10093 = vunpack.c.h.b16 %v10036
    %v10094 = vpack.c.b16 %v10064, %v10062
    %v10095 = vpack.c.b16 %v10065, %v10063
    %v10096 = vpack.c.b16 %v10068, %v10066
    %v10097 = vpack.c.b16 %v10069, %v10067
    %v10098 = vpack.c.b16 %v10072, %v10070
    %v10099 = vpack.c.b16 %v10073, %v10071
    %v10100 = vpack.c.b16 %v10076, %v10074
    %v10101 = vpack.c.b16 %v10077, %v10075
    %v10102 = vpack.c.b16 %v10080, %v10078
    %v10103 = vpack.c.b16 %v10081, %v10079
    %v10104 = vpack.c.b16 %v10084, %v10082
    %v10105 = vpack.c.b16 %v10085, %v10083
    %v10106 = vpack.c.b16 %v10088, %v10086
    %v10107 = vpack.c.b16 %v10089, %v10087
    %v10108 = vpack.c.b16 %v10092, %v10090
    %v10109 = vpack.c.b16 %v10093, %v10091
    %10126 = vmatpush.bf16.msra.mxu0 %v10108
    %10127 = vmatpush.bf16.msra.mxu0 %v10106
    %10128 = vmatpush.bf16.msra.mxu0 %v10104
    %10129 = vmatpush.bf16.msra.mxu0 %v10102
    %10130 = vmatpush.bf16.msra.mxu0 %v10100
    %10131 = vmatpush.bf16.msra.mxu0 %v10098
    %10132 = vmatpush.bf16.msra.mxu0 %v10096
    %10133 = vmatpush.bf16.msra.mxu0 %v10094
    %10134 = vmatmul.bf16.gmra.mxu0 %v10044
    %v10135 = vpop.f32.mrf.mxu0
    %v10136 = vadd.f32 0.0, %v10135
    %v10137 = vpop.f32.mrf.mxu0
    %10138 = vdwg.mxu0
    %10139 = vmatpush.bf16.msra.mxu0 %v10109
    %10140 = vmatpush.bf16.msra.mxu0 %v10107
    %10141 = vmatpush.bf16.msra.mxu0 %v10105
    %10142 = vmatpush.bf16.msra.mxu0 %v10103
    %10143 = vmatpush.bf16.msra.mxu0 %v10101
    %10144 = vmatpush.bf16.msra.mxu0 %v10099
    %10145 = vmatpush.bf16.msra.mxu0 %v10097
    %10146 = vmatpush.bf16.msra.mxu0 %v10095
    %10147 = vmatmul.bf16.gmra.mxu0 %v10044
    %v10148 = vpop.f32.mrf.mxu0
    %v10149 = vadd.f32 0.0, %v10148
    %v10150 = vpop.f32.mrf.mxu0
    %10151 = vdwg.mxu0
    %v10152 = vadd.f32 %v9996, %v10136
    %v10153 = vadd.f32 %v10009, %v10149
    %v10154 = vld [vmem:[#allocation5 + $0x180] sm:$0xff]
    %v10155 = vld [vmem:[#allocation5 + $0x188] sm:$0xff]
    %v10156 = vld [vmem:[#allocation5 + $0x190] sm:$0xff]
    %v10157 = vld [vmem:[#allocation5 + $0x198] sm:$0xff]
    %v10158 = vld [vmem:[#allocation5 + $0x1a0] sm:$0xff]
    %v10159 = vld [vmem:[#allocation5 + $0x1a8] sm:$0xff]
    %v10160 = vld [vmem:[#allocation5 + $0x1b0] sm:$0xff]
    %v10161 = vld [vmem:[#allocation5 + $0x1b8] sm:$0xff]
    %v10162 = vld [vmem:[#allocation5 + $0x1c0] sm:$0xff]
    %v10163 = vld [vmem:[#allocation5 + $0x1c8] sm:$0xff]
    %v10164 = vld [vmem:[#allocation5 + $0x1d0] sm:$0xff]
    %v10165 = vld [vmem:[#allocation5 + $0x1d8] sm:$0xff]
    %v10166 = vld [vmem:[#allocation5 + $0x1e0] sm:$0xff]
    %v10167 = vld [vmem:[#allocation5 + $0x1e8] sm:$0xff]
    %v10168 = vld [vmem:[#allocation5 + $0x1f0] sm:$0xff]
    %v10169 = vld [vmem:[#allocation5 + $0x1f8] sm:$0xff]
    %10170 = vst [vmem:[#allocation1] ss:$9 sm:$0xff] %v9696
    %s10172 = scalar_lea.vmem [#allocation1], 1
    %10173 = vst [vmem:[%s10172] ss:$9 sm:$0xff] %v9697
    %s10174 = scalar_lea.vmem [#allocation1], 2
    %10175 = vst [vmem:[%s10174] ss:$9 sm:$0xff] %v9698
    %s10177 = scalar_lea.vmem [#allocation1], 3
    %10178 = vst [vmem:[%s10177] ss:$9 sm:$0xff] %v9699
    %v10179 = vld [vmem:[#allocation1] sm:$0xff]
    %v10197 = vunpack.c.l.b16 %v10154
    %v10198 = vunpack.c.h.b16 %v10154
    %v10199 = vunpack.c.l.b16 %v10155
    %v10200 = vunpack.c.h.b16 %v10155
    %v10201 = vunpack.c.l.b16 %v10156
    %v10202 = vunpack.c.h.b16 %v10156
    %v10203 = vunpack.c.l.b16 %v10157
    %v10204 = vunpack.c.h.b16 %v10157
    %v10205 = vunpack.c.l.b16 %v10158
    %v10206 = vunpack.c.h.b16 %v10158
    %v10207 = vunpack.c.l.b16 %v10159
    %v10208 = vunpack.c.h.b16 %v10159
    %v10209 = vunpack.c.l.b16 %v10160
    %v10210 = vunpack.c.h.b16 %v10160
    %v10211 = vunpack.c.l.b16 %v10161
    %v10212 = vunpack.c.h.b16 %v10161
    %v10213 = vunpack.c.l.b16 %v10162
    %v10214 = vunpack.c.h.b16 %v10162
    %v10215 = vunpack.c.l.b16 %v10163
    %v10216 = vunpack.c.h.b16 %v10163
    %v10217 = vunpack.c.l.b16 %v10164
    %v10218 = vunpack.c.h.b16 %v10164
    %v10219 = vunpack.c.l.b16 %v10165
    %v10220 = vunpack.c.h.b16 %v10165
    %v10221 = vunpack.c.l.b16 %v10166
    %v10222 = vunpack.c.h.b16 %v10166
    %v10223 = vunpack.c.l.b16 %v10167
    %v10224 = vunpack.c.h.b16 %v10167
    %v10225 = vunpack.c.l.b16 %v10168
    %v10226 = vunpack.c.h.b16 %v10168
    %v10227 = vunpack.c.l.b16 %v10169
    %v10228 = vunpack.c.h.b16 %v10169
    %v10229 = vpack.c.b16 %v10199, %v10197
    %v10230 = vpack.c.b16 %v10200, %v10198
    %v10231 = vpack.c.b16 %v10203, %v10201
    %v10232 = vpack.c.b16 %v10204, %v10202
    %v10233 = vpack.c.b16 %v10207, %v10205
    %v10234 = vpack.c.b16 %v10208, %v10206
    %v10235 = vpack.c.b16 %v10211, %v10209
    %v10236 = vpack.c.b16 %v10212, %v10210
    %v10237 = vpack.c.b16 %v10215, %v10213
    %v10238 = vpack.c.b16 %v10216, %v10214
    %v10239 = vpack.c.b16 %v10219, %v10217
    %v10240 = vpack.c.b16 %v10220, %v10218
    %v10241 = vpack.c.b16 %v10223, %v10221
    %v10242 = vpack.c.b16 %v10224, %v10222
    %v10243 = vpack.c.b16 %v10227, %v10225
    %v10244 = vpack.c.b16 %v10228, %v10226
    %10261 = vmatpush.bf16.msra.mxu0 %v10243
    %10262 = vmatpush.bf16.msra.mxu0 %v10241
    %10263 = vmatpush.bf16.msra.mxu0 %v10239
    %10264 = vmatpush.bf16.msra.mxu0 %v10237
    %10265 = vmatpush.bf16.msra.mxu0 %v10235
    %10266 = vmatpush.bf16.msra.mxu0 %v10233
    %10267 = vmatpush.bf16.msra.mxu0 %v10231
    %10268 = vmatpush.bf16.msra.mxu0 %v10229
    %10269 = vmatmul.bf16.gmra.mxu0 %v10179
    %v10270 = vpop.f32.mrf.mxu0
    %v10271 = vadd.f32 0.0, %v10270
    %v10272 = vpop.f32.mrf.mxu0
    %10273 = vdwg.mxu0
    %10274 = vmatpush.bf16.msra.mxu0 %v10244
    %10275 = vmatpush.bf16.msra.mxu0 %v10242
    %10276 = vmatpush.bf16.msra.mxu0 %v10240
    %10277 = vmatpush.bf16.msra.mxu0 %v10238
    %10278 = vmatpush.bf16.msra.mxu0 %v10236
    %10279 = vmatpush.bf16.msra.mxu0 %v10234
    %10280 = vmatpush.bf16.msra.mxu0 %v10232
    %10281 = vmatpush.bf16.msra.mxu0 %v10230
    %10282 = vmatmul.bf16.gmra.mxu0 %v10179
    %v10283 = vpop.f32.mrf.mxu0
    %v10284 = vadd.f32 0.0, %v10283
    %v10285 = vpop.f32.mrf.mxu0
    %10286 = vdwg.mxu0
    %v10287 = vadd.f32 %v10152, %v10271
    %v10288 = vadd.f32 %v10153, %v10284
    %v10291 = vrot.slane %v9697, 1
    %v10292 = vrot.slane %v9699, 1
    %v10293 = vshrl.u32 %v9697, 16
    %v10295 = vrot.slane %v10293, 7
    %v10296 = vrot.slane %v10295, 1
    %v10298 = vshll.u32 %v10291, 16
    %v10300 = vsel %vm9735, %v10296, %v10298
    %v10301 = vshrl.u32 %v9699, 16
    %v10303 = vrot.slane %v10301, 7
    %v10304 = vrot.slane %v10303, 1
    %v10306 = vshll.u32 %v10292, 16
    %v10308 = vsel %vm9735, %v10304, %v10306
    %v10309 = vld [vmem:[#allocation5 + $0x200] sm:$0xff]
    %v10310 = vld [vmem:[#allocation5 + $0x208] sm:$0xff]
    %v10311 = vld [vmem:[#allocation5 + $0x210] sm:$0xff]
    %v10312 = vld [vmem:[#allocation5 + $0x218] sm:$0xff]
    %v10313 = vld [vmem:[#allocation5 + $0x220] sm:$0xff]
    %v10314 = vld [vmem:[#allocation5 + $0x228] sm:$0xff]
    %v10315 = vld [vmem:[#allocation5 + $0x230] sm:$0xff]
    %v10316 = vld [vmem:[#allocation5 + $0x238] sm:$0xff]
    %v10317 = vld [vmem:[#allocation5 + $0x240] sm:$0xff]
    %v10318 = vld [vmem:[#allocation5 + $0x248] sm:$0xff]
    %v10319 = vld [vmem:[#allocation5 + $0x250] sm:$0xff]
    %v10320 = vld [vmem:[#allocation5 + $0x258] sm:$0xff]
    %v10321 = vld [vmem:[#allocation5 + $0x260] sm:$0xff]
    %v10322 = vld [vmem:[#allocation5 + $0x268] sm:$0xff]
    %v10323 = vld [vmem:[#allocation5 + $0x270] sm:$0xff]
    %v10324 = vld [vmem:[#allocation5 + $0x278] sm:$0xff]
    %10325 = vst [vmem:[#allocation1] ss:$9 sm:$0xff] %v9753
    %s10327 = scalar_lea.vmem [#allocation1], 1
    %10328 = vst [vmem:[%s10327] ss:$9 sm:$0xff] %v10300
    %s10329 = scalar_lea.vmem [#allocation1], 2
    %10330 = vst [vmem:[%s10329] ss:$9 sm:$0xff] %v9762
    %s10332 = scalar_lea.vmem [#allocation1], 3
    %10333 = vst [vmem:[%s10332] ss:$9 sm:$0xff] %v10308
    %v10334 = vld [vmem:[#allocation1] sm:$0xff]
    %v10352 = vunpack.c.l.b16 %v10309
    %v10353 = vunpack.c.h.b16 %v10309
    %v10354 = vunpack.c.l.b16 %v10310
    %v10355 = vunpack.c.h.b16 %v10310
    %v10356 = vunpack.c.l.b16 %v10311
    %v10357 = vunpack.c.h.b16 %v10311
    %v10358 = vunpack.c.l.b16 %v10312
    %v10359 = vunpack.c.h.b16 %v10312
    %v10360 = vunpack.c.l.b16 %v10313
    %v10361 = vunpack.c.h.b16 %v10313
    %v10362 = vunpack.c.l.b16 %v10314
    %v10363 = vunpack.c.h.b16 %v10314
    %v10364 = vunpack.c.l.b16 %v10315
    %v10365 = vunpack.c.h.b16 %v10315
    %v10366 = vunpack.c.l.b16 %v10316
    %v10367 = vunpack.c.h.b16 %v10316
    %v10368 = vunpack.c.l.b16 %v10317
    %v10369 = vunpack.c.h.b16 %v10317
    %v10370 = vunpack.c.l.b16 %v10318
    %v10371 = vunpack.c.h.b16 %v10318
    %v10372 = vunpack.c.l.b16 %v10319
    %v10373 = vunpack.c.h.b16 %v10319
    %v10374 = vunpack.c.l.b16 %v10320
    %v10375 = vunpack.c.h.b16 %v10320
    %v10376 = vunpack.c.l.b16 %v10321
    %v10377 = vunpack.c.h.b16 %v10321
    %v10378 = vunpack.c.l.b16 %v10322
    %v10379 = vunpack.c.h.b16 %v10322
    %v10380 = vunpack.c.l.b16 %v10323
    %v10381 = vunpack.c.h.b16 %v10323
    %v10382 = vunpack.c.l.b16 %v10324
    %v10383 = vunpack.c.h.b16 %v10324
    %v10384 = vpack.c.b16 %v10354, %v10352
    %v10385 = vpack.c.b16 %v10355, %v10353
    %v10386 = vpack.c.b16 %v10358, %v10356
    %v10387 = vpack.c.b16 %v10359, %v10357
    %v10388 = vpack.c.b16 %v10362, %v10360
    %v10389 = vpack.c.b16 %v10363, %v10361
    %v10390 = vpack.c.b16 %v10366, %v10364
    %v10391 = vpack.c.b16 %v10367, %v10365
    %v10392 = vpack.c.b16 %v10370, %v10368
    %v10393 = vpack.c.b16 %v10371, %v10369
    %v10394 = vpack.c.b16 %v10374, %v10372
    %v10395 = vpack.c.b16 %v10375, %v10373
    %v10396 = vpack.c.b16 %v10378, %v10376
    %v10397 = vpack.c.b16 %v10379, %v10377
    %v10398 = vpack.c.b16 %v10382, %v10380
    %v10399 = vpack.c.b16 %v10383, %v10381
    %10416 = vmatpush.bf16.msra.mxu0 %v10398
    %10417 = vmatpush.bf16.msra.mxu0 %v10396
    %10418 = vmatpush.bf16.msra.mxu0 %v10394
    %10419 = vmatpush.bf16.msra.mxu0 %v10392
    %10420 = vmatpush.bf16.msra.mxu0 %v10390
    %10421 = vmatpush.bf16.msra.mxu0 %v10388
    %10422 = vmatpush.bf16.msra.mxu0 %v10386
    %10423 = vmatpush.bf16.msra.mxu0 %v10384
    %10424 = vmatmul.bf16.gmra.mxu0 %v10334
    %v10425 = vpop.f32.mrf.mxu0
    %v10426 = vadd.f32 0.0, %v10425
    %v10427 = vpop.f32.mrf.mxu0
    %10428 = vdwg.mxu0
    %10429 = vmatpush.bf16.msra.mxu0 %v10399
    %10430 = vmatpush.bf16.msra.mxu0 %v10397
    %10431 = vmatpush.bf16.msra.mxu0 %v10395
    %10432 = vmatpush.bf16.msra.mxu0 %v10393
    %10433 = vmatpush.bf16.msra.mxu0 %v10391
    %10434 = vmatpush.bf16.msra.mxu0 %v10389
    %10435 = vmatpush.bf16.msra.mxu0 %v10387
    %10436 = vmatpush.bf16.msra.mxu0 %v10385
    %10437 = vmatmul.bf16.gmra.mxu0 %v10334
    %v10438 = vpop.f32.mrf.mxu0
    %v10439 = vadd.f32 0.0, %v10438
    %v10440 = vpop.f32.mrf.mxu0
    %10441 = vdwg.mxu0
    %v10442 = vadd.f32 %v10287, %v10426
    %v10443 = vadd.f32 %v10288, %v10439
    %10444 = vst [vmem:[#allocation1] sm:$0xff] %v9696
    %s10445 = scalar_lea.vmem [#allocation1], 1
    %v10446 = vld [vmem:[%s10445] ss:$9 sm:$0xff]
    %10447 = vst [vmem:[#allocation1] sm:$0xff] %v9697
    %v10448 = vld [vmem:[%s10445] ss:$9 sm:$0xff]
    %10449 = vst [vmem:[#allocation1] sm:$0xff] %v9698
    %v10450 = vld [vmem:[%s10445] ss:$9 sm:$0xff]
    %10451 = vst [vmem:[#allocation1] sm:$0xff] %v9699
    %v10452 = vld [vmem:[%s10445] ss:$9 sm:$0xff]
    %v10453 = vld [vmem:[#allocation5 + $0x280] sm:$0xff]
    %v10454 = vld [vmem:[#allocation5 + $0x288] sm:$0xff]
    %v10455 = vld [vmem:[#allocation5 + $0x290] sm:$0xff]
    %v10456 = vld [vmem:[#allocation5 + $0x298] sm:$0xff]
    %v10457 = vld [vmem:[#allocation5 + $0x2a0] sm:$0xff]
    %v10458 = vld [vmem:[#allocation5 + $0x2a8] sm:$0xff]
    %v10459 = vld [vmem:[#allocation5 + $0x2b0] sm:$0xff]
    %v10460 = vld [vmem:[#allocation5 + $0x2b8] sm:$0xff]
    %v10461 = vld [vmem:[#allocation5 + $0x2c0] sm:$0xff]
    %v10462 = vld [vmem:[#allocation5 + $0x2c8] sm:$0xff]
    %v10463 = vld [vmem:[#allocation5 + $0x2d0] sm:$0xff]
    %v10464 = vld [vmem:[#allocation5 + $0x2d8] sm:$0xff]
    %v10465 = vld [vmem:[#allocation5 + $0x2e0] sm:$0xff]
    %v10466 = vld [vmem:[#allocation5 + $0x2e8] sm:$0xff]
    %v10467 = vld [vmem:[#allocation5 + $0x2f0] sm:$0xff]
    %v10468 = vld [vmem:[#allocation5 + $0x2f8] sm:$0xff]
    %10469 = vst [vmem:[#allocation1] ss:$9 sm:$0xff] %v10446
    %s10470 = scalar_lea.vmem [#allocation1], 1
    %10471 = vst [vmem:[%s10470] ss:$9 sm:$0xff] %v10448
    %s10472 = scalar_lea.vmem [#allocation1], 2
    %10473 = vst [vmem:[%s10472] ss:$9 sm:$0xff] %v10450
    %s10474 = scalar_lea.vmem [#allocation1], 3
    %10475 = vst [vmem:[%s10474] ss:$9 sm:$0xff] %v10452
    %v10476 = vld [vmem:[#allocation1] sm:$0xff]
    %v10494 = vunpack.c.l.b16 %v10453
    %v10495 = vunpack.c.h.b16 %v10453
    %v10496 = vunpack.c.l.b16 %v10454
    %v10497 = vunpack.c.h.b16 %v10454
    %v10498 = vunpack.c.l.b16 %v10455
    %v10499 = vunpack.c.h.b16 %v10455
    %v10500 = vunpack.c.l.b16 %v10456
    %v10501 = vunpack.c.h.b16 %v10456
    %v10502 = vunpack.c.l.b16 %v10457
    %v10503 = vunpack.c.h.b16 %v10457
    %v10504 = vunpack.c.l.b16 %v10458
    %v10505 = vunpack.c.h.b16 %v10458
    %v10506 = vunpack.c.l.b16 %v10459
    %v10507 = vunpack.c.h.b16 %v10459
    %v10508 = vunpack.c.l.b16 %v10460
    %v10509 = vunpack.c.h.b16 %v10460
    %v10510 = vunpack.c.l.b16 %v10461
    %v10511 = vunpack.c.h.b16 %v10461
    %v10512 = vunpack.c.l.b16 %v10462
    %v10513 = vunpack.c.h.b16 %v10462
    %v10514 = vunpack.c.l.b16 %v10463
    %v10515 = vunpack.c.h.b16 %v10463
    %v10516 = vunpack.c.l.b16 %v10464
    %v10517 = vunpack.c.h.b16 %v10464
    %v10518 = vunpack.c.l.b16 %v10465
    %v10519 = vunpack.c.h.b16 %v10465
    %v10520 = vunpack.c.l.b16 %v10466
    %v10521 = vunpack.c.h.b16 %v10466
    %v10522 = vunpack.c.l.b16 %v10467
    %v10523 = vunpack.c.h.b16 %v10467
    %v10524 = vunpack.c.l.b16 %v10468
    %v10525 = vunpack.c.h.b16 %v10468
    %v10526 = vpack.c.b16 %v10496, %v10494
    %v10527 = vpack.c.b16 %v10497, %v10495
    %v10528 = vpack.c.b16 %v10500, %v10498
    %v10529 = vpack.c.b16 %v10501, %v10499
    %v10530 = vpack.c.b16 %v10504, %v10502
    %v10531 = vpack.c.b16 %v10505, %v10503
    %v10532 = vpack.c.b16 %v10508, %v10506
    %v10533 = vpack.c.b16 %v10509, %v10507
    %v10534 = vpack.c.b16 %v10512, %v10510
    %v10535 = vpack.c.b16 %v10513, %v10511
    %v10536 = vpack.c.b16 %v10516, %v10514
    %v10537 = vpack.c.b16 %v10517, %v10515
    %v10538 = vpack.c.b16 %v10520, %v10518
    %v10539 = vpack.c.b16 %v10521, %v10519
    %v10540 = vpack.c.b16 %v10524, %v10522
    %v10541 = vpack.c.b16 %v10525, %v10523
    %10558 = vmatpush.bf16.msra.mxu0 %v10540
    %10559 = vmatpush.bf16.msra.mxu0 %v10538
    %10560 = vmatpush.bf16.msra.mxu0 %v10536
    %10561 = vmatpush.bf16.msra.mxu0 %v10534
    %10562 = vmatpush.bf16.msra.mxu0 %v10532
    %10563 = vmatpush.bf16.msra.mxu0 %v10530
    %10564 = vmatpush.bf16.msra.mxu0 %v10528
    %10565 = vmatpush.bf16.msra.mxu0 %v10526
    %10566 = vmatmul.bf16.gmra.mxu0 %v10476
    %v10567 = vpop.f32.mrf.mxu0
    %v10568 = vadd.f32 0.0, %v10567
    %v10569 = vpop.f32.mrf.mxu0
    %10570 = vdwg.mxu0
    %10571 = vmatpush.bf16.msra.mxu0 %v10541
    %10572 = vmatpush.bf16.msra.mxu0 %v10539
    %10573 = vmatpush.bf16.msra.mxu0 %v10537
    %10574 = vmatpush.bf16.msra.mxu0 %v10535
    %10575 = vmatpush.bf16.msra.mxu0 %v10533
    %10576 = vmatpush.bf16.msra.mxu0 %v10531
    %10577 = vmatpush.bf16.msra.mxu0 %v10529
    %10578 = vmatpush.bf16.msra.mxu0 %v10527
    %10579 = vmatmul.bf16.gmra.mxu0 %v10476
    %v10580 = vpop.f32.mrf.mxu0
    %v10581 = vadd.f32 0.0, %v10580
    %v10582 = vpop.f32.mrf.mxu0
    %10583 = vdwg.mxu0
    %v10584 = vadd.f32 %v10442, %v10568
    %v10585 = vadd.f32 %v10443, %v10581
    %v10586 = vld [vmem:[#allocation5 + $0x300] sm:$0xff]
    %v10587 = vld [vmem:[#allocation5 + $0x308] sm:$0xff]
    %v10588 = vld [vmem:[#allocation5 + $0x310] sm:$0xff]
    %v10589 = vld [vmem:[#allocation5 + $0x318] sm:$0xff]
    %v10590 = vld [vmem:[#allocation5 + $0x320] sm:$0xff]
    %v10591 = vld [vmem:[#allocation5 + $0x328] sm:$0xff]
    %v10592 = vld [vmem:[#allocation5 + $0x330] sm:$0xff]
    %v10593 = vld [vmem:[#allocation5 + $0x338] sm:$0xff]
    %v10594 = vld [vmem:[#allocation5 + $0x340] sm:$0xff]
    %v10595 = vld [vmem:[#allocation5 + $0x348] sm:$0xff]
    %v10596 = vld [vmem:[#allocation5 + $0x350] sm:$0xff]
    %v10597 = vld [vmem:[#allocation5 + $0x358] sm:$0xff]
    %v10598 = vld [vmem:[#allocation5 + $0x360] sm:$0xff]
    %v10599 = vld [vmem:[#allocation5 + $0x368] sm:$0xff]
    %v10600 = vld [vmem:[#allocation5 + $0x370] sm:$0xff]
    %v10601 = vld [vmem:[#allocation5 + $0x378] sm:$0xff]
    %10602 = vst [vmem:[#allocation1] ss:$9 sm:$0xff] %v9697
    %s10603 = scalar_lea.vmem [#allocation1], 1
    %10604 = vst [vmem:[%s10603] ss:$9 sm:$0xff] %v9695
    %s10605 = scalar_lea.vmem [#allocation1], 2
    %10606 = vst [vmem:[%s10605] ss:$9 sm:$0xff] %v9699
    %s10607 = scalar_lea.vmem [#allocation1], 3
    %10608 = vst [vmem:[%s10607] ss:$9 sm:$0xff] %v9695
    %v10609 = vld [vmem:[#allocation1] sm:$0xff]
    %v10627 = vunpack.c.l.b16 %v10586
    %v10628 = vunpack.c.h.b16 %v10586
    %v10629 = vunpack.c.l.b16 %v10587
    %v10630 = vunpack.c.h.b16 %v10587
    %v10631 = vunpack.c.l.b16 %v10588
    %v10632 = vunpack.c.h.b16 %v10588
    %v10633 = vunpack.c.l.b16 %v10589
    %v10634 = vunpack.c.h.b16 %v10589
    %v10635 = vunpack.c.l.b16 %v10590
    %v10636 = vunpack.c.h.b16 %v10590
    %v10637 = vunpack.c.l.b16 %v10591
    %v10638 = vunpack.c.h.b16 %v10591
    %v10639 = vunpack.c.l.b16 %v10592
    %v10640 = vunpack.c.h.b16 %v10592
    %v10641 = vunpack.c.l.b16 %v10593
    %v10642 = vunpack.c.h.b16 %v10593
    %v10643 = vunpack.c.l.b16 %v10594
    %v10644 = vunpack.c.h.b16 %v10594
    %v10645 = vunpack.c.l.b16 %v10595
    %v10646 = vunpack.c.h.b16 %v10595
    %v10647 = vunpack.c.l.b16 %v10596
    %v10648 = vunpack.c.h.b16 %v10596
    %v10649 = vunpack.c.l.b16 %v10597
    %v10650 = vunpack.c.h.b16 %v10597
    %v10651 = vunpack.c.l.b16 %v10598
    %v10652 = vunpack.c.h.b16 %v10598
    %v10653 = vunpack.c.l.b16 %v10599
    %v10654 = vunpack.c.h.b16 %v10599
    %v10655 = vunpack.c.l.b16 %v10600
    %v10656 = vunpack.c.h.b16 %v10600
    %v10657 = vunpack.c.l.b16 %v10601
    %v10658 = vunpack.c.h.b16 %v10601
    %v10659 = vpack.c.b16 %v10629, %v10627
    %v10660 = vpack.c.b16 %v10630, %v10628
    %v10661 = vpack.c.b16 %v10633, %v10631
    %v10662 = vpack.c.b16 %v10634, %v10632
    %v10663 = vpack.c.b16 %v10637, %v10635
    %v10664 = vpack.c.b16 %v10638, %v10636
    %v10665 = vpack.c.b16 %v10641, %v10639
    %v10666 = vpack.c.b16 %v10642, %v10640
    %v10667 = vpack.c.b16 %v10645, %v10643
    %v10668 = vpack.c.b16 %v10646, %v10644
    %v10669 = vpack.c.b16 %v10649, %v10647
    %v10670 = vpack.c.b16 %v10650, %v10648
    %v10671 = vpack.c.b16 %v10653, %v10651
    %v10672 = vpack.c.b16 %v10654, %v10652
    %v10673 = vpack.c.b16 %v10657, %v10655
    %v10674 = vpack.c.b16 %v10658, %v10656
    %10691 = vmatpush.bf16.msra.mxu0 %v10673
    %10692 = vmatpush.bf16.msra.mxu0 %v10671
    %10693 = vmatpush.bf16.msra.mxu0 %v10669
    %10694 = vmatpush.bf16.msra.mxu0 %v10667
    %10695 = vmatpush.bf16.msra.mxu0 %v10665
    %10696 = vmatpush.bf16.msra.mxu0 %v10663
    %10697 = vmatpush.bf16.msra.mxu0 %v10661
    %10698 = vmatpush.bf16.msra.mxu0 %v10659
    %10699 = vmatmul.bf16.gmra.mxu0 %v10609
    %v10700 = vpop.f32.mrf.mxu0
    %v10701 = vadd.f32 0.0, %v10700
    %v10702 = vpop.f32.mrf.mxu0
    %10703 = vdwg.mxu0
    %10704 = vmatpush.bf16.msra.mxu0 %v10674
    %10705 = vmatpush.bf16.msra.mxu0 %v10672
    %10706 = vmatpush.bf16.msra.mxu0 %v10670
    %10707 = vmatpush.bf16.msra.mxu0 %v10668
    %10708 = vmatpush.bf16.msra.mxu0 %v10666
    %10709 = vmatpush.bf16.msra.mxu0 %v10664
    %10710 = vmatpush.bf16.msra.mxu0 %v10662
    %10711 = vmatpush.bf16.msra.mxu0 %v10660
    %10712 = vmatmul.bf16.gmra.mxu0 %v10609
    %v10713 = vpop.f32.mrf.mxu0
    %v10714 = vadd.f32 0.0, %v10713
    %v10715 = vpop.f32.mrf.mxu0
    %10716 = vdwg.mxu0
    %v10717 = vadd.f32 %v10584, %v10701
    %v10718 = vadd.f32 %v10585, %v10714
    %v10719 = vld [vmem:[#allocation5 + $0x380] sm:$0xff]
    %v10720 = vld [vmem:[#allocation5 + $0x388] sm:$0xff]
    %v10721 = vld [vmem:[#allocation5 + $0x390] sm:$0xff]
    %v10722 = vld [vmem:[#allocation5 + $0x398] sm:$0xff]
    %v10723 = vld [vmem:[#allocation5 + $0x3a0] sm:$0xff]
    %v10724 = vld [vmem:[#allocation5 + $0x3a8] sm:$0xff]
    %v10725 = vld [vmem:[#allocation5 + $0x3b0] sm:$0xff]
    %v10726 = vld [vmem:[#allocation5 + $0x3b8] sm:$0xff]
    %v10727 = vld [vmem:[#allocation5 + $0x3c0] sm:$0xff]
    %v10728 = vld [vmem:[#allocation5 + $0x3c8] sm:$0xff]
    %v10729 = vld [vmem:[#allocation5 + $0x3d0] sm:$0xff]
    %v10730 = vld [vmem:[#allocation5 + $0x3d8] sm:$0xff]
    %v10731 = vld [vmem:[#allocation5 + $0x3e0] sm:$0xff]
    %v10732 = vld [vmem:[#allocation5 + $0x3e8] sm:$0xff]
    %v10733 = vld [vmem:[#allocation5 + $0x3f0] sm:$0xff]
    %v10734 = vld [vmem:[#allocation5 + $0x3f8] sm:$0xff]
    %10735 = vst [vmem:[#allocation1] ss:$9 sm:$0xff] %v10300
    %s10736 = scalar_lea.vmem [#allocation1], 1
    %10737 = vst [vmem:[%s10736] ss:$9 sm:$0xff] %v9744
    %s10738 = scalar_lea.vmem [#allocation1], 2
    %10739 = vst [vmem:[%s10738] ss:$9 sm:$0xff] %v10308
    %s10740 = scalar_lea.vmem [#allocation1], 3
    %10741 = vst [vmem:[%s10740] ss:$9 sm:$0xff] %v9744
    %v10742 = vld [vmem:[#allocation1] sm:$0xff]
    %v10760 = vunpack.c.l.b16 %v10719
    %v10761 = vunpack.c.h.b16 %v10719
    %v10762 = vunpack.c.l.b16 %v10720
    %v10763 = vunpack.c.h.b16 %v10720
    %v10764 = vunpack.c.l.b16 %v10721
    %v10765 = vunpack.c.h.b16 %v10721
    %v10766 = vunpack.c.l.b16 %v10722
    %v10767 = vunpack.c.h.b16 %v10722
    %v10768 = vunpack.c.l.b16 %v10723
    %v10769 = vunpack.c.h.b16 %v10723
    %v10770 = vunpack.c.l.b16 %v10724
    %v10771 = vunpack.c.h.b16 %v10724
    %v10772 = vunpack.c.l.b16 %v10725
    %v10773 = vunpack.c.h.b16 %v10725
    %v10774 = vunpack.c.l.b16 %v10726
    %v10775 = vunpack.c.h.b16 %v10726
    %v10776 = vunpack.c.l.b16 %v10727
    %v10777 = vunpack.c.h.b16 %v10727
    %v10778 = vunpack.c.l.b16 %v10728
    %v10779 = vunpack.c.h.b16 %v10728
    %v10780 = vunpack.c.l.b16 %v10729
    %v10781 = vunpack.c.h.b16 %v10729
    %v10782 = vunpack.c.l.b16 %v10730
    %v10783 = vunpack.c.h.b16 %v10730
    %v10784 = vunpack.c.l.b16 %v10731
    %v10785 = vunpack.c.h.b16 %v10731
    %v10786 = vunpack.c.l.b16 %v10732
    %v10787 = vunpack.c.h.b16 %v10732
    %v10788 = vunpack.c.l.b16 %v10733
    %v10789 = vunpack.c.h.b16 %v10733
    %v10790 = vunpack.c.l.b16 %v10734
    %v10791 = vunpack.c.h.b16 %v10734
    %v10792 = vpack.c.b16 %v10762, %v10760
    %v10793 = vpack.c.b16 %v10763, %v10761
    %v10794 = vpack.c.b16 %v10766, %v10764
    %v10795 = vpack.c.b16 %v10767, %v10765
    %v10796 = vpack.c.b16 %v10770, %v10768
    %v10797 = vpack.c.b16 %v10771, %v10769
    %v10798 = vpack.c.b16 %v10774, %v10772
    %v10799 = vpack.c.b16 %v10775, %v10773
    %v10800 = vpack.c.b16 %v10778, %v10776
    %v10801 = vpack.c.b16 %v10779, %v10777
    %v10802 = vpack.c.b16 %v10782, %v10780
    %v10803 = vpack.c.b16 %v10783, %v10781
    %v10804 = vpack.c.b16 %v10786, %v10784
    %v10805 = vpack.c.b16 %v10787, %v10785
    %v10806 = vpack.c.b16 %v10790, %v10788
    %v10807 = vpack.c.b16 %v10791, %v10789
    %10824 = vmatpush.bf16.msra.mxu0 %v10806
    %10825 = vmatpush.bf16.msra.mxu0 %v10804
    %10826 = vmatpush.bf16.msra.mxu0 %v10802
    %10827 = vmatpush.bf16.msra.mxu0 %v10800
    %10828 = vmatpush.bf16.msra.mxu0 %v10798
    %10829 = vmatpush.bf16.msra.mxu0 %v10796
    %10830 = vmatpush.bf16.msra.mxu0 %v10794
    %10831 = vmatpush.bf16.msra.mxu0 %v10792
    %10832 = vmatmul.bf16.gmra.mxu0 %v10742
    %v10833 = vpop.f32.mrf.mxu0
    %v10834 = vadd.f32 0.0, %v10833
    %v10835 = vpop.f32.mrf.mxu0
    %10836 = vdwg.mxu0
    %10837 = vmatpush.bf16.msra.mxu0 %v10807
    %10838 = vmatpush.bf16.msra.mxu0 %v10805
    %10839 = vmatpush.bf16.msra.mxu0 %v10803
    %10840 = vmatpush.bf16.msra.mxu0 %v10801
    %10841 = vmatpush.bf16.msra.mxu0 %v10799
    %10842 = vmatpush.bf16.msra.mxu0 %v10797
    %10843 = vmatpush.bf16.msra.mxu0 %v10795
    %10844 = vmatpush.bf16.msra.mxu0 %v10793
    %10845 = vmatmul.bf16.gmra.mxu0 %v10742
    %v10846 = vpop.f32.mrf.mxu0
    %v10847 = vadd.f32 0.0, %v10846
    %v10848 = vpop.f32.mrf.mxu0
    %10849 = vdwg.mxu0
    %v10850 = vadd.f32 %v10717, %v10834
    %v10851 = vadd.f32 %v10718, %v10847
    %10852 = vst [vmem:[#allocation1] sm:$0xff] %v9697
    %s10853 = scalar_lea.vmem [#allocation1], 1
    %v10854 = vld [vmem:[%s10853] ss:$9 sm:$0xff]
    %10855 = vst [vmem:[#allocation1] sm:$0xff] %v9695
    %v10856 = vld [vmem:[%s10853] ss:$9 sm:$0xff]
    %10857 = vst [vmem:[#allocation1] sm:$0xff] %v9699
    %v10858 = vld [vmem:[%s10853] ss:$9 sm:$0xff]
    %10859 = vst [vmem:[#allocation1] sm:$0xff] %v9695
    %v10860 = vld [vmem:[%s10853] ss:$9 sm:$0xff]
    %v10861 = vld [vmem:[#allocation5 + $0x400] sm:$0xff]
    %v10862 = vld [vmem:[#allocation5 + $0x408] sm:$0xff]
    %v10863 = vld [vmem:[#allocation5 + $0x410] sm:$0xff]
    %v10864 = vld [vmem:[#allocation5 + $0x418] sm:$0xff]
    %v10865 = vld [vmem:[#allocation5 + $0x420] sm:$0xff]
    %v10866 = vld [vmem:[#allocation5 + $0x428] sm:$0xff]
    %v10867 = vld [vmem:[#allocation5 + $0x430] sm:$0xff]
    %v10868 = vld [vmem:[#allocation5 + $0x438] sm:$0xff]
    %v10869 = vld [vmem:[#allocation5 + $0x440] sm:$0xff]
    %v10870 = vld [vmem:[#allocation5 + $0x448] sm:$0xff]
    %v10871 = vld [vmem:[#allocation5 + $0x450] sm:$0xff]
    %v10872 = vld [vmem:[#allocation5 + $0x458] sm:$0xff]
    %v10873 = vld [vmem:[#allocation5 + $0x460] sm:$0xff]
    %v10874 = vld [vmem:[#allocation5 + $0x468] sm:$0xff]
    %v10875 = vld [vmem:[#allocation5 + $0x470] sm:$0xff]
    %v10876 = vld [vmem:[#allocation5 + $0x478] sm:$0xff]
    %10877 = vst [vmem:[#allocation1] ss:$9 sm:$0xff] %v10854
    %s10878 = scalar_lea.vmem [#allocation1], 1
    %10879 = vst [vmem:[%s10878] ss:$9 sm:$0xff] %v10856
    %s10880 = scalar_lea.vmem [#allocation1], 2
    %10881 = vst [vmem:[%s10880] ss:$9 sm:$0xff] %v10858
    %s10882 = scalar_lea.vmem [#allocation1], 3
    %10883 = vst [vmem:[%s10882] ss:$9 sm:$0xff] %v10860
    %v10884 = vld [vmem:[#allocation1] sm:$0xff]
    %v10902 = vunpack.c.l.b16 %v10861
    %v10903 = vunpack.c.h.b16 %v10861
    %v10904 = vunpack.c.l.b16 %v10862
    %v10905 = vunpack.c.h.b16 %v10862
    %v10906 = vunpack.c.l.b16 %v10863
    %v10907 = vunpack.c.h.b16 %v10863
    %v10908 = vunpack.c.l.b16 %v10864
    %v10909 = vunpack.c.h.b16 %v10864
    %v10910 = vunpack.c.l.b16 %v10865
    %v10911 = vunpack.c.h.b16 %v10865
    %v10912 = vunpack.c.l.b16 %v10866
    %v10913 = vunpack.c.h.b16 %v10866
    %v10914 = vunpack.c.l.b16 %v10867
    %v10915 = vunpack.c.h.b16 %v10867
    %v10916 = vunpack.c.l.b16 %v10868
    %v10917 = vunpack.c.h.b16 %v10868
    %v10918 = vunpack.c.l.b16 %v10869
    %v10919 = vunpack.c.h.b16 %v10869
    %v10920 = vunpack.c.l.b16 %v10870
    %v10921 = vunpack.c.h.b16 %v10870
    %v10922 = vunpack.c.l.b16 %v10871
    %v10923 = vunpack.c.h.b16 %v10871
    %v10924 = vunpack.c.l.b16 %v10872
    %v10925 = vunpack.c.h.b16 %v10872
    %v10926 = vunpack.c.l.b16 %v10873
    %v10927 = vunpack.c.h.b16 %v10873
    %v10928 = vunpack.c.l.b16 %v10874
    %v10929 = vunpack.c.h.b16 %v10874
    %v10930 = vunpack.c.l.b16 %v10875
    %v10931 = vunpack.c.h.b16 %v10875
    %v10932 = vunpack.c.l.b16 %v10876
    %v10933 = vunpack.c.h.b16 %v10876
    %v10934 = vpack.c.b16 %v10904, %v10902
    %v10935 = vpack.c.b16 %v10905, %v10903
    %v10936 = vpack.c.b16 %v10908, %v10906
    %v10937 = vpack.c.b16 %v10909, %v10907
    %v10938 = vpack.c.b16 %v10912, %v10910
    %v10939 = vpack.c.b16 %v10913, %v10911
    %v10940 = vpack.c.b16 %v10916, %v10914
    %v10941 = vpack.c.b16 %v10917, %v10915
    %v10942 = vpack.c.b16 %v10920, %v10918
    %v10943 = vpack.c.b16 %v10921, %v10919
    %v10944 = vpack.c.b16 %v10924, %v10922
    %v10945 = vpack.c.b16 %v10925, %v10923
    %v10946 = vpack.c.b16 %v10928, %v10926
    %v10947 = vpack.c.b16 %v10929, %v10927
    %v10948 = vpack.c.b16 %v10932, %v10930
    %v10949 = vpack.c.b16 %v10933, %v10931
    %10966 = vmatpush.bf16.msra.mxu0 %v10948
    %10967 = vmatpush.bf16.msra.mxu0 %v10946
    %10968 = vmatpush.bf16.msra.mxu0 %v10944
    %10969 = vmatpush.bf16.msra.mxu0 %v10942
    %10970 = vmatpush.bf16.msra.mxu0 %v10940
    %10971 = vmatpush.bf16.msra.mxu0 %v10938
    %10972 = vmatpush.bf16.msra.mxu0 %v10936
    %10973 = vmatpush.bf16.msra.mxu0 %v10934
    %10974 = vmatmul.bf16.gmra.mxu0 %v10884
    %v10975 = vpop.f32.mrf.mxu0
    %v10976 = vadd.f32 0.0, %v10975
    %v10977 = vpop.f32.mrf.mxu0
    %10978 = vdwg.mxu0
    %10979 = vmatpush.bf16.msra.mxu0 %v10949
    %10980 = vmatpush.bf16.msra.mxu0 %v10947
    %10981 = vmatpush.bf16.msra.mxu0 %v10945
    %10982 = vmatpush.bf16.msra.mxu0 %v10943
    %10983 = vmatpush.bf16.msra.mxu0 %v10941
    %10984 = vmatpush.bf16.msra.mxu0 %v10939
    %10985 = vmatpush.bf16.msra.mxu0 %v10937
    %10986 = vmatpush.bf16.msra.mxu0 %v10935
    %10987 = vmatmul.bf16.gmra.mxu0 %v10884
    %v10988 = vpop.f32.mrf.mxu0
    %v10989 = vadd.f32 0.0, %v10988
    %v10990 = vpop.f32.mrf.mxu0
    %10991 = vdwg.mxu0
    %v10992 = vadd.f32 %v10850, %v10976
    %v10993 = vadd.f32 %v10851, %v10989
    %v10994 = vld [vmem:[%s8] sm:$0xf]
    %v10996 = vperm.slane %v10994, 0
    %v10997 = vperm.slane %v10994, 2
    %v11000 = vperm.slane %v10996, 0
    %v11001 = vperm.slane %v10997, 0
    %v11002 = vmul.f32 %v10992, %v11000
    %v11003 = vmul.f32 %v10993, %v11001
    %v11004 = vperm.slane %v10994, 1
    %v11005 = vperm.slane %v10994, 3
    %v11008 = vperm.slane %v11004, 1
    %v11009 = vperm.slane %v11005, 1
    %v11010 = vadd.f32 %v11002, %v11008
    %v11011 = vadd.f32 %v11003, %v11009
    %v11012 = vmax.f32 %v11010, 0.0
    %v11013 = vmax.f32 %v11011, 0.0
    %v11016 = vrot.slane %v11013, 6
    %v11017 = vsel %vm9496, %v11012, %v11016
    %vm11018 = vcmask 1043458
    %v11019 = vsel %vm11018, %v11012, %v11016
    %v11020 = vrot.slane %v11019, 2
    %vm11021 = vcmask 1045508
    %v11022 = vsel %vm11021, %v11012, %v11016
    %v11023 = vrot.slane %v11022, 4
    %vm11024 = vcmask 1045504
    %v11025 = vsel %vm11024, %v11016, %v11012
    %v11026 = vrot.slane %v11025, 6
    %11027 = vst [vmem:[#allocation1] ss:$4 sm:$0xff] %v11017
    %v11028 = vld.sshfl [vmem:[#allocation1] sm:$0xff pattern:$0x73625140]
    %v11029 = vld.sshfl [vmem:[#allocation1 + $0x8] sm:$0xff pattern:$0x73625140]
    %s11030 = scalar_lea.vmem [#allocation1], 32
    %11031 = vst [vmem:[%s11030] ss:$4 sm:$0xff] %v11020
    %v11032 = vld.sshfl [vmem:[#allocation1 + $0x20] sm:$0xff pattern:$0x73625140]
    %v11033 = vld.sshfl [vmem:[#allocation1 + $0x28] sm:$0xff pattern:$0x73625140]
    %11034 = vst [vmem:[#allocation1] ss:$4 sm:$0xff] %v11023
    %v11035 = vld.sshfl [vmem:[#allocation1] sm:$0xff pattern:$0x73625140]
    %v11036 = vld.sshfl [vmem:[#allocation1 + $0x8] sm:$0xff pattern:$0x73625140]
    %11037 = vst [vmem:[%s11030] ss:$4 sm:$0xff] %v11026
    %v11038 = vld.sshfl [vmem:[#allocation1 + $0x20] sm:$0xff pattern:$0x73625140]
    %v11039 = vld.sshfl [vmem:[#allocation1 + $0x28] sm:$0xff pattern:$0x73625140]
    %v11048 = vsel %vm9496, %v11028, -inf
    %v11049 = vrot.slane %v11048, 4
    %v11050 = vmax.f32 %v11048, %v11049
    %v11051 = vrot.slane %v11050, 2
    %v11052 = vmax.f32 %v11050, %v11051
    %v11053 = vrot.slane %v11052, 1
    %v11054 = vmax.f32 %v11052, %v11053
    %v11055 = vsel %vm9496, %v11029, -inf
    %v11056 = vrot.slane %v11055, 4
    %v11057 = vmax.f32 %v11055, %v11056
    %v11058 = vrot.slane %v11057, 2
    %v11059 = vmax.f32 %v11057, %v11058
    %v11060 = vrot.slane %v11059, 1
    %v11061 = vmax.f32 %v11059, %v11060
    %v11062 = vsel %vm9496, %v11032, -inf
    %v11063 = vrot.slane %v11062, 4
    %v11064 = vmax.f32 %v11062, %v11063
    %v11065 = vrot.slane %v11064, 2
    %v11066 = vmax.f32 %v11064, %v11065
    %v11067 = vrot.slane %v11066, 1
    %v11068 = vmax.f32 %v11066, %v11067
    %v11069 = vsel %vm9496, %v11033, -inf
    %v11070 = vrot.slane %v11069, 4
    %v11071 = vmax.f32 %v11069, %v11070
    %v11072 = vrot.slane %v11071, 2
    %v11073 = vmax.f32 %v11071, %v11072
    %v11074 = vrot.slane %v11073, 1
    %v11075 = vmax.f32 %v11073, %v11074
    %v11076 = vsel %vm9496, %v11035, -inf
    %v11077 = vrot.slane %v11076, 4
    %v11078 = vmax.f32 %v11076, %v11077
    %v11079 = vrot.slane %v11078, 2
    %v11080 = vmax.f32 %v11078, %v11079
    %v11081 = vrot.slane %v11080, 1
    %v11082 = vmax.f32 %v11080, %v11081
    %v11083 = vsel %vm9496, %v11036, -inf
    %v11084 = vrot.slane %v11083, 4
    %v11085 = vmax.f32 %v11083, %v11084
    %v11086 = vrot.slane %v11085, 2
    %v11087 = vmax.f32 %v11085, %v11086
    %v11088 = vrot.slane %v11087, 1
    %v11089 = vmax.f32 %v11087, %v11088
    %v11090 = vsel %vm9496, %v11038, -inf
    %v11091 = vrot.slane %v11090, 4
    %v11092 = vmax.f32 %v11090, %v11091
    %v11093 = vrot.slane %v11092, 2
    %v11094 = vmax.f32 %v11092, %v11093
    %v11095 = vrot.slane %v11094, 1
    %v11096 = vmax.f32 %v11094, %v11095
    %v11097 = vsel %vm9496, %v11039, -inf
    %v11098 = vrot.slane %v11097, 4
    %v11099 = vmax.f32 %v11097, %v11098
    %v11100 = vrot.slane %v11099, 2
    %v11101 = vmax.f32 %v11099, %v11100
    %v11102 = vrot.slane %v11101, 1
    %v11103 = vmax.f32 %v11101, %v11102
    %v11104 = vmax.f32 %v11054, %v11068
    %v11105 = vmax.f32 %v11061, %v11075
    %v11106 = vmax.f32 %v11082, %v11096
    %v11107 = vmax.f32 %v11089, %v11103
    %v11108 = vpack.c.bf16 %v11104, %v11104
    %v11109 = vpack.c.bf16 %v11105, %v11105
    %v11110 = vpack.c.bf16 %v11106, %v11106
    %v11111 = vpack.c.bf16 %v11107, %v11107
    %v11112 = vld [vmem:[%s9] sm:$0xf]
    %v11113 = vld [vmem:[%s9 + $0x4] sm:$0xf]
    %v11114 = vld [vmem:[%s9 + $0x8] sm:$0xf]
    %v11115 = vld [vmem:[%s9 + $0xc] sm:$0xf]
    %v11116 = vld [vmem:[%s9 + $0x10] sm:$0xf]
    %v11117 = vld [vmem:[%s9 + $0x14] sm:$0xf]
    %v11118 = vld [vmem:[%s9 + $0x18] sm:$0xf]
    %v11119 = vld [vmem:[%s9 + $0x1c] sm:$0xf]
    %v11120 = vld [vmem:[%s9 + $0x20] sm:$0xf]
    %v11121 = vld [vmem:[%s9 + $0x24] sm:$0xf]
    %v11122 = vld [vmem:[%s9 + $0x28] sm:$0xf]
    %v11123 = vld [vmem:[%s9 + $0x2c] sm:$0xf]
    %v11124 = vld [vmem:[%s9 + $0x30] sm:$0xf]
    %v11125 = vld [vmem:[%s9 + $0x34] sm:$0xf]
    %v11126 = vld [vmem:[%s9 + $0x38] sm:$0xf]
    %v11127 = vld [vmem:[%s9 + $0x3c] sm:$0xf]
    %v11128 = vld [vmem:[%s9 + $0x40] sm:$0xf]
    %v11129 = vld [vmem:[%s9 + $0x44] sm:$0xf]
    %v11130 = vld [vmem:[%s9 + $0x48] sm:$0xf]
    %v11131 = vld [vmem:[%s9 + $0x4c] sm:$0xf]
    %v11132 = vld [vmem:[%s9 + $0x50] sm:$0xf]
    %v11133 = vld [vmem:[%s9 + $0x54] sm:$0xf]
    %v11134 = vld [vmem:[%s9 + $0x58] sm:$0xf]
    %v11135 = vld [vmem:[%s9 + $0x5c] sm:$0xf]
    %v11136 = vld [vmem:[%s9 + $0x60] sm:$0xf]
    %v11137 = vld [vmem:[%s9 + $0x64] sm:$0xf]
    %v11138 = vld [vmem:[%s9 + $0x68] sm:$0xf]
    %v11139 = vld [vmem:[%s9 + $0x6c] sm:$0xf]
    %v11140 = vld [vmem:[%s9 + $0x70] sm:$0xf]
    %v11141 = vld [vmem:[%s9 + $0x74] sm:$0xf]
    %v11142 = vld [vmem:[%s9 + $0x78] sm:$0xf]
    %v11143 = vld [vmem:[%s9 + $0x7c] sm:$0xf]
    %v11144 = vld [vmem:[%s10] sm:$0x1]
    %v11146 = vperm.slane %v11144, 0
    %v11152 = vunpack.c.l.b16 %v11108
    %v11153 = vunpack.c.l.b16 %v11109
    %v11154 = vunpack.c.l.b16 %v11110
    %v11155 = vunpack.c.l.b16 %v11111
    %v11156 = vsel %vm5959, %v11154, %v11152
    %v11157 = vsel %vm5959, %v11155, %v11153
    %v11158 = vpack.c.b16 %v11156, %v11156
    %v11159 = vpack.c.b16 %v11157, %v11157
    %v11194 = vunpack.c.l.b16 %v11112
    %v11195 = vunpack.c.l.b16 %v11113
    %v11196 = vunpack.c.l.b16 %v11114
    %v11197 = vunpack.c.l.b16 %v11115
    %v11198 = vunpack.c.l.b16 %v11116
    %v11199 = vunpack.c.l.b16 %v11117
    %v11200 = vunpack.c.l.b16 %v11118
    %v11201 = vunpack.c.l.b16 %v11119
    %v11202 = vunpack.c.l.b16 %v11120
    %v11203 = vunpack.c.l.b16 %v11121
    %v11204 = vunpack.c.l.b16 %v11122
    %v11205 = vunpack.c.l.b16 %v11123
    %v11206 = vunpack.c.l.b16 %v11124
    %v11207 = vunpack.c.l.b16 %v11125
    %v11208 = vunpack.c.l.b16 %v11126
    %v11209 = vunpack.c.l.b16 %v11127
    %v11210 = vunpack.c.l.b16 %v11128
    %v11211 = vunpack.c.l.b16 %v11129
    %v11212 = vunpack.c.l.b16 %v11130
    %v11213 = vunpack.c.l.b16 %v11131
    %v11214 = vunpack.c.l.b16 %v11132
    %v11215 = vunpack.c.l.b16 %v11133
    %v11216 = vunpack.c.l.b16 %v11134
    %v11217 = vunpack.c.l.b16 %v11135
    %v11218 = vunpack.c.l.b16 %v11136
    %v11219 = vunpack.c.l.b16 %v11137
    %v11220 = vunpack.c.l.b16 %v11138
    %v11221 = vunpack.c.l.b16 %v11139
    %v11222 = vunpack.c.l.b16 %v11140
    %v11223 = vunpack.c.l.b16 %v11141
    %v11224 = vunpack.c.l.b16 %v11142
    %v11225 = vunpack.c.l.b16 %v11143
    %v11226 = vpack.c.b16 %v11195, %v11194
    %v11227 = vpack.c.b16 %v11197, %v11196
    %v11228 = vpack.c.b16 %v11199, %v11198
    %v11229 = vpack.c.b16 %v11201, %v11200
    %v11230 = vpack.c.b16 %v11203, %v11202
    %v11231 = vpack.c.b16 %v11205, %v11204
    %v11232 = vpack.c.b16 %v11207, %v11206
    %v11233 = vpack.c.b16 %v11209, %v11208
    %v11234 = vpack.c.b16 %v11211, %v11210
    %v11235 = vpack.c.b16 %v11213, %v11212
    %v11236 = vpack.c.b16 %v11215, %v11214
    %v11237 = vpack.c.b16 %v11217, %v11216
    %v11238 = vpack.c.b16 %v11219, %v11218
    %v11239 = vpack.c.b16 %v11221, %v11220
    %v11240 = vpack.c.b16 %v11223, %v11222
    %v11241 = vpack.c.b16 %v11225, %v11224
    %11258 = vmatpush.bf16.msra.mxu0 %v11233
    %11259 = vmatpush.bf16.msra.mxu0 %v11232
    %11260 = vmatpush.bf16.msra.mxu0 %v11231
    %11261 = vmatpush.bf16.msra.mxu0 %v11230
    %11262 = vmatpush.bf16.msra.mxu0 %v11229
    %11263 = vmatpush.bf16.msra.mxu0 %v11228
    %11264 = vmatpush.bf16.msra.mxu0 %v11227
    %11265 = vmatpush.bf16.msra.mxu0 %v11226
    %11266 = vmatmul.bf16.gmra.mxu0 %v11158
    %v11267 = vpop.f32.mrf.mxu0
    %v11268 = vadd.f32 %v11146, %v11267
    %v11269 = vpop.f32.mrf.mxu0
    %11270 = vdwg.mxu0
    %11271 = vmatpush.bf16.msra.mxu0 %v11241
    %11272 = vmatpush.bf16.msra.mxu0 %v11240
    %11273 = vmatpush.bf16.msra.mxu0 %v11239
    %11274 = vmatpush.bf16.msra.mxu0 %v11238
    %11275 = vmatpush.bf16.msra.mxu0 %v11237
    %11276 = vmatpush.bf16.msra.mxu0 %v11236
    %11277 = vmatpush.bf16.msra.mxu0 %v11235
    %11278 = vmatpush.bf16.msra.mxu0 %v11234
    %11279 = vmatmul.bf16.gmra.mxu0 %v11159
    %v11280 = vpop.f32.mrf.mxu0
    %v11281 = vadd.f32 %v11268, %v11280
    %v11282 = vpop.f32.mrf.mxu0
    %11283 = vdwg.mxu0
    %11284 = vst [vmem:[#allocation7] sm:$0x3] %v11281
    // Predicated region
    $region54: #{tpu_custom_call.1} parent=1 // pred_check
      _
    $region55: #{tpu_custom_call.1} parent=1 // pred_check_branch
      %11286 = sbr.rel (0) target = $region57
    $region56: #{tpu_custom_call.1} parent=1 // pred_region
      %11288 = vsyncadd [#allocation4], 0
      %s11290 = sshll.u32 [#allocation7], 4
      %s11291 = int_to_ptr.vmem [resolvable:$true] %s11290
      %s11292 = sshll.u32 %s11, 4
      %s11293 = int_to_ptr.hbm [resolvable:$true] %s11292
      %11295 = dma.vmem_to_hbm [thread:$0]  %s11291, 32, %s11293, [#allocation4]
    $region57: #{tpu_custom_call.1} parent=1 // pred_fallthru
      _
    // Predicated region
    $region58: #{tpu_custom_call.1} parent=1 // pred_check
      _
    $region59: #{tpu_custom_call.1} parent=1 // pred_check_branch
      %11297 = sbr.rel (0) target = $region61
    $region60: #{tpu_custom_call.1} parent=1 // pred_region
      %11299 = dma.done [#allocation4], 32
    $region61: #{tpu_custom_call.1} parent=1 // pred_fallthru
      _
    %11300 = vsyncpa [#allocation3], 1
    %11301 = vsyncpa [#allocation6], 1
    %11302 = vsyncpa [#allocation4], 1

</llo_original>
